<compile_context>
chip_gen: v7x
topology: tpu7x:2x2x1
jax: 0.10.0
libtpu: 0.0.40
codegen_flags: <defaults>
</compile_context>

<pallas_src>
import functools

import jax
import jax.numpy as jnp
from jax import lax
from jax.experimental import pallas as pl
from jax.experimental.pallas import tpu as pltpu


_COMPILER_PARAMS_CLS = getattr(pltpu, "CompilerParams", None)
if _COMPILER_PARAMS_CLS is None:  # very old jax fallback
    _COMPILER_PARAMS_CLS = getattr(pltpu, "TPUCompilerParams")


def _round_up(x, m):
    return ((x + m - 1) // m) * m


def _sigmoid_via_tanh(x):
    # sigmoid(x) = 0.5 * (tanh(x / 2) + 1)  -> one EUP push instead of exp+recip.
    return 0.5 * jnp.tanh(0.5 * x) + 0.5


# ---------------------------------------------------------------------------
# Recurrent kernel: grid = (2 directions, num_chunks).
# Per grid step: Tc timesteps of  gates = xw_t + h @ Wh  + gate nonlinearities.
# ---------------------------------------------------------------------------
def _lstm_chunk_kernel(xw_ref, h0_ref, c0_ref, wh_ref,
                       out_ref, hF_ref, cF_ref,
                       h_sc, c_sc, *,
                       hidden_size, seq_len, time_chunk, num_chunks, unroll):
    d = pl.program_id(0)            # direction: 0 = forward, 1 = backward
    c = pl.program_id(1)            # time-chunk index in per-direction order
    Hp = hidden_size
    Tc = time_chunk
    needs_mask = (num_chunks * Tc != seq_len)   # static Python bool

    # Load the initial hidden / cell state on the first chunk of each direction.
    @pl.when(c == 0)
    def _():
        h_sc[...] = h0_ref[...]
        c_sc[...] = c0_ref[...]

    def lstm_step(xw_t):
        # Serial critical path: one bf16 MXU matmul (f32 accumulate) + gates.
        h_bf = h_sc[...].astype(jnp.bfloat16)
        gates = xw_t.astype(jnp.float32) + jnp.dot(
            h_bf, wh_ref[...], preferred_element_type=jnp.float32)
        i_g = _sigmoid_via_tanh(gates[:, 0 * Hp:1 * Hp])    # input gate
        f_g = _sigmoid_via_tanh(gates[:, 1 * Hp:2 * Hp])    # forget gate
        g_g = jnp.tanh(gates[:, 2 * Hp:3 * Hp])             # cell gate
        o_g = _sigmoid_via_tanh(gates[:, 3 * Hp:4 * Hp])    # output gate
        c_new = f_g * c_sc[...] + i_g * g_g
        h_new = o_g * jnp.tanh(c_new)
        h_sc[...] = h_new
        c_sc[...] = c_new
        return h_new

    def run_direction(reverse):
        # Original-time index of this chunk (backward walks chunks reversed).
        c_orig = (num_chunks - 1 - c) if reverse else c

        def step(s, carry):
            tt = (Tc - 1 - s) if reverse else s   # static per-direction arith

            def do_step():
                h_new = lstm_step(xw_ref[tt])
                out_ref[tt] = h_new.astype(out_ref.dtype)

            if needs_mask:
                # Skip zero-padded tail timesteps (t >= seq_len); carry intact.
                @pl.when(c_orig * Tc + tt < seq_len)
                def _():
                    do_step()
            else:
                do_step()
            return carry

        lax.fori_loop(0, Tc, step, 0, unroll=unroll)

    # Two statically-indexed paths instead of a traced reversal index.
    @pl.when(d == 0)
    def _():
        run_direction(False)

    @pl.when(d == 1)
    def _():
        run_direction(True)

    # Emit final (H, C) on the last chunk of each direction.
    @pl.when(c == pl.num_programs(1) - 1)
    def _():
        hF_ref[...] = h_sc[...]
        cF_ref[...] = c_sc[...]


def _single_buffered_spec(block_shape, index_map):
    """Constant-across-time operands: a second pipeline buffer is wasted VMEM."""
    buffered = getattr(pl, "Buffered", None)
    if buffered is not None:
        try:
            return pl.BlockSpec(block_shape, index_map,
                                pipeline_mode=buffered(1))
        except TypeError:
            pass
    return pl.BlockSpec(block_shape, index_map)


def _recurrent_lstm(xw, h0, c0, wh, *, seq_len, time_chunk, vmem_limit_bytes):
    """xw: (2, Tp, Bp, 4Hp) bf16;  h0/c0: (2, Bp, Hp) f32;  wh: (2, Hp, 4Hp) bf16."""
    n_dir, Tp, Bp, G = xw.shape
    Hp = G // 4
    Tc = time_chunk
    NC = Tp // Tc

    # Chunk index: forward -> c, backward -> NC-1-c (pure int arithmetic).
    def chunk_map(d, c):
        return (d, c + d * (NC - 1 - 2 * c), 0, 0)

    def const_map(d, c):
        return (d, 0, 0)

    kernel = functools.partial(
        _lstm_chunk_kernel, hidden_size=Hp, seq_len=seq_len,
        time_chunk=Tc, num_chunks=NC, unroll=int(min(Tc, 8)))

    out_shapes = (
        jax.ShapeDtypeStruct((n_dir, Tp, Bp, Hp), jnp.bfloat16),  # per-step H
        jax.ShapeDtypeStruct((n_dir, Bp, Hp), jnp.float32),       # final H
        jax.ShapeDtypeStruct((n_dir, Bp, Hp), jnp.float32),       # final C
    )

    grid_spec = pltpu.PrefetchScalarGridSpec(
        num_scalar_prefetch=0,
        grid=(n_dir, NC),
        in_specs=[
            pl.BlockSpec((None, Tc, Bp, G), chunk_map),           # xw chunk (bf16)
            _single_buffered_spec((None, Bp, Hp), const_map),     # h0
            _single_buffered_spec((None, Bp, Hp), const_map),     # c0
            _single_buffered_spec((None, Hp, G), const_map),      # Wh (bf16)
        ],
        out_specs=(
            pl.BlockSpec((None, Tc, Bp, Hp), chunk_map),          # hidden states
            pl.BlockSpec((None, Bp, Hp), const_map),              # final H
            pl.BlockSpec((None, Bp, Hp), const_map),              # final C
        ),
        scratch_shapes=[
            pltpu.VMEM((Bp, Hp), jnp.float32),                    # carried H (f32)
            pltpu.VMEM((Bp, Hp), jnp.float32),                    # carried C (f32)
        ],
    )

    return pl.pallas_call(
        kernel,
        out_shape=out_shapes,
        grid_spec=grid_spec,
        compiler_params=_COMPILER_PARAMS_CLS(
            # direction axis: independent -> parallel; time axis: recurrence.
            dimension_semantics=("parallel", "arbitrary"),
            vmem_limit_bytes=vmem_limit_bytes),
    )(xw, h0, c0, wh)


def _plan_recurrence(T, Bp, Hp, requested_tc, budget_bytes=24 << 20):
    """Pick the time chunk from a VMEM residency budget; size the VMEM limit."""
    bf16, f32 = 2, 4
    fixed = Hp * 4 * Hp * bf16            # Wh (bf16, single-buffered)
    fixed += 2 * 2 * Bp * Hp * f32        # h0, c0
    fixed += 2 * 2 * Bp * Hp * f32        # final H, C outputs
    fixed += 2 * Bp * Hp * f32            # h/c scratch carry
    # Double-buffered, time-chunk-dependent streams (bf16 xw in + bf16 out).
    per_step = 2 * (Bp * 4 * Hp + Bp * Hp) * bf16
    tc_budget = max(1, (budget_bytes - fixed) // per_step)
    tc = int(max(1, min(requested_tc, T, tc_budget)))
    Tp = _round_up(T, tc)
    needed = fixed + per_step * tc
    vmem_limit = int(max(needed + (2 << 20), 16 << 20))
    return tc, Tp, vmem_limit


# ---------------------------------------------------------------------------
# Parameter helpers
# ---------------------------------------------------------------------------
def _init_direction_params(key, input_size, hidden_size):
    """Fused gate weights mirroring 4x nn.Linear(D+H -> H) on cat(x, H).

    Returns Wx (D, 4H), Wh (H, 4H), b (4H,) with gate order [i, f, g, o].
    """
    D, Hs = input_size, hidden_size
    keys = jax.random.split(key, 8)
    scale = 1.0 / jnp.sqrt(jnp.float32(D + Hs))
    wxs, whs, bs = [], [], []
    for g in range(4):
        w = jax.random.uniform(keys[2 * g], (Hs, D + Hs), jnp.float32,
                               minval=-scale, maxval=scale)
        b = jax.random.uniform(keys[2 * g + 1], (Hs,), jnp.float32,
                               minval=-scale, maxval=scale)
        wxs.append(w[:, :D].T)        # (D, H)
        whs.append(w[:, D:].T)        # (H, H)
        bs.append(b)
    return (jnp.concatenate(wxs, axis=1),     # (D, 4H)
            jnp.concatenate(whs, axis=1),     # (H, 4H)
            jnp.concatenate(bs))              # (4H,)


def _pad_gate_params(wx, wh, b, H, Hp):
    """Zero-pad per gate H -> Hp (padding is inert for the recurrence)."""
    D = wx.shape[0]
    pad = Hp - H
    wxp = jnp.pad(wx.reshape(D, 4, H), ((0, 0), (0, 0), (0, pad)))
    whp = jnp.pad(wh.reshape(H, 4, H), ((0, pad), (0, 0), (0, pad)))
    bp = jnp.pad(b.reshape(4, H), ((0, 0), (0, pad)))
    return wxp.reshape(D, 4 * Hp), whp.reshape(Hp, 4 * Hp), bp.reshape(4 * Hp)


# ---------------------------------------------------------------------------
# BiLSTMSubLayer wrapper
# ---------------------------------------------------------------------------
def bilstm_forward(x_btd, hidden_state, params_fwd, params_bwd, *,
                   time_chunk=64):
    """x_btd: (B, T, D) batch-major.  Returns (outputs (B,T,2H), ((Hf,Cf),(Hb,Cb)))."""
    B, T, D = x_btd.shape
    (h0f, c0f), (h0b, c0b) = hidden_state
    H = h0f.shape[-1]
    Hp = _round_up(H, 128)       # lane-dense gates / outputs
    Bp = _round_up(B, 8)         # sublane-dense batch

    Tc, Tp, vmem_limit = _plan_recurrence(T, Bp, Hp, time_chunk)

    # Fused + zero-padded gate weights, both directions (bf16 for MXU/DMA).
    wx_f, wh_f, b_f = _pad_gate_params(*params_fwd, H, Hp)
    wx_b, wh_b, b_b = _pad_gate_params(*params_bwd, H, Hp)
    wx_all = jnp.stack([wx_f, wx_b]).astype(jnp.bfloat16)     # (2, D, 4Hp)
    wh_all = jnp.stack([wh_f, wh_b]).astype(jnp.bfloat16)     # (2, Hp, 4Hp)
    b_all = jnp.stack([b_f, b_b])                             # (2, 4Hp) f32

    x_p = jnp.pad(x_btd, ((0, Bp - B), (0, 0), (0, 0)))       # (Bp, T, D)
    h0_all = jnp.stack([jnp.pad(h0f, ((0, Bp - B), (0, Hp - H))),
                        jnp.pad(h0b, ((0, Bp - B), (0, Hp - H)))])  # (2, Bp, Hp)
    c0_all = jnp.stack([jnp.pad(c0f, ((0, Bp - B), (0, Hp - H))),
                        jnp.pad(c0b, ((0, Bp - B), (0, Hp - H)))])

    # Hoisted, fully parallel input projection (+ bias) for all timesteps and
    # both directions.  bf16 operands, f32 accumulate, emitted in bf16.
    # NOTE: padded batch rows carry the bias (harmless garbage; sliced off).
    xw = jnp.einsum('btd,edg->etbg', x_p.astype(jnp.bfloat16), wx_all,
                    preferred_element_type=jnp.float32)
    xw = (xw + b_all[:, None, None, :]).astype(jnp.bfloat16)  # (2, T, Bp, 4Hp)
    if Tp != T:                                               # ragged T: pad + mask
        xw = jnp.pad(xw, ((0, 0), (0, Tp - T), (0, 0), (0, 0)))

    out, hF, cF = _recurrent_lstm(xw, h0_all, c0_all, wh_all,
                                  seq_len=T, time_chunk=Tc,
                                  vmem_limit_bytes=vmem_limit)

    # Single fused glue pass: drop padding, go batch-major, concat directions.
    outputs = out[:, :T, :B, :H].astype(x_btd.dtype)          # (2, T, B, H)
    outputs = jnp.transpose(outputs, (2, 1, 0, 3)).reshape(B, T, 2 * H)
    hidden = ((hF[0, :B, :H], cF[0, :B, :H]),
              (hF[1, :B, :H], cF[1, :B, :H]))
    return outputs, hidden


# ---------------------------------------------------------------------------
# Pure-JAX reference (mirrors the PyTorch loop)
# ---------------------------------------------------------------------------
def _reference_direction(x_btd, h0, c0, wx, wh, b, reverse):
    B, T, D = x_btd.shape
    Hs = h0.shape[-1]
    H, C = h0, c0
    outs = [None] * T
    idx = range(T - 1, -1, -1) if reverse else range(T)
    for t in idx:
        gates = x_btd[:, t, :] @ wx + H @ wh + b
        i = jax.nn.sigmoid(gates[:, 0 * Hs:1 * Hs])
        f = jax.nn.sigmoid(gates[:, 1 * Hs:2 * Hs])
        g = jnp.tanh(gates[:, 2 * Hs:3 * Hs])
        o = jax.nn.sigmoid(gates[:, 3 * Hs:4 * Hs])
        C = f * C + i * g
        H = o * jnp.tanh(C)
        outs[t] = H
    return jnp.stack(outs, axis=1), H, C


if __name__ == "__main__":
    B, T, D, Hs = 2, 8, 16, 32

    key = jax.random.PRNGKey(0)
    kx, kf, kb = jax.random.split(key, 3)

    x = jax.random.normal(kx, (B, T, D), jnp.float32)
    params_fwd = _init_direction_params(kf, D, Hs)
    params_bwd = _init_direction_params(kb, D, Hs)

    zeros = jnp.zeros((B, Hs), jnp.float32)
    hidden_state = ((zeros, zeros), (zeros, zeros))

    tol = dict(atol=3e-2, rtol=3e-2)   # bf16 weight/activation streams in kernel

    # --- main case: T divisible by the chosen chunk -------------------------
    fwd = jax.jit(functools.partial(bilstm_forward, time_chunk=64))
    outputs, ((Hf, Cf), (Hb, Cb)) = fwd(x, hidden_state, params_fwd, params_bwd)
    jax.block_until_ready(outputs)

    ref_f, rHf, rCf = _reference_direction(x, zeros, zeros, *params_fwd, False)
    ref_b, rHb, rCb = _reference_direction(x, zeros, zeros, *params_bwd, True)
    ref_out = jnp.concatenate([ref_f, ref_b], axis=-1)

    assert outputs.shape == (B, T, 2 * Hs)
    assert jnp.allclose(outputs, ref_out, **tol)
    assert jnp.allclose(Hf, rHf, **tol)
    assert jnp.allclose(Cf, rCf, **tol)
    assert jnp.allclose(Hb, rHb, **tol)
    assert jnp.allclose(Cb, rCb, **tol)

    # --- ragged case: T not divisible by chunk (time padding + masking) -----
    T2 = 7
    x2 = x[:, :T2, :]
    fwd2 = jax.jit(functools.partial(bilstm_forward, time_chunk=4))
    outputs2, ((Hf2, Cf2), (Hb2, Cb2)) = fwd2(x2, hidden_state,
                                              params_fwd, params_bwd)
    jax.block_until_ready(outputs2)

    ref_f2, rHf2, rCf2 = _reference_direction(x2, zeros, zeros, *params_fwd, False)
    ref_b2, rHb2, rCb2 = _reference_direction(x2, zeros, zeros, *params_bwd, True)
    ref_out2 = jnp.concatenate([ref_f2, ref_b2], axis=-1)

    assert outputs2.shape == (B, T2, 2 * Hs)
    assert jnp.allclose(outputs2, ref_out2, **tol)
    assert jnp.allclose(Hf2, rHf2, **tol)
    assert jnp.allclose(Cf2, rCf2, **tol)
    assert jnp.allclose(Hb2, rHb2, **tol)
    assert jnp.allclose(Cb2, rCb2, **tol)

    print("KERNEL_OK")
</pallas_src>

<mosaic_0001>
module attributes {stable_mosaic.version = 11 : i64} {
  func.func @_lstm_chunk_kernel(%arg0: i32, %arg1: i32, %arg2: memref<1x8x8x512xbf16, #tpu.memory_space<vmem>>, %arg3: memref<1x8x128xf32, #tpu.memory_space<vmem>>, %arg4: memref<1x8x128xf32, #tpu.memory_space<vmem>>, %arg5: memref<1x128x512xbf16, #tpu.memory_space<vmem>>, %arg6: memref<1x8x8x128xbf16, #tpu.memory_space<vmem>>, %arg7: memref<1x8x128xf32, #tpu.memory_space<vmem>>, %arg8: memref<1x8x128xf32, #tpu.memory_space<vmem>>, %arg9: memref<8x128xf32, #tpu.memory_space<vmem>>, %arg10: memref<8x128xf32, #tpu.memory_space<vmem>>) attributes {dimension_semantics = [#tpu.dimension_semantics<parallel>, #tpu.dimension_semantics<arbitrary>], iteration_bounds = array<i64: 2, 1>, scalar_prefetch = 0 : i64, scratch_operands = 2 : i64, tpu.core_type = #tpu.core_type<tc>, window_params = [{transform_indices = @transform_0, window_bounds = array<i64: 1, 8, 8, 512>}, {pipeline_mode = #tpu.pipeline_mode<synchronous>, transform_indices = @transform_1, window_bounds = array<i64: 1, 8, 128>}, {pipeline_mode = #tpu.pipeline_mode<synchronous>, transform_indices = @transform_2, window_bounds = array<i64: 1, 8, 128>}, {pipeline_mode = #tpu.pipeline_mode<synchronous>, transform_indices = @transform_3, window_bounds = array<i64: 1, 128, 512>}, {transform_indices = @transform_4, window_bounds = array<i64: 1, 8, 8, 128>}, {transform_indices = @transform_5, window_bounds = array<i64: 1, 8, 128>}, {transform_indices = @transform_6, window_bounds = array<i64: 1, 8, 128>}]} {
    %c0_i32 = arith.constant 0 : i32
    %0 = arith.cmpi eq, %arg1, %c0_i32 : i32
    %1 = arith.extui %0 : i1 to i32
    %c0_i32_0 = arith.constant 0 : i32
    %2 = arith.cmpi ne, %1, %c0_i32_0 : i32
    scf.if %2 {
      %c0 = arith.constant 0 : index
      %c0_6 = arith.constant 0 : index
      %c0_7 = arith.constant 0 : index
      %12 = vector.load %arg3[%c0, %c0_6, %c0_7] : memref<1x8x128xf32, #tpu.memory_space<vmem>>, vector<1x8x128xf32>
      %13 = vector.shape_cast %12 : vector<1x8x128xf32> to vector<8x128xf32>
      %c0_8 = arith.constant 0 : index
      %c0_9 = arith.constant 0 : index
      %14 = vector.load %arg9[%c0_8, %c0_9] : memref<8x128xf32, #tpu.memory_space<vmem>>, vector<8x128xf32>
      tpu.vector_store %arg9[%c0_8, %c0_9], %13 {strides = array<i32>} : memref<8x128xf32, #tpu.memory_space<vmem>>, vector<8x128xf32>,
      %c0_10 = arith.constant 0 : index
      %c0_11 = arith.constant 0 : index
      %c0_12 = arith.constant 0 : index
      %15 = vector.load %arg4[%c0_10, %c0_11, %c0_12] : memref<1x8x128xf32, #tpu.memory_space<vmem>>, vector<1x8x128xf32>
      %16 = vector.shape_cast %15 : vector<1x8x128xf32> to vector<8x128xf32>
      %c0_13 = arith.constant 0 : index
      %c0_14 = arith.constant 0 : index
      %17 = vector.load %arg10[%c0_13, %c0_14] : memref<8x128xf32, #tpu.memory_space<vmem>>, vector<8x128xf32>
      tpu.vector_store %arg10[%c0_13, %c0_14], %16 {strides = array<i32>} : memref<8x128xf32, #tpu.memory_space<vmem>>, vector<8x128xf32>,
    } else {
    }
    %c0_i32_1 = arith.constant 0 : i32
    %3 = arith.cmpi eq, %arg0, %c0_i32_1 : i32
    %4 = arith.extui %3 : i1 to i32
    %c0_i32_2 = arith.constant 0 : i32
    %5 = arith.cmpi ne, %4, %c0_i32_2 : i32
    scf.if %5 {
      %c0_i32_6 = arith.constant 0 : i32
      %c0 = arith.constant 0 : index
      %12 = arith.index_cast %c0_i32_6 : i32 to index
      %c0_7 = arith.constant 0 : index
      %c0_8 = arith.constant 0 : index
      %13 = vector.load %arg2[%c0, %12, %c0_7, %c0_8] : memref<1x8x8x512xbf16, #tpu.memory_space<vmem>>, vector<1x1x8x512xbf16>
      %14 = vector.shape_cast %13 : vector<1x1x8x512xbf16> to vector<8x512xbf16>
      %c0_9 = arith.constant 0 : index
      %c0_10 = arith.constant 0 : index
      %15 = vector.load %arg9[%c0_9, %c0_10] : memref<8x128xf32, #tpu.memory_space<vmem>>, vector<8x128xf32>
      %16 = arith.truncf %15 : vector<8x128xf32> to vector<8x128xbf16>
      %17 = arith.extf %14 : vector<8x512xbf16> to vector<8x512xf32>
      %c0_11 = arith.constant 0 : index
      %c0_12 = arith.constant 0 : index
      %c0_13 = arith.constant 0 : index
      %18 = vector.load %arg5[%c0_11, %c0_12, %c0_13] : memref<1x128x512xbf16, #tpu.memory_space<vmem>>, vector<1x128x512xbf16>
      %19 = vector.shape_cast %18 : vector<1x128x512xbf16> to vector<128x512xbf16>
      %cst = arith.constant dense<0.000000e+00> : vector<8x512xf32>
      %20 = tpu.matmul %16, %19, %cst {dimension_numbers = #tpu.dot_dimension_numbers<[1], [0], [0], [1], [0, 0, 1, 1], [], []>} : vector<8x128xbf16>, vector<128x512xbf16>, vector<8x512xf32> -> vector<8x512xf32>
      %21 = arith.addf %17, %20 : vector<8x512xf32>
      %22 = vector.extract_strided_slice %21 {offsets = [0, 0], sizes = [8, 128], strides = [1, 1]} : vector<8x512xf32> to vector<8x128xf32>
      %cst_14 = arith.constant 5.000000e-01 : f32
      %23 = vector.broadcast %cst_14 : f32 to vector<8x128xf32>
      %24 = arith.mulf %23, %22 : vector<8x128xf32>
      %25 = math.tanh %24 : vector<8x128xf32>
      %cst_15 = arith.constant 5.000000e-01 : f32
      %26 = vector.broadcast %cst_15 : f32 to vector<8x128xf32>
      %27 = arith.mulf %26, %25 : vector<8x128xf32>
      %cst_16 = arith.constant 5.000000e-01 : f32
      %28 = vector.broadcast %cst_16 : f32 to vector<8x128xf32>
      %29 = arith.addf %27, %28 : vector<8x128xf32>
      %30 = vector.extract_strided_slice %21 {offsets = [0, 128], sizes = [8, 128], strides = [1, 1]} : vector<8x512xf32> to vector<8x128xf32>
      %cst_17 = arith.constant 5.000000e-01 : f32
      %31 = vector.broadcast %cst_17 : f32 to vector<8x128xf32>
      %32 = arith.mulf %31, %30 : vector<8x128xf32>
      %33 = math.tanh %32 : vector<8x128xf32>
      %cst_18 = arith.constant 5.000000e-01 : f32
      %34 = vector.broadcast %cst_18 : f32 to vector<8x128xf32>
      %35 = arith.mulf %34, %33 : vector<8x128xf32>
      %cst_19 = arith.constant 5.000000e-01 : f32
      %36 = vector.broadcast %cst_19 : f32 to vector<8x128xf32>
      %37 = arith.addf %35, %36 : vector<8x128xf32>
      %38 = vector.extract_strided_slice %21 {offsets = [0, 256], sizes = [8, 128], strides = [1, 1]} : vector<8x512xf32> to vector<8x128xf32>
      %39 = math.tanh %38 : vector<8x128xf32>
      %40 = vector.extract_strided_slice %21 {offsets = [0, 384], sizes = [8, 128], strides = [1, 1]} : vector<8x512xf32> to vector<8x128xf32>
      %cst_20 = arith.constant 5.000000e-01 : f32
      %41 = vector.broadcast %cst_20 : f32 to vector<8x128xf32>
      %42 = arith.mulf %41, %40 : vector<8x128xf32>
      %43 = math.tanh %42 : vector<8x128xf32>
      %cst_21 = arith.constant 5.000000e-01 : f32
      %44 = vector.broadcast %cst_21 : f32 to vector<8x128xf32>
      %45 = arith.mulf %44, %43 : vector<8x128xf32>
      %cst_22 = arith.constant 5.000000e-01 : f32
      %46 = vector.broadcast %cst_22 : f32 to vector<8x128xf32>
      %47 = arith.addf %45, %46 : vector<8x128xf32>
      %c0_23 = arith.constant 0 : index
      %c0_24 = arith.constant 0 : index
      %48 = vector.load %arg10[%c0_23, %c0_24] : memref<8x128xf32, #tpu.memory_space<vmem>>, vector<8x128xf32>
      %49 = arith.mulf %37, %48 : vector<8x128xf32>
      %50 = arith.mulf %29, %39 : vector<8x128xf32>
      %51 = arith.addf %49, %50 : vector<8x128xf32>
      %52 = math.tanh %51 : vector<8x128xf32>
      %53 = arith.mulf %47, %52 : vector<8x128xf32>
      %c0_25 = arith.constant 0 : index
      %c0_26 = arith.constant 0 : index
      %54 = vector.load %arg9[%c0_25, %c0_26] : memref<8x128xf32, #tpu.memory_space<vmem>>, vector<8x128xf32>
      tpu.vector_store %arg9[%c0_25, %c0_26], %53 {strides = array<i32>} : memref<8x128xf32, #tpu.memory_space<vmem>>, vector<8x128xf32>,
      %c0_27 = arith.constant 0 : index
      %c0_28 = arith.constant 0 : index
      %55 = vector.load %arg10[%c0_27, %c0_28] : memref<8x128xf32, #tpu.memory_space<vmem>>, vector<8x128xf32>
      tpu.vector_store %arg10[%c0_27, %c0_28], %51 {strides = array<i32>} : memref<8x128xf32, #tpu.memory_space<vmem>>, vector<8x128xf32>,
      %56 = arith.truncf %53 : vector<8x128xf32> to vector<8x128xbf16>
      %c0_29 = arith.constant 0 : index
      %57 = arith.index_cast %c0_i32_6 : i32 to index
      %c0_30 = arith.constant 0 : index
      %c0_31 = arith.constant 0 : index
      %58 = vector.load %arg6[%c0_29, %57, %c0_30, %c0_31] : memref<1x8x8x128xbf16, #tpu.memory_space<vmem>>, vector<1x1x8x128xbf16>
      %59 = vector.shape_cast %58 : vector<1x1x8x128xbf16> to vector<8x128xbf16>
      %60 = vector.shape_cast %56 : vector<8x128xbf16> to vector<1x1x8x128xbf16>
      tpu.vector_store %arg6[%c0_29, %57, %c0_30, %c0_31], %60 {strides = array<i32>} : memref<1x8x8x128xbf16, #tpu.memory_space<vmem>>, vector<1x1x8x128xbf16>,
      %c1_i32_32 = arith.constant 1 : i32
      %c0_33 = arith.constant 0 : index
      %61 = arith.index_cast %c1_i32_32 : i32 to index
      %c0_34 = arith.constant 0 : index
      %c0_35 = arith.constant 0 : index
      %62 = vector.load %arg2[%c0_33, %61, %c0_34, %c0_35] : memref<1x8x8x512xbf16, #tpu.memory_space<vmem>>, vector<1x1x8x512xbf16>
      %63 = vector.shape_cast %62 : vector<1x1x8x512xbf16> to vector<8x512xbf16>
      %c0_36 = arith.constant 0 : index
      %c0_37 = arith.constant 0 : index
      %64 = vector.load %arg9[%c0_36, %c0_37] : memref<8x128xf32, #tpu.memory_space<vmem>>, vector<8x128xf32>
      %65 = arith.truncf %64 : vector<8x128xf32> to vector<8x128xbf16>
      %66 = arith.extf %63 : vector<8x512xbf16> to vector<8x512xf32>
      %c0_38 = arith.constant 0 : index
      %c0_39 = arith.constant 0 : index
      %c0_40 = arith.constant 0 : index
      %67 = vector.load %arg5[%c0_38, %c0_39, %c0_40] : memref<1x128x512xbf16, #tpu.memory_space<vmem>>, vector<1x128x512xbf16>
      %68 = vector.shape_cast %67 : vector<1x128x512xbf16> to vector<128x512xbf16>
      %cst_41 = arith.constant dense<0.000000e+00> : vector<8x512xf32>
      %69 = tpu.matmul %65, %68, %cst_41 {dimension_numbers = #tpu.dot_dimension_numbers<[1], [0], [0], [1], [0, 0, 1, 1], [], []>} : vector<8x128xbf16>, vector<128x512xbf16>, vector<8x512xf32> -> vector<8x512xf32>
      %70 = arith.addf %66, %69 : vector<8x512xf32>
      %71 = vector.extract_strided_slice %70 {offsets = [0, 0], sizes = [8, 128], strides = [1, 1]} : vector<8x512xf32> to vector<8x128xf32>
      %cst_42 = arith.constant 5.000000e-01 : f32
      %72 = vector.broadcast %cst_42 : f32 to vector<8x128xf32>
      %73 = arith.mulf %72, %71 : vector<8x128xf32>
      %74 = math.tanh %73 : vector<8x128xf32>
      %cst_43 = arith.constant 5.000000e-01 : f32
      %75 = vector.broadcast %cst_43 : f32 to vector<8x128xf32>
      %76 = arith.mulf %75, %74 : vector<8x128xf32>
      %cst_44 = arith.constant 5.000000e-01 : f32
      %77 = vector.broadcast %cst_44 : f32 to vector<8x128xf32>
      %78 = arith.addf %76, %77 : vector<8x128xf32>
      %79 = vector.extract_strided_slice %70 {offsets = [0, 128], sizes = [8, 128], strides = [1, 1]} : vector<8x512xf32> to vector<8x128xf32>
      %cst_45 = arith.constant 5.000000e-01 : f32
      %80 = vector.broadcast %cst_45 : f32 to vector<8x128xf32>
      %81 = arith.mulf %80, %79 : vector<8x128xf32>
      %82 = math.tanh %81 : vector<8x128xf32>
      %cst_46 = arith.constant 5.000000e-01 : f32
      %83 = vector.broadcast %cst_46 : f32 to vector<8x128xf32>
      %84 = arith.mulf %83, %82 : vector<8x128xf32>
      %cst_47 = arith.constant 5.000000e-01 : f32
      %85 = vector.broadcast %cst_47 : f32 to vector<8x128xf32>
      %86 = arith.addf %84, %85 : vector<8x128xf32>
      %87 = vector.extract_strided_slice %70 {offsets = [0, 256], sizes = [8, 128], strides = [1, 1]} : vector<8x512xf32> to vector<8x128xf32>
      %88 = math.tanh %87 : vector<8x128xf32>
      %89 = vector.extract_strided_slice %70 {offsets = [0, 384], sizes = [8, 128], strides = [1, 1]} : vector<8x512xf32> to vector<8x128xf32>
      %cst_48 = arith.constant 5.000000e-01 : f32
      %90 = vector.broadcast %cst_48 : f32 to vector<8x128xf32>
      %91 = arith.mulf %90, %89 : vector<8x128xf32>
      %92 = math.tanh %91 : vector<8x128xf32>
      %cst_49 = arith.constant 5.000000e-01 : f32
      %93 = vector.broadcast %cst_49 : f32 to vector<8x128xf32>
      %94 = arith.mulf %93, %92 : vector<8x128xf32>
      %cst_50 = arith.constant 5.000000e-01 : f32
      %95 = vector.broadcast %cst_50 : f32 to vector<8x128xf32>
      %96 = arith.addf %94, %95 : vector<8x128xf32>
      %c0_51 = arith.constant 0 : index
      %c0_52 = arith.constant 0 : index
      %97 = vector.load %arg10[%c0_51, %c0_52] : memref<8x128xf32, #tpu.memory_space<vmem>>, vector<8x128xf32>
      %98 = arith.mulf %86, %97 : vector<8x128xf32>
      %99 = arith.mulf %78, %88 : vector<8x128xf32>
      %100 = arith.addf %98, %99 : vector<8x128xf32>
      %101 = math.tanh %100 : vector<8x128xf32>
      %102 = arith.mulf %96, %101 : vector<8x128xf32>
      %c0_53 = arith.constant 0 : index
      %c0_54 = arith.constant 0 : index
      %103 = vector.load %arg9[%c0_53, %c0_54] : memref<8x128xf32, #tpu.memory_space<vmem>>, vector<8x128xf32>
      tpu.vector_store %arg9[%c0_53, %c0_54], %102 {strides = array<i32>} : memref<8x128xf32, #tpu.memory_space<vmem>>, vector<8x128xf32>,
      %c0_55 = arith.constant 0 : index
      %c0_56 = arith.constant 0 : index
      %104 = vector.load %arg10[%c0_55, %c0_56] : memref<8x128xf32, #tpu.memory_space<vmem>>, vector<8x128xf32>
      tpu.vector_store %arg10[%c0_55, %c0_56], %100 {strides = array<i32>} : memref<8x128xf32, #tpu.memory_space<vmem>>, vector<8x128xf32>,
      %105 = arith.truncf %102 : vector<8x128xf32> to vector<8x128xbf16>
      %c0_57 = arith.constant 0 : index
      %106 = arith.index_cast %c1_i32_32 : i32 to index
      %c0_58 = arith.constant 0 : index
      %c0_59 = arith.constant 0 : index
      %107 = vector.load %arg6[%c0_57, %106, %c0_58, %c0_59] : memref<1x8x8x128xbf16, #tpu.memory_space<vmem>>, vector<1x1x8x128xbf16>
      %108 = vector.shape_cast %107 : vector<1x1x8x128xbf16> to vector<8x128xbf16>
      %109 = vector.shape_cast %105 : vector<8x128xbf16> to vector<1x1x8x128xbf16>
      tpu.vector_store %arg6[%c0_57, %106, %c0_58, %c0_59], %109 {strides = array<i32>} : memref<1x8x8x128xbf16, #tpu.memory_space<vmem>>, vector<1x1x8x128xbf16>,
      %c2_i32 = arith.constant 2 : i32
      %c0_60 = arith.constant 0 : index
      %110 = arith.index_cast %c2_i32 : i32 to index
      %c0_61 = arith.constant 0 : index
      %c0_62 = arith.constant 0 : index
      %111 = vector.load %arg2[%c0_60, %110, %c0_61, %c0_62] : memref<1x8x8x512xbf16, #tpu.memory_space<vmem>>, vector<1x1x8x512xbf16>
      %112 = vector.shape_cast %111 : vector<1x1x8x512xbf16> to vector<8x512xbf16>
      %c0_63 = arith.constant 0 : index
      %c0_64 = arith.constant 0 : index
      %113 = vector.load %arg9[%c0_63, %c0_64] : memref<8x128xf32, #tpu.memory_space<vmem>>, vector<8x128xf32>
      %114 = arith.truncf %113 : vector<8x128xf32> to vector<8x128xbf16>
      %115 = arith.extf %112 : vector<8x512xbf16> to vector<8x512xf32>
      %c0_65 = arith.constant 0 : index
      %c0_66 = arith.constant 0 : index
      %c0_67 = arith.constant 0 : index
      %116 = vector.load %arg5[%c0_65, %c0_66, %c0_67] : memref<1x128x512xbf16, #tpu.memory_space<vmem>>, vector<1x128x512xbf16>
      %117 = vector.shape_cast %116 : vector<1x128x512xbf16> to vector<128x512xbf16>
      %cst_68 = arith.constant dense<0.000000e+00> : vector<8x512xf32>
      %118 = tpu.matmul %114, %117, %cst_68 {dimension_numbers = #tpu.dot_dimension_numbers<[1], [0], [0], [1], [0, 0, 1, 1], [], []>} : vector<8x128xbf16>, vector<128x512xbf16>, vector<8x512xf32> -> vector<8x512xf32>
      %119 = arith.addf %115, %118 : vector<8x512xf32>
      %120 = vector.extract_strided_slice %119 {offsets = [0, 0], sizes = [8, 128], strides = [1, 1]} : vector<8x512xf32> to vector<8x128xf32>
      %cst_69 = arith.constant 5.000000e-01 : f32
      %121 = vector.broadcast %cst_69 : f32 to vector<8x128xf32>
      %122 = arith.mulf %121, %120 : vector<8x128xf32>
      %123 = math.tanh %122 : vector<8x128xf32>
      %cst_70 = arith.constant 5.000000e-01 : f32
      %124 = vector.broadcast %cst_70 : f32 to vector<8x128xf32>
      %125 = arith.mulf %124, %123 : vector<8x128xf32>
      %cst_71 = arith.constant 5.000000e-01 : f32
      %126 = vector.broadcast %cst_71 : f32 to vector<8x128xf32>
      %127 = arith.addf %125, %126 : vector<8x128xf32>
      %128 = vector.extract_strided_slice %119 {offsets = [0, 128], sizes = [8, 128], strides = [1, 1]} : vector<8x512xf32> to vector<8x128xf32>
      %cst_72 = arith.constant 5.000000e-01 : f32
      %129 = vector.broadcast %cst_72 : f32 to vector<8x128xf32>
      %130 = arith.mulf %129, %128 : vector<8x128xf32>
      %131 = math.tanh %130 : vector<8x128xf32>
      %cst_73 = arith.constant 5.000000e-01 : f32
      %132 = vector.broadcast %cst_73 : f32 to vector<8x128xf32>
      %133 = arith.mulf %132, %131 : vector<8x128xf32>
      %cst_74 = arith.constant 5.000000e-01 : f32
      %134 = vector.broadcast %cst_74 : f32 to vector<8x128xf32>
      %135 = arith.addf %133, %134 : vector<8x128xf32>
      %136 = vector.extract_strided_slice %119 {offsets = [0, 256], sizes = [8, 128], strides = [1, 1]} : vector<8x512xf32> to vector<8x128xf32>
      %137 = math.tanh %136 : vector<8x128xf32>
      %138 = vector.extract_strided_slice %119 {offsets = [0, 384], sizes = [8, 128], strides = [1, 1]} : vector<8x512xf32> to vector<8x128xf32>
      %cst_75 = arith.constant 5.000000e-01 : f32
      %139 = vector.broadcast %cst_75 : f32 to vector<8x128xf32>
      %140 = arith.mulf %139, %138 : vector<8x128xf32>
      %141 = math.tanh %140 : vector<8x128xf32>
      %cst_76 = arith.constant 5.000000e-01 : f32
      %142 = vector.broadcast %cst_76 : f32 to vector<8x128xf32>
      %143 = arith.mulf %142, %141 : vector<8x128xf32>
      %cst_77 = arith.constant 5.000000e-01 : f32
      %144 = vector.broadcast %cst_77 : f32 to vector<8x128xf32>
      %145 = arith.addf %143, %144 : vector<8x128xf32>
      %c0_78 = arith.constant 0 : index
      %c0_79 = arith.constant 0 : index
      %146 = vector.load %arg10[%c0_78, %c0_79] : memref<8x128xf32, #tpu.memory_space<vmem>>, vector<8x128xf32>
      %147 = arith.mulf %135, %146 : vector<8x128xf32>
      %148 = arith.mulf %127, %137 : vector<8x128xf32>
      %149 = arith.addf %147, %148 : vector<8x128xf32>
      %150 = math.tanh %149 : vector<8x128xf32>
      %151 = arith.mulf %145, %150 : vector<8x128xf32>
      %c0_80 = arith.constant 0 : index
      %c0_81 = arith.constant 0 : index
      %152 = vector.load %arg9[%c0_80, %c0_81] : memref<8x128xf32, #tpu.memory_space<vmem>>, vector<8x128xf32>
      tpu.vector_store %arg9[%c0_80, %c0_81], %151 {strides = array<i32>} : memref<8x128xf32, #tpu.memory_space<vmem>>, vector<8x128xf32>,
      %c0_82 = arith.constant 0 : index
      %c0_83 = arith.constant 0 : index
      %153 = vector.load %arg10[%c0_82, %c0_83] : memref<8x128xf32, #tpu.memory_space<vmem>>, vector<8x128xf32>
      tpu.vector_store %arg10[%c0_82, %c0_83], %149 {strides = array<i32>} : memref<8x128xf32, #tpu.memory_space<vmem>>, vector<8x128xf32>,
      %154 = arith.truncf %151 : vector<8x128xf32> to vector<8x128xbf16>
      %c0_84 = arith.constant 0 : index
      %155 = arith.index_cast %c2_i32 : i32 to index
      %c0_85 = arith.constant 0 : index
      %c0_86 = arith.constant 0 : index
      %156 = vector.load %arg6[%c0_84, %155, %c0_85, %c0_86] : memref<1x8x8x128xbf16, #tpu.memory_space<vmem>>, vector<1x1x8x128xbf16>
      %157 = vector.shape_cast %156 : vector<1x1x8x128xbf16> to vector<8x128xbf16>
      %158 = vector.shape_cast %154 : vector<8x128xbf16> to vector<1x1x8x128xbf16>
      tpu.vector_store %arg6[%c0_84, %155, %c0_85, %c0_86], %158 {strides = array<i32>} : memref<1x8x8x128xbf16, #tpu.memory_space<vmem>>, vector<1x1x8x128xbf16>,
      %c3_i32 = arith.constant 3 : i32
      %c0_87 = arith.constant 0 : index
      %159 = arith.index_cast %c3_i32 : i32 to index
      %c0_88 = arith.constant 0 : index
      %c0_89 = arith.constant 0 : index
      %160 = vector.load %arg2[%c0_87, %159, %c0_88, %c0_89] : memref<1x8x8x512xbf16, #tpu.memory_space<vmem>>, vector<1x1x8x512xbf16>
      %161 = vector.shape_cast %160 : vector<1x1x8x512xbf16> to vector<8x512xbf16>
      %c0_90 = arith.constant 0 : index
      %c0_91 = arith.constant 0 : index
      %162 = vector.load %arg9[%c0_90, %c0_91] : memref<8x128xf32, #tpu.memory_space<vmem>>, vector<8x128xf32>
      %163 = arith.truncf %162 : vector<8x128xf32> to vector<8x128xbf16>
      %164 = arith.extf %161 : vector<8x512xbf16> to vector<8x512xf32>
      %c0_92 = arith.constant 0 : index
      %c0_93 = arith.constant 0 : index
      %c0_94 = arith.constant 0 : index
      %165 = vector.load %arg5[%c0_92, %c0_93, %c0_94] : memref<1x128x512xbf16, #tpu.memory_space<vmem>>, vector<1x128x512xbf16>
      %166 = vector.shape_cast %165 : vector<1x128x512xbf16> to vector<128x512xbf16>
      %cst_95 = arith.constant dense<0.000000e+00> : vector<8x512xf32>
      %167 = tpu.matmul %163, %166, %cst_95 {dimension_numbers = #tpu.dot_dimension_numbers<[1], [0], [0], [1], [0, 0, 1, 1], [], []>} : vector<8x128xbf16>, vector<128x512xbf16>, vector<8x512xf32> -> vector<8x512xf32>
      %168 = arith.addf %164, %167 : vector<8x512xf32>
      %169 = vector.extract_strided_slice %168 {offsets = [0, 0], sizes = [8, 128], strides = [1, 1]} : vector<8x512xf32> to vector<8x128xf32>
      %cst_96 = arith.constant 5.000000e-01 : f32
      %170 = vector.broadcast %cst_96 : f32 to vector<8x128xf32>
      %171 = arith.mulf %170, %169 : vector<8x128xf32>
      %172 = math.tanh %171 : vector<8x128xf32>
      %cst_97 = arith.constant 5.000000e-01 : f32
      %173 = vector.broadcast %cst_97 : f32 to vector<8x128xf32>
      %174 = arith.mulf %173, %172 : vector<8x128xf32>
      %cst_98 = arith.constant 5.000000e-01 : f32
      %175 = vector.broadcast %cst_98 : f32 to vector<8x128xf32>
      %176 = arith.addf %174, %175 : vector<8x128xf32>
      %177 = vector.extract_strided_slice %168 {offsets = [0, 128], sizes = [8, 128], strides = [1, 1]} : vector<8x512xf32> to vector<8x128xf32>
      %cst_99 = arith.constant 5.000000e-01 : f32
      %178 = vector.broadcast %cst_99 : f32 to vector<8x128xf32>
      %179 = arith.mulf %178, %177 : vector<8x128xf32>
      %180 = math.tanh %179 : vector<8x128xf32>
      %cst_100 = arith.constant 5.000000e-01 : f32
      %181 = vector.broadcast %cst_100 : f32 to vector<8x128xf32>
      %182 = arith.mulf %181, %180 : vector<8x128xf32>
      %cst_101 = arith.constant 5.000000e-01 : f32
      %183 = vector.broadcast %cst_101 : f32 to vector<8x128xf32>
      %184 = arith.addf %182, %183 : vector<8x128xf32>
      %185 = vector.extract_strided_slice %168 {offsets = [0, 256], sizes = [8, 128], strides = [1, 1]} : vector<8x512xf32> to vector<8x128xf32>
      %186 = math.tanh %185 : vector<8x128xf32>
      %187 = vector.extract_strided_slice %168 {offsets = [0, 384], sizes = [8, 128], strides = [1, 1]} : vector<8x512xf32> to vector<8x128xf32>
      %cst_102 = arith.constant 5.000000e-01 : f32
      %188 = vector.broadcast %cst_102 : f32 to vector<8x128xf32>
      %189 = arith.mulf %188, %187 : vector<8x128xf32>
      %190 = math.tanh %189 : vector<8x128xf32>
      %cst_103 = arith.constant 5.000000e-01 : f32
      %191 = vector.broadcast %cst_103 : f32 to vector<8x128xf32>
      %192 = arith.mulf %191, %190 : vector<8x128xf32>
      %cst_104 = arith.constant 5.000000e-01 : f32
      %193 = vector.broadcast %cst_104 : f32 to vector<8x128xf32>
      %194 = arith.addf %192, %193 : vector<8x128xf32>
      %c0_105 = arith.constant 0 : index
      %c0_106 = arith.constant 0 : index
      %195 = vector.load %arg10[%c0_105, %c0_106] : memref<8x128xf32, #tpu.memory_space<vmem>>, vector<8x128xf32>
      %196 = arith.mulf %184, %195 : vector<8x128xf32>
      %197 = arith.mulf %176, %186 : vector<8x128xf32>
      %198 = arith.addf %196, %197 : vector<8x128xf32>
      %199 = math.tanh %198 : vector<8x128xf32>
      %200 = arith.mulf %194, %199 : vector<8x128xf32>
      %c0_107 = arith.constant 0 : index
      %c0_108 = arith.constant 0 : index
      %201 = vector.load %arg9[%c0_107, %c0_108] : memref<8x128xf32, #tpu.memory_space<vmem>>, vector<8x128xf32>
      tpu.vector_store %arg9[%c0_107, %c0_108], %200 {strides = array<i32>} : memref<8x128xf32, #tpu.memory_space<vmem>>, vector<8x128xf32>,
      %c0_109 = arith.constant 0 : index
      %c0_110 = arith.constant 0 : index
      %202 = vector.load %arg10[%c0_109, %c0_110] : memref<8x128xf32, #tpu.memory_space<vmem>>, vector<8x128xf32>
      tpu.vector_store %arg10[%c0_109, %c0_110], %198 {strides = array<i32>} : memref<8x128xf32, #tpu.memory_space<vmem>>, vector<8x128xf32>,
      %203 = arith.truncf %200 : vector<8x128xf32> to vector<8x128xbf16>
      %c0_111 = arith.constant 0 : index
      %204 = arith.index_cast %c3_i32 : i32 to index
      %c0_112 = arith.constant 0 : index
      %c0_113 = arith.constant 0 : index
      %205 = vector.load %arg6[%c0_111, %204, %c0_112, %c0_113] : memref<1x8x8x128xbf16, #tpu.memory_space<vmem>>, vector<1x1x8x128xbf16>
      %206 = vector.shape_cast %205 : vector<1x1x8x128xbf16> to vector<8x128xbf16>
      %207 = vector.shape_cast %203 : vector<8x128xbf16> to vector<1x1x8x128xbf16>
      tpu.vector_store %arg6[%c0_111, %204, %c0_112, %c0_113], %207 {strides = array<i32>} : memref<1x8x8x128xbf16, #tpu.memory_space<vmem>>, vector<1x1x8x128xbf16>,
      %c4_i32 = arith.constant 4 : i32
      %c0_114 = arith.constant 0 : index
      %208 = arith.index_cast %c4_i32 : i32 to index
      %c0_115 = arith.constant 0 : index
      %c0_116 = arith.constant 0 : index
      %209 = vector.load %arg2[%c0_114, %208, %c0_115, %c0_116] : memref<1x8x8x512xbf16, #tpu.memory_space<vmem>>, vector<1x1x8x512xbf16>
      %210 = vector.shape_cast %209 : vector<1x1x8x512xbf16> to vector<8x512xbf16>
      %c0_117 = arith.constant 0 : index
      %c0_118 = arith.constant 0 : index
      %211 = vector.load %arg9[%c0_117, %c0_118] : memref<8x128xf32, #tpu.memory_space<vmem>>, vector<8x128xf32>
      %212 = arith.truncf %211 : vector<8x128xf32> to vector<8x128xbf16>
      %213 = arith.extf %210 : vector<8x512xbf16> to vector<8x512xf32>
      %c0_119 = arith.constant 0 : index
      %c0_120 = arith.constant 0 : index
      %c0_121 = arith.constant 0 : index
      %214 = vector.load %arg5[%c0_119, %c0_120, %c0_121] : memref<1x128x512xbf16, #tpu.memory_space<vmem>>, vector<1x128x512xbf16>
      %215 = vector.shape_cast %214 : vector<1x128x512xbf16> to vector<128x512xbf16>
      %cst_122 = arith.constant dense<0.000000e+00> : vector<8x512xf32>
      %216 = tpu.matmul %212, %215, %cst_122 {dimension_numbers = #tpu.dot_dimension_numbers<[1], [0], [0], [1], [0, 0, 1, 1], [], []>} : vector<8x128xbf16>, vector<128x512xbf16>, vector<8x512xf32> -> vector<8x512xf32>
      %217 = arith.addf %213, %216 : vector<8x512xf32>
      %218 = vector.extract_strided_slice %217 {offsets = [0, 0], sizes = [8, 128], strides = [1, 1]} : vector<8x512xf32> to vector<8x128xf32>
      %cst_123 = arith.constant 5.000000e-01 : f32
      %219 = vector.broadcast %cst_123 : f32 to vector<8x128xf32>
      %220 = arith.mulf %219, %218 : vector<8x128xf32>
      %221 = math.tanh %220 : vector<8x128xf32>
      %cst_124 = arith.constant 5.000000e-01 : f32
      %222 = vector.broadcast %cst_124 : f32 to vector<8x128xf32>
      %223 = arith.mulf %222, %221 : vector<8x128xf32>
      %cst_125 = arith.constant 5.000000e-01 : f32
      %224 = vector.broadcast %cst_125 : f32 to vector<8x128xf32>
      %225 = arith.addf %223, %224 : vector<8x128xf32>
      %226 = vector.extract_strided_slice %217 {offsets = [0, 128], sizes = [8, 128], strides = [1, 1]} : vector<8x512xf32> to vector<8x128xf32>
      %cst_126 = arith.constant 5.000000e-01 : f32
      %227 = vector.broadcast %cst_126 : f32 to vector<8x128xf32>
      %228 = arith.mulf %227, %226 : vector<8x128xf32>
      %229 = math.tanh %228 : vector<8x128xf32>
      %cst_127 = arith.constant 5.000000e-01 : f32
      %230 = vector.broadcast %cst_127 : f32 to vector<8x128xf32>
      %231 = arith.mulf %230, %229 : vector<8x128xf32>
      %cst_128 = arith.constant 5.000000e-01 : f32
      %232 = vector.broadcast %cst_128 : f32 to vector<8x128xf32>
      %233 = arith.addf %231, %232 : vector<8x128xf32>
      %234 = vector.extract_strided_slice %217 {offsets = [0, 256], sizes = [8, 128], strides = [1, 1]} : vector<8x512xf32> to vector<8x128xf32>
      %235 = math.tanh %234 : vector<8x128xf32>
      %236 = vector.extract_strided_slice %217 {offsets = [0, 384], sizes = [8, 128], strides = [1, 1]} : vector<8x512xf32> to vector<8x128xf32>
      %cst_129 = arith.constant 5.000000e-01 : f32
      %237 = vector.broadcast %cst_129 : f32 to vector<8x128xf32>
      %238 = arith.mulf %237, %236 : vector<8x128xf32>
      %239 = math.tanh %238 : vector<8x128xf32>
      %cst_130 = arith.constant 5.000000e-01 : f32
      %240 = vector.broadcast %cst_130 : f32 to vector<8x128xf32>
      %241 = arith.mulf %240, %239 : vector<8x128xf32>
      %cst_131 = arith.constant 5.000000e-01 : f32
      %242 = vector.broadcast %cst_131 : f32 to vector<8x128xf32>
      %243 = arith.addf %241, %242 : vector<8x128xf32>
      %c0_132 = arith.constant 0 : index
      %c0_133 = arith.constant 0 : index
      %244 = vector.load %arg10[%c0_132, %c0_133] : memref<8x128xf32, #tpu.memory_space<vmem>>, vector<8x128xf32>
      %245 = arith.mulf %233, %244 : vector<8x128xf32>
      %246 = arith.mulf %225, %235 : vector<8x128xf32>
      %247 = arith.addf %245, %246 : vector<8x128xf32>
      %248 = math.tanh %247 : vector<8x128xf32>
      %249 = arith.mulf %243, %248 : vector<8x128xf32>
      %c0_134 = arith.constant 0 : index
      %c0_135 = arith.constant 0 : index
      %250 = vector.load %arg9[%c0_134, %c0_135] : memref<8x128xf32, #tpu.memory_space<vmem>>, vector<8x128xf32>
      tpu.vector_store %arg9[%c0_134, %c0_135], %249 {strides = array<i32>} : memref<8x128xf32, #tpu.memory_space<vmem>>, vector<8x128xf32>,
      %c0_136 = arith.constant 0 : index
      %c0_137 = arith.constant 0 : index
      %251 = vector.load %arg10[%c0_136, %c0_137] : memref<8x128xf32, #tpu.memory_space<vmem>>, vector<8x128xf32>
      tpu.vector_store %arg10[%c0_136, %c0_137], %247 {strides = array<i32>} : memref<8x128xf32, #tpu.memory_space<vmem>>, vector<8x128xf32>,
      %252 = arith.truncf %249 : vector<8x128xf32> to vector<8x128xbf16>
      %c0_138 = arith.constant 0 : index
      %253 = arith.index_cast %c4_i32 : i32 to index
      %c0_139 = arith.constant 0 : index
      %c0_140 = arith.constant 0 : index
      %254 = vector.load %arg6[%c0_138, %253, %c0_139, %c0_140] : memref<1x8x8x128xbf16, #tpu.memory_space<vmem>>, vector<1x1x8x128xbf16>
      %255 = vector.shape_cast %254 : vector<1x1x8x128xbf16> to vector<8x128xbf16>
      %256 = vector.shape_cast %252 : vector<8x128xbf16> to vector<1x1x8x128xbf16>
      tpu.vector_store %arg6[%c0_138, %253, %c0_139, %c0_140], %256 {strides = array<i32>} : memref<1x8x8x128xbf16, #tpu.memory_space<vmem>>, vector<1x1x8x128xbf16>,
      %c5_i32 = arith.constant 5 : i32
      %c0_141 = arith.constant 0 : index
      %257 = arith.index_cast %c5_i32 : i32 to index
      %c0_142 = arith.constant 0 : index
      %c0_143 = arith.constant 0 : index
      %258 = vector.load %arg2[%c0_141, %257, %c0_142, %c0_143] : memref<1x8x8x512xbf16, #tpu.memory_space<vmem>>, vector<1x1x8x512xbf16>
      %259 = vector.shape_cast %258 : vector<1x1x8x512xbf16> to vector<8x512xbf16>
      %c0_144 = arith.constant 0 : index
      %c0_145 = arith.constant 0 : index
      %260 = vector.load %arg9[%c0_144, %c0_145] : memref<8x128xf32, #tpu.memory_space<vmem>>, vector<8x128xf32>
      %261 = arith.truncf %260 : vector<8x128xf32> to vector<8x128xbf16>
      %262 = arith.extf %259 : vector<8x512xbf16> to vector<8x512xf32>
      %c0_146 = arith.constant 0 : index
      %c0_147 = arith.constant 0 : index
      %c0_148 = arith.constant 0 : index
      %263 = vector.load %arg5[%c0_146, %c0_147, %c0_148] : memref<1x128x512xbf16, #tpu.memory_space<vmem>>, vector<1x128x512xbf16>
      %264 = vector.shape_cast %263 : vector<1x128x512xbf16> to vector<128x512xbf16>
      %cst_149 = arith.constant dense<0.000000e+00> : vector<8x512xf32>
      %265 = tpu.matmul %261, %264, %cst_149 {dimension_numbers = #tpu.dot_dimension_numbers<[1], [0], [0], [1], [0, 0, 1, 1], [], []>} : vector<8x128xbf16>, vector<128x512xbf16>, vector<8x512xf32> -> vector<8x512xf32>
      %266 = arith.addf %262, %265 : vector<8x512xf32>
      %267 = vector.extract_strided_slice %266 {offsets = [0, 0], sizes = [8, 128], strides = [1, 1]} : vector<8x512xf32> to vector<8x128xf32>
      %cst_150 = arith.constant 5.000000e-01 : f32
      %268 = vector.broadcast %cst_150 : f32 to vector<8x128xf32>
      %269 = arith.mulf %268, %267 : vector<8x128xf32>
      %270 = math.tanh %269 : vector<8x128xf32>
      %cst_151 = arith.constant 5.000000e-01 : f32
      %271 = vector.broadcast %cst_151 : f32 to vector<8x128xf32>
      %272 = arith.mulf %271, %270 : vector<8x128xf32>
      %cst_152 = arith.constant 5.000000e-01 : f32
      %273 = vector.broadcast %cst_152 : f32 to vector<8x128xf32>
      %274 = arith.addf %272, %273 : vector<8x128xf32>
      %275 = vector.extract_strided_slice %266 {offsets = [0, 128], sizes = [8, 128], strides = [1, 1]} : vector<8x512xf32> to vector<8x128xf32>
      %cst_153 = arith.constant 5.000000e-01 : f32
      %276 = vector.broadcast %cst_153 : f32 to vector<8x128xf32>
      %277 = arith.mulf %276, %275 : vector<8x128xf32>
      %278 = math.tanh %277 : vector<8x128xf32>
      %cst_154 = arith.constant 5.000000e-01 : f32
      %279 = vector.broadcast %cst_154 : f32 to vector<8x128xf32>
      %280 = arith.mulf %279, %278 : vector<8x128xf32>
      %cst_155 = arith.constant 5.000000e-01 : f32
      %281 = vector.broadcast %cst_155 : f32 to vector<8x128xf32>
      %282 = arith.addf %280, %281 : vector<8x128xf32>
      %283 = vector.extract_strided_slice %266 {offsets = [0, 256], sizes = [8, 128], strides = [1, 1]} : vector<8x512xf32> to vector<8x128xf32>
      %284 = math.tanh %283 : vector<8x128xf32>
      %285 = vector.extract_strided_slice %266 {offsets = [0, 384], sizes = [8, 128], strides = [1, 1]} : vector<8x512xf32> to vector<8x128xf32>
      %cst_156 = arith.constant 5.000000e-01 : f32
      %286 = vector.broadcast %cst_156 : f32 to vector<8x128xf32>
      %287 = arith.mulf %286, %285 : vector<8x128xf32>
      %288 = math.tanh %287 : vector<8x128xf32>
      %cst_157 = arith.constant 5.000000e-01 : f32
      %289 = vector.broadcast %cst_157 : f32 to vector<8x128xf32>
      %290 = arith.mulf %289, %288 : vector<8x128xf32>
      %cst_158 = arith.constant 5.000000e-01 : f32
      %291 = vector.broadcast %cst_158 : f32 to vector<8x128xf32>
      %292 = arith.addf %290, %291 : vector<8x128xf32>
      %c0_159 = arith.constant 0 : index
      %c0_160 = arith.constant 0 : index
      %293 = vector.load %arg10[%c0_159, %c0_160] : memref<8x128xf32, #tpu.memory_space<vmem>>, vector<8x128xf32>
      %294 = arith.mulf %282, %293 : vector<8x128xf32>
      %295 = arith.mulf %274, %284 : vector<8x128xf32>
      %296 = arith.addf %294, %295 : vector<8x128xf32>
      %297 = math.tanh %296 : vector<8x128xf32>
      %298 = arith.mulf %292, %297 : vector<8x128xf32>
      %c0_161 = arith.constant 0 : index
      %c0_162 = arith.constant 0 : index
      %299 = vector.load %arg9[%c0_161, %c0_162] : memref<8x128xf32, #tpu.memory_space<vmem>>, vector<8x128xf32>
      tpu.vector_store %arg9[%c0_161, %c0_162], %298 {strides = array<i32>} : memref<8x128xf32, #tpu.memory_space<vmem>>, vector<8x128xf32>,
      %c0_163 = arith.constant 0 : index
      %c0_164 = arith.constant 0 : index
      %300 = vector.load %arg10[%c0_163, %c0_164] : memref<8x128xf32, #tpu.memory_space<vmem>>, vector<8x128xf32>
      tpu.vector_store %arg10[%c0_163, %c0_164], %296 {strides = array<i32>} : memref<8x128xf32, #tpu.memory_space<vmem>>, vector<8x128xf32>,
      %301 = arith.truncf %298 : vector<8x128xf32> to vector<8x128xbf16>
      %c0_165 = arith.constant 0 : index
      %302 = arith.index_cast %c5_i32 : i32 to index
      %c0_166 = arith.constant 0 : index
      %c0_167 = arith.constant 0 : index
      %303 = vector.load %arg6[%c0_165, %302, %c0_166, %c0_167] : memref<1x8x8x128xbf16, #tpu.memory_space<vmem>>, vector<1x1x8x128xbf16>
      %304 = vector.shape_cast %303 : vector<1x1x8x128xbf16> to vector<8x128xbf16>
      %305 = vector.shape_cast %301 : vector<8x128xbf16> to vector<1x1x8x128xbf16>
      tpu.vector_store %arg6[%c0_165, %302, %c0_166, %c0_167], %305 {strides = array<i32>} : memref<1x8x8x128xbf16, #tpu.memory_space<vmem>>, vector<1x1x8x128xbf16>,
      %c6_i32 = arith.constant 6 : i32
      %c0_168 = arith.constant 0 : index
      %306 = arith.index_cast %c6_i32 : i32 to index
      %c0_169 = arith.constant 0 : index
      %c0_170 = arith.constant 0 : index
      %307 = vector.load %arg2[%c0_168, %306, %c0_169, %c0_170] : memref<1x8x8x512xbf16, #tpu.memory_space<vmem>>, vector<1x1x8x512xbf16>
      %308 = vector.shape_cast %307 : vector<1x1x8x512xbf16> to vector<8x512xbf16>
      %c0_171 = arith.constant 0 : index
      %c0_172 = arith.constant 0 : index
      %309 = vector.load %arg9[%c0_171, %c0_172] : memref<8x128xf32, #tpu.memory_space<vmem>>, vector<8x128xf32>
      %310 = arith.truncf %309 : vector<8x128xf32> to vector<8x128xbf16>
      %311 = arith.extf %308 : vector<8x512xbf16> to vector<8x512xf32>
      %c0_173 = arith.constant 0 : index
      %c0_174 = arith.constant 0 : index
      %c0_175 = arith.constant 0 : index
      %312 = vector.load %arg5[%c0_173, %c0_174, %c0_175] : memref<1x128x512xbf16, #tpu.memory_space<vmem>>, vector<1x128x512xbf16>
      %313 = vector.shape_cast %312 : vector<1x128x512xbf16> to vector<128x512xbf16>
      %cst_176 = arith.constant dense<0.000000e+00> : vector<8x512xf32>
      %314 = tpu.matmul %310, %313, %cst_176 {dimension_numbers = #tpu.dot_dimension_numbers<[1], [0], [0], [1], [0, 0, 1, 1], [], []>} : vector<8x128xbf16>, vector<128x512xbf16>, vector<8x512xf32> -> vector<8x512xf32>
      %315 = arith.addf %311, %314 : vector<8x512xf32>
      %316 = vector.extract_strided_slice %315 {offsets = [0, 0], sizes = [8, 128], strides = [1, 1]} : vector<8x512xf32> to vector<8x128xf32>
      %cst_177 = arith.constant 5.000000e-01 : f32
      %317 = vector.broadcast %cst_177 : f32 to vector<8x128xf32>
      %318 = arith.mulf %317, %316 : vector<8x128xf32>
      %319 = math.tanh %318 : vector<8x128xf32>
      %cst_178 = arith.constant 5.000000e-01 : f32
      %320 = vector.broadcast %cst_178 : f32 to vector<8x128xf32>
      %321 = arith.mulf %320, %319 : vector<8x128xf32>
      %cst_179 = arith.constant 5.000000e-01 : f32
      %322 = vector.broadcast %cst_179 : f32 to vector<8x128xf32>
      %323 = arith.addf %321, %322 : vector<8x128xf32>
      %324 = vector.extract_strided_slice %315 {offsets = [0, 128], sizes = [8, 128], strides = [1, 1]} : vector<8x512xf32> to vector<8x128xf32>
      %cst_180 = arith.constant 5.000000e-01 : f32
      %325 = vector.broadcast %cst_180 : f32 to vector<8x128xf32>
      %326 = arith.mulf %325, %324 : vector<8x128xf32>
      %327 = math.tanh %326 : vector<8x128xf32>
      %cst_181 = arith.constant 5.000000e-01 : f32
      %328 = vector.broadcast %cst_181 : f32 to vector<8x128xf32>
      %329 = arith.mulf %328, %327 : vector<8x128xf32>
      %cst_182 = arith.constant 5.000000e-01 : f32
      %330 = vector.broadcast %cst_182 : f32 to vector<8x128xf32>
      %331 = arith.addf %329, %330 : vector<8x128xf32>
      %332 = vector.extract_strided_slice %315 {offsets = [0, 256], sizes = [8, 128], strides = [1, 1]} : vector<8x512xf32> to vector<8x128xf32>
      %333 = math.tanh %332 : vector<8x128xf32>
      %334 = vector.extract_strided_slice %315 {offsets = [0, 384], sizes = [8, 128], strides = [1, 1]} : vector<8x512xf32> to vector<8x128xf32>
      %cst_183 = arith.constant 5.000000e-01 : f32
      %335 = vector.broadcast %cst_183 : f32 to vector<8x128xf32>
      %336 = arith.mulf %335, %334 : vector<8x128xf32>
      %337 = math.tanh %336 : vector<8x128xf32>
      %cst_184 = arith.constant 5.000000e-01 : f32
      %338 = vector.broadcast %cst_184 : f32 to vector<8x128xf32>
      %339 = arith.mulf %338, %337 : vector<8x128xf32>
      %cst_185 = arith.constant 5.000000e-01 : f32
      %340 = vector.broadcast %cst_185 : f32 to vector<8x128xf32>
      %341 = arith.addf %339, %340 : vector<8x128xf32>
      %c0_186 = arith.constant 0 : index
      %c0_187 = arith.constant 0 : index
      %342 = vector.load %arg10[%c0_186, %c0_187] : memref<8x128xf32, #tpu.memory_space<vmem>>, vector<8x128xf32>
      %343 = arith.mulf %331, %342 : vector<8x128xf32>
      %344 = arith.mulf %323, %333 : vector<8x128xf32>
      %345 = arith.addf %343, %344 : vector<8x128xf32>
      %346 = math.tanh %345 : vector<8x128xf32>
      %347 = arith.mulf %341, %346 : vector<8x128xf32>
      %c0_188 = arith.constant 0 : index
      %c0_189 = arith.constant 0 : index
      %348 = vector.load %arg9[%c0_188, %c0_189] : memref<8x128xf32, #tpu.memory_space<vmem>>, vector<8x128xf32>
      tpu.vector_store %arg9[%c0_188, %c0_189], %347 {strides = array<i32>} : memref<8x128xf32, #tpu.memory_space<vmem>>, vector<8x128xf32>,
      %c0_190 = arith.constant 0 : index
      %c0_191 = arith.constant 0 : index
      %349 = vector.load %arg10[%c0_190, %c0_191] : memref<8x128xf32, #tpu.memory_space<vmem>>, vector<8x128xf32>
      tpu.vector_store %arg10[%c0_190, %c0_191], %345 {strides = array<i32>} : memref<8x128xf32, #tpu.memory_space<vmem>>, vector<8x128xf32>,
      %350 = arith.truncf %347 : vector<8x128xf32> to vector<8x128xbf16>
      %c0_192 = arith.constant 0 : index
      %351 = arith.index_cast %c6_i32 : i32 to index
      %c0_193 = arith.constant 0 : index
      %c0_194 = arith.constant 0 : index
      %352 = vector.load %arg6[%c0_192, %351, %c0_193, %c0_194] : memref<1x8x8x128xbf16, #tpu.memory_space<vmem>>, vector<1x1x8x128xbf16>
      %353 = vector.shape_cast %352 : vector<1x1x8x128xbf16> to vector<8x128xbf16>
      %354 = vector.shape_cast %350 : vector<8x128xbf16> to vector<1x1x8x128xbf16>
      tpu.vector_store %arg6[%c0_192, %351, %c0_193, %c0_194], %354 {strides = array<i32>} : memref<1x8x8x128xbf16, #tpu.memory_space<vmem>>, vector<1x1x8x128xbf16>,
      %c7_i32 = arith.constant 7 : i32
      %c0_195 = arith.constant 0 : index
      %355 = arith.index_cast %c7_i32 : i32 to index
      %c0_196 = arith.constant 0 : index
      %c0_197 = arith.constant 0 : index
      %356 = vector.load %arg2[%c0_195, %355, %c0_196, %c0_197] : memref<1x8x8x512xbf16, #tpu.memory_space<vmem>>, vector<1x1x8x512xbf16>
      %357 = vector.shape_cast %356 : vector<1x1x8x512xbf16> to vector<8x512xbf16>
      %c0_198 = arith.constant 0 : index
      %c0_199 = arith.constant 0 : index
      %358 = vector.load %arg9[%c0_198, %c0_199] : memref<8x128xf32, #tpu.memory_space<vmem>>, vector<8x128xf32>
      %359 = arith.truncf %358 : vector<8x128xf32> to vector<8x128xbf16>
      %360 = arith.extf %357 : vector<8x512xbf16> to vector<8x512xf32>
      %c0_200 = arith.constant 0 : index
      %c0_201 = arith.constant 0 : index
      %c0_202 = arith.constant 0 : index
      %361 = vector.load %arg5[%c0_200, %c0_201, %c0_202] : memref<1x128x512xbf16, #tpu.memory_space<vmem>>, vector<1x128x512xbf16>
      %362 = vector.shape_cast %361 : vector<1x128x512xbf16> to vector<128x512xbf16>
      %cst_203 = arith.constant dense<0.000000e+00> : vector<8x512xf32>
      %363 = tpu.matmul %359, %362, %cst_203 {dimension_numbers = #tpu.dot_dimension_numbers<[1], [0], [0], [1], [0, 0, 1, 1], [], []>} : vector<8x128xbf16>, vector<128x512xbf16>, vector<8x512xf32> -> vector<8x512xf32>
      %364 = arith.addf %360, %363 : vector<8x512xf32>
      %365 = vector.extract_strided_slice %364 {offsets = [0, 0], sizes = [8, 128], strides = [1, 1]} : vector<8x512xf32> to vector<8x128xf32>
      %cst_204 = arith.constant 5.000000e-01 : f32
      %366 = vector.broadcast %cst_204 : f32 to vector<8x128xf32>
      %367 = arith.mulf %366, %365 : vector<8x128xf32>
      %368 = math.tanh %367 : vector<8x128xf32>
      %cst_205 = arith.constant 5.000000e-01 : f32
      %369 = vector.broadcast %cst_205 : f32 to vector<8x128xf32>
      %370 = arith.mulf %369, %368 : vector<8x128xf32>
      %cst_206 = arith.constant 5.000000e-01 : f32
      %371 = vector.broadcast %cst_206 : f32 to vector<8x128xf32>
      %372 = arith.addf %370, %371 : vector<8x128xf32>
      %373 = vector.extract_strided_slice %364 {offsets = [0, 128], sizes = [8, 128], strides = [1, 1]} : vector<8x512xf32> to vector<8x128xf32>
      %cst_207 = arith.constant 5.000000e-01 : f32
      %374 = vector.broadcast %cst_207 : f32 to vector<8x128xf32>
      %375 = arith.mulf %374, %373 : vector<8x128xf32>
      %376 = math.tanh %375 : vector<8x128xf32>
      %cst_208 = arith.constant 5.000000e-01 : f32
      %377 = vector.broadcast %cst_208 : f32 to vector<8x128xf32>
      %378 = arith.mulf %377, %376 : vector<8x128xf32>
      %cst_209 = arith.constant 5.000000e-01 : f32
      %379 = vector.broadcast %cst_209 : f32 to vector<8x128xf32>
      %380 = arith.addf %378, %379 : vector<8x128xf32>
      %381 = vector.extract_strided_slice %364 {offsets = [0, 256], sizes = [8, 128], strides = [1, 1]} : vector<8x512xf32> to vector<8x128xf32>
      %382 = math.tanh %381 : vector<8x128xf32>
      %383 = vector.extract_strided_slice %364 {offsets = [0, 384], sizes = [8, 128], strides = [1, 1]} : vector<8x512xf32> to vector<8x128xf32>
      %cst_210 = arith.constant 5.000000e-01 : f32
      %384 = vector.broadcast %cst_210 : f32 to vector<8x128xf32>
      %385 = arith.mulf %384, %383 : vector<8x128xf32>
      %386 = math.tanh %385 : vector<8x128xf32>
      %cst_211 = arith.constant 5.000000e-01 : f32
      %387 = vector.broadcast %cst_211 : f32 to vector<8x128xf32>
      %388 = arith.mulf %387, %386 : vector<8x128xf32>
      %cst_212 = arith.constant 5.000000e-01 : f32
      %389 = vector.broadcast %cst_212 : f32 to vector<8x128xf32>
      %390 = arith.addf %388, %389 : vector<8x128xf32>
      %c0_213 = arith.constant 0 : index
      %c0_214 = arith.constant 0 : index
      %391 = vector.load %arg10[%c0_213, %c0_214] : memref<8x128xf32, #tpu.memory_space<vmem>>, vector<8x128xf32>
      %392 = arith.mulf %380, %391 : vector<8x128xf32>
      %393 = arith.mulf %372, %382 : vector<8x128xf32>
      %394 = arith.addf %392, %393 : vector<8x128xf32>
      %395 = math.tanh %394 : vector<8x128xf32>
      %396 = arith.mulf %390, %395 : vector<8x128xf32>
      %c0_215 = arith.constant 0 : index
      %c0_216 = arith.constant 0 : index
      %397 = vector.load %arg9[%c0_215, %c0_216] : memref<8x128xf32, #tpu.memory_space<vmem>>, vector<8x128xf32>
      tpu.vector_store %arg9[%c0_215, %c0_216], %396 {strides = array<i32>} : memref<8x128xf32, #tpu.memory_space<vmem>>, vector<8x128xf32>,
      %c0_217 = arith.constant 0 : index
      %c0_218 = arith.constant 0 : index
      %398 = vector.load %arg10[%c0_217, %c0_218] : memref<8x128xf32, #tpu.memory_space<vmem>>, vector<8x128xf32>
      tpu.vector_store %arg10[%c0_217, %c0_218], %394 {strides = array<i32>} : memref<8x128xf32, #tpu.memory_space<vmem>>, vector<8x128xf32>,
      %399 = arith.truncf %396 : vector<8x128xf32> to vector<8x128xbf16>
      %c0_219 = arith.constant 0 : index
      %400 = arith.index_cast %c7_i32 : i32 to index
      %c0_220 = arith.constant 0 : index
      %c0_221 = arith.constant 0 : index
      %401 = vector.load %arg6[%c0_219, %400, %c0_220, %c0_221] : memref<1x8x8x128xbf16, #tpu.memory_space<vmem>>, vector<1x1x8x128xbf16>
      %402 = vector.shape_cast %401 : vector<1x1x8x128xbf16> to vector<8x128xbf16>
      %403 = vector.shape_cast %399 : vector<8x128xbf16> to vector<1x1x8x128xbf16>
      tpu.vector_store %arg6[%c0_219, %400, %c0_220, %c0_221], %403 {strides = array<i32>} : memref<1x8x8x128xbf16, #tpu.memory_space<vmem>>, vector<1x1x8x128xbf16>,
      %c8_i32 = arith.constant 8 : i32
    } else {
    }
    %c1_i32 = arith.constant 1 : i32
    %6 = arith.cmpi eq, %arg0, %c1_i32 : i32
    %7 = arith.extui %6 : i1 to i32
    %c0_i32_3 = arith.constant 0 : i32
    %8 = arith.cmpi ne, %7, %c0_i32_3 : i32
    scf.if %8 {
      %c0_i32_6 = arith.constant 0 : i32
      %c7_i32 = arith.constant 7 : i32
      %12 = arith.subi %c7_i32, %c0_i32_6 : i32
      %c0 = arith.constant 0 : index
      %13 = arith.index_cast %12 : i32 to index
      %c0_7 = arith.constant 0 : index
      %c0_8 = arith.constant 0 : index
      %14 = vector.load %arg2[%c0, %13, %c0_7, %c0_8] : memref<1x8x8x512xbf16, #tpu.memory_space<vmem>>, vector<1x1x8x512xbf16>
      %15 = vector.shape_cast %14 : vector<1x1x8x512xbf16> to vector<8x512xbf16>
      %c0_9 = arith.constant 0 : index
      %c0_10 = arith.constant 0 : index
      %16 = vector.load %arg9[%c0_9, %c0_10] : memref<8x128xf32, #tpu.memory_space<vmem>>, vector<8x128xf32>
      %17 = arith.truncf %16 : vector<8x128xf32> to vector<8x128xbf16>
      %18 = arith.extf %15 : vector<8x512xbf16> to vector<8x512xf32>
      %c0_11 = arith.constant 0 : index
      %c0_12 = arith.constant 0 : index
      %c0_13 = arith.constant 0 : index
      %19 = vector.load %arg5[%c0_11, %c0_12, %c0_13] : memref<1x128x512xbf16, #tpu.memory_space<vmem>>, vector<1x128x512xbf16>
      %20 = vector.shape_cast %19 : vector<1x128x512xbf16> to vector<128x512xbf16>
      %cst = arith.constant dense<0.000000e+00> : vector<8x512xf32>
      %21 = tpu.matmul %17, %20, %cst {dimension_numbers = #tpu.dot_dimension_numbers<[1], [0], [0], [1], [0, 0, 1, 1], [], []>} : vector<8x128xbf16>, vector<128x512xbf16>, vector<8x512xf32> -> vector<8x512xf32>
      %22 = arith.addf %18, %21 : vector<8x512xf32>
      %23 = vector.extract_strided_slice %22 {offsets = [0, 0], sizes = [8, 128], strides = [1, 1]} : vector<8x512xf32> to vector<8x128xf32>
      %cst_14 = arith.constant 5.000000e-01 : f32
      %24 = vector.broadcast %cst_14 : f32 to vector<8x128xf32>
      %25 = arith.mulf %24, %23 : vector<8x128xf32>
      %26 = math.tanh %25 : vector<8x128xf32>
      %cst_15 = arith.constant 5.000000e-01 : f32
      %27 = vector.broadcast %cst_15 : f32 to vector<8x128xf32>
      %28 = arith.mulf %27, %26 : vector<8x128xf32>
      %cst_16 = arith.constant 5.000000e-01 : f32
      %29 = vector.broadcast %cst_16 : f32 to vector<8x128xf32>
      %30 = arith.addf %28, %29 : vector<8x128xf32>
      %31 = vector.extract_strided_slice %22 {offsets = [0, 128], sizes = [8, 128], strides = [1, 1]} : vector<8x512xf32> to vector<8x128xf32>
      %cst_17 = arith.constant 5.000000e-01 : f32
      %32 = vector.broadcast %cst_17 : f32 to vector<8x128xf32>
      %33 = arith.mulf %32, %31 : vector<8x128xf32>
      %34 = math.tanh %33 : vector<8x128xf32>
      %cst_18 = arith.constant 5.000000e-01 : f32
      %35 = vector.broadcast %cst_18 : f32 to vector<8x128xf32>
      %36 = arith.mulf %35, %34 : vector<8x128xf32>
      %cst_19 = arith.constant 5.000000e-01 : f32
      %37 = vector.broadcast %cst_19 : f32 to vector<8x128xf32>
      %38 = arith.addf %36, %37 : vector<8x128xf32>
      %39 = vector.extract_strided_slice %22 {offsets = [0, 256], sizes = [8, 128], strides = [1, 1]} : vector<8x512xf32> to vector<8x128xf32>
      %40 = math.tanh %39 : vector<8x128xf32>
      %41 = vector.extract_strided_slice %22 {offsets = [0, 384], sizes = [8, 128], strides = [1, 1]} : vector<8x512xf32> to vector<8x128xf32>
      %cst_20 = arith.constant 5.000000e-01 : f32
      %42 = vector.broadcast %cst_20 : f32 to vector<8x128xf32>
      %43 = arith.mulf %42, %41 : vector<8x128xf32>
      %44 = math.tanh %43 : vector<8x128xf32>
      %cst_21 = arith.constant 5.000000e-01 : f32
      %45 = vector.broadcast %cst_21 : f32 to vector<8x128xf32>
      %46 = arith.mulf %45, %44 : vector<8x128xf32>
      %cst_22 = arith.constant 5.000000e-01 : f32
      %47 = vector.broadcast %cst_22 : f32 to vector<8x128xf32>
      %48 = arith.addf %46, %47 : vector<8x128xf32>
      %c0_23 = arith.constant 0 : index
      %c0_24 = arith.constant 0 : index
      %49 = vector.load %arg10[%c0_23, %c0_24] : memref<8x128xf32, #tpu.memory_space<vmem>>, vector<8x128xf32>
      %50 = arith.mulf %38, %49 : vector<8x128xf32>
      %51 = arith.mulf %30, %40 : vector<8x128xf32>
      %52 = arith.addf %50, %51 : vector<8x128xf32>
      %53 = math.tanh %52 : vector<8x128xf32>
      %54 = arith.mulf %48, %53 : vector<8x128xf32>
      %c0_25 = arith.constant 0 : index
      %c0_26 = arith.constant 0 : index
      %55 = vector.load %arg9[%c0_25, %c0_26] : memref<8x128xf32, #tpu.memory_space<vmem>>, vector<8x128xf32>
      tpu.vector_store %arg9[%c0_25, %c0_26], %54 {strides = array<i32>} : memref<8x128xf32, #tpu.memory_space<vmem>>, vector<8x128xf32>,
      %c0_27 = arith.constant 0 : index
      %c0_28 = arith.constant 0 : index
      %56 = vector.load %arg10[%c0_27, %c0_28] : memref<8x128xf32, #tpu.memory_space<vmem>>, vector<8x128xf32>
      tpu.vector_store %arg10[%c0_27, %c0_28], %52 {strides = array<i32>} : memref<8x128xf32, #tpu.memory_space<vmem>>, vector<8x128xf32>,
      %57 = arith.truncf %54 : vector<8x128xf32> to vector<8x128xbf16>
      %c0_29 = arith.constant 0 : index
      %58 = arith.index_cast %12 : i32 to index
      %c0_30 = arith.constant 0 : index
      %c0_31 = arith.constant 0 : index
      %59 = vector.load %arg6[%c0_29, %58, %c0_30, %c0_31] : memref<1x8x8x128xbf16, #tpu.memory_space<vmem>>, vector<1x1x8x128xbf16>
      %60 = vector.shape_cast %59 : vector<1x1x8x128xbf16> to vector<8x128xbf16>
      %61 = vector.shape_cast %57 : vector<8x128xbf16> to vector<1x1x8x128xbf16>
      tpu.vector_store %arg6[%c0_29, %58, %c0_30, %c0_31], %61 {strides = array<i32>} : memref<1x8x8x128xbf16, #tpu.memory_space<vmem>>, vector<1x1x8x128xbf16>,
      %c1_i32_32 = arith.constant 1 : i32
      %c7_i32_33 = arith.constant 7 : i32
      %62 = arith.subi %c7_i32_33, %c1_i32_32 : i32
      %c0_34 = arith.constant 0 : index
      %63 = arith.index_cast %62 : i32 to index
      %c0_35 = arith.constant 0 : index
      %c0_36 = arith.constant 0 : index
      %64 = vector.load %arg2[%c0_34, %63, %c0_35, %c0_36] : memref<1x8x8x512xbf16, #tpu.memory_space<vmem>>, vector<1x1x8x512xbf16>
      %65 = vector.shape_cast %64 : vector<1x1x8x512xbf16> to vector<8x512xbf16>
      %c0_37 = arith.constant 0 : index
      %c0_38 = arith.constant 0 : index
      %66 = vector.load %arg9[%c0_37, %c0_38] : memref<8x128xf32, #tpu.memory_space<vmem>>, vector<8x128xf32>
      %67 = arith.truncf %66 : vector<8x128xf32> to vector<8x128xbf16>
      %68 = arith.extf %65 : vector<8x512xbf16> to vector<8x512xf32>
      %c0_39 = arith.constant 0 : index
      %c0_40 = arith.constant 0 : index
      %c0_41 = arith.constant 0 : index
      %69 = vector.load %arg5[%c0_39, %c0_40, %c0_41] : memref<1x128x512xbf16, #tpu.memory_space<vmem>>, vector<1x128x512xbf16>
      %70 = vector.shape_cast %69 : vector<1x128x512xbf16> to vector<128x512xbf16>
      %cst_42 = arith.constant dense<0.000000e+00> : vector<8x512xf32>
      %71 = tpu.matmul %67, %70, %cst_42 {dimension_numbers = #tpu.dot_dimension_numbers<[1], [0], [0], [1], [0, 0, 1, 1], [], []>} : vector<8x128xbf16>, vector<128x512xbf16>, vector<8x512xf32> -> vector<8x512xf32>
      %72 = arith.addf %68, %71 : vector<8x512xf32>
      %73 = vector.extract_strided_slice %72 {offsets = [0, 0], sizes = [8, 128], strides = [1, 1]} : vector<8x512xf32> to vector<8x128xf32>
      %cst_43 = arith.constant 5.000000e-01 : f32
      %74 = vector.broadcast %cst_43 : f32 to vector<8x128xf32>
      %75 = arith.mulf %74, %73 : vector<8x128xf32>
      %76 = math.tanh %75 : vector<8x128xf32>
      %cst_44 = arith.constant 5.000000e-01 : f32
      %77 = vector.broadcast %cst_44 : f32 to vector<8x128xf32>
      %78 = arith.mulf %77, %76 : vector<8x128xf32>
      %cst_45 = arith.constant 5.000000e-01 : f32
      %79 = vector.broadcast %cst_45 : f32 to vector<8x128xf32>
      %80 = arith.addf %78, %79 : vector<8x128xf32>
      %81 = vector.extract_strided_slice %72 {offsets = [0, 128], sizes = [8, 128], strides = [1, 1]} : vector<8x512xf32> to vector<8x128xf32>
      %cst_46 = arith.constant 5.000000e-01 : f32
      %82 = vector.broadcast %cst_46 : f32 to vector<8x128xf32>
      %83 = arith.mulf %82, %81 : vector<8x128xf32>
      %84 = math.tanh %83 : vector<8x128xf32>
      %cst_47 = arith.constant 5.000000e-01 : f32
      %85 = vector.broadcast %cst_47 : f32 to vector<8x128xf32>
      %86 = arith.mulf %85, %84 : vector<8x128xf32>
      %cst_48 = arith.constant 5.000000e-01 : f32
      %87 = vector.broadcast %cst_48 : f32 to vector<8x128xf32>
      %88 = arith.addf %86, %87 : vector<8x128xf32>
      %89 = vector.extract_strided_slice %72 {offsets = [0, 256], sizes = [8, 128], strides = [1, 1]} : vector<8x512xf32> to vector<8x128xf32>
      %90 = math.tanh %89 : vector<8x128xf32>
      %91 = vector.extract_strided_slice %72 {offsets = [0, 384], sizes = [8, 128], strides = [1, 1]} : vector<8x512xf32> to vector<8x128xf32>
      %cst_49 = arith.constant 5.000000e-01 : f32
      %92 = vector.broadcast %cst_49 : f32 to vector<8x128xf32>
      %93 = arith.mulf %92, %91 : vector<8x128xf32>
      %94 = math.tanh %93 : vector<8x128xf32>
      %cst_50 = arith.constant 5.000000e-01 : f32
      %95 = vector.broadcast %cst_50 : f32 to vector<8x128xf32>
      %96 = arith.mulf %95, %94 : vector<8x128xf32>
      %cst_51 = arith.constant 5.000000e-01 : f32
      %97 = vector.broadcast %cst_51 : f32 to vector<8x128xf32>
      %98 = arith.addf %96, %97 : vector<8x128xf32>
      %c0_52 = arith.constant 0 : index
      %c0_53 = arith.constant 0 : index
      %99 = vector.load %arg10[%c0_52, %c0_53] : memref<8x128xf32, #tpu.memory_space<vmem>>, vector<8x128xf32>
      %100 = arith.mulf %88, %99 : vector<8x128xf32>
      %101 = arith.mulf %80, %90 : vector<8x128xf32>
      %102 = arith.addf %100, %101 : vector<8x128xf32>
      %103 = math.tanh %102 : vector<8x128xf32>
      %104 = arith.mulf %98, %103 : vector<8x128xf32>
      %c0_54 = arith.constant 0 : index
      %c0_55 = arith.constant 0 : index
      %105 = vector.load %arg9[%c0_54, %c0_55] : memref<8x128xf32, #tpu.memory_space<vmem>>, vector<8x128xf32>
      tpu.vector_store %arg9[%c0_54, %c0_55], %104 {strides = array<i32>} : memref<8x128xf32, #tpu.memory_space<vmem>>, vector<8x128xf32>,
      %c0_56 = arith.constant 0 : index
      %c0_57 = arith.constant 0 : index
      %106 = vector.load %arg10[%c0_56, %c0_57] : memref<8x128xf32, #tpu.memory_space<vmem>>, vector<8x128xf32>
      tpu.vector_store %arg10[%c0_56, %c0_57], %102 {strides = array<i32>} : memref<8x128xf32, #tpu.memory_space<vmem>>, vector<8x128xf32>,
      %107 = arith.truncf %104 : vector<8x128xf32> to vector<8x128xbf16>
      %c0_58 = arith.constant 0 : index
      %108 = arith.index_cast %62 : i32 to index
      %c0_59 = arith.constant 0 : index
      %c0_60 = arith.constant 0 : index
      %109 = vector.load %arg6[%c0_58, %108, %c0_59, %c0_60] : memref<1x8x8x128xbf16, #tpu.memory_space<vmem>>, vector<1x1x8x128xbf16>
      %110 = vector.shape_cast %109 : vector<1x1x8x128xbf16> to vector<8x128xbf16>
      %111 = vector.shape_cast %107 : vector<8x128xbf16> to vector<1x1x8x128xbf16>
      tpu.vector_store %arg6[%c0_58, %108, %c0_59, %c0_60], %111 {strides = array<i32>} : memref<1x8x8x128xbf16, #tpu.memory_space<vmem>>, vector<1x1x8x128xbf16>,
      %c2_i32 = arith.constant 2 : i32
      %c7_i32_61 = arith.constant 7 : i32
      %112 = arith.subi %c7_i32_61, %c2_i32 : i32
      %c0_62 = arith.constant 0 : index
      %113 = arith.index_cast %112 : i32 to index
      %c0_63 = arith.constant 0 : index
      %c0_64 = arith.constant 0 : index
      %114 = vector.load %arg2[%c0_62, %113, %c0_63, %c0_64] : memref<1x8x8x512xbf16, #tpu.memory_space<vmem>>, vector<1x1x8x512xbf16>
      %115 = vector.shape_cast %114 : vector<1x1x8x512xbf16> to vector<8x512xbf16>
      %c0_65 = arith.constant 0 : index
      %c0_66 = arith.constant 0 : index
      %116 = vector.load %arg9[%c0_65, %c0_66] : memref<8x128xf32, #tpu.memory_space<vmem>>, vector<8x128xf32>
      %117 = arith.truncf %116 : vector<8x128xf32> to vector<8x128xbf16>
      %118 = arith.extf %115 : vector<8x512xbf16> to vector<8x512xf32>
      %c0_67 = arith.constant 0 : index
      %c0_68 = arith.constant 0 : index
      %c0_69 = arith.constant 0 : index
      %119 = vector.load %arg5[%c0_67, %c0_68, %c0_69] : memref<1x128x512xbf16, #tpu.memory_space<vmem>>, vector<1x128x512xbf16>
      %120 = vector.shape_cast %119 : vector<1x128x512xbf16> to vector<128x512xbf16>
      %cst_70 = arith.constant dense<0.000000e+00> : vector<8x512xf32>
      %121 = tpu.matmul %117, %120, %cst_70 {dimension_numbers = #tpu.dot_dimension_numbers<[1], [0], [0], [1], [0, 0, 1, 1], [], []>} : vector<8x128xbf16>, vector<128x512xbf16>, vector<8x512xf32> -> vector<8x512xf32>
      %122 = arith.addf %118, %121 : vector<8x512xf32>
      %123 = vector.extract_strided_slice %122 {offsets = [0, 0], sizes = [8, 128], strides = [1, 1]} : vector<8x512xf32> to vector<8x128xf32>
      %cst_71 = arith.constant 5.000000e-01 : f32
      %124 = vector.broadcast %cst_71 : f32 to vector<8x128xf32>
      %125 = arith.mulf %124, %123 : vector<8x128xf32>
      %126 = math.tanh %125 : vector<8x128xf32>
      %cst_72 = arith.constant 5.000000e-01 : f32
      %127 = vector.broadcast %cst_72 : f32 to vector<8x128xf32>
      %128 = arith.mulf %127, %126 : vector<8x128xf32>
      %cst_73 = arith.constant 5.000000e-01 : f32
      %129 = vector.broadcast %cst_73 : f32 to vector<8x128xf32>
      %130 = arith.addf %128, %129 : vector<8x128xf32>
      %131 = vector.extract_strided_slice %122 {offsets = [0, 128], sizes = [8, 128], strides = [1, 1]} : vector<8x512xf32> to vector<8x128xf32>
      %cst_74 = arith.constant 5.000000e-01 : f32
      %132 = vector.broadcast %cst_74 : f32 to vector<8x128xf32>
      %133 = arith.mulf %132, %131 : vector<8x128xf32>
      %134 = math.tanh %133 : vector<8x128xf32>
      %cst_75 = arith.constant 5.000000e-01 : f32
      %135 = vector.broadcast %cst_75 : f32 to vector<8x128xf32>
      %136 = arith.mulf %135, %134 : vector<8x128xf32>
      %cst_76 = arith.constant 5.000000e-01 : f32
      %137 = vector.broadcast %cst_76 : f32 to vector<8x128xf32>
      %138 = arith.addf %136, %137 : vector<8x128xf32>
      %139 = vector.extract_strided_slice %122 {offsets = [0, 256], sizes = [8, 128], strides = [1, 1]} : vector<8x512xf32> to vector<8x128xf32>
      %140 = math.tanh %139 : vector<8x128xf32>
      %141 = vector.extract_strided_slice %122 {offsets = [0, 384], sizes = [8, 128], strides = [1, 1]} : vector<8x512xf32> to vector<8x128xf32>
      %cst_77 = arith.constant 5.000000e-01 : f32
      %142 = vector.broadcast %cst_77 : f32 to vector<8x128xf32>
      %143 = arith.mulf %142, %141 : vector<8x128xf32>
      %144 = math.tanh %143 : vector<8x128xf32>
      %cst_78 = arith.constant 5.000000e-01 : f32
      %145 = vector.broadcast %cst_78 : f32 to vector<8x128xf32>
      %146 = arith.mulf %145, %144 : vector<8x128xf32>
      %cst_79 = arith.constant 5.000000e-01 : f32
      %147 = vector.broadcast %cst_79 : f32 to vector<8x128xf32>
      %148 = arith.addf %146, %147 : vector<8x128xf32>
      %c0_80 = arith.constant 0 : index
      %c0_81 = arith.constant 0 : index
      %149 = vector.load %arg10[%c0_80, %c0_81] : memref<8x128xf32, #tpu.memory_space<vmem>>, vector<8x128xf32>
      %150 = arith.mulf %138, %149 : vector<8x128xf32>
      %151 = arith.mulf %130, %140 : vector<8x128xf32>
      %152 = arith.addf %150, %151 : vector<8x128xf32>
      %153 = math.tanh %152 : vector<8x128xf32>
      %154 = arith.mulf %148, %153 : vector<8x128xf32>
      %c0_82 = arith.constant 0 : index
      %c0_83 = arith.constant 0 : index
      %155 = vector.load %arg9[%c0_82, %c0_83] : memref<8x128xf32, #tpu.memory_space<vmem>>, vector<8x128xf32>
      tpu.vector_store %arg9[%c0_82, %c0_83], %154 {strides = array<i32>} : memref<8x128xf32, #tpu.memory_space<vmem>>, vector<8x128xf32>,
      %c0_84 = arith.constant 0 : index
      %c0_85 = arith.constant 0 : index
      %156 = vector.load %arg10[%c0_84, %c0_85] : memref<8x128xf32, #tpu.memory_space<vmem>>, vector<8x128xf32>
      tpu.vector_store %arg10[%c0_84, %c0_85], %152 {strides = array<i32>} : memref<8x128xf32, #tpu.memory_space<vmem>>, vector<8x128xf32>,
      %157 = arith.truncf %154 : vector<8x128xf32> to vector<8x128xbf16>
      %c0_86 = arith.constant 0 : index
      %158 = arith.index_cast %112 : i32 to index
      %c0_87 = arith.constant 0 : index
      %c0_88 = arith.constant 0 : index
      %159 = vector.load %arg6[%c0_86, %158, %c0_87, %c0_88] : memref<1x8x8x128xbf16, #tpu.memory_space<vmem>>, vector<1x1x8x128xbf16>
      %160 = vector.shape_cast %159 : vector<1x1x8x128xbf16> to vector<8x128xbf16>
      %161 = vector.shape_cast %157 : vector<8x128xbf16> to vector<1x1x8x128xbf16>
      tpu.vector_store %arg6[%c0_86, %158, %c0_87, %c0_88], %161 {strides = array<i32>} : memref<1x8x8x128xbf16, #tpu.memory_space<vmem>>, vector<1x1x8x128xbf16>,
      %c3_i32 = arith.constant 3 : i32
      %c7_i32_89 = arith.constant 7 : i32
      %162 = arith.subi %c7_i32_89, %c3_i32 : i32
      %c0_90 = arith.constant 0 : index
      %163 = arith.index_cast %162 : i32 to index
      %c0_91 = arith.constant 0 : index
      %c0_92 = arith.constant 0 : index
      %164 = vector.load %arg2[%c0_90, %163, %c0_91, %c0_92] : memref<1x8x8x512xbf16, #tpu.memory_space<vmem>>, vector<1x1x8x512xbf16>
      %165 = vector.shape_cast %164 : vector<1x1x8x512xbf16> to vector<8x512xbf16>
      %c0_93 = arith.constant 0 : index
      %c0_94 = arith.constant 0 : index
      %166 = vector.load %arg9[%c0_93, %c0_94] : memref<8x128xf32, #tpu.memory_space<vmem>>, vector<8x128xf32>
      %167 = arith.truncf %166 : vector<8x128xf32> to vector<8x128xbf16>
      %168 = arith.extf %165 : vector<8x512xbf16> to vector<8x512xf32>
      %c0_95 = arith.constant 0 : index
      %c0_96 = arith.constant 0 : index
      %c0_97 = arith.constant 0 : index
      %169 = vector.load %arg5[%c0_95, %c0_96, %c0_97] : memref<1x128x512xbf16, #tpu.memory_space<vmem>>, vector<1x128x512xbf16>
      %170 = vector.shape_cast %169 : vector<1x128x512xbf16> to vector<128x512xbf16>
      %cst_98 = arith.constant dense<0.000000e+00> : vector<8x512xf32>
      %171 = tpu.matmul %167, %170, %cst_98 {dimension_numbers = #tpu.dot_dimension_numbers<[1], [0], [0], [1], [0, 0, 1, 1], [], []>} : vector<8x128xbf16>, vector<128x512xbf16>, vector<8x512xf32> -> vector<8x512xf32>
      %172 = arith.addf %168, %171 : vector<8x512xf32>
      %173 = vector.extract_strided_slice %172 {offsets = [0, 0], sizes = [8, 128], strides = [1, 1]} : vector<8x512xf32> to vector<8x128xf32>
      %cst_99 = arith.constant 5.000000e-01 : f32
      %174 = vector.broadcast %cst_99 : f32 to vector<8x128xf32>
      %175 = arith.mulf %174, %173 : vector<8x128xf32>
      %176 = math.tanh %175 : vector<8x128xf32>
      %cst_100 = arith.constant 5.000000e-01 : f32
      %177 = vector.broadcast %cst_100 : f32 to vector<8x128xf32>
      %178 = arith.mulf %177, %176 : vector<8x128xf32>
      %cst_101 = arith.constant 5.000000e-01 : f32
      %179 = vector.broadcast %cst_101 : f32 to vector<8x128xf32>
      %180 = arith.addf %178, %179 : vector<8x128xf32>
      %181 = vector.extract_strided_slice %172 {offsets = [0, 128], sizes = [8, 128], strides = [1, 1]} : vector<8x512xf32> to vector<8x128xf32>
      %cst_102 = arith.constant 5.000000e-01 : f32
      %182 = vector.broadcast %cst_102 : f32 to vector<8x128xf32>
      %183 = arith.mulf %182, %181 : vector<8x128xf32>
      %184 = math.tanh %183 : vector<8x128xf32>
      %cst_103 = arith.constant 5.000000e-01 : f32
      %185 = vector.broadcast %cst_103 : f32 to vector<8x128xf32>
      %186 = arith.mulf %185, %184 : vector<8x128xf32>
      %cst_104 = arith.constant 5.000000e-01 : f32
      %187 = vector.broadcast %cst_104 : f32 to vector<8x128xf32>
      %188 = arith.addf %186, %187 : vector<8x128xf32>
      %189 = vector.extract_strided_slice %172 {offsets = [0, 256], sizes = [8, 128], strides = [1, 1]} : vector<8x512xf32> to vector<8x128xf32>
      %190 = math.tanh %189 : vector<8x128xf32>
      %191 = vector.extract_strided_slice %172 {offsets = [0, 384], sizes = [8, 128], strides = [1, 1]} : vector<8x512xf32> to vector<8x128xf32>
      %cst_105 = arith.constant 5.000000e-01 : f32
      %192 = vector.broadcast %cst_105 : f32 to vector<8x128xf32>
      %193 = arith.mulf %192, %191 : vector<8x128xf32>
      %194 = math.tanh %193 : vector<8x128xf32>
      %cst_106 = arith.constant 5.000000e-01 : f32
      %195 = vector.broadcast %cst_106 : f32 to vector<8x128xf32>
      %196 = arith.mulf %195, %194 : vector<8x128xf32>
      %cst_107 = arith.constant 5.000000e-01 : f32
      %197 = vector.broadcast %cst_107 : f32 to vector<8x128xf32>
      %198 = arith.addf %196, %197 : vector<8x128xf32>
      %c0_108 = arith.constant 0 : index
      %c0_109 = arith.constant 0 : index
      %199 = vector.load %arg10[%c0_108, %c0_109] : memref<8x128xf32, #tpu.memory_space<vmem>>, vector<8x128xf32>
      %200 = arith.mulf %188, %199 : vector<8x128xf32>
      %201 = arith.mulf %180, %190 : vector<8x128xf32>
      %202 = arith.addf %200, %201 : vector<8x128xf32>
      %203 = math.tanh %202 : vector<8x128xf32>
      %204 = arith.mulf %198, %203 : vector<8x128xf32>
      %c0_110 = arith.constant 0 : index
      %c0_111 = arith.constant 0 : index
      %205 = vector.load %arg9[%c0_110, %c0_111] : memref<8x128xf32, #tpu.memory_space<vmem>>, vector<8x128xf32>
      tpu.vector_store %arg9[%c0_110, %c0_111], %204 {strides = array<i32>} : memref<8x128xf32, #tpu.memory_space<vmem>>, vector<8x128xf32>,
      %c0_112 = arith.constant 0 : index
      %c0_113 = arith.constant 0 : index
      %206 = vector.load %arg10[%c0_112, %c0_113] : memref<8x128xf32, #tpu.memory_space<vmem>>, vector<8x128xf32>
      tpu.vector_store %arg10[%c0_112, %c0_113], %202 {strides = array<i32>} : memref<8x128xf32, #tpu.memory_space<vmem>>, vector<8x128xf32>,
      %207 = arith.truncf %204 : vector<8x128xf32> to vector<8x128xbf16>
      %c0_114 = arith.constant 0 : index
      %208 = arith.index_cast %162 : i32 to index
      %c0_115 = arith.constant 0 : index
      %c0_116 = arith.constant 0 : index
      %209 = vector.load %arg6[%c0_114, %208, %c0_115, %c0_116] : memref<1x8x8x128xbf16, #tpu.memory_space<vmem>>, vector<1x1x8x128xbf16>
      %210 = vector.shape_cast %209 : vector<1x1x8x128xbf16> to vector<8x128xbf16>
      %211 = vector.shape_cast %207 : vector<8x128xbf16> to vector<1x1x8x128xbf16>
      tpu.vector_store %arg6[%c0_114, %208, %c0_115, %c0_116], %211 {strides = array<i32>} : memref<1x8x8x128xbf16, #tpu.memory_space<vmem>>, vector<1x1x8x128xbf16>,
      %c4_i32 = arith.constant 4 : i32
      %c7_i32_117 = arith.constant 7 : i32
      %212 = arith.subi %c7_i32_117, %c4_i32 : i32
      %c0_118 = arith.constant 0 : index
      %213 = arith.index_cast %212 : i32 to index
      %c0_119 = arith.constant 0 : index
      %c0_120 = arith.constant 0 : index
      %214 = vector.load %arg2[%c0_118, %213, %c0_119, %c0_120] : memref<1x8x8x512xbf16, #tpu.memory_space<vmem>>, vector<1x1x8x512xbf16>
      %215 = vector.shape_cast %214 : vector<1x1x8x512xbf16> to vector<8x512xbf16>
      %c0_121 = arith.constant 0 : index
      %c0_122 = arith.constant 0 : index
      %216 = vector.load %arg9[%c0_121, %c0_122] : memref<8x128xf32, #tpu.memory_space<vmem>>, vector<8x128xf32>
      %217 = arith.truncf %216 : vector<8x128xf32> to vector<8x128xbf16>
      %218 = arith.extf %215 : vector<8x512xbf16> to vector<8x512xf32>
      %c0_123 = arith.constant 0 : index
      %c0_124 = arith.constant 0 : index
      %c0_125 = arith.constant 0 : index
      %219 = vector.load %arg5[%c0_123, %c0_124, %c0_125] : memref<1x128x512xbf16, #tpu.memory_space<vmem>>, vector<1x128x512xbf16>
      %220 = vector.shape_cast %219 : vector<1x128x512xbf16> to vector<128x512xbf16>
      %cst_126 = arith.constant dense<0.000000e+00> : vector<8x512xf32>
      %221 = tpu.matmul %217, %220, %cst_126 {dimension_numbers = #tpu.dot_dimension_numbers<[1], [0], [0], [1], [0, 0, 1, 1], [], []>} : vector<8x128xbf16>, vector<128x512xbf16>, vector<8x512xf32> -> vector<8x512xf32>
      %222 = arith.addf %218, %221 : vector<8x512xf32>
      %223 = vector.extract_strided_slice %222 {offsets = [0, 0], sizes = [8, 128], strides = [1, 1]} : vector<8x512xf32> to vector<8x128xf32>
      %cst_127 = arith.constant 5.000000e-01 : f32
      %224 = vector.broadcast %cst_127 : f32 to vector<8x128xf32>
      %225 = arith.mulf %224, %223 : vector<8x128xf32>
      %226 = math.tanh %225 : vector<8x128xf32>
      %cst_128 = arith.constant 5.000000e-01 : f32
      %227 = vector.broadcast %cst_128 : f32 to vector<8x128xf32>
      %228 = arith.mulf %227, %226 : vector<8x128xf32>
      %cst_129 = arith.constant 5.000000e-01 : f32
      %229 = vector.broadcast %cst_129 : f32 to vector<8x128xf32>
      %230 = arith.addf %228, %229 : vector<8x128xf32>
      %231 = vector.extract_strided_slice %222 {offsets = [0, 128], sizes = [8, 128], strides = [1, 1]} : vector<8x512xf32> to vector<8x128xf32>
      %cst_130 = arith.constant 5.000000e-01 : f32
      %232 = vector.broadcast %cst_130 : f32 to vector<8x128xf32>
      %233 = arith.mulf %232, %231 : vector<8x128xf32>
      %234 = math.tanh %233 : vector<8x128xf32>
      %cst_131 = arith.constant 5.000000e-01 : f32
      %235 = vector.broadcast %cst_131 : f32 to vector<8x128xf32>
      %236 = arith.mulf %235, %234 : vector<8x128xf32>
      %cst_132 = arith.constant 5.000000e-01 : f32
      %237 = vector.broadcast %cst_132 : f32 to vector<8x128xf32>
      %238 = arith.addf %236, %237 : vector<8x128xf32>
      %239 = vector.extract_strided_slice %222 {offsets = [0, 256], sizes = [8, 128], strides = [1, 1]} : vector<8x512xf32> to vector<8x128xf32>
      %240 = math.tanh %239 : vector<8x128xf32>
      %241 = vector.extract_strided_slice %222 {offsets = [0, 384], sizes = [8, 128], strides = [1, 1]} : vector<8x512xf32> to vector<8x128xf32>
      %cst_133 = arith.constant 5.000000e-01 : f32
      %242 = vector.broadcast %cst_133 : f32 to vector<8x128xf32>
      %243 = arith.mulf %242, %241 : vector<8x128xf32>
      %244 = math.tanh %243 : vector<8x128xf32>
      %cst_134 = arith.constant 5.000000e-01 : f32
      %245 = vector.broadcast %cst_134 : f32 to vector<8x128xf32>
      %246 = arith.mulf %245, %244 : vector<8x128xf32>
      %cst_135 = arith.constant 5.000000e-01 : f32
      %247 = vector.broadcast %cst_135 : f32 to vector<8x128xf32>
      %248 = arith.addf %246, %247 : vector<8x128xf32>
      %c0_136 = arith.constant 0 : index
      %c0_137 = arith.constant 0 : index
      %249 = vector.load %arg10[%c0_136, %c0_137] : memref<8x128xf32, #tpu.memory_space<vmem>>, vector<8x128xf32>
      %250 = arith.mulf %238, %249 : vector<8x128xf32>
      %251 = arith.mulf %230, %240 : vector<8x128xf32>
      %252 = arith.addf %250, %251 : vector<8x128xf32>
      %253 = math.tanh %252 : vector<8x128xf32>
      %254 = arith.mulf %248, %253 : vector<8x128xf32>
      %c0_138 = arith.constant 0 : index
      %c0_139 = arith.constant 0 : index
      %255 = vector.load %arg9[%c0_138, %c0_139] : memref<8x128xf32, #tpu.memory_space<vmem>>, vector<8x128xf32>
      tpu.vector_store %arg9[%c0_138, %c0_139], %254 {strides = array<i32>} : memref<8x128xf32, #tpu.memory_space<vmem>>, vector<8x128xf32>,
      %c0_140 = arith.constant 0 : index
      %c0_141 = arith.constant 0 : index
      %256 = vector.load %arg10[%c0_140, %c0_141] : memref<8x128xf32, #tpu.memory_space<vmem>>, vector<8x128xf32>
      tpu.vector_store %arg10[%c0_140, %c0_141], %252 {strides = array<i32>} : memref<8x128xf32, #tpu.memory_space<vmem>>, vector<8x128xf32>,
      %257 = arith.truncf %254 : vector<8x128xf32> to vector<8x128xbf16>
      %c0_142 = arith.constant 0 : index
      %258 = arith.index_cast %212 : i32 to index
      %c0_143 = arith.constant 0 : index
      %c0_144 = arith.constant 0 : index
      %259 = vector.load %arg6[%c0_142, %258, %c0_143, %c0_144] : memref<1x8x8x128xbf16, #tpu.memory_space<vmem>>, vector<1x1x8x128xbf16>
      %260 = vector.shape_cast %259 : vector<1x1x8x128xbf16> to vector<8x128xbf16>
      %261 = vector.shape_cast %257 : vector<8x128xbf16> to vector<1x1x8x128xbf16>
      tpu.vector_store %arg6[%c0_142, %258, %c0_143, %c0_144], %261 {strides = array<i32>} : memref<1x8x8x128xbf16, #tpu.memory_space<vmem>>, vector<1x1x8x128xbf16>,
      %c5_i32 = arith.constant 5 : i32
      %c7_i32_145 = arith.constant 7 : i32
      %262 = arith.subi %c7_i32_145, %c5_i32 : i32
      %c0_146 = arith.constant 0 : index
      %263 = arith.index_cast %262 : i32 to index
      %c0_147 = arith.constant 0 : index
      %c0_148 = arith.constant 0 : index
      %264 = vector.load %arg2[%c0_146, %263, %c0_147, %c0_148] : memref<1x8x8x512xbf16, #tpu.memory_space<vmem>>, vector<1x1x8x512xbf16>
      %265 = vector.shape_cast %264 : vector<1x1x8x512xbf16> to vector<8x512xbf16>
      %c0_149 = arith.constant 0 : index
      %c0_150 = arith.constant 0 : index
      %266 = vector.load %arg9[%c0_149, %c0_150] : memref<8x128xf32, #tpu.memory_space<vmem>>, vector<8x128xf32>
      %267 = arith.truncf %266 : vector<8x128xf32> to vector<8x128xbf16>
      %268 = arith.extf %265 : vector<8x512xbf16> to vector<8x512xf32>
      %c0_151 = arith.constant 0 : index
      %c0_152 = arith.constant 0 : index
      %c0_153 = arith.constant 0 : index
      %269 = vector.load %arg5[%c0_151, %c0_152, %c0_153] : memref<1x128x512xbf16, #tpu.memory_space<vmem>>, vector<1x128x512xbf16>
      %270 = vector.shape_cast %269 : vector<1x128x512xbf16> to vector<128x512xbf16>
      %cst_154 = arith.constant dense<0.000000e+00> : vector<8x512xf32>
      %271 = tpu.matmul %267, %270, %cst_154 {dimension_numbers = #tpu.dot_dimension_numbers<[1], [0], [0], [1], [0, 0, 1, 1], [], []>} : vector<8x128xbf16>, vector<128x512xbf16>, vector<8x512xf32> -> vector<8x512xf32>
      %272 = arith.addf %268, %271 : vector<8x512xf32>
      %273 = vector.extract_strided_slice %272 {offsets = [0, 0], sizes = [8, 128], strides = [1, 1]} : vector<8x512xf32> to vector<8x128xf32>
      %cst_155 = arith.constant 5.000000e-01 : f32
      %274 = vector.broadcast %cst_155 : f32 to vector<8x128xf32>
      %275 = arith.mulf %274, %273 : vector<8x128xf32>
      %276 = math.tanh %275 : vector<8x128xf32>
      %cst_156 = arith.constant 5.000000e-01 : f32
      %277 = vector.broadcast %cst_156 : f32 to vector<8x128xf32>
      %278 = arith.mulf %277, %276 : vector<8x128xf32>
      %cst_157 = arith.constant 5.000000e-01 : f32
      %279 = vector.broadcast %cst_157 : f32 to vector<8x128xf32>
      %280 = arith.addf %278, %279 : vector<8x128xf32>
      %281 = vector.extract_strided_slice %272 {offsets = [0, 128], sizes = [8, 128], strides = [1, 1]} : vector<8x512xf32> to vector<8x128xf32>
      %cst_158 = arith.constant 5.000000e-01 : f32
      %282 = vector.broadcast %cst_158 : f32 to vector<8x128xf32>
      %283 = arith.mulf %282, %281 : vector<8x128xf32>
      %284 = math.tanh %283 : vector<8x128xf32>
      %cst_159 = arith.constant 5.000000e-01 : f32
      %285 = vector.broadcast %cst_159 : f32 to vector<8x128xf32>
      %286 = arith.mulf %285, %284 : vector<8x128xf32>
      %cst_160 = arith.constant 5.000000e-01 : f32
      %287 = vector.broadcast %cst_160 : f32 to vector<8x128xf32>
      %288 = arith.addf %286, %287 : vector<8x128xf32>
      %289 = vector.extract_strided_slice %272 {offsets = [0, 256], sizes = [8, 128], strides = [1, 1]} : vector<8x512xf32> to vector<8x128xf32>
      %290 = math.tanh %289 : vector<8x128xf32>
      %291 = vector.extract_strided_slice %272 {offsets = [0, 384], sizes = [8, 128], strides = [1, 1]} : vector<8x512xf32> to vector<8x128xf32>
      %cst_161 = arith.constant 5.000000e-01 : f32
      %292 = vector.broadcast %cst_161 : f32 to vector<8x128xf32>
      %293 = arith.mulf %292, %291 : vector<8x128xf32>
      %294 = math.tanh %293 : vector<8x128xf32>
      %cst_162 = arith.constant 5.000000e-01 : f32
      %295 = vector.broadcast %cst_162 : f32 to vector<8x128xf32>
      %296 = arith.mulf %295, %294 : vector<8x128xf32>
      %cst_163 = arith.constant 5.000000e-01 : f32
      %297 = vector.broadcast %cst_163 : f32 to vector<8x128xf32>
      %298 = arith.addf %296, %297 : vector<8x128xf32>
      %c0_164 = arith.constant 0 : index
      %c0_165 = arith.constant 0 : index
      %299 = vector.load %arg10[%c0_164, %c0_165] : memref<8x128xf32, #tpu.memory_space<vmem>>, vector<8x128xf32>
      %300 = arith.mulf %288, %299 : vector<8x128xf32>
      %301 = arith.mulf %280, %290 : vector<8x128xf32>
      %302 = arith.addf %300, %301 : vector<8x128xf32>
      %303 = math.tanh %302 : vector<8x128xf32>
      %304 = arith.mulf %298, %303 : vector<8x128xf32>
      %c0_166 = arith.constant 0 : index
      %c0_167 = arith.constant 0 : index
      %305 = vector.load %arg9[%c0_166, %c0_167] : memref<8x128xf32, #tpu.memory_space<vmem>>, vector<8x128xf32>
      tpu.vector_store %arg9[%c0_166, %c0_167], %304 {strides = array<i32>} : memref<8x128xf32, #tpu.memory_space<vmem>>, vector<8x128xf32>,
      %c0_168 = arith.constant 0 : index
      %c0_169 = arith.constant 0 : index
      %306 = vector.load %arg10[%c0_168, %c0_169] : memref<8x128xf32, #tpu.memory_space<vmem>>, vector<8x128xf32>
      tpu.vector_store %arg10[%c0_168, %c0_169], %302 {strides = array<i32>} : memref<8x128xf32, #tpu.memory_space<vmem>>, vector<8x128xf32>,
      %307 = arith.truncf %304 : vector<8x128xf32> to vector<8x128xbf16>
      %c0_170 = arith.constant 0 : index
      %308 = arith.index_cast %262 : i32 to index
      %c0_171 = arith.constant 0 : index
      %c0_172 = arith.constant 0 : index
      %309 = vector.load %arg6[%c0_170, %308, %c0_171, %c0_172] : memref<1x8x8x128xbf16, #tpu.memory_space<vmem>>, vector<1x1x8x128xbf16>
      %310 = vector.shape_cast %309 : vector<1x1x8x128xbf16> to vector<8x128xbf16>
      %311 = vector.shape_cast %307 : vector<8x128xbf16> to vector<1x1x8x128xbf16>
      tpu.vector_store %arg6[%c0_170, %308, %c0_171, %c0_172], %311 {strides = array<i32>} : memref<1x8x8x128xbf16, #tpu.memory_space<vmem>>, vector<1x1x8x128xbf16>,
      %c6_i32 = arith.constant 6 : i32
      %c7_i32_173 = arith.constant 7 : i32
      %312 = arith.subi %c7_i32_173, %c6_i32 : i32
      %c0_174 = arith.constant 0 : index
      %313 = arith.index_cast %312 : i32 to index
      %c0_175 = arith.constant 0 : index
      %c0_176 = arith.constant 0 : index
      %314 = vector.load %arg2[%c0_174, %313, %c0_175, %c0_176] : memref<1x8x8x512xbf16, #tpu.memory_space<vmem>>, vector<1x1x8x512xbf16>
      %315 = vector.shape_cast %314 : vector<1x1x8x512xbf16> to vector<8x512xbf16>
      %c0_177 = arith.constant 0 : index
      %c0_178 = arith.constant 0 : index
      %316 = vector.load %arg9[%c0_177, %c0_178] : memref<8x128xf32, #tpu.memory_space<vmem>>, vector<8x128xf32>
      %317 = arith.truncf %316 : vector<8x128xf32> to vector<8x128xbf16>
      %318 = arith.extf %315 : vector<8x512xbf16> to vector<8x512xf32>
      %c0_179 = arith.constant 0 : index
      %c0_180 = arith.constant 0 : index
      %c0_181 = arith.constant 0 : index
      %319 = vector.load %arg5[%c0_179, %c0_180, %c0_181] : memref<1x128x512xbf16, #tpu.memory_space<vmem>>, vector<1x128x512xbf16>
      %320 = vector.shape_cast %319 : vector<1x128x512xbf16> to vector<128x512xbf16>
      %cst_182 = arith.constant dense<0.000000e+00> : vector<8x512xf32>
      %321 = tpu.matmul %317, %320, %cst_182 {dimension_numbers = #tpu.dot_dimension_numbers<[1], [0], [0], [1], [0, 0, 1, 1], [], []>} : vector<8x128xbf16>, vector<128x512xbf16>, vector<8x512xf32> -> vector<8x512xf32>
      %322 = arith.addf %318, %321 : vector<8x512xf32>
      %323 = vector.extract_strided_slice %322 {offsets = [0, 0], sizes = [8, 128], strides = [1, 1]} : vector<8x512xf32> to vector<8x128xf32>
      %cst_183 = arith.constant 5.000000e-01 : f32
      %324 = vector.broadcast %cst_183 : f32 to vector<8x128xf32>
      %325 = arith.mulf %324, %323 : vector<8x128xf32>
      %326 = math.tanh %325 : vector<8x128xf32>
      %cst_184 = arith.constant 5.000000e-01 : f32
      %327 = vector.broadcast %cst_184 : f32 to vector<8x128xf32>
      %328 = arith.mulf %327, %326 : vector<8x128xf32>
      %cst_185 = arith.constant 5.000000e-01 : f32
      %329 = vector.broadcast %cst_185 : f32 to vector<8x128xf32>
      %330 = arith.addf %328, %329 : vector<8x128xf32>
      %331 = vector.extract_strided_slice %322 {offsets = [0, 128], sizes = [8, 128], strides = [1, 1]} : vector<8x512xf32> to vector<8x128xf32>
      %cst_186 = arith.constant 5.000000e-01 : f32
      %332 = vector.broadcast %cst_186 : f32 to vector<8x128xf32>
      %333 = arith.mulf %332, %331 : vector<8x128xf32>
      %334 = math.tanh %333 : vector<8x128xf32>
      %cst_187 = arith.constant 5.000000e-01 : f32
      %335 = vector.broadcast %cst_187 : f32 to vector<8x128xf32>
      %336 = arith.mulf %335, %334 : vector<8x128xf32>
      %cst_188 = arith.constant 5.000000e-01 : f32
      %337 = vector.broadcast %cst_188 : f32 to vector<8x128xf32>
      %338 = arith.addf %336, %337 : vector<8x128xf32>
      %339 = vector.extract_strided_slice %322 {offsets = [0, 256], sizes = [8, 128], strides = [1, 1]} : vector<8x512xf32> to vector<8x128xf32>
      %340 = math.tanh %339 : vector<8x128xf32>
      %341 = vector.extract_strided_slice %322 {offsets = [0, 384], sizes = [8, 128], strides = [1, 1]} : vector<8x512xf32> to vector<8x128xf32>
      %cst_189 = arith.constant 5.000000e-01 : f32
      %342 = vector.broadcast %cst_189 : f32 to vector<8x128xf32>
      %343 = arith.mulf %342, %341 : vector<8x128xf32>
      %344 = math.tanh %343 : vector<8x128xf32>
      %cst_190 = arith.constant 5.000000e-01 : f32
      %345 = vector.broadcast %cst_190 : f32 to vector<8x128xf32>
      %346 = arith.mulf %345, %344 : vector<8x128xf32>
      %cst_191 = arith.constant 5.000000e-01 : f32
      %347 = vector.broadcast %cst_191 : f32 to vector<8x128xf32>
      %348 = arith.addf %346, %347 : vector<8x128xf32>
      %c0_192 = arith.constant 0 : index
      %c0_193 = arith.constant 0 : index
      %349 = vector.load %arg10[%c0_192, %c0_193] : memref<8x128xf32, #tpu.memory_space<vmem>>, vector<8x128xf32>
      %350 = arith.mulf %338, %349 : vector<8x128xf32>
      %351 = arith.mulf %330, %340 : vector<8x128xf32>
      %352 = arith.addf %350, %351 : vector<8x128xf32>
      %353 = math.tanh %352 : vector<8x128xf32>
      %354 = arith.mulf %348, %353 : vector<8x128xf32>
      %c0_194 = arith.constant 0 : index
      %c0_195 = arith.constant 0 : index
      %355 = vector.load %arg9[%c0_194, %c0_195] : memref<8x128xf32, #tpu.memory_space<vmem>>, vector<8x128xf32>
      tpu.vector_store %arg9[%c0_194, %c0_195], %354 {strides = array<i32>} : memref<8x128xf32, #tpu.memory_space<vmem>>, vector<8x128xf32>,
      %c0_196 = arith.constant 0 : index
      %c0_197 = arith.constant 0 : index
      %356 = vector.load %arg10[%c0_196, %c0_197] : memref<8x128xf32, #tpu.memory_space<vmem>>, vector<8x128xf32>
      tpu.vector_store %arg10[%c0_196, %c0_197], %352 {strides = array<i32>} : memref<8x128xf32, #tpu.memory_space<vmem>>, vector<8x128xf32>,
      %357 = arith.truncf %354 : vector<8x128xf32> to vector<8x128xbf16>
      %c0_198 = arith.constant 0 : index
      %358 = arith.index_cast %312 : i32 to index
      %c0_199 = arith.constant 0 : index
      %c0_200 = arith.constant 0 : index
      %359 = vector.load %arg6[%c0_198, %358, %c0_199, %c0_200] : memref<1x8x8x128xbf16, #tpu.memory_space<vmem>>, vector<1x1x8x128xbf16>
      %360 = vector.shape_cast %359 : vector<1x1x8x128xbf16> to vector<8x128xbf16>
      %361 = vector.shape_cast %357 : vector<8x128xbf16> to vector<1x1x8x128xbf16>
      tpu.vector_store %arg6[%c0_198, %358, %c0_199, %c0_200], %361 {strides = array<i32>} : memref<1x8x8x128xbf16, #tpu.memory_space<vmem>>, vector<1x1x8x128xbf16>,
      %c7_i32_201 = arith.constant 7 : i32
      %c7_i32_202 = arith.constant 7 : i32
      %362 = arith.subi %c7_i32_202, %c7_i32_201 : i32
      %c0_203 = arith.constant 0 : index
      %363 = arith.index_cast %362 : i32 to index
      %c0_204 = arith.constant 0 : index
      %c0_205 = arith.constant 0 : index
      %364 = vector.load %arg2[%c0_203, %363, %c0_204, %c0_205] : memref<1x8x8x512xbf16, #tpu.memory_space<vmem>>, vector<1x1x8x512xbf16>
      %365 = vector.shape_cast %364 : vector<1x1x8x512xbf16> to vector<8x512xbf16>
      %c0_206 = arith.constant 0 : index
      %c0_207 = arith.constant 0 : index
      %366 = vector.load %arg9[%c0_206, %c0_207] : memref<8x128xf32, #tpu.memory_space<vmem>>, vector<8x128xf32>
      %367 = arith.truncf %366 : vector<8x128xf32> to vector<8x128xbf16>
      %368 = arith.extf %365 : vector<8x512xbf16> to vector<8x512xf32>
      %c0_208 = arith.constant 0 : index
      %c0_209 = arith.constant 0 : index
      %c0_210 = arith.constant 0 : index
      %369 = vector.load %arg5[%c0_208, %c0_209, %c0_210] : memref<1x128x512xbf16, #tpu.memory_space<vmem>>, vector<1x128x512xbf16>
      %370 = vector.shape_cast %369 : vector<1x128x512xbf16> to vector<128x512xbf16>
      %cst_211 = arith.constant dense<0.000000e+00> : vector<8x512xf32>
      %371 = tpu.matmul %367, %370, %cst_211 {dimension_numbers = #tpu.dot_dimension_numbers<[1], [0], [0], [1], [0, 0, 1, 1], [], []>} : vector<8x128xbf16>, vector<128x512xbf16>, vector<8x512xf32> -> vector<8x512xf32>
      %372 = arith.addf %368, %371 : vector<8x512xf32>
      %373 = vector.extract_strided_slice %372 {offsets = [0, 0], sizes = [8, 128], strides = [1, 1]} : vector<8x512xf32> to vector<8x128xf32>
      %cst_212 = arith.constant 5.000000e-01 : f32
      %374 = vector.broadcast %cst_212 : f32 to vector<8x128xf32>
      %375 = arith.mulf %374, %373 : vector<8x128xf32>
      %376 = math.tanh %375 : vector<8x128xf32>
      %cst_213 = arith.constant 5.000000e-01 : f32
      %377 = vector.broadcast %cst_213 : f32 to vector<8x128xf32>
      %378 = arith.mulf %377, %376 : vector<8x128xf32>
      %cst_214 = arith.constant 5.000000e-01 : f32
      %379 = vector.broadcast %cst_214 : f32 to vector<8x128xf32>
      %380 = arith.addf %378, %379 : vector<8x128xf32>
      %381 = vector.extract_strided_slice %372 {offsets = [0, 128], sizes = [8, 128], strides = [1, 1]} : vector<8x512xf32> to vector<8x128xf32>
      %cst_215 = arith.constant 5.000000e-01 : f32
      %382 = vector.broadcast %cst_215 : f32 to vector<8x128xf32>
      %383 = arith.mulf %382, %381 : vector<8x128xf32>
      %384 = math.tanh %383 : vector<8x128xf32>
      %cst_216 = arith.constant 5.000000e-01 : f32
      %385 = vector.broadcast %cst_216 : f32 to vector<8x128xf32>
      %386 = arith.mulf %385, %384 : vector<8x128xf32>
      %cst_217 = arith.constant 5.000000e-01 : f32
      %387 = vector.broadcast %cst_217 : f32 to vector<8x128xf32>
      %388 = arith.addf %386, %387 : vector<8x128xf32>
      %389 = vector.extract_strided_slice %372 {offsets = [0, 256], sizes = [8, 128], strides = [1, 1]} : vector<8x512xf32> to vector<8x128xf32>
      %390 = math.tanh %389 : vector<8x128xf32>
      %391 = vector.extract_strided_slice %372 {offsets = [0, 384], sizes = [8, 128], strides = [1, 1]} : vector<8x512xf32> to vector<8x128xf32>
      %cst_218 = arith.constant 5.000000e-01 : f32
      %392 = vector.broadcast %cst_218 : f32 to vector<8x128xf32>
      %393 = arith.mulf %392, %391 : vector<8x128xf32>
      %394 = math.tanh %393 : vector<8x128xf32>
      %cst_219 = arith.constant 5.000000e-01 : f32
      %395 = vector.broadcast %cst_219 : f32 to vector<8x128xf32>
      %396 = arith.mulf %395, %394 : vector<8x128xf32>
      %cst_220 = arith.constant 5.000000e-01 : f32
      %397 = vector.broadcast %cst_220 : f32 to vector<8x128xf32>
      %398 = arith.addf %396, %397 : vector<8x128xf32>
      %c0_221 = arith.constant 0 : index
      %c0_222 = arith.constant 0 : index
      %399 = vector.load %arg10[%c0_221, %c0_222] : memref<8x128xf32, #tpu.memory_space<vmem>>, vector<8x128xf32>
      %400 = arith.mulf %388, %399 : vector<8x128xf32>
      %401 = arith.mulf %380, %390 : vector<8x128xf32>
      %402 = arith.addf %400, %401 : vector<8x128xf32>
      %403 = math.tanh %402 : vector<8x128xf32>
      %404 = arith.mulf %398, %403 : vector<8x128xf32>
      %c0_223 = arith.constant 0 : index
      %c0_224 = arith.constant 0 : index
      %405 = vector.load %arg9[%c0_223, %c0_224] : memref<8x128xf32, #tpu.memory_space<vmem>>, vector<8x128xf32>
      tpu.vector_store %arg9[%c0_223, %c0_224], %404 {strides = array<i32>} : memref<8x128xf32, #tpu.memory_space<vmem>>, vector<8x128xf32>,
      %c0_225 = arith.constant 0 : index
      %c0_226 = arith.constant 0 : index
      %406 = vector.load %arg10[%c0_225, %c0_226] : memref<8x128xf32, #tpu.memory_space<vmem>>, vector<8x128xf32>
      tpu.vector_store %arg10[%c0_225, %c0_226], %402 {strides = array<i32>} : memref<8x128xf32, #tpu.memory_space<vmem>>, vector<8x128xf32>,
      %407 = arith.truncf %404 : vector<8x128xf32> to vector<8x128xbf16>
      %c0_227 = arith.constant 0 : index
      %408 = arith.index_cast %362 : i32 to index
      %c0_228 = arith.constant 0 : index
      %c0_229 = arith.constant 0 : index
      %409 = vector.load %arg6[%c0_227, %408, %c0_228, %c0_229] : memref<1x8x8x128xbf16, #tpu.memory_space<vmem>>, vector<1x1x8x128xbf16>
      %410 = vector.shape_cast %409 : vector<1x1x8x128xbf16> to vector<8x128xbf16>
      %411 = vector.shape_cast %407 : vector<8x128xbf16> to vector<1x1x8x128xbf16>
      tpu.vector_store %arg6[%c0_227, %408, %c0_228, %c0_229], %411 {strides = array<i32>} : memref<1x8x8x128xbf16, #tpu.memory_space<vmem>>, vector<1x1x8x128xbf16>,
      %c8_i32 = arith.constant 8 : i32
    } else {
    }
    %c0_i32_4 = arith.constant 0 : i32
    %9 = arith.cmpi eq, %arg1, %c0_i32_4 : i32
    %10 = arith.extui %9 : i1 to i32
    %c0_i32_5 = arith.constant 0 : i32
    %11 = arith.cmpi ne, %10, %c0_i32_5 : i32
    scf.if %11 {
      %c0 = arith.constant 0 : index
      %c0_6 = arith.constant 0 : index
      %12 = vector.load %arg9[%c0, %c0_6] : memref<8x128xf32, #tpu.memory_space<vmem>>, vector<8x128xf32>
      %c0_7 = arith.constant 0 : index
      %c0_8 = arith.constant 0 : index
      %c0_9 = arith.constant 0 : index
      %13 = vector.load %arg7[%c0_7, %c0_8, %c0_9] : memref<1x8x128xf32, #tpu.memory_space<vmem>>, vector<1x8x128xf32>
      %14 = vector.shape_cast %13 : vector<1x8x128xf32> to vector<8x128xf32>
      %15 = vector.shape_cast %12 : vector<8x128xf32> to vector<1x8x128xf32>
      tpu.vector_store %arg7[%c0_7, %c0_8, %c0_9], %15 {strides = array<i32>} : memref<1x8x128xf32, #tpu.memory_space<vmem>>, vector<1x8x128xf32>,
      %c0_10 = arith.constant 0 : index
      %c0_11 = arith.constant 0 : index
      %16 = vector.load %arg10[%c0_10, %c0_11] : memref<8x128xf32, #tpu.memory_space<vmem>>, vector<8x128xf32>
      %c0_12 = arith.constant 0 : index
      %c0_13 = arith.constant 0 : index
      %c0_14 = arith.constant 0 : index
      %17 = vector.load %arg8[%c0_12, %c0_13, %c0_14] : memref<1x8x128xf32, #tpu.memory_space<vmem>>, vector<1x8x128xf32>
      %18 = vector.shape_cast %17 : vector<1x8x128xf32> to vector<8x128xf32>
      %19 = vector.shape_cast %16 : vector<8x128xf32> to vector<1x8x128xf32>
      tpu.vector_store %arg8[%c0_12, %c0_13, %c0_14], %19 {strides = array<i32>} : memref<1x8x128xf32, #tpu.memory_space<vmem>>, vector<1x8x128xf32>,
    } else {
    }
    return
  }
  func.func @transform_0(%arg0: i32, %arg1: i32) -> (i32, i32, i32, i32) {
    %c2_i32 = arith.constant 2 : i32
    %0 = arith.muli %c2_i32, %arg1 : i32
    %c0_i32 = arith.constant 0 : i32
    %1 = arith.subi %c0_i32, %0 : i32
    %2 = arith.muli %arg0, %1 : i32
    %3 = arith.addi %arg1, %2 : i32
    %c0_i32_0 = arith.constant 0 : i32
    %c0_i32_1 = arith.constant 0 : i32
    %c0_i32_2 = arith.constant 0 : i32
    return %arg0, %3, %c0_i32_0, %c0_i32_1 : i32, i32, i32, i32
  }
  func.func @transform_1(%arg0: i32, %arg1: i32) -> (i32, i32, i32) {
    %c0_i32 = arith.constant 0 : i32
    %c0_i32_0 = arith.constant 0 : i32
    %c0_i32_1 = arith.constant 0 : i32
    return %arg0, %c0_i32, %c0_i32_0 : i32, i32, i32
  }
  func.func @transform_2(%arg0: i32, %arg1: i32) -> (i32, i32, i32) {
    %c0_i32 = arith.constant 0 : i32
    %c0_i32_0 = arith.constant 0 : i32
    %c0_i32_1 = arith.constant 0 : i32
    return %arg0, %c0_i32, %c0_i32_0 : i32, i32, i32
  }
  func.func @transform_3(%arg0: i32, %arg1: i32) -> (i32, i32, i32) {
    %c0_i32 = arith.constant 0 : i32
    %c0_i32_0 = arith.constant 0 : i32
    %c0_i32_1 = arith.constant 0 : i32
    return %arg0, %c0_i32, %c0_i32_0 : i32, i32, i32
  }
  func.func @transform_4(%arg0: i32, %arg1: i32) -> (i32, i32, i32, i32) {
    %c2_i32 = arith.constant 2 : i32
    %0 = arith.muli %c2_i32, %arg1 : i32
    %c0_i32 = arith.constant 0 : i32
    %1 = arith.subi %c0_i32, %0 : i32
    %2 = arith.muli %arg0, %1 : i32
    %3 = arith.addi %arg1, %2 : i32
    %c0_i32_0 = arith.constant 0 : i32
    %c0_i32_1 = arith.constant 0 : i32
    %c0_i32_2 = arith.constant 0 : i32
    return %arg0, %3, %c0_i32_0, %c0_i32_1 : i32, i32, i32, i32
  }
  func.func @transform_5(%arg0: i32, %arg1: i32) -> (i32, i32, i32) {
    %c0_i32 = arith.constant 0 : i32
    %c0_i32_0 = arith.constant 0 : i32
    %c0_i32_1 = arith.constant 0 : i32
    return %arg0, %c0_i32, %c0_i32_0 : i32, i32, i32
  }
  func.func @transform_6(%arg0: i32, %arg1: i32) -> (i32, i32, i32) {
    %c0_i32 = arith.constant 0 : i32
    %c0_i32_0 = arith.constant 0 : i32
    %c0_i32_1 = arith.constant 0 : i32
    return %arg0, %c0_i32, %c0_i32_0 : i32, i32, i32
  }
}

</mosaic_0001>

<llo_original>
// kernel: bilstm_forward.1
$region0: #{bilstm_forward.1}
  #allocation0 [shape = 'u32[]', space=smem, size = 0x4, offset = 0x4, fixed_abs, tag = 'smem constant byte address 0x4 - core index']
  #allocation1 [shape = 'u32[144,128]{1,0:T(1,128)}', space=vmem, size = 0x12000, scoped, tag = 'internal scratch']
  #allocation2 [shape = 'f32[8,128]{1,0:T(8,128)}', space=vmem, size = 0x1000, scoped, tag = 'scratch operand']
  #allocation3 [shape = 'f32[8,128]{1,0:T(8,128)}', space=vmem, size = 0x1000, scoped, tag = 'scratch operand']
  %s0 = inlined_call_operand.vmem [shape: bf16[2,8,8,512], index: 0, kind: input, shape index: {}]
  %s1 = inlined_call_operand.vmem [shape: f32[2,8,128], index: 1, kind: input, shape index: {}]
  %s2 = inlined_call_operand.vmem [shape: f32[2,8,128], index: 2, kind: input, shape index: {}]
  %s3 = inlined_call_operand.vmem [shape: bf16[2,128,512], index: 3, kind: input, shape index: {}]
  %s4 = inlined_call_operand.vmem [shape: bf16[2,8,8,128], index: 4, kind: output, shape index: {0}]
  %s5 = inlined_call_operand.vmem [shape: f32[2,8,128], index: 5, kind: output, shape index: {1}]
  %s6 = inlined_call_operand.vmem [shape: f32[2,8,128], index: 6, kind: output, shape index: {2}]
  %7 = xla_tuple %s4, %s5, %s6
  %s8 = sld [smem:[#allocation0]]
  $region81: #{bilstm_forward.1} parent=0
    _
  %s10 = ssub.s32 1, %s8
  %s11 = scalar_select 0, %s10, %s8
  loop: start=0, step=1, limit=4
  $region2: #{bilstm_forward.1} parent=0 // loop_pre_header
    _
  $region3: #{bilstm_forward.1} parent=0 // loop_header
    %s13 = sphi 0, %s17
    %p14 = scmp.ge.s32.totalorder %s13, 4
    %s20 = sphi 0, %s32
    %s21 = sphi 0, %s28
    %s22 = sphi 0, %s20
    %s23 = sphi 0, %s21
    %s24 = sphi 0, %s22
    %s25 = sphi 0, %s23
    %s45 = sphi 0, %s47
    %s48 = sphi 0, %s45
    %s49 = sphi 0, %s48
    %s65 = sphi 0, %s49
    %s71 = sphi 0, %s73
    %s74 = sphi 0, %s71
    %s75 = sphi 0, %s74
    %s91 = sphi 0, %s75
    %s97 = sphi 0, %s99
    %s100 = sphi 0, %s97
    %s101 = sphi 0, %s100
    %s117 = sphi 0, %s101
    %s123 = sphi 0, %s125
    %s126 = sphi 0, %s123
    %s127 = sphi 0, %s126
    %s143 = sphi 0, %s127
    %s159 = sphi 0, %s161
    %s162 = sphi 0, %s159
    %s163 = sphi 0, %s162
    %s179 = sphi 0, %s163
    %s185 = sphi 0, %s187
    %s188 = sphi 0, %s185
    %s189 = sphi 0, %s188
    %s205 = sphi 0, %s189
    %s211 = sphi 0, %s213
    %s214 = sphi 0, %s211
    %s215 = sphi 0, %s214
    %s231 = sphi 0, %s215
  $region4: #{bilstm_forward.1} parent=0 // loop_header_branch
    %16 = sbr.rel (%p14) target = $region8
  $region5: #{bilstm_forward.1} parent=0 // loop_body
    %s18 = ssub.s32 %s13, 1
    %s19 = ssub.s32 %s13, 2
    %s26 = sadd.s32 1, %s21
    %p27 = scmp.ge.s32.totalorder %s26, 1
    %s28 = scalar_select %p27, 0, %s26
    %s29 = sadd.s32 1, %s20
    %s30 = scalar_select %p27, %s29, %s20
    %p31 = scmp.ge.s32.totalorder %s30, 2
    %s32 = scalar_select %p31, 0, %s30
    %s33 = smul.u32 %s21, 2
    %s34 = ssub.s32 0, %s33
    %s35 = smul.u32 %s20, %s34
    %s36 = sadd.s32 %s21, %s35
    %s37 = smul.u32 %s28, 2
    %s38 = ssub.s32 0, %s37
    %s39 = smul.u32 %s32, %s38
    %s40 = sadd.s32 %s28, %s39
    %s41 = ssub.s32 %s20, %s32
    %s42 = ssub.s32 %s36, %s40
    %s43 = sor.u32 %s41, %s42
    %p44 = scmp.eq.s32.totalorder %s43, 0
    %s46 = sadd.s32 %s45, 1
    %s47 = scalar_select %p44, %s45, %s46
    %p50 = pneg %p44
    %p51 = scmp.eq.s32.totalorder %s13, 1
    %p52 = por %p50, %p51
    %p53 = scmp.ne.s32.totalorder %s45, %s48
    %p54 = scmp.eq.s32.totalorder %s13, 0
    %p55 = por %p53, %p54
    %p56 = scmp.ne.s32.totalorder %s45, %s48
    %p57 = scmp.eq.s32.totalorder %s18, 1
    %p58 = por %p56, %p57
    %p59 = scmp.ne.s32.totalorder %s48, %s49
    %p60 = scmp.eq.s32.totalorder %s18, 0
    %p61 = por %p59, %p60
    %p62 = scmp.ne.s32.totalorder %s48, %s49
    %p63 = scmp.eq.s32.totalorder %s19, 1
    %p64 = por %p62, %p63
    %p66 = scmp.ne.s32.totalorder %s49, %s65
    %p67 = scmp.eq.s32.totalorder %s19, 0
    %p68 = por %p66, %p67
    %s69 = ssub.s32 %s20, %s32
    %p70 = scmp.eq.s32.totalorder %s69, 0
    %s72 = sadd.s32 %s71, 1
    %s73 = scalar_select %p70, %s71, %s72
    %p76 = pneg %p70
    %p77 = scmp.eq.s32.totalorder %s13, 1
    %p78 = por %p76, %p77
    %p79 = scmp.ne.s32.totalorder %s71, %s74
    %p80 = scmp.eq.s32.totalorder %s13, 0
    %p81 = por %p79, %p80
    %p82 = scmp.ne.s32.totalorder %s71, %s74
    %p83 = scmp.eq.s32.totalorder %s18, 1
    %p84 = por %p82, %p83
    %p85 = scmp.ne.s32.totalorder %s74, %s75
    %p86 = scmp.eq.s32.totalorder %s18, 0
    %p87 = por %p85, %p86
    %p88 = scmp.ne.s32.totalorder %s74, %s75
    %p89 = scmp.eq.s32.totalorder %s19, 1
    %p90 = por %p88, %p89
    %p92 = scmp.ne.s32.totalorder %s75, %s91
    %p93 = scmp.eq.s32.totalorder %s19, 0
    %p94 = por %p92, %p93
    %s95 = ssub.s32 %s20, %s32
    %p96 = scmp.eq.s32.totalorder %s95, 0
    %s98 = sadd.s32 %s97, 1
    %s99 = scalar_select %p96, %s97, %s98
    %p102 = pneg %p96
    %p103 = scmp.eq.s32.totalorder %s13, 1
    %p104 = por %p102, %p103
    %p105 = scmp.ne.s32.totalorder %s97, %s100
    %p106 = scmp.eq.s32.totalorder %s13, 0
    %p107 = por %p105, %p106
    %p108 = scmp.ne.s32.totalorder %s97, %s100
    %p109 = scmp.eq.s32.totalorder %s18, 1
    %p110 = por %p108, %p109
    %p111 = scmp.ne.s32.totalorder %s100, %s101
    %p112 = scmp.eq.s32.totalorder %s18, 0
    %p113 = por %p111, %p112
    %p114 = scmp.ne.s32.totalorder %s100, %s101
    %p115 = scmp.eq.s32.totalorder %s19, 1
    %p116 = por %p114, %p115
    %p118 = scmp.ne.s32.totalorder %s101, %s117
    %p119 = scmp.eq.s32.totalorder %s19, 0
    %p120 = por %p118, %p119
    %s121 = ssub.s32 %s20, %s32
    %p122 = scmp.eq.s32.totalorder %s121, 0
    %s124 = sadd.s32 %s123, 1
    %s125 = scalar_select %p122, %s123, %s124
    %p128 = pneg %p122
    %p129 = scmp.eq.s32.totalorder %s13, 1
    %p130 = por %p128, %p129
    %p131 = scmp.ne.s32.totalorder %s123, %s126
    %p132 = scmp.eq.s32.totalorder %s13, 0
    %p133 = por %p131, %p132
    %p134 = scmp.ne.s32.totalorder %s123, %s126
    %p135 = scmp.eq.s32.totalorder %s18, 1
    %p136 = por %p134, %p135
    %p137 = scmp.ne.s32.totalorder %s126, %s127
    %p138 = scmp.eq.s32.totalorder %s18, 0
    %p139 = por %p137, %p138
    %p140 = scmp.ne.s32.totalorder %s126, %s127
    %p141 = scmp.eq.s32.totalorder %s19, 1
    %p142 = por %p140, %p141
    %p144 = scmp.ne.s32.totalorder %s127, %s143
    %p145 = scmp.eq.s32.totalorder %s19, 0
    %p146 = por %p144, %p145
    %s147 = smul.u32 %s21, 2
    %s148 = ssub.s32 0, %s147
    %s149 = smul.u32 %s20, %s148
    %s150 = sadd.s32 %s21, %s149
    %s151 = smul.u32 %s28, 2
    %s152 = ssub.s32 0, %s151
    %s153 = smul.u32 %s32, %s152
    %s154 = sadd.s32 %s28, %s153
    %s155 = ssub.s32 %s20, %s32
    %s156 = ssub.s32 %s150, %s154
    %s157 = sor.u32 %s155, %s156
    %p158 = scmp.eq.s32.totalorder %s157, 0
    %s160 = sadd.s32 %s159, 1
    %s161 = scalar_select %p158, %s159, %s160
    %p164 = pneg %p158
    %p165 = scmp.eq.s32.totalorder %s13, 1
    %p166 = por %p164, %p165
    %p167 = scmp.ne.s32.totalorder %s159, %s162
    %p168 = scmp.eq.s32.totalorder %s13, 0
    %p169 = por %p167, %p168
    %p170 = scmp.ne.s32.totalorder %s159, %s162
    %p171 = scmp.eq.s32.totalorder %s18, 1
    %p172 = por %p170, %p171
    %p173 = scmp.ne.s32.totalorder %s162, %s163
    %p174 = scmp.eq.s32.totalorder %s18, 0
    %p175 = por %p173, %p174
    %p176 = scmp.ne.s32.totalorder %s162, %s163
    %p177 = scmp.eq.s32.totalorder %s19, 1
    %p178 = por %p176, %p177
    %p180 = scmp.ne.s32.totalorder %s163, %s179
    %p181 = scmp.eq.s32.totalorder %s19, 0
    %p182 = por %p180, %p181
    %s183 = ssub.s32 %s20, %s32
    %p184 = scmp.eq.s32.totalorder %s183, 0
    %s186 = sadd.s32 %s185, 1
    %s187 = scalar_select %p184, %s185, %s186
    %p190 = pneg %p184
    %p191 = scmp.eq.s32.totalorder %s13, 1
    %p192 = por %p190, %p191
    %p193 = scmp.ne.s32.totalorder %s185, %s188
    %p194 = scmp.eq.s32.totalorder %s13, 0
    %p195 = por %p193, %p194
    %p196 = scmp.ne.s32.totalorder %s185, %s188
    %p197 = scmp.eq.s32.totalorder %s18, 1
    %p198 = por %p196, %p197
    %p199 = scmp.ne.s32.totalorder %s188, %s189
    %p200 = scmp.eq.s32.totalorder %s18, 0
    %p201 = por %p199, %p200
    %p202 = scmp.ne.s32.totalorder %s188, %s189
    %p203 = scmp.eq.s32.totalorder %s19, 1
    %p204 = por %p202, %p203
    %p206 = scmp.ne.s32.totalorder %s189, %s205
    %p207 = scmp.eq.s32.totalorder %s19, 0
    %p208 = por %p206, %p207
    %s209 = ssub.s32 %s20, %s32
    %p210 = scmp.eq.s32.totalorder %s209, 0
    %s212 = sadd.s32 %s211, 1
    %s213 = scalar_select %p210, %s211, %s212
    %p216 = pneg %p210
    %p217 = scmp.eq.s32.totalorder %s13, 1
    %p218 = por %p216, %p217
    %p219 = scmp.ne.s32.totalorder %s211, %s214
    %p220 = scmp.eq.s32.totalorder %s13, 0
    %p221 = por %p219, %p220
    %p222 = scmp.ne.s32.totalorder %s211, %s214
    %p223 = scmp.eq.s32.totalorder %s18, 1
    %p224 = por %p222, %p223
    %p225 = scmp.ne.s32.totalorder %s214, %s215
    %p226 = scmp.eq.s32.totalorder %s18, 0
    %p227 = por %p225, %p226
    %p228 = scmp.ne.s32.totalorder %s214, %s215
    %p229 = scmp.eq.s32.totalorder %s19, 1
    %p230 = por %p228, %p229
    %p232 = scmp.ne.s32.totalorder %s215, %s231
    %p233 = scmp.eq.s32.totalorder %s19, 0
    %p234 = por %p232, %p233
    %p235 = scmp.le.s32.totalorder 1, %s13
    %p236 = scmp.lt.s32.totalorder %s13, 3
    %p237 = pnand %p235, %p236
    %p238 = pneg %p237
    // Predicated region
    $region9: #{bilstm_forward.1} parent=5 // pred_check
      _
    $region10: #{bilstm_forward.1} parent=5 // pred_check_branch
      %240 = sbr.rel (%p237) target = $region12
    $region11: #{bilstm_forward.1} parent=5 // pred_region
      %s241 = ssub.s32 %s13, 1
      // Predicated region
      $region13: #{bilstm_forward.1} parent=11 // pred_check
        %p242 = pneg %p87
      $region14: #{bilstm_forward.1} parent=11 // pred_check_branch
        %244 = sbr.rel (%p242) target = $region16
      $region15: #{bilstm_forward.1} parent=11 // pred_region
        %p245 = scmp.lt.s32.totalorder %s22, 1
        %s246 = scalar_select %p245, %s22, 1
        %s247 = smul.addr %s246, 8
        %s248 = scalar_lea.vmem %s1, %s247
      $region16: #{bilstm_forward.1} parent=11 // pred_fallthru
        _
      // Predicated region
      $region17: #{bilstm_forward.1} parent=11 // pred_check
        %p249 = pneg %p113
      $region18: #{bilstm_forward.1} parent=11 // pred_check_branch
        %251 = sbr.rel (%p249) target = $region20
      $region19: #{bilstm_forward.1} parent=11 // pred_region
        %p252 = scmp.lt.s32.totalorder %s22, 1
        %s253 = scalar_select %p252, %s22, 1
        %s254 = smul.addr %s253, 8
        %s255 = scalar_lea.vmem %s2, %s254
      $region20: #{bilstm_forward.1} parent=11 // pred_fallthru
        _
      // Predicated region
      $region21: #{bilstm_forward.1} parent=11 // pred_check
        %p256 = pneg %p139
      $region22: #{bilstm_forward.1} parent=11 // pred_check_branch
        %258 = sbr.rel (%p256) target = $region24
      $region23: #{bilstm_forward.1} parent=11 // pred_region
        %p259 = scmp.lt.s32.totalorder %s22, 1
        %s260 = scalar_select %p259, %s22, 1
        %s261 = smul.addr %s260, 64
        %s262 = smul.addr %s261, 4
        %s263 = scalar_lea.vmem %s3, %s262
      $region24: #{bilstm_forward.1} parent=11 // pred_fallthru
        _
    $region12: #{bilstm_forward.1} parent=5 // pred_fallthru
      _
    %p264 = scmp.lt.s32.totalorder %s13, 2
    // Predicated region
    $region25: #{bilstm_forward.1} parent=5 // pred_check
      %p265 = pneg %p264
    $region26: #{bilstm_forward.1} parent=5 // pred_check_branch
      %267 = sbr.rel (%p265) target = $region28
    $region27: #{bilstm_forward.1} parent=5 // pred_region
      // Predicated region
      $region29: #{bilstm_forward.1} parent=27 // pred_check
        %p268 = pneg %p55
      $region30: #{bilstm_forward.1} parent=27 // pred_check_branch
        %270 = sbr.rel (%p268) target = $region32
      $region31: #{bilstm_forward.1} parent=27 // pred_region
        %s271 = smul.u32 %s21, 2
        %s272 = ssub.s32 0, %s271
        %s273 = smul.u32 %s20, %s272
        %s274 = sadd.s32 %s21, %s273
        %s275 = smul.u32 8, %s274
        %p276 = scmp.lt.s32.totalorder %s20, 1
        %s277 = scalar_select %p276, %s20, 1
        %p278 = scmp.lt.s32.totalorder %s275, 7
        %s279 = scalar_select %p278, %s275, 7
        %s280 = smul.addr %s279, 4
        %s281 = smul.addr %s277, 32
        %s282 = sadd.s32 %s280, %s281
        %s283 = smul.addr %s282, 4
        %s284 = scalar_lea.vmem %s0, %s283
        %s285 = smul.u32 %s21, 2
        %s286 = ssub.s32 0, %s285
        %s287 = smul.u32 %s20, %s286
        %s288 = sadd.s32 %s21, %s287
        %s289 = smul.u32 8, %s288
      $region32: #{bilstm_forward.1} parent=27 // pred_fallthru
        _
    $region28: #{bilstm_forward.1} parent=5 // pred_fallthru
      _
    %p290 = scmp.le.s32.totalorder 1, %s13
    %p291 = scmp.lt.s32.totalorder %s13, 3
    %p292 = pnand %p290, %p291
    %p293 = pneg %p292
    // Predicated region
    $region33: #{bilstm_forward.1} parent=5 // pred_check
      _
    $region34: #{bilstm_forward.1} parent=5 // pred_check_branch
      %295 = sbr.rel (%p292) target = $region36
    $region35: #{bilstm_forward.1} parent=5 // pred_region
      %s296 = ssub.s32 %s13, 1
      %s297 = smul.u32 %s23, 2
      %s298 = ssub.s32 0, %s297
      %s299 = smul.u32 %s22, %s298
      %s300 = sadd.s32 %s23, %s299
      %s301 = smul.u32 8, %s300
      %p302 = scmp.lt.s32.totalorder %s22, 1
      %s303 = scalar_select %p302, %s22, 1
      %p304 = scmp.lt.s32.totalorder %s301, 7
      %s305 = scalar_select %p304, %s301, 7
      %s306 = smul.addr %s305, 4
      %s307 = smul.addr %s303, 32
      %s308 = sadd.s32 %s306, %s307
      %s309 = smul.addr %s308, 4
      %s310 = scalar_lea.vmem %s0, %s309
      %p311 = pneg %p61
      %p312 = pneg %p58
      %p313 = scmp.lt.s32.totalorder %s22, 1
      %s314 = scalar_select %p313, %s22, 1
      %s315 = smul.addr %s314, 8
      %s316 = scalar_lea.vmem %s1, %s315
      %p317 = pneg %p87
      %p318 = pneg %p84
      %p319 = scmp.lt.s32.totalorder %s22, 1
      %s320 = scalar_select %p319, %s22, 1
      %s321 = smul.addr %s320, 8
      %s322 = scalar_lea.vmem %s2, %s321
      %p323 = pneg %p113
      %p324 = pneg %p110
      %p325 = scmp.lt.s32.totalorder %s22, 1
      %s326 = scalar_select %p325, %s22, 1
      %s327 = smul.addr %s326, 64
      %s328 = smul.addr %s327, 4
      %s329 = scalar_lea.vmem %s3, %s328
      %p330 = pneg %p139
      %p331 = pneg %p136
      %p332 = pneg %p175
      %p333 = pneg %p172
      %s334 = smul.u32 %s23, 2
      %s335 = ssub.s32 0, %s334
      %s336 = smul.u32 %s22, %s335
      %s337 = sadd.s32 %s23, %s336
      %s338 = smul.u32 8, %s337
      %p339 = scmp.lt.s32.totalorder %s22, 1
      %s340 = scalar_select %p339, %s22, 1
      %p341 = scmp.lt.s32.totalorder %s338, 7
      %s342 = scalar_select %p341, %s338, 7
      %s343 = smul.addr %s340, 8
      %s344 = sadd.s32 %s342, %s343
      %s345 = smul.addr %s344, 4
      %s346 = scalar_lea.vmem %s4, %s345
      %p347 = pneg %p201
      %p348 = pneg %p198
      %p349 = scmp.lt.s32.totalorder %s22, 1
      %s350 = scalar_select %p349, %s22, 1
      %s351 = smul.addr %s350, 8
      %s352 = scalar_lea.vmem %s5, %s351
      %p353 = pneg %p227
      %p354 = pneg %p224
      %p355 = scmp.lt.s32.totalorder %s22, 1
      %s356 = scalar_select %p355, %s22, 1
      %s357 = smul.addr %s356, 8
      %s358 = scalar_lea.vmem %s6, %s357
      %s359 = smul.u32 %s23, 2
      %s360 = ssub.s32 0, %s359
      %s361 = smul.u32 %s22, %s360
      %s362 = sadd.s32 %s23, %s361
      %s363 = smul.u32 8, %s362
      %p364 = scmp.lt.s32.totalorder %s22, 1
      %s365 = scalar_select %p364, %s22, 1
      %p366 = scmp.lt.s32.totalorder %s363, 7
      %s367 = scalar_select %p366, %s363, 7
      %s368 = smul.addr %s367, 4
      %s369 = smul.addr %s365, 32
      %s370 = sadd.s32 %s368, %s369
      %s371 = smul.addr %s370, 4
      %s372 = scalar_lea.vmem %s0, %s371
      %s373 = smul.u32 %s23, 2
      %s374 = ssub.s32 0, %s373
      %s375 = smul.u32 %s22, %s374
      %s376 = sadd.s32 %s23, %s375
      %s377 = smul.u32 8, %s376
      %p378 = scmp.lt.s32.totalorder %s22, 1
      %s379 = scalar_select %p378, %s22, 1
      %s380 = smul.addr %s379, 8
      %s381 = scalar_lea.vmem %s1, %s380
      %p382 = scmp.lt.s32.totalorder %s22, 1
      %s383 = scalar_select %p382, %s22, 1
      %s384 = smul.addr %s383, 8
      %s385 = scalar_lea.vmem %s2, %s384
      %p386 = scmp.lt.s32.totalorder %s22, 1
      %s387 = scalar_select %p386, %s22, 1
      %s388 = smul.addr %s387, 64
      %s389 = smul.addr %s388, 4
      %s390 = scalar_lea.vmem %s3, %s389
      %s391 = smul.u32 %s23, 2
      %s392 = ssub.s32 0, %s391
      %s393 = smul.u32 %s22, %s392
      %s394 = sadd.s32 %s23, %s393
      %s395 = smul.u32 8, %s394
      %p396 = scmp.lt.s32.totalorder %s22, 1
      %s397 = scalar_select %p396, %s22, 1
      %p398 = scmp.lt.s32.totalorder %s395, 7
      %s399 = scalar_select %p398, %s395, 7
      %s400 = smul.addr %s397, 8
      %s401 = sadd.s32 %s399, %s400
      %s402 = smul.addr %s401, 4
      %s403 = scalar_lea.vmem %s4, %s402
      %s404 = smul.u32 %s23, 2
      %s405 = ssub.s32 0, %s404
      %s406 = smul.u32 %s22, %s405
      %s407 = sadd.s32 %s23, %s406
      %s408 = smul.u32 8, %s407
      %p409 = scmp.lt.s32.totalorder %s22, 1
      %s410 = scalar_select %p409, %s22, 1
      %s411 = smul.addr %s410, 8
      %s412 = scalar_lea.vmem %s5, %s411
      %p413 = scmp.lt.s32.totalorder %s22, 1
      %s414 = scalar_select %p413, %s22, 1
      %s415 = smul.addr %s414, 8
      %s416 = scalar_lea.vmem %s6, %s415
      %p418 = scmp.eq.s32.totalorder %s23, 0
      // Predicated region
      $region37: #{bilstm_forward.1} parent=35 // pred_check
        %p419 = pneg %p418
      $region38: #{bilstm_forward.1} parent=35 // pred_check_branch
        %421 = sbr.rel (%p419) target = $region40
      $region39: #{bilstm_forward.1} parent=35 // pred_region
        %v422 = vld [vmem:[%s381] sm:$0xff]
        %423 = vst [vmem:[#allocation2] sm:$0xff] %v422
        %v424 = vld [vmem:[%s385] sm:$0xff]
        %425 = vst [vmem:[#allocation3] sm:$0xff] %v424
      $region40: #{bilstm_forward.1} parent=35 // pred_fallthru
        _
      %p426 = scmp.eq.s32.totalorder %s22, 0
      // Predicated region
      $region41: #{bilstm_forward.1} parent=35 // pred_check
        %p427 = pneg %p426
      $region42: #{bilstm_forward.1} parent=35 // pred_check_branch
        %429 = sbr.rel (%p427) target = $region44
      $region43: #{bilstm_forward.1} parent=35 // pred_region
        %v430 = vld [vmem:[%s372] sm:$0xff]
        %v431 = vld [vmem:[%s372 + $0x8] sm:$0xff]
        %v432 = vld [vmem:[#allocation2] sm:$0xff]
        %v433 = vpack.c.bf16 %v432, %v432
        %v434 = vunpack.c.l.bf16 %v430
        %v435 = vunpack.c.h.bf16 %v430
        %v436 = vunpack.c.l.bf16 %v431
        %v437 = vunpack.c.h.bf16 %v431
        %v438 = vld [vmem:[%s390] sm:$0xff]
        %v439 = vld [vmem:[%s390 + $0x8] sm:$0xff]
        %v440 = vld [vmem:[%s390 + $0x10] sm:$0xff]
        %v441 = vld [vmem:[%s390 + $0x18] sm:$0xff]
        %v442 = vld [vmem:[%s390 + $0x20] sm:$0xff]
        %v443 = vld [vmem:[%s390 + $0x28] sm:$0xff]
        %v444 = vld [vmem:[%s390 + $0x30] sm:$0xff]
        %v445 = vld [vmem:[%s390 + $0x38] sm:$0xff]
        %v446 = vld [vmem:[%s390 + $0x40] sm:$0xff]
        %v447 = vld [vmem:[%s390 + $0x48] sm:$0xff]
        %v448 = vld [vmem:[%s390 + $0x50] sm:$0xff]
        %v449 = vld [vmem:[%s390 + $0x58] sm:$0xff]
        %v450 = vld [vmem:[%s390 + $0x60] sm:$0xff]
        %v451 = vld [vmem:[%s390 + $0x68] sm:$0xff]
        %v452 = vld [vmem:[%s390 + $0x70] sm:$0xff]
        %v453 = vld [vmem:[%s390 + $0x78] sm:$0xff]
        %v454 = vld [vmem:[%s390 + $0x80] sm:$0xff]
        %v455 = vld [vmem:[%s390 + $0x88] sm:$0xff]
        %v456 = vld [vmem:[%s390 + $0x90] sm:$0xff]
        %v457 = vld [vmem:[%s390 + $0x98] sm:$0xff]
        %v458 = vld [vmem:[%s390 + $0xa0] sm:$0xff]
        %v459 = vld [vmem:[%s390 + $0xa8] sm:$0xff]
        %v460 = vld [vmem:[%s390 + $0xb0] sm:$0xff]
        %v461 = vld [vmem:[%s390 + $0xb8] sm:$0xff]
        %v462 = vld [vmem:[%s390 + $0xc0] sm:$0xff]
        %v463 = vld [vmem:[%s390 + $0xc8] sm:$0xff]
        %v464 = vld [vmem:[%s390 + $0xd0] sm:$0xff]
        %v465 = vld [vmem:[%s390 + $0xd8] sm:$0xff]
        %v466 = vld [vmem:[%s390 + $0xe0] sm:$0xff]
        %v467 = vld [vmem:[%s390 + $0xe8] sm:$0xff]
        %v468 = vld [vmem:[%s390 + $0xf0] sm:$0xff]
        %v469 = vld [vmem:[%s390 + $0xf8] sm:$0xff]
        %v502 = vunpack.c.l.b16 %v438
        %v503 = vunpack.c.h.b16 %v438
        %v504 = vunpack.c.l.b16 %v439
        %v505 = vunpack.c.h.b16 %v439
        %v506 = vunpack.c.l.b16 %v440
        %v507 = vunpack.c.h.b16 %v440
        %v508 = vunpack.c.l.b16 %v441
        %v509 = vunpack.c.h.b16 %v441
        %v510 = vunpack.c.l.b16 %v442
        %v511 = vunpack.c.h.b16 %v442
        %v512 = vunpack.c.l.b16 %v443
        %v513 = vunpack.c.h.b16 %v443
        %v514 = vunpack.c.l.b16 %v444
        %v515 = vunpack.c.h.b16 %v444
        %v516 = vunpack.c.l.b16 %v445
        %v517 = vunpack.c.h.b16 %v445
        %v518 = vunpack.c.l.b16 %v446
        %v519 = vunpack.c.h.b16 %v446
        %v520 = vunpack.c.l.b16 %v447
        %v521 = vunpack.c.h.b16 %v447
        %v522 = vunpack.c.l.b16 %v448
        %v523 = vunpack.c.h.b16 %v448
        %v524 = vunpack.c.l.b16 %v449
        %v525 = vunpack.c.h.b16 %v449
        %v526 = vunpack.c.l.b16 %v450
        %v527 = vunpack.c.h.b16 %v450
        %v528 = vunpack.c.l.b16 %v451
        %v529 = vunpack.c.h.b16 %v451
        %v530 = vunpack.c.l.b16 %v452
        %v531 = vunpack.c.h.b16 %v452
        %v532 = vunpack.c.l.b16 %v453
        %v533 = vunpack.c.h.b16 %v453
        %v534 = vunpack.c.l.b16 %v454
        %v535 = vunpack.c.h.b16 %v454
        %v536 = vunpack.c.l.b16 %v455
        %v537 = vunpack.c.h.b16 %v455
        %v538 = vunpack.c.l.b16 %v456
        %v539 = vunpack.c.h.b16 %v456
        %v540 = vunpack.c.l.b16 %v457
        %v541 = vunpack.c.h.b16 %v457
        %v542 = vunpack.c.l.b16 %v458
        %v543 = vunpack.c.h.b16 %v458
        %v544 = vunpack.c.l.b16 %v459
        %v545 = vunpack.c.h.b16 %v459
        %v546 = vunpack.c.l.b16 %v460
        %v547 = vunpack.c.h.b16 %v460
        %v548 = vunpack.c.l.b16 %v461
        %v549 = vunpack.c.h.b16 %v461
        %v550 = vunpack.c.l.b16 %v462
        %v551 = vunpack.c.h.b16 %v462
        %v552 = vunpack.c.l.b16 %v463
        %v553 = vunpack.c.h.b16 %v463
        %v554 = vunpack.c.l.b16 %v464
        %v555 = vunpack.c.h.b16 %v464
        %v556 = vunpack.c.l.b16 %v465
        %v557 = vunpack.c.h.b16 %v465
        %v558 = vunpack.c.l.b16 %v466
        %v559 = vunpack.c.h.b16 %v466
        %v560 = vunpack.c.l.b16 %v467
        %v561 = vunpack.c.h.b16 %v467
        %v562 = vunpack.c.l.b16 %v468
        %v563 = vunpack.c.h.b16 %v468
        %v564 = vunpack.c.l.b16 %v469
        %v565 = vunpack.c.h.b16 %v469
        %v566 = vpack.c.b16 %v506, %v502
        %v567 = vpack.c.b16 %v507, %v503
        %v568 = vpack.c.b16 %v508, %v504
        %v569 = vpack.c.b16 %v509, %v505
        %v570 = vpack.c.b16 %v514, %v510
        %v571 = vpack.c.b16 %v515, %v511
        %v572 = vpack.c.b16 %v516, %v512
        %v573 = vpack.c.b16 %v517, %v513
        %v574 = vpack.c.b16 %v522, %v518
        %v575 = vpack.c.b16 %v523, %v519
        %v576 = vpack.c.b16 %v524, %v520
        %v577 = vpack.c.b16 %v525, %v521
        %v578 = vpack.c.b16 %v530, %v526
        %v579 = vpack.c.b16 %v531, %v527
        %v580 = vpack.c.b16 %v532, %v528
        %v581 = vpack.c.b16 %v533, %v529
        %v582 = vpack.c.b16 %v538, %v534
        %v583 = vpack.c.b16 %v539, %v535
        %v584 = vpack.c.b16 %v540, %v536
        %v585 = vpack.c.b16 %v541, %v537
        %v586 = vpack.c.b16 %v546, %v542
        %v587 = vpack.c.b16 %v547, %v543
        %v588 = vpack.c.b16 %v548, %v544
        %v589 = vpack.c.b16 %v549, %v545
        %v590 = vpack.c.b16 %v554, %v550
        %v591 = vpack.c.b16 %v555, %v551
        %v592 = vpack.c.b16 %v556, %v552
        %v593 = vpack.c.b16 %v557, %v553
        %v594 = vpack.c.b16 %v562, %v558
        %v595 = vpack.c.b16 %v563, %v559
        %v596 = vpack.c.b16 %v564, %v560
        %v597 = vpack.c.b16 %v565, %v561
        %630 = vmatprep.subr.bf16.mxu0 %v567
        %631 = vmatpush1.bf16.msra.mxu0 %v566
        %632 = vmatprep.subr.bf16.mxu0 %v571
        %633 = vmatpush1.bf16.msra.mxu0 %v570
        %634 = vmatprep.subr.bf16.mxu0 %v575
        %635 = vmatpush1.bf16.msra.mxu0 %v574
        %636 = vmatprep.subr.bf16.mxu0 %v579
        %637 = vmatpush1.bf16.msra.mxu0 %v578
        %638 = vmatprep.subr.bf16.mxu0 %v583
        %639 = vmatpush1.bf16.msra.mxu0 %v582
        %640 = vmatprep.subr.bf16.mxu0 %v587
        %641 = vmatpush1.bf16.msra.mxu0 %v586
        %642 = vmatprep.subr.bf16.mxu0 %v591
        %643 = vmatpush1.bf16.msra.mxu0 %v590
        %644 = vmatprep.subr.bf16.mxu0 %v595
        %645 = vmatpush1.bf16.msra.mxu0 %v594
        %646 = vmatprep.subr.bf16.mxu0 0
        %647 = vmatpush1.bf16.msra.mxu0 0
        %648 = vmatprep.subr.bf16.mxu0 0
        %649 = vmatpush1.bf16.msra.mxu0 0
        %650 = vmatprep.subr.bf16.mxu0 0
        %651 = vmatpush1.bf16.msra.mxu0 0
        %652 = vmatprep.subr.bf16.mxu0 0
        %653 = vmatpush1.bf16.msra.mxu0 0
        %654 = vmatprep.subr.bf16.mxu0 0
        %655 = vmatpush1.bf16.msra.mxu0 0
        %656 = vmatprep.subr.bf16.mxu0 0
        %657 = vmatpush1.bf16.msra.mxu0 0
        %658 = vmatprep.subr.bf16.mxu0 0
        %659 = vmatpush1.bf16.msra.mxu0 0
        %660 = vmatprep.subr.bf16.mxu0 0
        %661 = vmatpush1.bf16.msra.mxu0 0
        %662 = vmatprep.mubr.bf16.mxu0 0
        %663 = vmatmul.mubr.bf16.gmra.mrb[0].mxu0 %v433
        %v664 = vpop.f32.mrb[0].mxu0
        %v665 = vadd.f32 0.0, %v664
        %v666 = vpop.f32.mrb[0].mxu0
        %v667 = vadd.f32 0.0, %v666
        %v668 = vpop.f32.mrb[0].mxu0
        %v669 = vpop.f32.mrb[0].mxu0
        %670 = vdwg.mxu0
        %671 = vmatprep.subr.bf16.mxu0 %v569
        %672 = vmatpush1.bf16.msra.mxu0 %v568
        %673 = vmatprep.subr.bf16.mxu0 %v573
        %674 = vmatpush1.bf16.msra.mxu0 %v572
        %675 = vmatprep.subr.bf16.mxu0 %v577
        %676 = vmatpush1.bf16.msra.mxu0 %v576
        %677 = vmatprep.subr.bf16.mxu0 %v581
        %678 = vmatpush1.bf16.msra.mxu0 %v580
        %679 = vmatprep.subr.bf16.mxu0 %v585
        %680 = vmatpush1.bf16.msra.mxu0 %v584
        %681 = vmatprep.subr.bf16.mxu0 %v589
        %682 = vmatpush1.bf16.msra.mxu0 %v588
        %683 = vmatprep.subr.bf16.mxu0 %v593
        %684 = vmatpush1.bf16.msra.mxu0 %v592
        %685 = vmatprep.subr.bf16.mxu0 %v597
        %686 = vmatpush1.bf16.msra.mxu0 %v596
        %687 = vmatprep.subr.bf16.mxu0 0
        %688 = vmatpush1.bf16.msra.mxu0 0
        %689 = vmatprep.subr.bf16.mxu0 0
        %690 = vmatpush1.bf16.msra.mxu0 0
        %691 = vmatprep.subr.bf16.mxu0 0
        %692 = vmatpush1.bf16.msra.mxu0 0
        %693 = vmatprep.subr.bf16.mxu0 0
        %694 = vmatpush1.bf16.msra.mxu0 0
        %695 = vmatprep.subr.bf16.mxu0 0
        %696 = vmatpush1.bf16.msra.mxu0 0
        %697 = vmatprep.subr.bf16.mxu0 0
        %698 = vmatpush1.bf16.msra.mxu0 0
        %699 = vmatprep.subr.bf16.mxu0 0
        %700 = vmatpush1.bf16.msra.mxu0 0
        %701 = vmatprep.subr.bf16.mxu0 0
        %702 = vmatpush1.bf16.msra.mxu0 0
        %703 = vmatprep.mubr.bf16.mxu0 0
        %704 = vmatmul.mubr.bf16.gmra.mrb[0].mxu0 %v433
        %v705 = vpop.f32.mrb[0].mxu0
        %v706 = vadd.f32 0.0, %v705
        %v707 = vpop.f32.mrb[0].mxu0
        %v708 = vadd.f32 0.0, %v707
        %v709 = vpop.f32.mrb[0].mxu0
        %v710 = vpop.f32.mrb[0].mxu0
        %711 = vdwg.mxu0
        %v712 = vadd.f32 %v434, %v665
        %v713 = vadd.f32 %v435, %v667
        %v714 = vadd.f32 %v436, %v706
        %v715 = vadd.f32 %v437, %v708
        %v716 = vmul.f32 %v712, 0.5
        %v717 = vtanh.pop %v716
        %v718 = vmul.f32 %v717, 0.5
        %v719 = vadd.f32 %v718, 0.5
        %v720 = vmul.f32 %v713, 0.5
        %v721 = vtanh.pop %v720
        %v722 = vmul.f32 %v721, 0.5
        %v723 = vadd.f32 %v722, 0.5
        %v724 = vtanh.pop %v714
        %v725 = vmul.f32 %v715, 0.5
        %v726 = vtanh.pop %v725
        %v727 = vmul.f32 %v726, 0.5
        %v728 = vadd.f32 %v727, 0.5
        %v729 = vld [vmem:[#allocation3] sm:$0xff]
        %v730 = vmul.f32 %v723, %v729
        %v731 = vmul.f32 %v719, %v724
        %v732 = vadd.f32 %v730, %v731
        %v733 = vtanh.pop %v732
        %v734 = vmul.f32 %v728, %v733
        %735 = vst [vmem:[#allocation2] sm:$0xff] %v734
        %736 = vst [vmem:[#allocation3] sm:$0xff] %v732
        %v737 = vpack.c.bf16 %v734, %v734
        %738 = vst [vmem:[%s403] sm:$0xf] %v737
        %s739 = scalar_lea.vmem %s372, 16
        %v740 = vld [vmem:[%s739] sm:$0xff]
        %v741 = vld [vmem:[%s739 + $0x8] sm:$0xff]
        %v742 = vld [vmem:[#allocation2] sm:$0xff]
        %v743 = vpack.c.bf16 %v742, %v742
        %v744 = vunpack.c.l.bf16 %v740
        %v745 = vunpack.c.h.bf16 %v740
        %v746 = vunpack.c.l.bf16 %v741
        %v747 = vunpack.c.h.bf16 %v741
        %v748 = vld [vmem:[%s390] sm:$0xff]
        %v749 = vld [vmem:[%s390 + $0x8] sm:$0xff]
        %v750 = vld [vmem:[%s390 + $0x10] sm:$0xff]
        %v751 = vld [vmem:[%s390 + $0x18] sm:$0xff]
        %v752 = vld [vmem:[%s390 + $0x20] sm:$0xff]
        %v753 = vld [vmem:[%s390 + $0x28] sm:$0xff]
        %v754 = vld [vmem:[%s390 + $0x30] sm:$0xff]
        %v755 = vld [vmem:[%s390 + $0x38] sm:$0xff]
        %v756 = vld [vmem:[%s390 + $0x40] sm:$0xff]
        %v757 = vld [vmem:[%s390 + $0x48] sm:$0xff]
        %v758 = vld [vmem:[%s390 + $0x50] sm:$0xff]
        %v759 = vld [vmem:[%s390 + $0x58] sm:$0xff]
        %v760 = vld [vmem:[%s390 + $0x60] sm:$0xff]
        %v761 = vld [vmem:[%s390 + $0x68] sm:$0xff]
        %v762 = vld [vmem:[%s390 + $0x70] sm:$0xff]
        %v763 = vld [vmem:[%s390 + $0x78] sm:$0xff]
        %v764 = vld [vmem:[%s390 + $0x80] sm:$0xff]
        %v765 = vld [vmem:[%s390 + $0x88] sm:$0xff]
        %v766 = vld [vmem:[%s390 + $0x90] sm:$0xff]
        %v767 = vld [vmem:[%s390 + $0x98] sm:$0xff]
        %v768 = vld [vmem:[%s390 + $0xa0] sm:$0xff]
        %v769 = vld [vmem:[%s390 + $0xa8] sm:$0xff]
        %v770 = vld [vmem:[%s390 + $0xb0] sm:$0xff]
        %v771 = vld [vmem:[%s390 + $0xb8] sm:$0xff]
        %v772 = vld [vmem:[%s390 + $0xc0] sm:$0xff]
        %v773 = vld [vmem:[%s390 + $0xc8] sm:$0xff]
        %v774 = vld [vmem:[%s390 + $0xd0] sm:$0xff]
        %v775 = vld [vmem:[%s390 + $0xd8] sm:$0xff]
        %v776 = vld [vmem:[%s390 + $0xe0] sm:$0xff]
        %v777 = vld [vmem:[%s390 + $0xe8] sm:$0xff]
        %v778 = vld [vmem:[%s390 + $0xf0] sm:$0xff]
        %v779 = vld [vmem:[%s390 + $0xf8] sm:$0xff]
        %v812 = vunpack.c.l.b16 %v748
        %v813 = vunpack.c.h.b16 %v748
        %v814 = vunpack.c.l.b16 %v749
        %v815 = vunpack.c.h.b16 %v749
        %v816 = vunpack.c.l.b16 %v750
        %v817 = vunpack.c.h.b16 %v750
        %v818 = vunpack.c.l.b16 %v751
        %v819 = vunpack.c.h.b16 %v751
        %v820 = vunpack.c.l.b16 %v752
        %v821 = vunpack.c.h.b16 %v752
        %v822 = vunpack.c.l.b16 %v753
        %v823 = vunpack.c.h.b16 %v753
        %v824 = vunpack.c.l.b16 %v754
        %v825 = vunpack.c.h.b16 %v754
        %v826 = vunpack.c.l.b16 %v755
        %v827 = vunpack.c.h.b16 %v755
        %v828 = vunpack.c.l.b16 %v756
        %v829 = vunpack.c.h.b16 %v756
        %v830 = vunpack.c.l.b16 %v757
        %v831 = vunpack.c.h.b16 %v757
        %v832 = vunpack.c.l.b16 %v758
        %v833 = vunpack.c.h.b16 %v758
        %v834 = vunpack.c.l.b16 %v759
        %v835 = vunpack.c.h.b16 %v759
        %v836 = vunpack.c.l.b16 %v760
        %v837 = vunpack.c.h.b16 %v760
        %v838 = vunpack.c.l.b16 %v761
        %v839 = vunpack.c.h.b16 %v761
        %v840 = vunpack.c.l.b16 %v762
        %v841 = vunpack.c.h.b16 %v762
        %v842 = vunpack.c.l.b16 %v763
        %v843 = vunpack.c.h.b16 %v763
        %v844 = vunpack.c.l.b16 %v764
        %v845 = vunpack.c.h.b16 %v764
        %v846 = vunpack.c.l.b16 %v765
        %v847 = vunpack.c.h.b16 %v765
        %v848 = vunpack.c.l.b16 %v766
        %v849 = vunpack.c.h.b16 %v766
        %v850 = vunpack.c.l.b16 %v767
        %v851 = vunpack.c.h.b16 %v767
        %v852 = vunpack.c.l.b16 %v768
        %v853 = vunpack.c.h.b16 %v768
        %v854 = vunpack.c.l.b16 %v769
        %v855 = vunpack.c.h.b16 %v769
        %v856 = vunpack.c.l.b16 %v770
        %v857 = vunpack.c.h.b16 %v770
        %v858 = vunpack.c.l.b16 %v771
        %v859 = vunpack.c.h.b16 %v771
        %v860 = vunpack.c.l.b16 %v772
        %v861 = vunpack.c.h.b16 %v772
        %v862 = vunpack.c.l.b16 %v773
        %v863 = vunpack.c.h.b16 %v773
        %v864 = vunpack.c.l.b16 %v774
        %v865 = vunpack.c.h.b16 %v774
        %v866 = vunpack.c.l.b16 %v775
        %v867 = vunpack.c.h.b16 %v775
        %v868 = vunpack.c.l.b16 %v776
        %v869 = vunpack.c.h.b16 %v776
        %v870 = vunpack.c.l.b16 %v777
        %v871 = vunpack.c.h.b16 %v777
        %v872 = vunpack.c.l.b16 %v778
        %v873 = vunpack.c.h.b16 %v778
        %v874 = vunpack.c.l.b16 %v779
        %v875 = vunpack.c.h.b16 %v779
        %v876 = vpack.c.b16 %v816, %v812
        %v877 = vpack.c.b16 %v817, %v813
        %v878 = vpack.c.b16 %v818, %v814
        %v879 = vpack.c.b16 %v819, %v815
        %v880 = vpack.c.b16 %v824, %v820
        %v881 = vpack.c.b16 %v825, %v821
        %v882 = vpack.c.b16 %v826, %v822
        %v883 = vpack.c.b16 %v827, %v823
        %v884 = vpack.c.b16 %v832, %v828
        %v885 = vpack.c.b16 %v833, %v829
        %v886 = vpack.c.b16 %v834, %v830
        %v887 = vpack.c.b16 %v835, %v831
        %v888 = vpack.c.b16 %v840, %v836
        %v889 = vpack.c.b16 %v841, %v837
        %v890 = vpack.c.b16 %v842, %v838
        %v891 = vpack.c.b16 %v843, %v839
        %v892 = vpack.c.b16 %v848, %v844
        %v893 = vpack.c.b16 %v849, %v845
        %v894 = vpack.c.b16 %v850, %v846
        %v895 = vpack.c.b16 %v851, %v847
        %v896 = vpack.c.b16 %v856, %v852
        %v897 = vpack.c.b16 %v857, %v853
        %v898 = vpack.c.b16 %v858, %v854
        %v899 = vpack.c.b16 %v859, %v855
        %v900 = vpack.c.b16 %v864, %v860
        %v901 = vpack.c.b16 %v865, %v861
        %v902 = vpack.c.b16 %v866, %v862
        %v903 = vpack.c.b16 %v867, %v863
        %v904 = vpack.c.b16 %v872, %v868
        %v905 = vpack.c.b16 %v873, %v869
        %v906 = vpack.c.b16 %v874, %v870
        %v907 = vpack.c.b16 %v875, %v871
        %940 = vmatprep.subr.bf16.mxu0 %v877
        %941 = vmatpush1.bf16.msra.mxu0 %v876
        %942 = vmatprep.subr.bf16.mxu0 %v881
        %943 = vmatpush1.bf16.msra.mxu0 %v880
        %944 = vmatprep.subr.bf16.mxu0 %v885
        %945 = vmatpush1.bf16.msra.mxu0 %v884
        %946 = vmatprep.subr.bf16.mxu0 %v889
        %947 = vmatpush1.bf16.msra.mxu0 %v888
        %948 = vmatprep.subr.bf16.mxu0 %v893
        %949 = vmatpush1.bf16.msra.mxu0 %v892
        %950 = vmatprep.subr.bf16.mxu0 %v897
        %951 = vmatpush1.bf16.msra.mxu0 %v896
        %952 = vmatprep.subr.bf16.mxu0 %v901
        %953 = vmatpush1.bf16.msra.mxu0 %v900
        %954 = vmatprep.subr.bf16.mxu0 %v905
        %955 = vmatpush1.bf16.msra.mxu0 %v904
        %956 = vmatprep.subr.bf16.mxu0 0
        %957 = vmatpush1.bf16.msra.mxu0 0
        %958 = vmatprep.subr.bf16.mxu0 0
        %959 = vmatpush1.bf16.msra.mxu0 0
        %960 = vmatprep.subr.bf16.mxu0 0
        %961 = vmatpush1.bf16.msra.mxu0 0
        %962 = vmatprep.subr.bf16.mxu0 0
        %963 = vmatpush1.bf16.msra.mxu0 0
        %964 = vmatprep.subr.bf16.mxu0 0
        %965 = vmatpush1.bf16.msra.mxu0 0
        %966 = vmatprep.subr.bf16.mxu0 0
        %967 = vmatpush1.bf16.msra.mxu0 0
        %968 = vmatprep.subr.bf16.mxu0 0
        %969 = vmatpush1.bf16.msra.mxu0 0
        %970 = vmatprep.subr.bf16.mxu0 0
        %971 = vmatpush1.bf16.msra.mxu0 0
        %972 = vmatprep.mubr.bf16.mxu0 0
        %973 = vmatmul.mubr.bf16.gmra.mrb[0].mxu0 %v743
        %v974 = vpop.f32.mrb[0].mxu0
        %v975 = vadd.f32 0.0, %v974
        %v976 = vpop.f32.mrb[0].mxu0
        %v977 = vadd.f32 0.0, %v976
        %v978 = vpop.f32.mrb[0].mxu0
        %v979 = vpop.f32.mrb[0].mxu0
        %980 = vdwg.mxu0
        %981 = vmatprep.subr.bf16.mxu0 %v879
        %982 = vmatpush1.bf16.msra.mxu0 %v878
        %983 = vmatprep.subr.bf16.mxu0 %v883
        %984 = vmatpush1.bf16.msra.mxu0 %v882
        %985 = vmatprep.subr.bf16.mxu0 %v887
        %986 = vmatpush1.bf16.msra.mxu0 %v886
        %987 = vmatprep.subr.bf16.mxu0 %v891
        %988 = vmatpush1.bf16.msra.mxu0 %v890
        %989 = vmatprep.subr.bf16.mxu0 %v895
        %990 = vmatpush1.bf16.msra.mxu0 %v894
        %991 = vmatprep.subr.bf16.mxu0 %v899
        %992 = vmatpush1.bf16.msra.mxu0 %v898
        %993 = vmatprep.subr.bf16.mxu0 %v903
        %994 = vmatpush1.bf16.msra.mxu0 %v902
        %995 = vmatprep.subr.bf16.mxu0 %v907
        %996 = vmatpush1.bf16.msra.mxu0 %v906
        %997 = vmatprep.subr.bf16.mxu0 0
        %998 = vmatpush1.bf16.msra.mxu0 0
        %999 = vmatprep.subr.bf16.mxu0 0
        %1000 = vmatpush1.bf16.msra.mxu0 0
        %1001 = vmatprep.subr.bf16.mxu0 0
        %1002 = vmatpush1.bf16.msra.mxu0 0
        %1003 = vmatprep.subr.bf16.mxu0 0
        %1004 = vmatpush1.bf16.msra.mxu0 0
        %1005 = vmatprep.subr.bf16.mxu0 0
        %1006 = vmatpush1.bf16.msra.mxu0 0
        %1007 = vmatprep.subr.bf16.mxu0 0
        %1008 = vmatpush1.bf16.msra.mxu0 0
        %1009 = vmatprep.subr.bf16.mxu0 0
        %1010 = vmatpush1.bf16.msra.mxu0 0
        %1011 = vmatprep.subr.bf16.mxu0 0
        %1012 = vmatpush1.bf16.msra.mxu0 0
        %1013 = vmatprep.mubr.bf16.mxu0 0
        %1014 = vmatmul.mubr.bf16.gmra.mrb[0].mxu0 %v743
        %v1015 = vpop.f32.mrb[0].mxu0
        %v1016 = vadd.f32 0.0, %v1015
        %v1017 = vpop.f32.mrb[0].mxu0
        %v1018 = vadd.f32 0.0, %v1017
        %v1019 = vpop.f32.mrb[0].mxu0
        %v1020 = vpop.f32.mrb[0].mxu0
        %1021 = vdwg.mxu0
        %v1022 = vadd.f32 %v744, %v975
        %v1023 = vadd.f32 %v745, %v977
        %v1024 = vadd.f32 %v746, %v1016
        %v1025 = vadd.f32 %v747, %v1018
        %v1026 = vmul.f32 %v1022, 0.5
        %v1027 = vtanh.pop %v1026
        %v1028 = vmul.f32 %v1027, 0.5
        %v1029 = vadd.f32 %v1028, 0.5
        %v1030 = vmul.f32 %v1023, 0.5
        %v1031 = vtanh.pop %v1030
        %v1032 = vmul.f32 %v1031, 0.5
        %v1033 = vadd.f32 %v1032, 0.5
        %v1034 = vtanh.pop %v1024
        %v1035 = vmul.f32 %v1025, 0.5
        %v1036 = vtanh.pop %v1035
        %v1037 = vmul.f32 %v1036, 0.5
        %v1038 = vadd.f32 %v1037, 0.5
        %v1039 = vld [vmem:[#allocation3] sm:$0xff]
        %v1040 = vmul.f32 %v1033, %v1039
        %v1041 = vmul.f32 %v1029, %v1034
        %v1042 = vadd.f32 %v1040, %v1041
        %v1043 = vtanh.pop %v1042
        %v1044 = vmul.f32 %v1038, %v1043
        %1045 = vst [vmem:[#allocation2] sm:$0xff] %v1044
        %1046 = vst [vmem:[#allocation3] sm:$0xff] %v1042
        %v1047 = vpack.c.bf16 %v1044, %v1044
        %s1048 = scalar_lea.vmem %s403, 4
        %1049 = vst [vmem:[%s1048] sm:$0xf] %v1047
        %s1050 = scalar_lea.vmem %s372, 32
        %v1051 = vld [vmem:[%s1050] sm:$0xff]
        %v1052 = vld [vmem:[%s1050 + $0x8] sm:$0xff]
        %v1053 = vld [vmem:[#allocation2] sm:$0xff]
        %v1054 = vpack.c.bf16 %v1053, %v1053
        %v1055 = vunpack.c.l.bf16 %v1051
        %v1056 = vunpack.c.h.bf16 %v1051
        %v1057 = vunpack.c.l.bf16 %v1052
        %v1058 = vunpack.c.h.bf16 %v1052
        %v1059 = vld [vmem:[%s390] sm:$0xff]
        %v1060 = vld [vmem:[%s390 + $0x8] sm:$0xff]
        %v1061 = vld [vmem:[%s390 + $0x10] sm:$0xff]
        %v1062 = vld [vmem:[%s390 + $0x18] sm:$0xff]
        %v1063 = vld [vmem:[%s390 + $0x20] sm:$0xff]
        %v1064 = vld [vmem:[%s390 + $0x28] sm:$0xff]
        %v1065 = vld [vmem:[%s390 + $0x30] sm:$0xff]
        %v1066 = vld [vmem:[%s390 + $0x38] sm:$0xff]
        %v1067 = vld [vmem:[%s390 + $0x40] sm:$0xff]
        %v1068 = vld [vmem:[%s390 + $0x48] sm:$0xff]
        %v1069 = vld [vmem:[%s390 + $0x50] sm:$0xff]
        %v1070 = vld [vmem:[%s390 + $0x58] sm:$0xff]
        %v1071 = vld [vmem:[%s390 + $0x60] sm:$0xff]
        %v1072 = vld [vmem:[%s390 + $0x68] sm:$0xff]
        %v1073 = vld [vmem:[%s390 + $0x70] sm:$0xff]
        %v1074 = vld [vmem:[%s390 + $0x78] sm:$0xff]
        %v1075 = vld [vmem:[%s390 + $0x80] sm:$0xff]
        %v1076 = vld [vmem:[%s390 + $0x88] sm:$0xff]
        %v1077 = vld [vmem:[%s390 + $0x90] sm:$0xff]
        %v1078 = vld [vmem:[%s390 + $0x98] sm:$0xff]
        %v1079 = vld [vmem:[%s390 + $0xa0] sm:$0xff]
        %v1080 = vld [vmem:[%s390 + $0xa8] sm:$0xff]
        %v1081 = vld [vmem:[%s390 + $0xb0] sm:$0xff]
        %v1082 = vld [vmem:[%s390 + $0xb8] sm:$0xff]
        %v1083 = vld [vmem:[%s390 + $0xc0] sm:$0xff]
        %v1084 = vld [vmem:[%s390 + $0xc8] sm:$0xff]
        %v1085 = vld [vmem:[%s390 + $0xd0] sm:$0xff]
        %v1086 = vld [vmem:[%s390 + $0xd8] sm:$0xff]
        %v1087 = vld [vmem:[%s390 + $0xe0] sm:$0xff]
        %v1088 = vld [vmem:[%s390 + $0xe8] sm:$0xff]
        %v1089 = vld [vmem:[%s390 + $0xf0] sm:$0xff]
        %v1090 = vld [vmem:[%s390 + $0xf8] sm:$0xff]
        %v1123 = vunpack.c.l.b16 %v1059
        %v1124 = vunpack.c.h.b16 %v1059
        %v1125 = vunpack.c.l.b16 %v1060
        %v1126 = vunpack.c.h.b16 %v1060
        %v1127 = vunpack.c.l.b16 %v1061
        %v1128 = vunpack.c.h.b16 %v1061
        %v1129 = vunpack.c.l.b16 %v1062
        %v1130 = vunpack.c.h.b16 %v1062
        %v1131 = vunpack.c.l.b16 %v1063
        %v1132 = vunpack.c.h.b16 %v1063
        %v1133 = vunpack.c.l.b16 %v1064
        %v1134 = vunpack.c.h.b16 %v1064
        %v1135 = vunpack.c.l.b16 %v1065
        %v1136 = vunpack.c.h.b16 %v1065
        %v1137 = vunpack.c.l.b16 %v1066
        %v1138 = vunpack.c.h.b16 %v1066
        %v1139 = vunpack.c.l.b16 %v1067
        %v1140 = vunpack.c.h.b16 %v1067
        %v1141 = vunpack.c.l.b16 %v1068
        %v1142 = vunpack.c.h.b16 %v1068
        %v1143 = vunpack.c.l.b16 %v1069
        %v1144 = vunpack.c.h.b16 %v1069
        %v1145 = vunpack.c.l.b16 %v1070
        %v1146 = vunpack.c.h.b16 %v1070
        %v1147 = vunpack.c.l.b16 %v1071
        %v1148 = vunpack.c.h.b16 %v1071
        %v1149 = vunpack.c.l.b16 %v1072
        %v1150 = vunpack.c.h.b16 %v1072
        %v1151 = vunpack.c.l.b16 %v1073
        %v1152 = vunpack.c.h.b16 %v1073
        %v1153 = vunpack.c.l.b16 %v1074
        %v1154 = vunpack.c.h.b16 %v1074
        %v1155 = vunpack.c.l.b16 %v1075
        %v1156 = vunpack.c.h.b16 %v1075
        %v1157 = vunpack.c.l.b16 %v1076
        %v1158 = vunpack.c.h.b16 %v1076
        %v1159 = vunpack.c.l.b16 %v1077
        %v1160 = vunpack.c.h.b16 %v1077
        %v1161 = vunpack.c.l.b16 %v1078
        %v1162 = vunpack.c.h.b16 %v1078
        %v1163 = vunpack.c.l.b16 %v1079
        %v1164 = vunpack.c.h.b16 %v1079
        %v1165 = vunpack.c.l.b16 %v1080
        %v1166 = vunpack.c.h.b16 %v1080
        %v1167 = vunpack.c.l.b16 %v1081
        %v1168 = vunpack.c.h.b16 %v1081
        %v1169 = vunpack.c.l.b16 %v1082
        %v1170 = vunpack.c.h.b16 %v1082
        %v1171 = vunpack.c.l.b16 %v1083
        %v1172 = vunpack.c.h.b16 %v1083
        %v1173 = vunpack.c.l.b16 %v1084
        %v1174 = vunpack.c.h.b16 %v1084
        %v1175 = vunpack.c.l.b16 %v1085
        %v1176 = vunpack.c.h.b16 %v1085
        %v1177 = vunpack.c.l.b16 %v1086
        %v1178 = vunpack.c.h.b16 %v1086
        %v1179 = vunpack.c.l.b16 %v1087
        %v1180 = vunpack.c.h.b16 %v1087
        %v1181 = vunpack.c.l.b16 %v1088
        %v1182 = vunpack.c.h.b16 %v1088
        %v1183 = vunpack.c.l.b16 %v1089
        %v1184 = vunpack.c.h.b16 %v1089
        %v1185 = vunpack.c.l.b16 %v1090
        %v1186 = vunpack.c.h.b16 %v1090
        %v1187 = vpack.c.b16 %v1127, %v1123
        %v1188 = vpack.c.b16 %v1128, %v1124
        %v1189 = vpack.c.b16 %v1129, %v1125
        %v1190 = vpack.c.b16 %v1130, %v1126
        %v1191 = vpack.c.b16 %v1135, %v1131
        %v1192 = vpack.c.b16 %v1136, %v1132
        %v1193 = vpack.c.b16 %v1137, %v1133
        %v1194 = vpack.c.b16 %v1138, %v1134
        %v1195 = vpack.c.b16 %v1143, %v1139
        %v1196 = vpack.c.b16 %v1144, %v1140
        %v1197 = vpack.c.b16 %v1145, %v1141
        %v1198 = vpack.c.b16 %v1146, %v1142
        %v1199 = vpack.c.b16 %v1151, %v1147
        %v1200 = vpack.c.b16 %v1152, %v1148
        %v1201 = vpack.c.b16 %v1153, %v1149
        %v1202 = vpack.c.b16 %v1154, %v1150
        %v1203 = vpack.c.b16 %v1159, %v1155
        %v1204 = vpack.c.b16 %v1160, %v1156
        %v1205 = vpack.c.b16 %v1161, %v1157
        %v1206 = vpack.c.b16 %v1162, %v1158
        %v1207 = vpack.c.b16 %v1167, %v1163
        %v1208 = vpack.c.b16 %v1168, %v1164
        %v1209 = vpack.c.b16 %v1169, %v1165
        %v1210 = vpack.c.b16 %v1170, %v1166
        %v1211 = vpack.c.b16 %v1175, %v1171
        %v1212 = vpack.c.b16 %v1176, %v1172
        %v1213 = vpack.c.b16 %v1177, %v1173
        %v1214 = vpack.c.b16 %v1178, %v1174
        %v1215 = vpack.c.b16 %v1183, %v1179
        %v1216 = vpack.c.b16 %v1184, %v1180
        %v1217 = vpack.c.b16 %v1185, %v1181
        %v1218 = vpack.c.b16 %v1186, %v1182
        %1251 = vmatprep.subr.bf16.mxu0 %v1188
        %1252 = vmatpush1.bf16.msra.mxu0 %v1187
        %1253 = vmatprep.subr.bf16.mxu0 %v1192
        %1254 = vmatpush1.bf16.msra.mxu0 %v1191
        %1255 = vmatprep.subr.bf16.mxu0 %v1196
        %1256 = vmatpush1.bf16.msra.mxu0 %v1195
        %1257 = vmatprep.subr.bf16.mxu0 %v1200
        %1258 = vmatpush1.bf16.msra.mxu0 %v1199
        %1259 = vmatprep.subr.bf16.mxu0 %v1204
        %1260 = vmatpush1.bf16.msra.mxu0 %v1203
        %1261 = vmatprep.subr.bf16.mxu0 %v1208
        %1262 = vmatpush1.bf16.msra.mxu0 %v1207
        %1263 = vmatprep.subr.bf16.mxu0 %v1212
        %1264 = vmatpush1.bf16.msra.mxu0 %v1211
        %1265 = vmatprep.subr.bf16.mxu0 %v1216
        %1266 = vmatpush1.bf16.msra.mxu0 %v1215
        %1267 = vmatprep.subr.bf16.mxu0 0
        %1268 = vmatpush1.bf16.msra.mxu0 0
        %1269 = vmatprep.subr.bf16.mxu0 0
        %1270 = vmatpush1.bf16.msra.mxu0 0
        %1271 = vmatprep.subr.bf16.mxu0 0
        %1272 = vmatpush1.bf16.msra.mxu0 0
        %1273 = vmatprep.subr.bf16.mxu0 0
        %1274 = vmatpush1.bf16.msra.mxu0 0
        %1275 = vmatprep.subr.bf16.mxu0 0
        %1276 = vmatpush1.bf16.msra.mxu0 0
        %1277 = vmatprep.subr.bf16.mxu0 0
        %1278 = vmatpush1.bf16.msra.mxu0 0
        %1279 = vmatprep.subr.bf16.mxu0 0
        %1280 = vmatpush1.bf16.msra.mxu0 0
        %1281 = vmatprep.subr.bf16.mxu0 0
        %1282 = vmatpush1.bf16.msra.mxu0 0
        %1283 = vmatprep.mubr.bf16.mxu0 0
        %1284 = vmatmul.mubr.bf16.gmra.mrb[0].mxu0 %v1054
        %v1285 = vpop.f32.mrb[0].mxu0
        %v1286 = vadd.f32 0.0, %v1285
        %v1287 = vpop.f32.mrb[0].mxu0
        %v1288 = vadd.f32 0.0, %v1287
        %v1289 = vpop.f32.mrb[0].mxu0
        %v1290 = vpop.f32.mrb[0].mxu0
        %1291 = vdwg.mxu0
        %1292 = vmatprep.subr.bf16.mxu0 %v1190
        %1293 = vmatpush1.bf16.msra.mxu0 %v1189
        %1294 = vmatprep.subr.bf16.mxu0 %v1194
        %1295 = vmatpush1.bf16.msra.mxu0 %v1193
        %1296 = vmatprep.subr.bf16.mxu0 %v1198
        %1297 = vmatpush1.bf16.msra.mxu0 %v1197
        %1298 = vmatprep.subr.bf16.mxu0 %v1202
        %1299 = vmatpush1.bf16.msra.mxu0 %v1201
        %1300 = vmatprep.subr.bf16.mxu0 %v1206
        %1301 = vmatpush1.bf16.msra.mxu0 %v1205
        %1302 = vmatprep.subr.bf16.mxu0 %v1210
        %1303 = vmatpush1.bf16.msra.mxu0 %v1209
        %1304 = vmatprep.subr.bf16.mxu0 %v1214
        %1305 = vmatpush1.bf16.msra.mxu0 %v1213
        %1306 = vmatprep.subr.bf16.mxu0 %v1218
        %1307 = vmatpush1.bf16.msra.mxu0 %v1217
        %1308 = vmatprep.subr.bf16.mxu0 0
        %1309 = vmatpush1.bf16.msra.mxu0 0
        %1310 = vmatprep.subr.bf16.mxu0 0
        %1311 = vmatpush1.bf16.msra.mxu0 0
        %1312 = vmatprep.subr.bf16.mxu0 0
        %1313 = vmatpush1.bf16.msra.mxu0 0
        %1314 = vmatprep.subr.bf16.mxu0 0
        %1315 = vmatpush1.bf16.msra.mxu0 0
        %1316 = vmatprep.subr.bf16.mxu0 0
        %1317 = vmatpush1.bf16.msra.mxu0 0
        %1318 = vmatprep.subr.bf16.mxu0 0
        %1319 = vmatpush1.bf16.msra.mxu0 0
        %1320 = vmatprep.subr.bf16.mxu0 0
        %1321 = vmatpush1.bf16.msra.mxu0 0
        %1322 = vmatprep.subr.bf16.mxu0 0
        %1323 = vmatpush1.bf16.msra.mxu0 0
        %1324 = vmatprep.mubr.bf16.mxu0 0
        %1325 = vmatmul.mubr.bf16.gmra.mrb[0].mxu0 %v1054
        %v1326 = vpop.f32.mrb[0].mxu0
        %v1327 = vadd.f32 0.0, %v1326
        %v1328 = vpop.f32.mrb[0].mxu0
        %v1329 = vadd.f32 0.0, %v1328
        %v1330 = vpop.f32.mrb[0].mxu0
        %v1331 = vpop.f32.mrb[0].mxu0
        %1332 = vdwg.mxu0
        %v1333 = vadd.f32 %v1055, %v1286
        %v1334 = vadd.f32 %v1056, %v1288
        %v1335 = vadd.f32 %v1057, %v1327
        %v1336 = vadd.f32 %v1058, %v1329
        %v1337 = vmul.f32 %v1333, 0.5
        %v1338 = vtanh.pop %v1337
        %v1339 = vmul.f32 %v1338, 0.5
        %v1340 = vadd.f32 %v1339, 0.5
        %v1341 = vmul.f32 %v1334, 0.5
        %v1342 = vtanh.pop %v1341
        %v1343 = vmul.f32 %v1342, 0.5
        %v1344 = vadd.f32 %v1343, 0.5
        %v1345 = vtanh.pop %v1335
        %v1346 = vmul.f32 %v1336, 0.5
        %v1347 = vtanh.pop %v1346
        %v1348 = vmul.f32 %v1347, 0.5
        %v1349 = vadd.f32 %v1348, 0.5
        %v1350 = vld [vmem:[#allocation3] sm:$0xff]
        %v1351 = vmul.f32 %v1344, %v1350
        %v1352 = vmul.f32 %v1340, %v1345
        %v1353 = vadd.f32 %v1351, %v1352
        %v1354 = vtanh.pop %v1353
        %v1355 = vmul.f32 %v1349, %v1354
        %1356 = vst [vmem:[#allocation2] sm:$0xff] %v1355
        %1357 = vst [vmem:[#allocation3] sm:$0xff] %v1353
        %v1358 = vpack.c.bf16 %v1355, %v1355
        %s1359 = scalar_lea.vmem %s403, 8
        %1360 = vst [vmem:[%s1359] sm:$0xf] %v1358
        %s1361 = scalar_lea.vmem %s372, 48
        %v1362 = vld [vmem:[%s1361] sm:$0xff]
        %v1363 = vld [vmem:[%s1361 + $0x8] sm:$0xff]
        %v1364 = vld [vmem:[#allocation2] sm:$0xff]
        %v1365 = vpack.c.bf16 %v1364, %v1364
        %v1366 = vunpack.c.l.bf16 %v1362
        %v1367 = vunpack.c.h.bf16 %v1362
        %v1368 = vunpack.c.l.bf16 %v1363
        %v1369 = vunpack.c.h.bf16 %v1363
        %v1370 = vld [vmem:[%s390] sm:$0xff]
        %v1371 = vld [vmem:[%s390 + $0x8] sm:$0xff]
        %v1372 = vld [vmem:[%s390 + $0x10] sm:$0xff]
        %v1373 = vld [vmem:[%s390 + $0x18] sm:$0xff]
        %v1374 = vld [vmem:[%s390 + $0x20] sm:$0xff]
        %v1375 = vld [vmem:[%s390 + $0x28] sm:$0xff]
        %v1376 = vld [vmem:[%s390 + $0x30] sm:$0xff]
        %v1377 = vld [vmem:[%s390 + $0x38] sm:$0xff]
        %v1378 = vld [vmem:[%s390 + $0x40] sm:$0xff]
        %v1379 = vld [vmem:[%s390 + $0x48] sm:$0xff]
        %v1380 = vld [vmem:[%s390 + $0x50] sm:$0xff]
        %v1381 = vld [vmem:[%s390 + $0x58] sm:$0xff]
        %v1382 = vld [vmem:[%s390 + $0x60] sm:$0xff]
        %v1383 = vld [vmem:[%s390 + $0x68] sm:$0xff]
        %v1384 = vld [vmem:[%s390 + $0x70] sm:$0xff]
        %v1385 = vld [vmem:[%s390 + $0x78] sm:$0xff]
        %v1386 = vld [vmem:[%s390 + $0x80] sm:$0xff]
        %v1387 = vld [vmem:[%s390 + $0x88] sm:$0xff]
        %v1388 = vld [vmem:[%s390 + $0x90] sm:$0xff]
        %v1389 = vld [vmem:[%s390 + $0x98] sm:$0xff]
        %v1390 = vld [vmem:[%s390 + $0xa0] sm:$0xff]
        %v1391 = vld [vmem:[%s390 + $0xa8] sm:$0xff]
        %v1392 = vld [vmem:[%s390 + $0xb0] sm:$0xff]
        %v1393 = vld [vmem:[%s390 + $0xb8] sm:$0xff]
        %v1394 = vld [vmem:[%s390 + $0xc0] sm:$0xff]
        %v1395 = vld [vmem:[%s390 + $0xc8] sm:$0xff]
        %v1396 = vld [vmem:[%s390 + $0xd0] sm:$0xff]
        %v1397 = vld [vmem:[%s390 + $0xd8] sm:$0xff]
        %v1398 = vld [vmem:[%s390 + $0xe0] sm:$0xff]
        %v1399 = vld [vmem:[%s390 + $0xe8] sm:$0xff]
        %v1400 = vld [vmem:[%s390 + $0xf0] sm:$0xff]
        %v1401 = vld [vmem:[%s390 + $0xf8] sm:$0xff]
        %v1434 = vunpack.c.l.b16 %v1370
        %v1435 = vunpack.c.h.b16 %v1370
        %v1436 = vunpack.c.l.b16 %v1371
        %v1437 = vunpack.c.h.b16 %v1371
        %v1438 = vunpack.c.l.b16 %v1372
        %v1439 = vunpack.c.h.b16 %v1372
        %v1440 = vunpack.c.l.b16 %v1373
        %v1441 = vunpack.c.h.b16 %v1373
        %v1442 = vunpack.c.l.b16 %v1374
        %v1443 = vunpack.c.h.b16 %v1374
        %v1444 = vunpack.c.l.b16 %v1375
        %v1445 = vunpack.c.h.b16 %v1375
        %v1446 = vunpack.c.l.b16 %v1376
        %v1447 = vunpack.c.h.b16 %v1376
        %v1448 = vunpack.c.l.b16 %v1377
        %v1449 = vunpack.c.h.b16 %v1377
        %v1450 = vunpack.c.l.b16 %v1378
        %v1451 = vunpack.c.h.b16 %v1378
        %v1452 = vunpack.c.l.b16 %v1379
        %v1453 = vunpack.c.h.b16 %v1379
        %v1454 = vunpack.c.l.b16 %v1380
        %v1455 = vunpack.c.h.b16 %v1380
        %v1456 = vunpack.c.l.b16 %v1381
        %v1457 = vunpack.c.h.b16 %v1381
        %v1458 = vunpack.c.l.b16 %v1382
        %v1459 = vunpack.c.h.b16 %v1382
        %v1460 = vunpack.c.l.b16 %v1383
        %v1461 = vunpack.c.h.b16 %v1383
        %v1462 = vunpack.c.l.b16 %v1384
        %v1463 = vunpack.c.h.b16 %v1384
        %v1464 = vunpack.c.l.b16 %v1385
        %v1465 = vunpack.c.h.b16 %v1385
        %v1466 = vunpack.c.l.b16 %v1386
        %v1467 = vunpack.c.h.b16 %v1386
        %v1468 = vunpack.c.l.b16 %v1387
        %v1469 = vunpack.c.h.b16 %v1387
        %v1470 = vunpack.c.l.b16 %v1388
        %v1471 = vunpack.c.h.b16 %v1388
        %v1472 = vunpack.c.l.b16 %v1389
        %v1473 = vunpack.c.h.b16 %v1389
        %v1474 = vunpack.c.l.b16 %v1390
        %v1475 = vunpack.c.h.b16 %v1390
        %v1476 = vunpack.c.l.b16 %v1391
        %v1477 = vunpack.c.h.b16 %v1391
        %v1478 = vunpack.c.l.b16 %v1392
        %v1479 = vunpack.c.h.b16 %v1392
        %v1480 = vunpack.c.l.b16 %v1393
        %v1481 = vunpack.c.h.b16 %v1393
        %v1482 = vunpack.c.l.b16 %v1394
        %v1483 = vunpack.c.h.b16 %v1394
        %v1484 = vunpack.c.l.b16 %v1395
        %v1485 = vunpack.c.h.b16 %v1395
        %v1486 = vunpack.c.l.b16 %v1396
        %v1487 = vunpack.c.h.b16 %v1396
        %v1488 = vunpack.c.l.b16 %v1397
        %v1489 = vunpack.c.h.b16 %v1397
        %v1490 = vunpack.c.l.b16 %v1398
        %v1491 = vunpack.c.h.b16 %v1398
        %v1492 = vunpack.c.l.b16 %v1399
        %v1493 = vunpack.c.h.b16 %v1399
        %v1494 = vunpack.c.l.b16 %v1400
        %v1495 = vunpack.c.h.b16 %v1400
        %v1496 = vunpack.c.l.b16 %v1401
        %v1497 = vunpack.c.h.b16 %v1401
        %v1498 = vpack.c.b16 %v1438, %v1434
        %v1499 = vpack.c.b16 %v1439, %v1435
        %v1500 = vpack.c.b16 %v1440, %v1436
        %v1501 = vpack.c.b16 %v1441, %v1437
        %v1502 = vpack.c.b16 %v1446, %v1442
        %v1503 = vpack.c.b16 %v1447, %v1443
        %v1504 = vpack.c.b16 %v1448, %v1444
        %v1505 = vpack.c.b16 %v1449, %v1445
        %v1506 = vpack.c.b16 %v1454, %v1450
        %v1507 = vpack.c.b16 %v1455, %v1451
        %v1508 = vpack.c.b16 %v1456, %v1452
        %v1509 = vpack.c.b16 %v1457, %v1453
        %v1510 = vpack.c.b16 %v1462, %v1458
        %v1511 = vpack.c.b16 %v1463, %v1459
        %v1512 = vpack.c.b16 %v1464, %v1460
        %v1513 = vpack.c.b16 %v1465, %v1461
        %v1514 = vpack.c.b16 %v1470, %v1466
        %v1515 = vpack.c.b16 %v1471, %v1467
        %v1516 = vpack.c.b16 %v1472, %v1468
        %v1517 = vpack.c.b16 %v1473, %v1469
        %v1518 = vpack.c.b16 %v1478, %v1474
        %v1519 = vpack.c.b16 %v1479, %v1475
        %v1520 = vpack.c.b16 %v1480, %v1476
        %v1521 = vpack.c.b16 %v1481, %v1477
        %v1522 = vpack.c.b16 %v1486, %v1482
        %v1523 = vpack.c.b16 %v1487, %v1483
        %v1524 = vpack.c.b16 %v1488, %v1484
        %v1525 = vpack.c.b16 %v1489, %v1485
        %v1526 = vpack.c.b16 %v1494, %v1490
        %v1527 = vpack.c.b16 %v1495, %v1491
        %v1528 = vpack.c.b16 %v1496, %v1492
        %v1529 = vpack.c.b16 %v1497, %v1493
        %1562 = vmatprep.subr.bf16.mxu0 %v1499
        %1563 = vmatpush1.bf16.msra.mxu0 %v1498
        %1564 = vmatprep.subr.bf16.mxu0 %v1503
        %1565 = vmatpush1.bf16.msra.mxu0 %v1502
        %1566 = vmatprep.subr.bf16.mxu0 %v1507
        %1567 = vmatpush1.bf16.msra.mxu0 %v1506
        %1568 = vmatprep.subr.bf16.mxu0 %v1511
        %1569 = vmatpush1.bf16.msra.mxu0 %v1510
        %1570 = vmatprep.subr.bf16.mxu0 %v1515
        %1571 = vmatpush1.bf16.msra.mxu0 %v1514
        %1572 = vmatprep.subr.bf16.mxu0 %v1519
        %1573 = vmatpush1.bf16.msra.mxu0 %v1518
        %1574 = vmatprep.subr.bf16.mxu0 %v1523
        %1575 = vmatpush1.bf16.msra.mxu0 %v1522
        %1576 = vmatprep.subr.bf16.mxu0 %v1527
        %1577 = vmatpush1.bf16.msra.mxu0 %v1526
        %1578 = vmatprep.subr.bf16.mxu0 0
        %1579 = vmatpush1.bf16.msra.mxu0 0
        %1580 = vmatprep.subr.bf16.mxu0 0
        %1581 = vmatpush1.bf16.msra.mxu0 0
        %1582 = vmatprep.subr.bf16.mxu0 0
        %1583 = vmatpush1.bf16.msra.mxu0 0
        %1584 = vmatprep.subr.bf16.mxu0 0
        %1585 = vmatpush1.bf16.msra.mxu0 0
        %1586 = vmatprep.subr.bf16.mxu0 0
        %1587 = vmatpush1.bf16.msra.mxu0 0
        %1588 = vmatprep.subr.bf16.mxu0 0
        %1589 = vmatpush1.bf16.msra.mxu0 0
        %1590 = vmatprep.subr.bf16.mxu0 0
        %1591 = vmatpush1.bf16.msra.mxu0 0
        %1592 = vmatprep.subr.bf16.mxu0 0
        %1593 = vmatpush1.bf16.msra.mxu0 0
        %1594 = vmatprep.mubr.bf16.mxu0 0
        %1595 = vmatmul.mubr.bf16.gmra.mrb[0].mxu0 %v1365
        %v1596 = vpop.f32.mrb[0].mxu0
        %v1597 = vadd.f32 0.0, %v1596
        %v1598 = vpop.f32.mrb[0].mxu0
        %v1599 = vadd.f32 0.0, %v1598
        %v1600 = vpop.f32.mrb[0].mxu0
        %v1601 = vpop.f32.mrb[0].mxu0
        %1602 = vdwg.mxu0
        %1603 = vmatprep.subr.bf16.mxu0 %v1501
        %1604 = vmatpush1.bf16.msra.mxu0 %v1500
        %1605 = vmatprep.subr.bf16.mxu0 %v1505
        %1606 = vmatpush1.bf16.msra.mxu0 %v1504
        %1607 = vmatprep.subr.bf16.mxu0 %v1509
        %1608 = vmatpush1.bf16.msra.mxu0 %v1508
        %1609 = vmatprep.subr.bf16.mxu0 %v1513
        %1610 = vmatpush1.bf16.msra.mxu0 %v1512
        %1611 = vmatprep.subr.bf16.mxu0 %v1517
        %1612 = vmatpush1.bf16.msra.mxu0 %v1516
        %1613 = vmatprep.subr.bf16.mxu0 %v1521
        %1614 = vmatpush1.bf16.msra.mxu0 %v1520
        %1615 = vmatprep.subr.bf16.mxu0 %v1525
        %1616 = vmatpush1.bf16.msra.mxu0 %v1524
        %1617 = vmatprep.subr.bf16.mxu0 %v1529
        %1618 = vmatpush1.bf16.msra.mxu0 %v1528
        %1619 = vmatprep.subr.bf16.mxu0 0
        %1620 = vmatpush1.bf16.msra.mxu0 0
        %1621 = vmatprep.subr.bf16.mxu0 0
        %1622 = vmatpush1.bf16.msra.mxu0 0
        %1623 = vmatprep.subr.bf16.mxu0 0
        %1624 = vmatpush1.bf16.msra.mxu0 0
        %1625 = vmatprep.subr.bf16.mxu0 0
        %1626 = vmatpush1.bf16.msra.mxu0 0
        %1627 = vmatprep.subr.bf16.mxu0 0
        %1628 = vmatpush1.bf16.msra.mxu0 0
        %1629 = vmatprep.subr.bf16.mxu0 0
        %1630 = vmatpush1.bf16.msra.mxu0 0
        %1631 = vmatprep.subr.bf16.mxu0 0
        %1632 = vmatpush1.bf16.msra.mxu0 0
        %1633 = vmatprep.subr.bf16.mxu0 0
        %1634 = vmatpush1.bf16.msra.mxu0 0
        %1635 = vmatprep.mubr.bf16.mxu0 0
        %1636 = vmatmul.mubr.bf16.gmra.mrb[0].mxu0 %v1365
        %v1637 = vpop.f32.mrb[0].mxu0
        %v1638 = vadd.f32 0.0, %v1637
        %v1639 = vpop.f32.mrb[0].mxu0
        %v1640 = vadd.f32 0.0, %v1639
        %v1641 = vpop.f32.mrb[0].mxu0
        %v1642 = vpop.f32.mrb[0].mxu0
        %1643 = vdwg.mxu0
        %v1644 = vadd.f32 %v1366, %v1597
        %v1645 = vadd.f32 %v1367, %v1599
        %v1646 = vadd.f32 %v1368, %v1638
        %v1647 = vadd.f32 %v1369, %v1640
        %v1648 = vmul.f32 %v1644, 0.5
        %v1649 = vtanh.pop %v1648
        %v1650 = vmul.f32 %v1649, 0.5
        %v1651 = vadd.f32 %v1650, 0.5
        %v1652 = vmul.f32 %v1645, 0.5
        %v1653 = vtanh.pop %v1652
        %v1654 = vmul.f32 %v1653, 0.5
        %v1655 = vadd.f32 %v1654, 0.5
        %v1656 = vtanh.pop %v1646
        %v1657 = vmul.f32 %v1647, 0.5
        %v1658 = vtanh.pop %v1657
        %v1659 = vmul.f32 %v1658, 0.5
        %v1660 = vadd.f32 %v1659, 0.5
        %v1661 = vld [vmem:[#allocation3] sm:$0xff]
        %v1662 = vmul.f32 %v1655, %v1661
        %v1663 = vmul.f32 %v1651, %v1656
        %v1664 = vadd.f32 %v1662, %v1663
        %v1665 = vtanh.pop %v1664
        %v1666 = vmul.f32 %v1660, %v1665
        %1667 = vst [vmem:[#allocation2] sm:$0xff] %v1666
        %1668 = vst [vmem:[#allocation3] sm:$0xff] %v1664
        %v1669 = vpack.c.bf16 %v1666, %v1666
        %s1670 = scalar_lea.vmem %s403, 12
        %1671 = vst [vmem:[%s1670] sm:$0xf] %v1669
        %s1672 = scalar_lea.vmem %s372, 64
        %v1673 = vld [vmem:[%s1672] sm:$0xff]
        %v1674 = vld [vmem:[%s1672 + $0x8] sm:$0xff]
        %v1675 = vld [vmem:[#allocation2] sm:$0xff]
        %v1676 = vpack.c.bf16 %v1675, %v1675
        %v1677 = vunpack.c.l.bf16 %v1673
        %v1678 = vunpack.c.h.bf16 %v1673
        %v1679 = vunpack.c.l.bf16 %v1674
        %v1680 = vunpack.c.h.bf16 %v1674
        %v1681 = vld [vmem:[%s390] sm:$0xff]
        %v1682 = vld [vmem:[%s390 + $0x8] sm:$0xff]
        %v1683 = vld [vmem:[%s390 + $0x10] sm:$0xff]
        %v1684 = vld [vmem:[%s390 + $0x18] sm:$0xff]
        %v1685 = vld [vmem:[%s390 + $0x20] sm:$0xff]
        %v1686 = vld [vmem:[%s390 + $0x28] sm:$0xff]
        %v1687 = vld [vmem:[%s390 + $0x30] sm:$0xff]
        %v1688 = vld [vmem:[%s390 + $0x38] sm:$0xff]
        %v1689 = vld [vmem:[%s390 + $0x40] sm:$0xff]
        %v1690 = vld [vmem:[%s390 + $0x48] sm:$0xff]
        %v1691 = vld [vmem:[%s390 + $0x50] sm:$0xff]
        %v1692 = vld [vmem:[%s390 + $0x58] sm:$0xff]
        %v1693 = vld [vmem:[%s390 + $0x60] sm:$0xff]
        %v1694 = vld [vmem:[%s390 + $0x68] sm:$0xff]
        %v1695 = vld [vmem:[%s390 + $0x70] sm:$0xff]
        %v1696 = vld [vmem:[%s390 + $0x78] sm:$0xff]
        %v1697 = vld [vmem:[%s390 + $0x80] sm:$0xff]
        %v1698 = vld [vmem:[%s390 + $0x88] sm:$0xff]
        %v1699 = vld [vmem:[%s390 + $0x90] sm:$0xff]
        %v1700 = vld [vmem:[%s390 + $0x98] sm:$0xff]
        %v1701 = vld [vmem:[%s390 + $0xa0] sm:$0xff]
        %v1702 = vld [vmem:[%s390 + $0xa8] sm:$0xff]
        %v1703 = vld [vmem:[%s390 + $0xb0] sm:$0xff]
        %v1704 = vld [vmem:[%s390 + $0xb8] sm:$0xff]
        %v1705 = vld [vmem:[%s390 + $0xc0] sm:$0xff]
        %v1706 = vld [vmem:[%s390 + $0xc8] sm:$0xff]
        %v1707 = vld [vmem:[%s390 + $0xd0] sm:$0xff]
        %v1708 = vld [vmem:[%s390 + $0xd8] sm:$0xff]
        %v1709 = vld [vmem:[%s390 + $0xe0] sm:$0xff]
        %v1710 = vld [vmem:[%s390 + $0xe8] sm:$0xff]
        %v1711 = vld [vmem:[%s390 + $0xf0] sm:$0xff]
        %v1712 = vld [vmem:[%s390 + $0xf8] sm:$0xff]
        %v1745 = vunpack.c.l.b16 %v1681
        %v1746 = vunpack.c.h.b16 %v1681
        %v1747 = vunpack.c.l.b16 %v1682
        %v1748 = vunpack.c.h.b16 %v1682
        %v1749 = vunpack.c.l.b16 %v1683
        %v1750 = vunpack.c.h.b16 %v1683
        %v1751 = vunpack.c.l.b16 %v1684
        %v1752 = vunpack.c.h.b16 %v1684
        %v1753 = vunpack.c.l.b16 %v1685
        %v1754 = vunpack.c.h.b16 %v1685
        %v1755 = vunpack.c.l.b16 %v1686
        %v1756 = vunpack.c.h.b16 %v1686
        %v1757 = vunpack.c.l.b16 %v1687
        %v1758 = vunpack.c.h.b16 %v1687
        %v1759 = vunpack.c.l.b16 %v1688
        %v1760 = vunpack.c.h.b16 %v1688
        %v1761 = vunpack.c.l.b16 %v1689
        %v1762 = vunpack.c.h.b16 %v1689
        %v1763 = vunpack.c.l.b16 %v1690
        %v1764 = vunpack.c.h.b16 %v1690
        %v1765 = vunpack.c.l.b16 %v1691
        %v1766 = vunpack.c.h.b16 %v1691
        %v1767 = vunpack.c.l.b16 %v1692
        %v1768 = vunpack.c.h.b16 %v1692
        %v1769 = vunpack.c.l.b16 %v1693
        %v1770 = vunpack.c.h.b16 %v1693
        %v1771 = vunpack.c.l.b16 %v1694
        %v1772 = vunpack.c.h.b16 %v1694
        %v1773 = vunpack.c.l.b16 %v1695
        %v1774 = vunpack.c.h.b16 %v1695
        %v1775 = vunpack.c.l.b16 %v1696
        %v1776 = vunpack.c.h.b16 %v1696
        %v1777 = vunpack.c.l.b16 %v1697
        %v1778 = vunpack.c.h.b16 %v1697
        %v1779 = vunpack.c.l.b16 %v1698
        %v1780 = vunpack.c.h.b16 %v1698
        %v1781 = vunpack.c.l.b16 %v1699
        %v1782 = vunpack.c.h.b16 %v1699
        %v1783 = vunpack.c.l.b16 %v1700
        %v1784 = vunpack.c.h.b16 %v1700
        %v1785 = vunpack.c.l.b16 %v1701
        %v1786 = vunpack.c.h.b16 %v1701
        %v1787 = vunpack.c.l.b16 %v1702
        %v1788 = vunpack.c.h.b16 %v1702
        %v1789 = vunpack.c.l.b16 %v1703
        %v1790 = vunpack.c.h.b16 %v1703
        %v1791 = vunpack.c.l.b16 %v1704
        %v1792 = vunpack.c.h.b16 %v1704
        %v1793 = vunpack.c.l.b16 %v1705
        %v1794 = vunpack.c.h.b16 %v1705
        %v1795 = vunpack.c.l.b16 %v1706
        %v1796 = vunpack.c.h.b16 %v1706
        %v1797 = vunpack.c.l.b16 %v1707
        %v1798 = vunpack.c.h.b16 %v1707
        %v1799 = vunpack.c.l.b16 %v1708
        %v1800 = vunpack.c.h.b16 %v1708
        %v1801 = vunpack.c.l.b16 %v1709
        %v1802 = vunpack.c.h.b16 %v1709
        %v1803 = vunpack.c.l.b16 %v1710
        %v1804 = vunpack.c.h.b16 %v1710
        %v1805 = vunpack.c.l.b16 %v1711
        %v1806 = vunpack.c.h.b16 %v1711
        %v1807 = vunpack.c.l.b16 %v1712
        %v1808 = vunpack.c.h.b16 %v1712
        %v1809 = vpack.c.b16 %v1749, %v1745
        %v1810 = vpack.c.b16 %v1750, %v1746
        %v1811 = vpack.c.b16 %v1751, %v1747
        %v1812 = vpack.c.b16 %v1752, %v1748
        %v1813 = vpack.c.b16 %v1757, %v1753
        %v1814 = vpack.c.b16 %v1758, %v1754
        %v1815 = vpack.c.b16 %v1759, %v1755
        %v1816 = vpack.c.b16 %v1760, %v1756
        %v1817 = vpack.c.b16 %v1765, %v1761
        %v1818 = vpack.c.b16 %v1766, %v1762
        %v1819 = vpack.c.b16 %v1767, %v1763
        %v1820 = vpack.c.b16 %v1768, %v1764
        %v1821 = vpack.c.b16 %v1773, %v1769
        %v1822 = vpack.c.b16 %v1774, %v1770
        %v1823 = vpack.c.b16 %v1775, %v1771
        %v1824 = vpack.c.b16 %v1776, %v1772
        %v1825 = vpack.c.b16 %v1781, %v1777
        %v1826 = vpack.c.b16 %v1782, %v1778
        %v1827 = vpack.c.b16 %v1783, %v1779
        %v1828 = vpack.c.b16 %v1784, %v1780
        %v1829 = vpack.c.b16 %v1789, %v1785
        %v1830 = vpack.c.b16 %v1790, %v1786
        %v1831 = vpack.c.b16 %v1791, %v1787
        %v1832 = vpack.c.b16 %v1792, %v1788
        %v1833 = vpack.c.b16 %v1797, %v1793
        %v1834 = vpack.c.b16 %v1798, %v1794
        %v1835 = vpack.c.b16 %v1799, %v1795
        %v1836 = vpack.c.b16 %v1800, %v1796
        %v1837 = vpack.c.b16 %v1805, %v1801
        %v1838 = vpack.c.b16 %v1806, %v1802
        %v1839 = vpack.c.b16 %v1807, %v1803
        %v1840 = vpack.c.b16 %v1808, %v1804
        %1873 = vmatprep.subr.bf16.mxu0 %v1810
        %1874 = vmatpush1.bf16.msra.mxu0 %v1809
        %1875 = vmatprep.subr.bf16.mxu0 %v1814
        %1876 = vmatpush1.bf16.msra.mxu0 %v1813
        %1877 = vmatprep.subr.bf16.mxu0 %v1818
        %1878 = vmatpush1.bf16.msra.mxu0 %v1817
        %1879 = vmatprep.subr.bf16.mxu0 %v1822
        %1880 = vmatpush1.bf16.msra.mxu0 %v1821
        %1881 = vmatprep.subr.bf16.mxu0 %v1826
        %1882 = vmatpush1.bf16.msra.mxu0 %v1825
        %1883 = vmatprep.subr.bf16.mxu0 %v1830
        %1884 = vmatpush1.bf16.msra.mxu0 %v1829
        %1885 = vmatprep.subr.bf16.mxu0 %v1834
        %1886 = vmatpush1.bf16.msra.mxu0 %v1833
        %1887 = vmatprep.subr.bf16.mxu0 %v1838
        %1888 = vmatpush1.bf16.msra.mxu0 %v1837
        %1889 = vmatprep.subr.bf16.mxu0 0
        %1890 = vmatpush1.bf16.msra.mxu0 0
        %1891 = vmatprep.subr.bf16.mxu0 0
        %1892 = vmatpush1.bf16.msra.mxu0 0
        %1893 = vmatprep.subr.bf16.mxu0 0
        %1894 = vmatpush1.bf16.msra.mxu0 0
        %1895 = vmatprep.subr.bf16.mxu0 0
        %1896 = vmatpush1.bf16.msra.mxu0 0
        %1897 = vmatprep.subr.bf16.mxu0 0
        %1898 = vmatpush1.bf16.msra.mxu0 0
        %1899 = vmatprep.subr.bf16.mxu0 0
        %1900 = vmatpush1.bf16.msra.mxu0 0
        %1901 = vmatprep.subr.bf16.mxu0 0
        %1902 = vmatpush1.bf16.msra.mxu0 0
        %1903 = vmatprep.subr.bf16.mxu0 0
        %1904 = vmatpush1.bf16.msra.mxu0 0
        %1905 = vmatprep.mubr.bf16.mxu0 0
        %1906 = vmatmul.mubr.bf16.gmra.mrb[0].mxu0 %v1676
        %v1907 = vpop.f32.mrb[0].mxu0
        %v1908 = vadd.f32 0.0, %v1907
        %v1909 = vpop.f32.mrb[0].mxu0
        %v1910 = vadd.f32 0.0, %v1909
        %v1911 = vpop.f32.mrb[0].mxu0
        %v1912 = vpop.f32.mrb[0].mxu0
        %1913 = vdwg.mxu0
        %1914 = vmatprep.subr.bf16.mxu0 %v1812
        %1915 = vmatpush1.bf16.msra.mxu0 %v1811
        %1916 = vmatprep.subr.bf16.mxu0 %v1816
        %1917 = vmatpush1.bf16.msra.mxu0 %v1815
        %1918 = vmatprep.subr.bf16.mxu0 %v1820
        %1919 = vmatpush1.bf16.msra.mxu0 %v1819
        %1920 = vmatprep.subr.bf16.mxu0 %v1824
        %1921 = vmatpush1.bf16.msra.mxu0 %v1823
        %1922 = vmatprep.subr.bf16.mxu0 %v1828
        %1923 = vmatpush1.bf16.msra.mxu0 %v1827
        %1924 = vmatprep.subr.bf16.mxu0 %v1832
        %1925 = vmatpush1.bf16.msra.mxu0 %v1831
        %1926 = vmatprep.subr.bf16.mxu0 %v1836
        %1927 = vmatpush1.bf16.msra.mxu0 %v1835
        %1928 = vmatprep.subr.bf16.mxu0 %v1840
        %1929 = vmatpush1.bf16.msra.mxu0 %v1839
        %1930 = vmatprep.subr.bf16.mxu0 0
        %1931 = vmatpush1.bf16.msra.mxu0 0
        %1932 = vmatprep.subr.bf16.mxu0 0
        %1933 = vmatpush1.bf16.msra.mxu0 0
        %1934 = vmatprep.subr.bf16.mxu0 0
        %1935 = vmatpush1.bf16.msra.mxu0 0
        %1936 = vmatprep.subr.bf16.mxu0 0
        %1937 = vmatpush1.bf16.msra.mxu0 0
        %1938 = vmatprep.subr.bf16.mxu0 0
        %1939 = vmatpush1.bf16.msra.mxu0 0
        %1940 = vmatprep.subr.bf16.mxu0 0
        %1941 = vmatpush1.bf16.msra.mxu0 0
        %1942 = vmatprep.subr.bf16.mxu0 0
        %1943 = vmatpush1.bf16.msra.mxu0 0
        %1944 = vmatprep.subr.bf16.mxu0 0
        %1945 = vmatpush1.bf16.msra.mxu0 0
        %1946 = vmatprep.mubr.bf16.mxu0 0
        %1947 = vmatmul.mubr.bf16.gmra.mrb[0].mxu0 %v1676
        %v1948 = vpop.f32.mrb[0].mxu0
        %v1949 = vadd.f32 0.0, %v1948
        %v1950 = vpop.f32.mrb[0].mxu0
        %v1951 = vadd.f32 0.0, %v1950
        %v1952 = vpop.f32.mrb[0].mxu0
        %v1953 = vpop.f32.mrb[0].mxu0
        %1954 = vdwg.mxu0
        %v1955 = vadd.f32 %v1677, %v1908
        %v1956 = vadd.f32 %v1678, %v1910
        %v1957 = vadd.f32 %v1679, %v1949
        %v1958 = vadd.f32 %v1680, %v1951
        %v1959 = vmul.f32 %v1955, 0.5
        %v1960 = vtanh.pop %v1959
        %v1961 = vmul.f32 %v1960, 0.5
        %v1962 = vadd.f32 %v1961, 0.5
        %v1963 = vmul.f32 %v1956, 0.5
        %v1964 = vtanh.pop %v1963
        %v1965 = vmul.f32 %v1964, 0.5
        %v1966 = vadd.f32 %v1965, 0.5
        %v1967 = vtanh.pop %v1957
        %v1968 = vmul.f32 %v1958, 0.5
        %v1969 = vtanh.pop %v1968
        %v1970 = vmul.f32 %v1969, 0.5
        %v1971 = vadd.f32 %v1970, 0.5
        %v1972 = vld [vmem:[#allocation3] sm:$0xff]
        %v1973 = vmul.f32 %v1966, %v1972
        %v1974 = vmul.f32 %v1962, %v1967
        %v1975 = vadd.f32 %v1973, %v1974
        %v1976 = vtanh.pop %v1975
        %v1977 = vmul.f32 %v1971, %v1976
        %1978 = vst [vmem:[#allocation2] sm:$0xff] %v1977
        %1979 = vst [vmem:[#allocation3] sm:$0xff] %v1975
        %v1980 = vpack.c.bf16 %v1977, %v1977
        %s1981 = scalar_lea.vmem %s403, 16
        %1982 = vst [vmem:[%s1981] sm:$0xf] %v1980
        %s1983 = scalar_lea.vmem %s372, 80
        %v1984 = vld [vmem:[%s1983] sm:$0xff]
        %v1985 = vld [vmem:[%s1983 + $0x8] sm:$0xff]
        %v1986 = vld [vmem:[#allocation2] sm:$0xff]
        %v1987 = vpack.c.bf16 %v1986, %v1986
        %v1988 = vunpack.c.l.bf16 %v1984
        %v1989 = vunpack.c.h.bf16 %v1984
        %v1990 = vunpack.c.l.bf16 %v1985
        %v1991 = vunpack.c.h.bf16 %v1985
        %v1992 = vld [vmem:[%s390] sm:$0xff]
        %v1993 = vld [vmem:[%s390 + $0x8] sm:$0xff]
        %v1994 = vld [vmem:[%s390 + $0x10] sm:$0xff]
        %v1995 = vld [vmem:[%s390 + $0x18] sm:$0xff]
        %v1996 = vld [vmem:[%s390 + $0x20] sm:$0xff]
        %v1997 = vld [vmem:[%s390 + $0x28] sm:$0xff]
        %v1998 = vld [vmem:[%s390 + $0x30] sm:$0xff]
        %v1999 = vld [vmem:[%s390 + $0x38] sm:$0xff]
        %v2000 = vld [vmem:[%s390 + $0x40] sm:$0xff]
        %v2001 = vld [vmem:[%s390 + $0x48] sm:$0xff]
        %v2002 = vld [vmem:[%s390 + $0x50] sm:$0xff]
        %v2003 = vld [vmem:[%s390 + $0x58] sm:$0xff]
        %v2004 = vld [vmem:[%s390 + $0x60] sm:$0xff]
        %v2005 = vld [vmem:[%s390 + $0x68] sm:$0xff]
        %v2006 = vld [vmem:[%s390 + $0x70] sm:$0xff]
        %v2007 = vld [vmem:[%s390 + $0x78] sm:$0xff]
        %v2008 = vld [vmem:[%s390 + $0x80] sm:$0xff]
        %v2009 = vld [vmem:[%s390 + $0x88] sm:$0xff]
        %v2010 = vld [vmem:[%s390 + $0x90] sm:$0xff]
        %v2011 = vld [vmem:[%s390 + $0x98] sm:$0xff]
        %v2012 = vld [vmem:[%s390 + $0xa0] sm:$0xff]
        %v2013 = vld [vmem:[%s390 + $0xa8] sm:$0xff]
        %v2014 = vld [vmem:[%s390 + $0xb0] sm:$0xff]
        %v2015 = vld [vmem:[%s390 + $0xb8] sm:$0xff]
        %v2016 = vld [vmem:[%s390 + $0xc0] sm:$0xff]
        %v2017 = vld [vmem:[%s390 + $0xc8] sm:$0xff]
        %v2018 = vld [vmem:[%s390 + $0xd0] sm:$0xff]
        %v2019 = vld [vmem:[%s390 + $0xd8] sm:$0xff]
        %v2020 = vld [vmem:[%s390 + $0xe0] sm:$0xff]
        %v2021 = vld [vmem:[%s390 + $0xe8] sm:$0xff]
        %v2022 = vld [vmem:[%s390 + $0xf0] sm:$0xff]
        %v2023 = vld [vmem:[%s390 + $0xf8] sm:$0xff]
        %v2056 = vunpack.c.l.b16 %v1992
        %v2057 = vunpack.c.h.b16 %v1992
        %v2058 = vunpack.c.l.b16 %v1993
        %v2059 = vunpack.c.h.b16 %v1993
        %v2060 = vunpack.c.l.b16 %v1994
        %v2061 = vunpack.c.h.b16 %v1994
        %v2062 = vunpack.c.l.b16 %v1995
        %v2063 = vunpack.c.h.b16 %v1995
        %v2064 = vunpack.c.l.b16 %v1996
        %v2065 = vunpack.c.h.b16 %v1996
        %v2066 = vunpack.c.l.b16 %v1997
        %v2067 = vunpack.c.h.b16 %v1997
        %v2068 = vunpack.c.l.b16 %v1998
        %v2069 = vunpack.c.h.b16 %v1998
        %v2070 = vunpack.c.l.b16 %v1999
        %v2071 = vunpack.c.h.b16 %v1999
        %v2072 = vunpack.c.l.b16 %v2000
        %v2073 = vunpack.c.h.b16 %v2000
        %v2074 = vunpack.c.l.b16 %v2001
        %v2075 = vunpack.c.h.b16 %v2001
        %v2076 = vunpack.c.l.b16 %v2002
        %v2077 = vunpack.c.h.b16 %v2002
        %v2078 = vunpack.c.l.b16 %v2003
        %v2079 = vunpack.c.h.b16 %v2003
        %v2080 = vunpack.c.l.b16 %v2004
        %v2081 = vunpack.c.h.b16 %v2004
        %v2082 = vunpack.c.l.b16 %v2005
        %v2083 = vunpack.c.h.b16 %v2005
        %v2084 = vunpack.c.l.b16 %v2006
        %v2085 = vunpack.c.h.b16 %v2006
        %v2086 = vunpack.c.l.b16 %v2007
        %v2087 = vunpack.c.h.b16 %v2007
        %v2088 = vunpack.c.l.b16 %v2008
        %v2089 = vunpack.c.h.b16 %v2008
        %v2090 = vunpack.c.l.b16 %v2009
        %v2091 = vunpack.c.h.b16 %v2009
        %v2092 = vunpack.c.l.b16 %v2010
        %v2093 = vunpack.c.h.b16 %v2010
        %v2094 = vunpack.c.l.b16 %v2011
        %v2095 = vunpack.c.h.b16 %v2011
        %v2096 = vunpack.c.l.b16 %v2012
        %v2097 = vunpack.c.h.b16 %v2012
        %v2098 = vunpack.c.l.b16 %v2013
        %v2099 = vunpack.c.h.b16 %v2013
        %v2100 = vunpack.c.l.b16 %v2014
        %v2101 = vunpack.c.h.b16 %v2014
        %v2102 = vunpack.c.l.b16 %v2015
        %v2103 = vunpack.c.h.b16 %v2015
        %v2104 = vunpack.c.l.b16 %v2016
        %v2105 = vunpack.c.h.b16 %v2016
        %v2106 = vunpack.c.l.b16 %v2017
        %v2107 = vunpack.c.h.b16 %v2017
        %v2108 = vunpack.c.l.b16 %v2018
        %v2109 = vunpack.c.h.b16 %v2018
        %v2110 = vunpack.c.l.b16 %v2019
        %v2111 = vunpack.c.h.b16 %v2019
        %v2112 = vunpack.c.l.b16 %v2020
        %v2113 = vunpack.c.h.b16 %v2020
        %v2114 = vunpack.c.l.b16 %v2021
        %v2115 = vunpack.c.h.b16 %v2021
        %v2116 = vunpack.c.l.b16 %v2022
        %v2117 = vunpack.c.h.b16 %v2022
        %v2118 = vunpack.c.l.b16 %v2023
        %v2119 = vunpack.c.h.b16 %v2023
        %v2120 = vpack.c.b16 %v2060, %v2056
        %v2121 = vpack.c.b16 %v2061, %v2057
        %v2122 = vpack.c.b16 %v2062, %v2058
        %v2123 = vpack.c.b16 %v2063, %v2059
        %v2124 = vpack.c.b16 %v2068, %v2064
        %v2125 = vpack.c.b16 %v2069, %v2065
        %v2126 = vpack.c.b16 %v2070, %v2066
        %v2127 = vpack.c.b16 %v2071, %v2067
        %v2128 = vpack.c.b16 %v2076, %v2072
        %v2129 = vpack.c.b16 %v2077, %v2073
        %v2130 = vpack.c.b16 %v2078, %v2074
        %v2131 = vpack.c.b16 %v2079, %v2075
        %v2132 = vpack.c.b16 %v2084, %v2080
        %v2133 = vpack.c.b16 %v2085, %v2081
        %v2134 = vpack.c.b16 %v2086, %v2082
        %v2135 = vpack.c.b16 %v2087, %v2083
        %v2136 = vpack.c.b16 %v2092, %v2088
        %v2137 = vpack.c.b16 %v2093, %v2089
        %v2138 = vpack.c.b16 %v2094, %v2090
        %v2139 = vpack.c.b16 %v2095, %v2091
        %v2140 = vpack.c.b16 %v2100, %v2096
        %v2141 = vpack.c.b16 %v2101, %v2097
        %v2142 = vpack.c.b16 %v2102, %v2098
        %v2143 = vpack.c.b16 %v2103, %v2099
        %v2144 = vpack.c.b16 %v2108, %v2104
        %v2145 = vpack.c.b16 %v2109, %v2105
        %v2146 = vpack.c.b16 %v2110, %v2106
        %v2147 = vpack.c.b16 %v2111, %v2107
        %v2148 = vpack.c.b16 %v2116, %v2112
        %v2149 = vpack.c.b16 %v2117, %v2113
        %v2150 = vpack.c.b16 %v2118, %v2114
        %v2151 = vpack.c.b16 %v2119, %v2115
        %2184 = vmatprep.subr.bf16.mxu0 %v2121
        %2185 = vmatpush1.bf16.msra.mxu0 %v2120
        %2186 = vmatprep.subr.bf16.mxu0 %v2125
        %2187 = vmatpush1.bf16.msra.mxu0 %v2124
        %2188 = vmatprep.subr.bf16.mxu0 %v2129
        %2189 = vmatpush1.bf16.msra.mxu0 %v2128
        %2190 = vmatprep.subr.bf16.mxu0 %v2133
        %2191 = vmatpush1.bf16.msra.mxu0 %v2132
        %2192 = vmatprep.subr.bf16.mxu0 %v2137
        %2193 = vmatpush1.bf16.msra.mxu0 %v2136
        %2194 = vmatprep.subr.bf16.mxu0 %v2141
        %2195 = vmatpush1.bf16.msra.mxu0 %v2140
        %2196 = vmatprep.subr.bf16.mxu0 %v2145
        %2197 = vmatpush1.bf16.msra.mxu0 %v2144
        %2198 = vmatprep.subr.bf16.mxu0 %v2149
        %2199 = vmatpush1.bf16.msra.mxu0 %v2148
        %2200 = vmatprep.subr.bf16.mxu0 0
        %2201 = vmatpush1.bf16.msra.mxu0 0
        %2202 = vmatprep.subr.bf16.mxu0 0
        %2203 = vmatpush1.bf16.msra.mxu0 0
        %2204 = vmatprep.subr.bf16.mxu0 0
        %2205 = vmatpush1.bf16.msra.mxu0 0
        %2206 = vmatprep.subr.bf16.mxu0 0
        %2207 = vmatpush1.bf16.msra.mxu0 0
        %2208 = vmatprep.subr.bf16.mxu0 0
        %2209 = vmatpush1.bf16.msra.mxu0 0
        %2210 = vmatprep.subr.bf16.mxu0 0
        %2211 = vmatpush1.bf16.msra.mxu0 0
        %2212 = vmatprep.subr.bf16.mxu0 0
        %2213 = vmatpush1.bf16.msra.mxu0 0
        %2214 = vmatprep.subr.bf16.mxu0 0
        %2215 = vmatpush1.bf16.msra.mxu0 0
        %2216 = vmatprep.mubr.bf16.mxu0 0
        %2217 = vmatmul.mubr.bf16.gmra.mrb[0].mxu0 %v1987
        %v2218 = vpop.f32.mrb[0].mxu0
        %v2219 = vadd.f32 0.0, %v2218
        %v2220 = vpop.f32.mrb[0].mxu0
        %v2221 = vadd.f32 0.0, %v2220
        %v2222 = vpop.f32.mrb[0].mxu0
        %v2223 = vpop.f32.mrb[0].mxu0
        %2224 = vdwg.mxu0
        %2225 = vmatprep.subr.bf16.mxu0 %v2123
        %2226 = vmatpush1.bf16.msra.mxu0 %v2122
        %2227 = vmatprep.subr.bf16.mxu0 %v2127
        %2228 = vmatpush1.bf16.msra.mxu0 %v2126
        %2229 = vmatprep.subr.bf16.mxu0 %v2131
        %2230 = vmatpush1.bf16.msra.mxu0 %v2130
        %2231 = vmatprep.subr.bf16.mxu0 %v2135
        %2232 = vmatpush1.bf16.msra.mxu0 %v2134
        %2233 = vmatprep.subr.bf16.mxu0 %v2139
        %2234 = vmatpush1.bf16.msra.mxu0 %v2138
        %2235 = vmatprep.subr.bf16.mxu0 %v2143
        %2236 = vmatpush1.bf16.msra.mxu0 %v2142
        %2237 = vmatprep.subr.bf16.mxu0 %v2147
        %2238 = vmatpush1.bf16.msra.mxu0 %v2146
        %2239 = vmatprep.subr.bf16.mxu0 %v2151
        %2240 = vmatpush1.bf16.msra.mxu0 %v2150
        %2241 = vmatprep.subr.bf16.mxu0 0
        %2242 = vmatpush1.bf16.msra.mxu0 0
        %2243 = vmatprep.subr.bf16.mxu0 0
        %2244 = vmatpush1.bf16.msra.mxu0 0
        %2245 = vmatprep.subr.bf16.mxu0 0
        %2246 = vmatpush1.bf16.msra.mxu0 0
        %2247 = vmatprep.subr.bf16.mxu0 0
        %2248 = vmatpush1.bf16.msra.mxu0 0
        %2249 = vmatprep.subr.bf16.mxu0 0
        %2250 = vmatpush1.bf16.msra.mxu0 0
        %2251 = vmatprep.subr.bf16.mxu0 0
        %2252 = vmatpush1.bf16.msra.mxu0 0
        %2253 = vmatprep.subr.bf16.mxu0 0
        %2254 = vmatpush1.bf16.msra.mxu0 0
        %2255 = vmatprep.subr.bf16.mxu0 0
        %2256 = vmatpush1.bf16.msra.mxu0 0
        %2257 = vmatprep.mubr.bf16.mxu0 0
        %2258 = vmatmul.mubr.bf16.gmra.mrb[0].mxu0 %v1987
        %v2259 = vpop.f32.mrb[0].mxu0
        %v2260 = vadd.f32 0.0, %v2259
        %v2261 = vpop.f32.mrb[0].mxu0
        %v2262 = vadd.f32 0.0, %v2261
        %v2263 = vpop.f32.mrb[0].mxu0
        %v2264 = vpop.f32.mrb[0].mxu0
        %2265 = vdwg.mxu0
        %v2266 = vadd.f32 %v1988, %v2219
        %v2267 = vadd.f32 %v1989, %v2221
        %v2268 = vadd.f32 %v1990, %v2260
        %v2269 = vadd.f32 %v1991, %v2262
        %v2270 = vmul.f32 %v2266, 0.5
        %v2271 = vtanh.pop %v2270
        %v2272 = vmul.f32 %v2271, 0.5
        %v2273 = vadd.f32 %v2272, 0.5
        %v2274 = vmul.f32 %v2267, 0.5
        %v2275 = vtanh.pop %v2274
        %v2276 = vmul.f32 %v2275, 0.5
        %v2277 = vadd.f32 %v2276, 0.5
        %v2278 = vtanh.pop %v2268
        %v2279 = vmul.f32 %v2269, 0.5
        %v2280 = vtanh.pop %v2279
        %v2281 = vmul.f32 %v2280, 0.5
        %v2282 = vadd.f32 %v2281, 0.5
        %v2283 = vld [vmem:[#allocation3] sm:$0xff]
        %v2284 = vmul.f32 %v2277, %v2283
        %v2285 = vmul.f32 %v2273, %v2278
        %v2286 = vadd.f32 %v2284, %v2285
        %v2287 = vtanh.pop %v2286
        %v2288 = vmul.f32 %v2282, %v2287
        %2289 = vst [vmem:[#allocation2] sm:$0xff] %v2288
        %2290 = vst [vmem:[#allocation3] sm:$0xff] %v2286
        %v2291 = vpack.c.bf16 %v2288, %v2288
        %s2292 = scalar_lea.vmem %s403, 20
        %2293 = vst [vmem:[%s2292] sm:$0xf] %v2291
        %s2294 = scalar_lea.vmem %s372, 96
        %v2295 = vld [vmem:[%s2294] sm:$0xff]
        %v2296 = vld [vmem:[%s2294 + $0x8] sm:$0xff]
        %v2297 = vld [vmem:[#allocation2] sm:$0xff]
        %v2298 = vpack.c.bf16 %v2297, %v2297
        %v2299 = vunpack.c.l.bf16 %v2295
        %v2300 = vunpack.c.h.bf16 %v2295
        %v2301 = vunpack.c.l.bf16 %v2296
        %v2302 = vunpack.c.h.bf16 %v2296
        %v2303 = vld [vmem:[%s390] sm:$0xff]
        %v2304 = vld [vmem:[%s390 + $0x8] sm:$0xff]
        %v2305 = vld [vmem:[%s390 + $0x10] sm:$0xff]
        %v2306 = vld [vmem:[%s390 + $0x18] sm:$0xff]
        %v2307 = vld [vmem:[%s390 + $0x20] sm:$0xff]
        %v2308 = vld [vmem:[%s390 + $0x28] sm:$0xff]
        %v2309 = vld [vmem:[%s390 + $0x30] sm:$0xff]
        %v2310 = vld [vmem:[%s390 + $0x38] sm:$0xff]
        %v2311 = vld [vmem:[%s390 + $0x40] sm:$0xff]
        %v2312 = vld [vmem:[%s390 + $0x48] sm:$0xff]
        %v2313 = vld [vmem:[%s390 + $0x50] sm:$0xff]
        %v2314 = vld [vmem:[%s390 + $0x58] sm:$0xff]
        %v2315 = vld [vmem:[%s390 + $0x60] sm:$0xff]
        %v2316 = vld [vmem:[%s390 + $0x68] sm:$0xff]
        %v2317 = vld [vmem:[%s390 + $0x70] sm:$0xff]
        %v2318 = vld [vmem:[%s390 + $0x78] sm:$0xff]
        %v2319 = vld [vmem:[%s390 + $0x80] sm:$0xff]
        %v2320 = vld [vmem:[%s390 + $0x88] sm:$0xff]
        %v2321 = vld [vmem:[%s390 + $0x90] sm:$0xff]
        %v2322 = vld [vmem:[%s390 + $0x98] sm:$0xff]
        %v2323 = vld [vmem:[%s390 + $0xa0] sm:$0xff]
        %v2324 = vld [vmem:[%s390 + $0xa8] sm:$0xff]
        %v2325 = vld [vmem:[%s390 + $0xb0] sm:$0xff]
        %v2326 = vld [vmem:[%s390 + $0xb8] sm:$0xff]
        %v2327 = vld [vmem:[%s390 + $0xc0] sm:$0xff]
        %v2328 = vld [vmem:[%s390 + $0xc8] sm:$0xff]
        %v2329 = vld [vmem:[%s390 + $0xd0] sm:$0xff]
        %v2330 = vld [vmem:[%s390 + $0xd8] sm:$0xff]
        %v2331 = vld [vmem:[%s390 + $0xe0] sm:$0xff]
        %v2332 = vld [vmem:[%s390 + $0xe8] sm:$0xff]
        %v2333 = vld [vmem:[%s390 + $0xf0] sm:$0xff]
        %v2334 = vld [vmem:[%s390 + $0xf8] sm:$0xff]
        %v2367 = vunpack.c.l.b16 %v2303
        %v2368 = vunpack.c.h.b16 %v2303
        %v2369 = vunpack.c.l.b16 %v2304
        %v2370 = vunpack.c.h.b16 %v2304
        %v2371 = vunpack.c.l.b16 %v2305
        %v2372 = vunpack.c.h.b16 %v2305
        %v2373 = vunpack.c.l.b16 %v2306
        %v2374 = vunpack.c.h.b16 %v2306
        %v2375 = vunpack.c.l.b16 %v2307
        %v2376 = vunpack.c.h.b16 %v2307
        %v2377 = vunpack.c.l.b16 %v2308
        %v2378 = vunpack.c.h.b16 %v2308
        %v2379 = vunpack.c.l.b16 %v2309
        %v2380 = vunpack.c.h.b16 %v2309
        %v2381 = vunpack.c.l.b16 %v2310
        %v2382 = vunpack.c.h.b16 %v2310
        %v2383 = vunpack.c.l.b16 %v2311
        %v2384 = vunpack.c.h.b16 %v2311
        %v2385 = vunpack.c.l.b16 %v2312
        %v2386 = vunpack.c.h.b16 %v2312
        %v2387 = vunpack.c.l.b16 %v2313
        %v2388 = vunpack.c.h.b16 %v2313
        %v2389 = vunpack.c.l.b16 %v2314
        %v2390 = vunpack.c.h.b16 %v2314
        %v2391 = vunpack.c.l.b16 %v2315
        %v2392 = vunpack.c.h.b16 %v2315
        %v2393 = vunpack.c.l.b16 %v2316
        %v2394 = vunpack.c.h.b16 %v2316
        %v2395 = vunpack.c.l.b16 %v2317
        %v2396 = vunpack.c.h.b16 %v2317
        %v2397 = vunpack.c.l.b16 %v2318
        %v2398 = vunpack.c.h.b16 %v2318
        %v2399 = vunpack.c.l.b16 %v2319
        %v2400 = vunpack.c.h.b16 %v2319
        %v2401 = vunpack.c.l.b16 %v2320
        %v2402 = vunpack.c.h.b16 %v2320
        %v2403 = vunpack.c.l.b16 %v2321
        %v2404 = vunpack.c.h.b16 %v2321
        %v2405 = vunpack.c.l.b16 %v2322
        %v2406 = vunpack.c.h.b16 %v2322
        %v2407 = vunpack.c.l.b16 %v2323
        %v2408 = vunpack.c.h.b16 %v2323
        %v2409 = vunpack.c.l.b16 %v2324
        %v2410 = vunpack.c.h.b16 %v2324
        %v2411 = vunpack.c.l.b16 %v2325
        %v2412 = vunpack.c.h.b16 %v2325
        %v2413 = vunpack.c.l.b16 %v2326
        %v2414 = vunpack.c.h.b16 %v2326
        %v2415 = vunpack.c.l.b16 %v2327
        %v2416 = vunpack.c.h.b16 %v2327
        %v2417 = vunpack.c.l.b16 %v2328
        %v2418 = vunpack.c.h.b16 %v2328
        %v2419 = vunpack.c.l.b16 %v2329
        %v2420 = vunpack.c.h.b16 %v2329
        %v2421 = vunpack.c.l.b16 %v2330
        %v2422 = vunpack.c.h.b16 %v2330
        %v2423 = vunpack.c.l.b16 %v2331
        %v2424 = vunpack.c.h.b16 %v2331
        %v2425 = vunpack.c.l.b16 %v2332
        %v2426 = vunpack.c.h.b16 %v2332
        %v2427 = vunpack.c.l.b16 %v2333
        %v2428 = vunpack.c.h.b16 %v2333
        %v2429 = vunpack.c.l.b16 %v2334
        %v2430 = vunpack.c.h.b16 %v2334
        %v2431 = vpack.c.b16 %v2371, %v2367
        %v2432 = vpack.c.b16 %v2372, %v2368
        %v2433 = vpack.c.b16 %v2373, %v2369
        %v2434 = vpack.c.b16 %v2374, %v2370
        %v2435 = vpack.c.b16 %v2379, %v2375
        %v2436 = vpack.c.b16 %v2380, %v2376
        %v2437 = vpack.c.b16 %v2381, %v2377
        %v2438 = vpack.c.b16 %v2382, %v2378
        %v2439 = vpack.c.b16 %v2387, %v2383
        %v2440 = vpack.c.b16 %v2388, %v2384
        %v2441 = vpack.c.b16 %v2389, %v2385
        %v2442 = vpack.c.b16 %v2390, %v2386
        %v2443 = vpack.c.b16 %v2395, %v2391
        %v2444 = vpack.c.b16 %v2396, %v2392
        %v2445 = vpack.c.b16 %v2397, %v2393
        %v2446 = vpack.c.b16 %v2398, %v2394
        %v2447 = vpack.c.b16 %v2403, %v2399
        %v2448 = vpack.c.b16 %v2404, %v2400
        %v2449 = vpack.c.b16 %v2405, %v2401
        %v2450 = vpack.c.b16 %v2406, %v2402
        %v2451 = vpack.c.b16 %v2411, %v2407
        %v2452 = vpack.c.b16 %v2412, %v2408
        %v2453 = vpack.c.b16 %v2413, %v2409
        %v2454 = vpack.c.b16 %v2414, %v2410
        %v2455 = vpack.c.b16 %v2419, %v2415
        %v2456 = vpack.c.b16 %v2420, %v2416
        %v2457 = vpack.c.b16 %v2421, %v2417
        %v2458 = vpack.c.b16 %v2422, %v2418
        %v2459 = vpack.c.b16 %v2427, %v2423
        %v2460 = vpack.c.b16 %v2428, %v2424
        %v2461 = vpack.c.b16 %v2429, %v2425
        %v2462 = vpack.c.b16 %v2430, %v2426
        %2495 = vmatprep.subr.bf16.mxu0 %v2432
        %2496 = vmatpush1.bf16.msra.mxu0 %v2431
        %2497 = vmatprep.subr.bf16.mxu0 %v2436
        %2498 = vmatpush1.bf16.msra.mxu0 %v2435
        %2499 = vmatprep.subr.bf16.mxu0 %v2440
        %2500 = vmatpush1.bf16.msra.mxu0 %v2439
        %2501 = vmatprep.subr.bf16.mxu0 %v2444
        %2502 = vmatpush1.bf16.msra.mxu0 %v2443
        %2503 = vmatprep.subr.bf16.mxu0 %v2448
        %2504 = vmatpush1.bf16.msra.mxu0 %v2447
        %2505 = vmatprep.subr.bf16.mxu0 %v2452
        %2506 = vmatpush1.bf16.msra.mxu0 %v2451
        %2507 = vmatprep.subr.bf16.mxu0 %v2456
        %2508 = vmatpush1.bf16.msra.mxu0 %v2455
        %2509 = vmatprep.subr.bf16.mxu0 %v2460
        %2510 = vmatpush1.bf16.msra.mxu0 %v2459
        %2511 = vmatprep.subr.bf16.mxu0 0
        %2512 = vmatpush1.bf16.msra.mxu0 0
        %2513 = vmatprep.subr.bf16.mxu0 0
        %2514 = vmatpush1.bf16.msra.mxu0 0
        %2515 = vmatprep.subr.bf16.mxu0 0
        %2516 = vmatpush1.bf16.msra.mxu0 0
        %2517 = vmatprep.subr.bf16.mxu0 0
        %2518 = vmatpush1.bf16.msra.mxu0 0
        %2519 = vmatprep.subr.bf16.mxu0 0
        %2520 = vmatpush1.bf16.msra.mxu0 0
        %2521 = vmatprep.subr.bf16.mxu0 0
        %2522 = vmatpush1.bf16.msra.mxu0 0
        %2523 = vmatprep.subr.bf16.mxu0 0
        %2524 = vmatpush1.bf16.msra.mxu0 0
        %2525 = vmatprep.subr.bf16.mxu0 0
        %2526 = vmatpush1.bf16.msra.mxu0 0
        %2527 = vmatprep.mubr.bf16.mxu0 0
        %2528 = vmatmul.mubr.bf16.gmra.mrb[0].mxu0 %v2298
        %v2529 = vpop.f32.mrb[0].mxu0
        %v2530 = vadd.f32 0.0, %v2529
        %v2531 = vpop.f32.mrb[0].mxu0
        %v2532 = vadd.f32 0.0, %v2531
        %v2533 = vpop.f32.mrb[0].mxu0
        %v2534 = vpop.f32.mrb[0].mxu0
        %2535 = vdwg.mxu0
        %2536 = vmatprep.subr.bf16.mxu0 %v2434
        %2537 = vmatpush1.bf16.msra.mxu0 %v2433
        %2538 = vmatprep.subr.bf16.mxu0 %v2438
        %2539 = vmatpush1.bf16.msra.mxu0 %v2437
        %2540 = vmatprep.subr.bf16.mxu0 %v2442
        %2541 = vmatpush1.bf16.msra.mxu0 %v2441
        %2542 = vmatprep.subr.bf16.mxu0 %v2446
        %2543 = vmatpush1.bf16.msra.mxu0 %v2445
        %2544 = vmatprep.subr.bf16.mxu0 %v2450
        %2545 = vmatpush1.bf16.msra.mxu0 %v2449
        %2546 = vmatprep.subr.bf16.mxu0 %v2454
        %2547 = vmatpush1.bf16.msra.mxu0 %v2453
        %2548 = vmatprep.subr.bf16.mxu0 %v2458
        %2549 = vmatpush1.bf16.msra.mxu0 %v2457
        %2550 = vmatprep.subr.bf16.mxu0 %v2462
        %2551 = vmatpush1.bf16.msra.mxu0 %v2461
        %2552 = vmatprep.subr.bf16.mxu0 0
        %2553 = vmatpush1.bf16.msra.mxu0 0
        %2554 = vmatprep.subr.bf16.mxu0 0
        %2555 = vmatpush1.bf16.msra.mxu0 0
        %2556 = vmatprep.subr.bf16.mxu0 0
        %2557 = vmatpush1.bf16.msra.mxu0 0
        %2558 = vmatprep.subr.bf16.mxu0 0
        %2559 = vmatpush1.bf16.msra.mxu0 0
        %2560 = vmatprep.subr.bf16.mxu0 0
        %2561 = vmatpush1.bf16.msra.mxu0 0
        %2562 = vmatprep.subr.bf16.mxu0 0
        %2563 = vmatpush1.bf16.msra.mxu0 0
        %2564 = vmatprep.subr.bf16.mxu0 0
        %2565 = vmatpush1.bf16.msra.mxu0 0
        %2566 = vmatprep.subr.bf16.mxu0 0
        %2567 = vmatpush1.bf16.msra.mxu0 0
        %2568 = vmatprep.mubr.bf16.mxu0 0
        %2569 = vmatmul.mubr.bf16.gmra.mrb[0].mxu0 %v2298
        %v2570 = vpop.f32.mrb[0].mxu0
        %v2571 = vadd.f32 0.0, %v2570
        %v2572 = vpop.f32.mrb[0].mxu0
        %v2573 = vadd.f32 0.0, %v2572
        %v2574 = vpop.f32.mrb[0].mxu0
        %v2575 = vpop.f32.mrb[0].mxu0
        %2576 = vdwg.mxu0
        %v2577 = vadd.f32 %v2299, %v2530
        %v2578 = vadd.f32 %v2300, %v2532
        %v2579 = vadd.f32 %v2301, %v2571
        %v2580 = vadd.f32 %v2302, %v2573
        %v2581 = vmul.f32 %v2577, 0.5
        %v2582 = vtanh.pop %v2581
        %v2583 = vmul.f32 %v2582, 0.5
        %v2584 = vadd.f32 %v2583, 0.5
        %v2585 = vmul.f32 %v2578, 0.5
        %v2586 = vtanh.pop %v2585
        %v2587 = vmul.f32 %v2586, 0.5
        %v2588 = vadd.f32 %v2587, 0.5
        %v2589 = vtanh.pop %v2579
        %v2590 = vmul.f32 %v2580, 0.5
        %v2591 = vtanh.pop %v2590
        %v2592 = vmul.f32 %v2591, 0.5
        %v2593 = vadd.f32 %v2592, 0.5
        %v2594 = vld [vmem:[#allocation3] sm:$0xff]
        %v2595 = vmul.f32 %v2588, %v2594
        %v2596 = vmul.f32 %v2584, %v2589
        %v2597 = vadd.f32 %v2595, %v2596
        %v2598 = vtanh.pop %v2597
        %v2599 = vmul.f32 %v2593, %v2598
        %2600 = vst [vmem:[#allocation2] sm:$0xff] %v2599
        %2601 = vst [vmem:[#allocation3] sm:$0xff] %v2597
        %v2602 = vpack.c.bf16 %v2599, %v2599
        %s2603 = scalar_lea.vmem %s403, 24
        %2604 = vst [vmem:[%s2603] sm:$0xf] %v2602
        %s2605 = scalar_lea.vmem %s372, 112
        %v2606 = vld [vmem:[%s2605] sm:$0xff]
        %v2607 = vld [vmem:[%s2605 + $0x8] sm:$0xff]
        %v2608 = vld [vmem:[#allocation2] sm:$0xff]
        %v2609 = vpack.c.bf16 %v2608, %v2608
        %v2610 = vunpack.c.l.bf16 %v2606
        %v2611 = vunpack.c.h.bf16 %v2606
        %v2612 = vunpack.c.l.bf16 %v2607
        %v2613 = vunpack.c.h.bf16 %v2607
        %v2614 = vld [vmem:[%s390] sm:$0xff]
        %v2615 = vld [vmem:[%s390 + $0x8] sm:$0xff]
        %v2616 = vld [vmem:[%s390 + $0x10] sm:$0xff]
        %v2617 = vld [vmem:[%s390 + $0x18] sm:$0xff]
        %v2618 = vld [vmem:[%s390 + $0x20] sm:$0xff]
        %v2619 = vld [vmem:[%s390 + $0x28] sm:$0xff]
        %v2620 = vld [vmem:[%s390 + $0x30] sm:$0xff]
        %v2621 = vld [vmem:[%s390 + $0x38] sm:$0xff]
        %v2622 = vld [vmem:[%s390 + $0x40] sm:$0xff]
        %v2623 = vld [vmem:[%s390 + $0x48] sm:$0xff]
        %v2624 = vld [vmem:[%s390 + $0x50] sm:$0xff]
        %v2625 = vld [vmem:[%s390 + $0x58] sm:$0xff]
        %v2626 = vld [vmem:[%s390 + $0x60] sm:$0xff]
        %v2627 = vld [vmem:[%s390 + $0x68] sm:$0xff]
        %v2628 = vld [vmem:[%s390 + $0x70] sm:$0xff]
        %v2629 = vld [vmem:[%s390 + $0x78] sm:$0xff]
        %v2630 = vld [vmem:[%s390 + $0x80] sm:$0xff]
        %v2631 = vld [vmem:[%s390 + $0x88] sm:$0xff]
        %v2632 = vld [vmem:[%s390 + $0x90] sm:$0xff]
        %v2633 = vld [vmem:[%s390 + $0x98] sm:$0xff]
        %v2634 = vld [vmem:[%s390 + $0xa0] sm:$0xff]
        %v2635 = vld [vmem:[%s390 + $0xa8] sm:$0xff]
        %v2636 = vld [vmem:[%s390 + $0xb0] sm:$0xff]
        %v2637 = vld [vmem:[%s390 + $0xb8] sm:$0xff]
        %v2638 = vld [vmem:[%s390 + $0xc0] sm:$0xff]
        %v2639 = vld [vmem:[%s390 + $0xc8] sm:$0xff]
        %v2640 = vld [vmem:[%s390 + $0xd0] sm:$0xff]
        %v2641 = vld [vmem:[%s390 + $0xd8] sm:$0xff]
        %v2642 = vld [vmem:[%s390 + $0xe0] sm:$0xff]
        %v2643 = vld [vmem:[%s390 + $0xe8] sm:$0xff]
        %v2644 = vld [vmem:[%s390 + $0xf0] sm:$0xff]
        %v2645 = vld [vmem:[%s390 + $0xf8] sm:$0xff]
        %v2678 = vunpack.c.l.b16 %v2614
        %v2679 = vunpack.c.h.b16 %v2614
        %v2680 = vunpack.c.l.b16 %v2615
        %v2681 = vunpack.c.h.b16 %v2615
        %v2682 = vunpack.c.l.b16 %v2616
        %v2683 = vunpack.c.h.b16 %v2616
        %v2684 = vunpack.c.l.b16 %v2617
        %v2685 = vunpack.c.h.b16 %v2617
        %v2686 = vunpack.c.l.b16 %v2618
        %v2687 = vunpack.c.h.b16 %v2618
        %v2688 = vunpack.c.l.b16 %v2619
        %v2689 = vunpack.c.h.b16 %v2619
        %v2690 = vunpack.c.l.b16 %v2620
        %v2691 = vunpack.c.h.b16 %v2620
        %v2692 = vunpack.c.l.b16 %v2621
        %v2693 = vunpack.c.h.b16 %v2621
        %v2694 = vunpack.c.l.b16 %v2622
        %v2695 = vunpack.c.h.b16 %v2622
        %v2696 = vunpack.c.l.b16 %v2623
        %v2697 = vunpack.c.h.b16 %v2623
        %v2698 = vunpack.c.l.b16 %v2624
        %v2699 = vunpack.c.h.b16 %v2624
        %v2700 = vunpack.c.l.b16 %v2625
        %v2701 = vunpack.c.h.b16 %v2625
        %v2702 = vunpack.c.l.b16 %v2626
        %v2703 = vunpack.c.h.b16 %v2626
        %v2704 = vunpack.c.l.b16 %v2627
        %v2705 = vunpack.c.h.b16 %v2627
        %v2706 = vunpack.c.l.b16 %v2628
        %v2707 = vunpack.c.h.b16 %v2628
        %v2708 = vunpack.c.l.b16 %v2629
        %v2709 = vunpack.c.h.b16 %v2629
        %v2710 = vunpack.c.l.b16 %v2630
        %v2711 = vunpack.c.h.b16 %v2630
        %v2712 = vunpack.c.l.b16 %v2631
        %v2713 = vunpack.c.h.b16 %v2631
        %v2714 = vunpack.c.l.b16 %v2632
        %v2715 = vunpack.c.h.b16 %v2632
        %v2716 = vunpack.c.l.b16 %v2633
        %v2717 = vunpack.c.h.b16 %v2633
        %v2718 = vunpack.c.l.b16 %v2634
        %v2719 = vunpack.c.h.b16 %v2634
        %v2720 = vunpack.c.l.b16 %v2635
        %v2721 = vunpack.c.h.b16 %v2635
        %v2722 = vunpack.c.l.b16 %v2636
        %v2723 = vunpack.c.h.b16 %v2636
        %v2724 = vunpack.c.l.b16 %v2637
        %v2725 = vunpack.c.h.b16 %v2637
        %v2726 = vunpack.c.l.b16 %v2638
        %v2727 = vunpack.c.h.b16 %v2638
        %v2728 = vunpack.c.l.b16 %v2639
        %v2729 = vunpack.c.h.b16 %v2639
        %v2730 = vunpack.c.l.b16 %v2640
        %v2731 = vunpack.c.h.b16 %v2640
        %v2732 = vunpack.c.l.b16 %v2641
        %v2733 = vunpack.c.h.b16 %v2641
        %v2734 = vunpack.c.l.b16 %v2642
        %v2735 = vunpack.c.h.b16 %v2642
        %v2736 = vunpack.c.l.b16 %v2643
        %v2737 = vunpack.c.h.b16 %v2643
        %v2738 = vunpack.c.l.b16 %v2644
        %v2739 = vunpack.c.h.b16 %v2644
        %v2740 = vunpack.c.l.b16 %v2645
        %v2741 = vunpack.c.h.b16 %v2645
        %v2742 = vpack.c.b16 %v2682, %v2678
        %v2743 = vpack.c.b16 %v2683, %v2679
        %v2744 = vpack.c.b16 %v2684, %v2680
        %v2745 = vpack.c.b16 %v2685, %v2681
        %v2746 = vpack.c.b16 %v2690, %v2686
        %v2747 = vpack.c.b16 %v2691, %v2687
        %v2748 = vpack.c.b16 %v2692, %v2688
        %v2749 = vpack.c.b16 %v2693, %v2689
        %v2750 = vpack.c.b16 %v2698, %v2694
        %v2751 = vpack.c.b16 %v2699, %v2695
        %v2752 = vpack.c.b16 %v2700, %v2696
        %v2753 = vpack.c.b16 %v2701, %v2697
        %v2754 = vpack.c.b16 %v2706, %v2702
        %v2755 = vpack.c.b16 %v2707, %v2703
        %v2756 = vpack.c.b16 %v2708, %v2704
        %v2757 = vpack.c.b16 %v2709, %v2705
        %v2758 = vpack.c.b16 %v2714, %v2710
        %v2759 = vpack.c.b16 %v2715, %v2711
        %v2760 = vpack.c.b16 %v2716, %v2712
        %v2761 = vpack.c.b16 %v2717, %v2713
        %v2762 = vpack.c.b16 %v2722, %v2718
        %v2763 = vpack.c.b16 %v2723, %v2719
        %v2764 = vpack.c.b16 %v2724, %v2720
        %v2765 = vpack.c.b16 %v2725, %v2721
        %v2766 = vpack.c.b16 %v2730, %v2726
        %v2767 = vpack.c.b16 %v2731, %v2727
        %v2768 = vpack.c.b16 %v2732, %v2728
        %v2769 = vpack.c.b16 %v2733, %v2729
        %v2770 = vpack.c.b16 %v2738, %v2734
        %v2771 = vpack.c.b16 %v2739, %v2735
        %v2772 = vpack.c.b16 %v2740, %v2736
        %v2773 = vpack.c.b16 %v2741, %v2737
        %2806 = vmatprep.subr.bf16.mxu0 %v2743
        %2807 = vmatpush1.bf16.msra.mxu0 %v2742
        %2808 = vmatprep.subr.bf16.mxu0 %v2747
        %2809 = vmatpush1.bf16.msra.mxu0 %v2746
        %2810 = vmatprep.subr.bf16.mxu0 %v2751
        %2811 = vmatpush1.bf16.msra.mxu0 %v2750
        %2812 = vmatprep.subr.bf16.mxu0 %v2755
        %2813 = vmatpush1.bf16.msra.mxu0 %v2754
        %2814 = vmatprep.subr.bf16.mxu0 %v2759
        %2815 = vmatpush1.bf16.msra.mxu0 %v2758
        %2816 = vmatprep.subr.bf16.mxu0 %v2763
        %2817 = vmatpush1.bf16.msra.mxu0 %v2762
        %2818 = vmatprep.subr.bf16.mxu0 %v2767
        %2819 = vmatpush1.bf16.msra.mxu0 %v2766
        %2820 = vmatprep.subr.bf16.mxu0 %v2771
        %2821 = vmatpush1.bf16.msra.mxu0 %v2770
        %2822 = vmatprep.subr.bf16.mxu0 0
        %2823 = vmatpush1.bf16.msra.mxu0 0
        %2824 = vmatprep.subr.bf16.mxu0 0
        %2825 = vmatpush1.bf16.msra.mxu0 0
        %2826 = vmatprep.subr.bf16.mxu0 0
        %2827 = vmatpush1.bf16.msra.mxu0 0
        %2828 = vmatprep.subr.bf16.mxu0 0
        %2829 = vmatpush1.bf16.msra.mxu0 0
        %2830 = vmatprep.subr.bf16.mxu0 0
        %2831 = vmatpush1.bf16.msra.mxu0 0
        %2832 = vmatprep.subr.bf16.mxu0 0
        %2833 = vmatpush1.bf16.msra.mxu0 0
        %2834 = vmatprep.subr.bf16.mxu0 0
        %2835 = vmatpush1.bf16.msra.mxu0 0
        %2836 = vmatprep.subr.bf16.mxu0 0
        %2837 = vmatpush1.bf16.msra.mxu0 0
        %2838 = vmatprep.mubr.bf16.mxu0 0
        %2839 = vmatmul.mubr.bf16.gmra.mrb[0].mxu0 %v2609
        %v2840 = vpop.f32.mrb[0].mxu0
        %v2841 = vadd.f32 0.0, %v2840
        %v2842 = vpop.f32.mrb[0].mxu0
        %v2843 = vadd.f32 0.0, %v2842
        %v2844 = vpop.f32.mrb[0].mxu0
        %v2845 = vpop.f32.mrb[0].mxu0
        %2846 = vdwg.mxu0
        %2847 = vmatprep.subr.bf16.mxu0 %v2745
        %2848 = vmatpush1.bf16.msra.mxu0 %v2744
        %2849 = vmatprep.subr.bf16.mxu0 %v2749
        %2850 = vmatpush1.bf16.msra.mxu0 %v2748
        %2851 = vmatprep.subr.bf16.mxu0 %v2753
        %2852 = vmatpush1.bf16.msra.mxu0 %v2752
        %2853 = vmatprep.subr.bf16.mxu0 %v2757
        %2854 = vmatpush1.bf16.msra.mxu0 %v2756
        %2855 = vmatprep.subr.bf16.mxu0 %v2761
        %2856 = vmatpush1.bf16.msra.mxu0 %v2760
        %2857 = vmatprep.subr.bf16.mxu0 %v2765
        %2858 = vmatpush1.bf16.msra.mxu0 %v2764
        %2859 = vmatprep.subr.bf16.mxu0 %v2769
        %2860 = vmatpush1.bf16.msra.mxu0 %v2768
        %2861 = vmatprep.subr.bf16.mxu0 %v2773
        %2862 = vmatpush1.bf16.msra.mxu0 %v2772
        %2863 = vmatprep.subr.bf16.mxu0 0
        %2864 = vmatpush1.bf16.msra.mxu0 0
        %2865 = vmatprep.subr.bf16.mxu0 0
        %2866 = vmatpush1.bf16.msra.mxu0 0
        %2867 = vmatprep.subr.bf16.mxu0 0
        %2868 = vmatpush1.bf16.msra.mxu0 0
        %2869 = vmatprep.subr.bf16.mxu0 0
        %2870 = vmatpush1.bf16.msra.mxu0 0
        %2871 = vmatprep.subr.bf16.mxu0 0
        %2872 = vmatpush1.bf16.msra.mxu0 0
        %2873 = vmatprep.subr.bf16.mxu0 0
        %2874 = vmatpush1.bf16.msra.mxu0 0
        %2875 = vmatprep.subr.bf16.mxu0 0
        %2876 = vmatpush1.bf16.msra.mxu0 0
        %2877 = vmatprep.subr.bf16.mxu0 0
        %2878 = vmatpush1.bf16.msra.mxu0 0
        %2879 = vmatprep.mubr.bf16.mxu0 0
        %2880 = vmatmul.mubr.bf16.gmra.mrb[0].mxu0 %v2609
        %v2881 = vpop.f32.mrb[0].mxu0
        %v2882 = vadd.f32 0.0, %v2881
        %v2883 = vpop.f32.mrb[0].mxu0
        %v2884 = vadd.f32 0.0, %v2883
        %v2885 = vpop.f32.mrb[0].mxu0
        %v2886 = vpop.f32.mrb[0].mxu0
        %2887 = vdwg.mxu0
        %v2888 = vadd.f32 %v2610, %v2841
        %v2889 = vadd.f32 %v2611, %v2843
        %v2890 = vadd.f32 %v2612, %v2882
        %v2891 = vadd.f32 %v2613, %v2884
        %v2892 = vmul.f32 %v2888, 0.5
        %v2893 = vtanh.pop %v2892
        %v2894 = vmul.f32 %v2893, 0.5
        %v2895 = vadd.f32 %v2894, 0.5
        %v2896 = vmul.f32 %v2889, 0.5
        %v2897 = vtanh.pop %v2896
        %v2898 = vmul.f32 %v2897, 0.5
        %v2899 = vadd.f32 %v2898, 0.5
        %v2900 = vtanh.pop %v2890
        %v2901 = vmul.f32 %v2891, 0.5
        %v2902 = vtanh.pop %v2901
        %v2903 = vmul.f32 %v2902, 0.5
        %v2904 = vadd.f32 %v2903, 0.5
        %v2905 = vld [vmem:[#allocation3] sm:$0xff]
        %v2906 = vmul.f32 %v2899, %v2905
        %v2907 = vmul.f32 %v2895, %v2900
        %v2908 = vadd.f32 %v2906, %v2907
        %v2909 = vtanh.pop %v2908
        %v2910 = vmul.f32 %v2904, %v2909
        %2911 = vst [vmem:[#allocation2] sm:$0xff] %v2910
        %2912 = vst [vmem:[#allocation3] sm:$0xff] %v2908
        %v2913 = vpack.c.bf16 %v2910, %v2910
        %s2914 = scalar_lea.vmem %s403, 28
        %2915 = vst [vmem:[%s2914] sm:$0xf] %v2913
      $region44: #{bilstm_forward.1} parent=35 // pred_fallthru
        _
      %p2916 = scmp.eq.s32.totalorder %s22, 1
      // Predicated region
      $region45: #{bilstm_forward.1} parent=35 // pred_check
        %p2917 = pneg %p2916
      $region46: #{bilstm_forward.1} parent=35 // pred_check_branch
        %2919 = sbr.rel (%p2917) target = $region48
      $region47: #{bilstm_forward.1} parent=35 // pred_region
        %s2920 = scalar_lea.vmem %s372, 112
        %v2921 = vld [vmem:[%s2920] sm:$0xff]
        %v2922 = vld [vmem:[%s2920 + $0x8] sm:$0xff]
        %v2923 = vld [vmem:[#allocation2] sm:$0xff]
        %v2924 = vpack.c.bf16 %v2923, %v2923
        %v2925 = vunpack.c.l.bf16 %v2921
        %v2926 = vunpack.c.h.bf16 %v2921
        %v2927 = vunpack.c.l.bf16 %v2922
        %v2928 = vunpack.c.h.bf16 %v2922
        %v2929 = vld [vmem:[%s390] sm:$0xff]
        %v2930 = vld [vmem:[%s390 + $0x8] sm:$0xff]
        %v2931 = vld [vmem:[%s390 + $0x10] sm:$0xff]
        %v2932 = vld [vmem:[%s390 + $0x18] sm:$0xff]
        %v2933 = vld [vmem:[%s390 + $0x20] sm:$0xff]
        %v2934 = vld [vmem:[%s390 + $0x28] sm:$0xff]
        %v2935 = vld [vmem:[%s390 + $0x30] sm:$0xff]
        %v2936 = vld [vmem:[%s390 + $0x38] sm:$0xff]
        %v2937 = vld [vmem:[%s390 + $0x40] sm:$0xff]
        %v2938 = vld [vmem:[%s390 + $0x48] sm:$0xff]
        %v2939 = vld [vmem:[%s390 + $0x50] sm:$0xff]
        %v2940 = vld [vmem:[%s390 + $0x58] sm:$0xff]
        %v2941 = vld [vmem:[%s390 + $0x60] sm:$0xff]
        %v2942 = vld [vmem:[%s390 + $0x68] sm:$0xff]
        %v2943 = vld [vmem:[%s390 + $0x70] sm:$0xff]
        %v2944 = vld [vmem:[%s390 + $0x78] sm:$0xff]
        %v2945 = vld [vmem:[%s390 + $0x80] sm:$0xff]
        %v2946 = vld [vmem:[%s390 + $0x88] sm:$0xff]
        %v2947 = vld [vmem:[%s390 + $0x90] sm:$0xff]
        %v2948 = vld [vmem:[%s390 + $0x98] sm:$0xff]
        %v2949 = vld [vmem:[%s390 + $0xa0] sm:$0xff]
        %v2950 = vld [vmem:[%s390 + $0xa8] sm:$0xff]
        %v2951 = vld [vmem:[%s390 + $0xb0] sm:$0xff]
        %v2952 = vld [vmem:[%s390 + $0xb8] sm:$0xff]
        %v2953 = vld [vmem:[%s390 + $0xc0] sm:$0xff]
        %v2954 = vld [vmem:[%s390 + $0xc8] sm:$0xff]
        %v2955 = vld [vmem:[%s390 + $0xd0] sm:$0xff]
        %v2956 = vld [vmem:[%s390 + $0xd8] sm:$0xff]
        %v2957 = vld [vmem:[%s390 + $0xe0] sm:$0xff]
        %v2958 = vld [vmem:[%s390 + $0xe8] sm:$0xff]
        %v2959 = vld [vmem:[%s390 + $0xf0] sm:$0xff]
        %v2960 = vld [vmem:[%s390 + $0xf8] sm:$0xff]
        %v2993 = vunpack.c.l.b16 %v2929
        %v2994 = vunpack.c.h.b16 %v2929
        %v2995 = vunpack.c.l.b16 %v2930
        %v2996 = vunpack.c.h.b16 %v2930
        %v2997 = vunpack.c.l.b16 %v2931
        %v2998 = vunpack.c.h.b16 %v2931
        %v2999 = vunpack.c.l.b16 %v2932
        %v3000 = vunpack.c.h.b16 %v2932
        %v3001 = vunpack.c.l.b16 %v2933
        %v3002 = vunpack.c.h.b16 %v2933
        %v3003 = vunpack.c.l.b16 %v2934
        %v3004 = vunpack.c.h.b16 %v2934
        %v3005 = vunpack.c.l.b16 %v2935
        %v3006 = vunpack.c.h.b16 %v2935
        %v3007 = vunpack.c.l.b16 %v2936
        %v3008 = vunpack.c.h.b16 %v2936
        %v3009 = vunpack.c.l.b16 %v2937
        %v3010 = vunpack.c.h.b16 %v2937
        %v3011 = vunpack.c.l.b16 %v2938
        %v3012 = vunpack.c.h.b16 %v2938
        %v3013 = vunpack.c.l.b16 %v2939
        %v3014 = vunpack.c.h.b16 %v2939
        %v3015 = vunpack.c.l.b16 %v2940
        %v3016 = vunpack.c.h.b16 %v2940
        %v3017 = vunpack.c.l.b16 %v2941
        %v3018 = vunpack.c.h.b16 %v2941
        %v3019 = vunpack.c.l.b16 %v2942
        %v3020 = vunpack.c.h.b16 %v2942
        %v3021 = vunpack.c.l.b16 %v2943
        %v3022 = vunpack.c.h.b16 %v2943
        %v3023 = vunpack.c.l.b16 %v2944
        %v3024 = vunpack.c.h.b16 %v2944
        %v3025 = vunpack.c.l.b16 %v2945
        %v3026 = vunpack.c.h.b16 %v2945
        %v3027 = vunpack.c.l.b16 %v2946
        %v3028 = vunpack.c.h.b16 %v2946
        %v3029 = vunpack.c.l.b16 %v2947
        %v3030 = vunpack.c.h.b16 %v2947
        %v3031 = vunpack.c.l.b16 %v2948
        %v3032 = vunpack.c.h.b16 %v2948
        %v3033 = vunpack.c.l.b16 %v2949
        %v3034 = vunpack.c.h.b16 %v2949
        %v3035 = vunpack.c.l.b16 %v2950
        %v3036 = vunpack.c.h.b16 %v2950
        %v3037 = vunpack.c.l.b16 %v2951
        %v3038 = vunpack.c.h.b16 %v2951
        %v3039 = vunpack.c.l.b16 %v2952
        %v3040 = vunpack.c.h.b16 %v2952
        %v3041 = vunpack.c.l.b16 %v2953
        %v3042 = vunpack.c.h.b16 %v2953
        %v3043 = vunpack.c.l.b16 %v2954
        %v3044 = vunpack.c.h.b16 %v2954
        %v3045 = vunpack.c.l.b16 %v2955
        %v3046 = vunpack.c.h.b16 %v2955
        %v3047 = vunpack.c.l.b16 %v2956
        %v3048 = vunpack.c.h.b16 %v2956
        %v3049 = vunpack.c.l.b16 %v2957
        %v3050 = vunpack.c.h.b16 %v2957
        %v3051 = vunpack.c.l.b16 %v2958
        %v3052 = vunpack.c.h.b16 %v2958
        %v3053 = vunpack.c.l.b16 %v2959
        %v3054 = vunpack.c.h.b16 %v2959
        %v3055 = vunpack.c.l.b16 %v2960
        %v3056 = vunpack.c.h.b16 %v2960
        %v3057 = vpack.c.b16 %v2997, %v2993
        %v3058 = vpack.c.b16 %v2998, %v2994
        %v3059 = vpack.c.b16 %v2999, %v2995
        %v3060 = vpack.c.b16 %v3000, %v2996
        %v3061 = vpack.c.b16 %v3005, %v3001
        %v3062 = vpack.c.b16 %v3006, %v3002
        %v3063 = vpack.c.b16 %v3007, %v3003
        %v3064 = vpack.c.b16 %v3008, %v3004
        %v3065 = vpack.c.b16 %v3013, %v3009
        %v3066 = vpack.c.b16 %v3014, %v3010
        %v3067 = vpack.c.b16 %v3015, %v3011
        %v3068 = vpack.c.b16 %v3016, %v3012
        %v3069 = vpack.c.b16 %v3021, %v3017
        %v3070 = vpack.c.b16 %v3022, %v3018
        %v3071 = vpack.c.b16 %v3023, %v3019
        %v3072 = vpack.c.b16 %v3024, %v3020
        %v3073 = vpack.c.b16 %v3029, %v3025
        %v3074 = vpack.c.b16 %v3030, %v3026
        %v3075 = vpack.c.b16 %v3031, %v3027
        %v3076 = vpack.c.b16 %v3032, %v3028
        %v3077 = vpack.c.b16 %v3037, %v3033
        %v3078 = vpack.c.b16 %v3038, %v3034
        %v3079 = vpack.c.b16 %v3039, %v3035
        %v3080 = vpack.c.b16 %v3040, %v3036
        %v3081 = vpack.c.b16 %v3045, %v3041
        %v3082 = vpack.c.b16 %v3046, %v3042
        %v3083 = vpack.c.b16 %v3047, %v3043
        %v3084 = vpack.c.b16 %v3048, %v3044
        %v3085 = vpack.c.b16 %v3053, %v3049
        %v3086 = vpack.c.b16 %v3054, %v3050
        %v3087 = vpack.c.b16 %v3055, %v3051
        %v3088 = vpack.c.b16 %v3056, %v3052
        %3121 = vmatprep.subr.bf16.mxu0 %v3058
        %3122 = vmatpush1.bf16.msra.mxu0 %v3057
        %3123 = vmatprep.subr.bf16.mxu0 %v3062
        %3124 = vmatpush1.bf16.msra.mxu0 %v3061
        %3125 = vmatprep.subr.bf16.mxu0 %v3066
        %3126 = vmatpush1.bf16.msra.mxu0 %v3065
        %3127 = vmatprep.subr.bf16.mxu0 %v3070
        %3128 = vmatpush1.bf16.msra.mxu0 %v3069
        %3129 = vmatprep.subr.bf16.mxu0 %v3074
        %3130 = vmatpush1.bf16.msra.mxu0 %v3073
        %3131 = vmatprep.subr.bf16.mxu0 %v3078
        %3132 = vmatpush1.bf16.msra.mxu0 %v3077
        %3133 = vmatprep.subr.bf16.mxu0 %v3082
        %3134 = vmatpush1.bf16.msra.mxu0 %v3081
        %3135 = vmatprep.subr.bf16.mxu0 %v3086
        %3136 = vmatpush1.bf16.msra.mxu0 %v3085
        %3137 = vmatprep.subr.bf16.mxu0 0
        %3138 = vmatpush1.bf16.msra.mxu0 0
        %3139 = vmatprep.subr.bf16.mxu0 0
        %3140 = vmatpush1.bf16.msra.mxu0 0
        %3141 = vmatprep.subr.bf16.mxu0 0
        %3142 = vmatpush1.bf16.msra.mxu0 0
        %3143 = vmatprep.subr.bf16.mxu0 0
        %3144 = vmatpush1.bf16.msra.mxu0 0
        %3145 = vmatprep.subr.bf16.mxu0 0
        %3146 = vmatpush1.bf16.msra.mxu0 0
        %3147 = vmatprep.subr.bf16.mxu0 0
        %3148 = vmatpush1.bf16.msra.mxu0 0
        %3149 = vmatprep.subr.bf16.mxu0 0
        %3150 = vmatpush1.bf16.msra.mxu0 0
        %3151 = vmatprep.subr.bf16.mxu0 0
        %3152 = vmatpush1.bf16.msra.mxu0 0
        %3153 = vmatprep.mubr.bf16.mxu0 0
        %3154 = vmatmul.mubr.bf16.gmra.mrb[0].mxu0 %v2924
        %v3155 = vpop.f32.mrb[0].mxu0
        %v3156 = vadd.f32 0.0, %v3155
        %v3157 = vpop.f32.mrb[0].mxu0
        %v3158 = vadd.f32 0.0, %v3157
        %v3159 = vpop.f32.mrb[0].mxu0
        %v3160 = vpop.f32.mrb[0].mxu0
        %3161 = vdwg.mxu0
        %3162 = vmatprep.subr.bf16.mxu0 %v3060
        %3163 = vmatpush1.bf16.msra.mxu0 %v3059
        %3164 = vmatprep.subr.bf16.mxu0 %v3064
        %3165 = vmatpush1.bf16.msra.mxu0 %v3063
        %3166 = vmatprep.subr.bf16.mxu0 %v3068
        %3167 = vmatpush1.bf16.msra.mxu0 %v3067
        %3168 = vmatprep.subr.bf16.mxu0 %v3072
        %3169 = vmatpush1.bf16.msra.mxu0 %v3071
        %3170 = vmatprep.subr.bf16.mxu0 %v3076
        %3171 = vmatpush1.bf16.msra.mxu0 %v3075
        %3172 = vmatprep.subr.bf16.mxu0 %v3080
        %3173 = vmatpush1.bf16.msra.mxu0 %v3079
        %3174 = vmatprep.subr.bf16.mxu0 %v3084
        %3175 = vmatpush1.bf16.msra.mxu0 %v3083
        %3176 = vmatprep.subr.bf16.mxu0 %v3088
        %3177 = vmatpush1.bf16.msra.mxu0 %v3087
        %3178 = vmatprep.subr.bf16.mxu0 0
        %3179 = vmatpush1.bf16.msra.mxu0 0
        %3180 = vmatprep.subr.bf16.mxu0 0
        %3181 = vmatpush1.bf16.msra.mxu0 0
        %3182 = vmatprep.subr.bf16.mxu0 0
        %3183 = vmatpush1.bf16.msra.mxu0 0
        %3184 = vmatprep.subr.bf16.mxu0 0
        %3185 = vmatpush1.bf16.msra.mxu0 0
        %3186 = vmatprep.subr.bf16.mxu0 0
        %3187 = vmatpush1.bf16.msra.mxu0 0
        %3188 = vmatprep.subr.bf16.mxu0 0
        %3189 = vmatpush1.bf16.msra.mxu0 0
        %3190 = vmatprep.subr.bf16.mxu0 0
        %3191 = vmatpush1.bf16.msra.mxu0 0
        %3192 = vmatprep.subr.bf16.mxu0 0
        %3193 = vmatpush1.bf16.msra.mxu0 0
        %3194 = vmatprep.mubr.bf16.mxu0 0
        %3195 = vmatmul.mubr.bf16.gmra.mrb[0].mxu0 %v2924
        %v3196 = vpop.f32.mrb[0].mxu0
        %v3197 = vadd.f32 0.0, %v3196
        %v3198 = vpop.f32.mrb[0].mxu0
        %v3199 = vadd.f32 0.0, %v3198
        %v3200 = vpop.f32.mrb[0].mxu0
        %v3201 = vpop.f32.mrb[0].mxu0
        %3202 = vdwg.mxu0
        %v3203 = vadd.f32 %v2925, %v3156
        %v3204 = vadd.f32 %v2926, %v3158
        %v3205 = vadd.f32 %v2927, %v3197
        %v3206 = vadd.f32 %v2928, %v3199
        %v3207 = vmul.f32 %v3203, 0.5
        %v3208 = vtanh.pop %v3207
        %v3209 = vmul.f32 %v3208, 0.5
        %v3210 = vadd.f32 %v3209, 0.5
        %v3211 = vmul.f32 %v3204, 0.5
        %v3212 = vtanh.pop %v3211
        %v3213 = vmul.f32 %v3212, 0.5
        %v3214 = vadd.f32 %v3213, 0.5
        %v3215 = vtanh.pop %v3205
        %v3216 = vmul.f32 %v3206, 0.5
        %v3217 = vtanh.pop %v3216
        %v3218 = vmul.f32 %v3217, 0.5
        %v3219 = vadd.f32 %v3218, 0.5
        %v3220 = vld [vmem:[#allocation3] sm:$0xff]
        %v3221 = vmul.f32 %v3214, %v3220
        %v3222 = vmul.f32 %v3210, %v3215
        %v3223 = vadd.f32 %v3221, %v3222
        %v3224 = vtanh.pop %v3223
        %v3225 = vmul.f32 %v3219, %v3224
        %3226 = vst [vmem:[#allocation2] sm:$0xff] %v3225
        %3227 = vst [vmem:[#allocation3] sm:$0xff] %v3223
        %v3228 = vpack.c.bf16 %v3225, %v3225
        %s3229 = scalar_lea.vmem %s403, 28
        %3230 = vst [vmem:[%s3229] sm:$0xf] %v3228
        %s3231 = scalar_lea.vmem %s372, 96
        %v3232 = vld [vmem:[%s3231] sm:$0xff]
        %v3233 = vld [vmem:[%s3231 + $0x8] sm:$0xff]
        %v3234 = vld [vmem:[#allocation2] sm:$0xff]
        %v3235 = vpack.c.bf16 %v3234, %v3234
        %v3236 = vunpack.c.l.bf16 %v3232
        %v3237 = vunpack.c.h.bf16 %v3232
        %v3238 = vunpack.c.l.bf16 %v3233
        %v3239 = vunpack.c.h.bf16 %v3233
        %v3240 = vld [vmem:[%s390] sm:$0xff]
        %v3241 = vld [vmem:[%s390 + $0x8] sm:$0xff]
        %v3242 = vld [vmem:[%s390 + $0x10] sm:$0xff]
        %v3243 = vld [vmem:[%s390 + $0x18] sm:$0xff]
        %v3244 = vld [vmem:[%s390 + $0x20] sm:$0xff]
        %v3245 = vld [vmem:[%s390 + $0x28] sm:$0xff]
        %v3246 = vld [vmem:[%s390 + $0x30] sm:$0xff]
        %v3247 = vld [vmem:[%s390 + $0x38] sm:$0xff]
        %v3248 = vld [vmem:[%s390 + $0x40] sm:$0xff]
        %v3249 = vld [vmem:[%s390 + $0x48] sm:$0xff]
        %v3250 = vld [vmem:[%s390 + $0x50] sm:$0xff]
        %v3251 = vld [vmem:[%s390 + $0x58] sm:$0xff]
        %v3252 = vld [vmem:[%s390 + $0x60] sm:$0xff]
        %v3253 = vld [vmem:[%s390 + $0x68] sm:$0xff]
        %v3254 = vld [vmem:[%s390 + $0x70] sm:$0xff]
        %v3255 = vld [vmem:[%s390 + $0x78] sm:$0xff]
        %v3256 = vld [vmem:[%s390 + $0x80] sm:$0xff]
        %v3257 = vld [vmem:[%s390 + $0x88] sm:$0xff]
        %v3258 = vld [vmem:[%s390 + $0x90] sm:$0xff]
        %v3259 = vld [vmem:[%s390 + $0x98] sm:$0xff]
        %v3260 = vld [vmem:[%s390 + $0xa0] sm:$0xff]
        %v3261 = vld [vmem:[%s390 + $0xa8] sm:$0xff]
        %v3262 = vld [vmem:[%s390 + $0xb0] sm:$0xff]
        %v3263 = vld [vmem:[%s390 + $0xb8] sm:$0xff]
        %v3264 = vld [vmem:[%s390 + $0xc0] sm:$0xff]
        %v3265 = vld [vmem:[%s390 + $0xc8] sm:$0xff]
        %v3266 = vld [vmem:[%s390 + $0xd0] sm:$0xff]
        %v3267 = vld [vmem:[%s390 + $0xd8] sm:$0xff]
        %v3268 = vld [vmem:[%s390 + $0xe0] sm:$0xff]
        %v3269 = vld [vmem:[%s390 + $0xe8] sm:$0xff]
        %v3270 = vld [vmem:[%s390 + $0xf0] sm:$0xff]
        %v3271 = vld [vmem:[%s390 + $0xf8] sm:$0xff]
        %v3304 = vunpack.c.l.b16 %v3240
        %v3305 = vunpack.c.h.b16 %v3240
        %v3306 = vunpack.c.l.b16 %v3241
        %v3307 = vunpack.c.h.b16 %v3241
        %v3308 = vunpack.c.l.b16 %v3242
        %v3309 = vunpack.c.h.b16 %v3242
        %v3310 = vunpack.c.l.b16 %v3243
        %v3311 = vunpack.c.h.b16 %v3243
        %v3312 = vunpack.c.l.b16 %v3244
        %v3313 = vunpack.c.h.b16 %v3244
        %v3314 = vunpack.c.l.b16 %v3245
        %v3315 = vunpack.c.h.b16 %v3245
        %v3316 = vunpack.c.l.b16 %v3246
        %v3317 = vunpack.c.h.b16 %v3246
        %v3318 = vunpack.c.l.b16 %v3247
        %v3319 = vunpack.c.h.b16 %v3247
        %v3320 = vunpack.c.l.b16 %v3248
        %v3321 = vunpack.c.h.b16 %v3248
        %v3322 = vunpack.c.l.b16 %v3249
        %v3323 = vunpack.c.h.b16 %v3249
        %v3324 = vunpack.c.l.b16 %v3250
        %v3325 = vunpack.c.h.b16 %v3250
        %v3326 = vunpack.c.l.b16 %v3251
        %v3327 = vunpack.c.h.b16 %v3251
        %v3328 = vunpack.c.l.b16 %v3252
        %v3329 = vunpack.c.h.b16 %v3252
        %v3330 = vunpack.c.l.b16 %v3253
        %v3331 = vunpack.c.h.b16 %v3253
        %v3332 = vunpack.c.l.b16 %v3254
        %v3333 = vunpack.c.h.b16 %v3254
        %v3334 = vunpack.c.l.b16 %v3255
        %v3335 = vunpack.c.h.b16 %v3255
        %v3336 = vunpack.c.l.b16 %v3256
        %v3337 = vunpack.c.h.b16 %v3256
        %v3338 = vunpack.c.l.b16 %v3257
        %v3339 = vunpack.c.h.b16 %v3257
        %v3340 = vunpack.c.l.b16 %v3258
        %v3341 = vunpack.c.h.b16 %v3258
        %v3342 = vunpack.c.l.b16 %v3259
        %v3343 = vunpack.c.h.b16 %v3259
        %v3344 = vunpack.c.l.b16 %v3260
        %v3345 = vunpack.c.h.b16 %v3260
        %v3346 = vunpack.c.l.b16 %v3261
        %v3347 = vunpack.c.h.b16 %v3261
        %v3348 = vunpack.c.l.b16 %v3262
        %v3349 = vunpack.c.h.b16 %v3262
        %v3350 = vunpack.c.l.b16 %v3263
        %v3351 = vunpack.c.h.b16 %v3263
        %v3352 = vunpack.c.l.b16 %v3264
        %v3353 = vunpack.c.h.b16 %v3264
        %v3354 = vunpack.c.l.b16 %v3265
        %v3355 = vunpack.c.h.b16 %v3265
        %v3356 = vunpack.c.l.b16 %v3266
        %v3357 = vunpack.c.h.b16 %v3266
        %v3358 = vunpack.c.l.b16 %v3267
        %v3359 = vunpack.c.h.b16 %v3267
        %v3360 = vunpack.c.l.b16 %v3268
        %v3361 = vunpack.c.h.b16 %v3268
        %v3362 = vunpack.c.l.b16 %v3269
        %v3363 = vunpack.c.h.b16 %v3269
        %v3364 = vunpack.c.l.b16 %v3270
        %v3365 = vunpack.c.h.b16 %v3270
        %v3366 = vunpack.c.l.b16 %v3271
        %v3367 = vunpack.c.h.b16 %v3271
        %v3368 = vpack.c.b16 %v3308, %v3304
        %v3369 = vpack.c.b16 %v3309, %v3305
        %v3370 = vpack.c.b16 %v3310, %v3306
        %v3371 = vpack.c.b16 %v3311, %v3307
        %v3372 = vpack.c.b16 %v3316, %v3312
        %v3373 = vpack.c.b16 %v3317, %v3313
        %v3374 = vpack.c.b16 %v3318, %v3314
        %v3375 = vpack.c.b16 %v3319, %v3315
        %v3376 = vpack.c.b16 %v3324, %v3320
        %v3377 = vpack.c.b16 %v3325, %v3321
        %v3378 = vpack.c.b16 %v3326, %v3322
        %v3379 = vpack.c.b16 %v3327, %v3323
        %v3380 = vpack.c.b16 %v3332, %v3328
        %v3381 = vpack.c.b16 %v3333, %v3329
        %v3382 = vpack.c.b16 %v3334, %v3330
        %v3383 = vpack.c.b16 %v3335, %v3331
        %v3384 = vpack.c.b16 %v3340, %v3336
        %v3385 = vpack.c.b16 %v3341, %v3337
        %v3386 = vpack.c.b16 %v3342, %v3338
        %v3387 = vpack.c.b16 %v3343, %v3339
        %v3388 = vpack.c.b16 %v3348, %v3344
        %v3389 = vpack.c.b16 %v3349, %v3345
        %v3390 = vpack.c.b16 %v3350, %v3346
        %v3391 = vpack.c.b16 %v3351, %v3347
        %v3392 = vpack.c.b16 %v3356, %v3352
        %v3393 = vpack.c.b16 %v3357, %v3353
        %v3394 = vpack.c.b16 %v3358, %v3354
        %v3395 = vpack.c.b16 %v3359, %v3355
        %v3396 = vpack.c.b16 %v3364, %v3360
        %v3397 = vpack.c.b16 %v3365, %v3361
        %v3398 = vpack.c.b16 %v3366, %v3362
        %v3399 = vpack.c.b16 %v3367, %v3363
        %3432 = vmatprep.subr.bf16.mxu0 %v3369
        %3433 = vmatpush1.bf16.msra.mxu0 %v3368
        %3434 = vmatprep.subr.bf16.mxu0 %v3373
        %3435 = vmatpush1.bf16.msra.mxu0 %v3372
        %3436 = vmatprep.subr.bf16.mxu0 %v3377
        %3437 = vmatpush1.bf16.msra.mxu0 %v3376
        %3438 = vmatprep.subr.bf16.mxu0 %v3381
        %3439 = vmatpush1.bf16.msra.mxu0 %v3380
        %3440 = vmatprep.subr.bf16.mxu0 %v3385
        %3441 = vmatpush1.bf16.msra.mxu0 %v3384
        %3442 = vmatprep.subr.bf16.mxu0 %v3389
        %3443 = vmatpush1.bf16.msra.mxu0 %v3388
        %3444 = vmatprep.subr.bf16.mxu0 %v3393
        %3445 = vmatpush1.bf16.msra.mxu0 %v3392
        %3446 = vmatprep.subr.bf16.mxu0 %v3397
        %3447 = vmatpush1.bf16.msra.mxu0 %v3396
        %3448 = vmatprep.subr.bf16.mxu0 0
        %3449 = vmatpush1.bf16.msra.mxu0 0
        %3450 = vmatprep.subr.bf16.mxu0 0
        %3451 = vmatpush1.bf16.msra.mxu0 0
        %3452 = vmatprep.subr.bf16.mxu0 0
        %3453 = vmatpush1.bf16.msra.mxu0 0
        %3454 = vmatprep.subr.bf16.mxu0 0
        %3455 = vmatpush1.bf16.msra.mxu0 0
        %3456 = vmatprep.subr.bf16.mxu0 0
        %3457 = vmatpush1.bf16.msra.mxu0 0
        %3458 = vmatprep.subr.bf16.mxu0 0
        %3459 = vmatpush1.bf16.msra.mxu0 0
        %3460 = vmatprep.subr.bf16.mxu0 0
        %3461 = vmatpush1.bf16.msra.mxu0 0
        %3462 = vmatprep.subr.bf16.mxu0 0
        %3463 = vmatpush1.bf16.msra.mxu0 0
        %3464 = vmatprep.mubr.bf16.mxu0 0
        %3465 = vmatmul.mubr.bf16.gmra.mrb[0].mxu0 %v3235
        %v3466 = vpop.f32.mrb[0].mxu0
        %v3467 = vadd.f32 0.0, %v3466
        %v3468 = vpop.f32.mrb[0].mxu0
        %v3469 = vadd.f32 0.0, %v3468
        %v3470 = vpop.f32.mrb[0].mxu0
        %v3471 = vpop.f32.mrb[0].mxu0
        %3472 = vdwg.mxu0
        %3473 = vmatprep.subr.bf16.mxu0 %v3371
        %3474 = vmatpush1.bf16.msra.mxu0 %v3370
        %3475 = vmatprep.subr.bf16.mxu0 %v3375
        %3476 = vmatpush1.bf16.msra.mxu0 %v3374
        %3477 = vmatprep.subr.bf16.mxu0 %v3379
        %3478 = vmatpush1.bf16.msra.mxu0 %v3378
        %3479 = vmatprep.subr.bf16.mxu0 %v3383
        %3480 = vmatpush1.bf16.msra.mxu0 %v3382
        %3481 = vmatprep.subr.bf16.mxu0 %v3387
        %3482 = vmatpush1.bf16.msra.mxu0 %v3386
        %3483 = vmatprep.subr.bf16.mxu0 %v3391
        %3484 = vmatpush1.bf16.msra.mxu0 %v3390
        %3485 = vmatprep.subr.bf16.mxu0 %v3395
        %3486 = vmatpush1.bf16.msra.mxu0 %v3394
        %3487 = vmatprep.subr.bf16.mxu0 %v3399
        %3488 = vmatpush1.bf16.msra.mxu0 %v3398
        %3489 = vmatprep.subr.bf16.mxu0 0
        %3490 = vmatpush1.bf16.msra.mxu0 0
        %3491 = vmatprep.subr.bf16.mxu0 0
        %3492 = vmatpush1.bf16.msra.mxu0 0
        %3493 = vmatprep.subr.bf16.mxu0 0
        %3494 = vmatpush1.bf16.msra.mxu0 0
        %3495 = vmatprep.subr.bf16.mxu0 0
        %3496 = vmatpush1.bf16.msra.mxu0 0
        %3497 = vmatprep.subr.bf16.mxu0 0
        %3498 = vmatpush1.bf16.msra.mxu0 0
        %3499 = vmatprep.subr.bf16.mxu0 0
        %3500 = vmatpush1.bf16.msra.mxu0 0
        %3501 = vmatprep.subr.bf16.mxu0 0
        %3502 = vmatpush1.bf16.msra.mxu0 0
        %3503 = vmatprep.subr.bf16.mxu0 0
        %3504 = vmatpush1.bf16.msra.mxu0 0
        %3505 = vmatprep.mubr.bf16.mxu0 0
        %3506 = vmatmul.mubr.bf16.gmra.mrb[0].mxu0 %v3235
        %v3507 = vpop.f32.mrb[0].mxu0
        %v3508 = vadd.f32 0.0, %v3507
        %v3509 = vpop.f32.mrb[0].mxu0
        %v3510 = vadd.f32 0.0, %v3509
        %v3511 = vpop.f32.mrb[0].mxu0
        %v3512 = vpop.f32.mrb[0].mxu0
        %3513 = vdwg.mxu0
        %v3514 = vadd.f32 %v3236, %v3467
        %v3515 = vadd.f32 %v3237, %v3469
        %v3516 = vadd.f32 %v3238, %v3508
        %v3517 = vadd.f32 %v3239, %v3510
        %v3518 = vmul.f32 %v3514, 0.5
        %v3519 = vtanh.pop %v3518
        %v3520 = vmul.f32 %v3519, 0.5
        %v3521 = vadd.f32 %v3520, 0.5
        %v3522 = vmul.f32 %v3515, 0.5
        %v3523 = vtanh.pop %v3522
        %v3524 = vmul.f32 %v3523, 0.5
        %v3525 = vadd.f32 %v3524, 0.5
        %v3526 = vtanh.pop %v3516
        %v3527 = vmul.f32 %v3517, 0.5
        %v3528 = vtanh.pop %v3527
        %v3529 = vmul.f32 %v3528, 0.5
        %v3530 = vadd.f32 %v3529, 0.5
        %v3531 = vld [vmem:[#allocation3] sm:$0xff]
        %v3532 = vmul.f32 %v3525, %v3531
        %v3533 = vmul.f32 %v3521, %v3526
        %v3534 = vadd.f32 %v3532, %v3533
        %v3535 = vtanh.pop %v3534
        %v3536 = vmul.f32 %v3530, %v3535
        %3537 = vst [vmem:[#allocation2] sm:$0xff] %v3536
        %3538 = vst [vmem:[#allocation3] sm:$0xff] %v3534
        %v3539 = vpack.c.bf16 %v3536, %v3536
        %s3540 = scalar_lea.vmem %s403, 24
        %3541 = vst [vmem:[%s3540] sm:$0xf] %v3539
        %s3542 = scalar_lea.vmem %s372, 80
        %v3543 = vld [vmem:[%s3542] sm:$0xff]
        %v3544 = vld [vmem:[%s3542 + $0x8] sm:$0xff]
        %v3545 = vld [vmem:[#allocation2] sm:$0xff]
        %v3546 = vpack.c.bf16 %v3545, %v3545
        %v3547 = vunpack.c.l.bf16 %v3543
        %v3548 = vunpack.c.h.bf16 %v3543
        %v3549 = vunpack.c.l.bf16 %v3544
        %v3550 = vunpack.c.h.bf16 %v3544
        %v3551 = vld [vmem:[%s390] sm:$0xff]
        %v3552 = vld [vmem:[%s390 + $0x8] sm:$0xff]
        %v3553 = vld [vmem:[%s390 + $0x10] sm:$0xff]
        %v3554 = vld [vmem:[%s390 + $0x18] sm:$0xff]
        %v3555 = vld [vmem:[%s390 + $0x20] sm:$0xff]
        %v3556 = vld [vmem:[%s390 + $0x28] sm:$0xff]
        %v3557 = vld [vmem:[%s390 + $0x30] sm:$0xff]
        %v3558 = vld [vmem:[%s390 + $0x38] sm:$0xff]
        %v3559 = vld [vmem:[%s390 + $0x40] sm:$0xff]
        %v3560 = vld [vmem:[%s390 + $0x48] sm:$0xff]
        %v3561 = vld [vmem:[%s390 + $0x50] sm:$0xff]
        %v3562 = vld [vmem:[%s390 + $0x58] sm:$0xff]
        %v3563 = vld [vmem:[%s390 + $0x60] sm:$0xff]
        %v3564 = vld [vmem:[%s390 + $0x68] sm:$0xff]
        %v3565 = vld [vmem:[%s390 + $0x70] sm:$0xff]
        %v3566 = vld [vmem:[%s390 + $0x78] sm:$0xff]
        %v3567 = vld [vmem:[%s390 + $0x80] sm:$0xff]
        %v3568 = vld [vmem:[%s390 + $0x88] sm:$0xff]
        %v3569 = vld [vmem:[%s390 + $0x90] sm:$0xff]
        %v3570 = vld [vmem:[%s390 + $0x98] sm:$0xff]
        %v3571 = vld [vmem:[%s390 + $0xa0] sm:$0xff]
        %v3572 = vld [vmem:[%s390 + $0xa8] sm:$0xff]
        %v3573 = vld [vmem:[%s390 + $0xb0] sm:$0xff]
        %v3574 = vld [vmem:[%s390 + $0xb8] sm:$0xff]
        %v3575 = vld [vmem:[%s390 + $0xc0] sm:$0xff]
        %v3576 = vld [vmem:[%s390 + $0xc8] sm:$0xff]
        %v3577 = vld [vmem:[%s390 + $0xd0] sm:$0xff]
        %v3578 = vld [vmem:[%s390 + $0xd8] sm:$0xff]
        %v3579 = vld [vmem:[%s390 + $0xe0] sm:$0xff]
        %v3580 = vld [vmem:[%s390 + $0xe8] sm:$0xff]
        %v3581 = vld [vmem:[%s390 + $0xf0] sm:$0xff]
        %v3582 = vld [vmem:[%s390 + $0xf8] sm:$0xff]
        %v3615 = vunpack.c.l.b16 %v3551
        %v3616 = vunpack.c.h.b16 %v3551
        %v3617 = vunpack.c.l.b16 %v3552
        %v3618 = vunpack.c.h.b16 %v3552
        %v3619 = vunpack.c.l.b16 %v3553
        %v3620 = vunpack.c.h.b16 %v3553
        %v3621 = vunpack.c.l.b16 %v3554
        %v3622 = vunpack.c.h.b16 %v3554
        %v3623 = vunpack.c.l.b16 %v3555
        %v3624 = vunpack.c.h.b16 %v3555
        %v3625 = vunpack.c.l.b16 %v3556
        %v3626 = vunpack.c.h.b16 %v3556
        %v3627 = vunpack.c.l.b16 %v3557
        %v3628 = vunpack.c.h.b16 %v3557
        %v3629 = vunpack.c.l.b16 %v3558
        %v3630 = vunpack.c.h.b16 %v3558
        %v3631 = vunpack.c.l.b16 %v3559
        %v3632 = vunpack.c.h.b16 %v3559
        %v3633 = vunpack.c.l.b16 %v3560
        %v3634 = vunpack.c.h.b16 %v3560
        %v3635 = vunpack.c.l.b16 %v3561
        %v3636 = vunpack.c.h.b16 %v3561
        %v3637 = vunpack.c.l.b16 %v3562
        %v3638 = vunpack.c.h.b16 %v3562
        %v3639 = vunpack.c.l.b16 %v3563
        %v3640 = vunpack.c.h.b16 %v3563
        %v3641 = vunpack.c.l.b16 %v3564
        %v3642 = vunpack.c.h.b16 %v3564
        %v3643 = vunpack.c.l.b16 %v3565
        %v3644 = vunpack.c.h.b16 %v3565
        %v3645 = vunpack.c.l.b16 %v3566
        %v3646 = vunpack.c.h.b16 %v3566
        %v3647 = vunpack.c.l.b16 %v3567
        %v3648 = vunpack.c.h.b16 %v3567
        %v3649 = vunpack.c.l.b16 %v3568
        %v3650 = vunpack.c.h.b16 %v3568
        %v3651 = vunpack.c.l.b16 %v3569
        %v3652 = vunpack.c.h.b16 %v3569
        %v3653 = vunpack.c.l.b16 %v3570
        %v3654 = vunpack.c.h.b16 %v3570
        %v3655 = vunpack.c.l.b16 %v3571
        %v3656 = vunpack.c.h.b16 %v3571
        %v3657 = vunpack.c.l.b16 %v3572
        %v3658 = vunpack.c.h.b16 %v3572
        %v3659 = vunpack.c.l.b16 %v3573
        %v3660 = vunpack.c.h.b16 %v3573
        %v3661 = vunpack.c.l.b16 %v3574
        %v3662 = vunpack.c.h.b16 %v3574
        %v3663 = vunpack.c.l.b16 %v3575
        %v3664 = vunpack.c.h.b16 %v3575
        %v3665 = vunpack.c.l.b16 %v3576
        %v3666 = vunpack.c.h.b16 %v3576
        %v3667 = vunpack.c.l.b16 %v3577
        %v3668 = vunpack.c.h.b16 %v3577
        %v3669 = vunpack.c.l.b16 %v3578
        %v3670 = vunpack.c.h.b16 %v3578
        %v3671 = vunpack.c.l.b16 %v3579
        %v3672 = vunpack.c.h.b16 %v3579
        %v3673 = vunpack.c.l.b16 %v3580
        %v3674 = vunpack.c.h.b16 %v3580
        %v3675 = vunpack.c.l.b16 %v3581
        %v3676 = vunpack.c.h.b16 %v3581
        %v3677 = vunpack.c.l.b16 %v3582
        %v3678 = vunpack.c.h.b16 %v3582
        %v3679 = vpack.c.b16 %v3619, %v3615
        %v3680 = vpack.c.b16 %v3620, %v3616
        %v3681 = vpack.c.b16 %v3621, %v3617
        %v3682 = vpack.c.b16 %v3622, %v3618
        %v3683 = vpack.c.b16 %v3627, %v3623
        %v3684 = vpack.c.b16 %v3628, %v3624
        %v3685 = vpack.c.b16 %v3629, %v3625
        %v3686 = vpack.c.b16 %v3630, %v3626
        %v3687 = vpack.c.b16 %v3635, %v3631
        %v3688 = vpack.c.b16 %v3636, %v3632
        %v3689 = vpack.c.b16 %v3637, %v3633
        %v3690 = vpack.c.b16 %v3638, %v3634
        %v3691 = vpack.c.b16 %v3643, %v3639
        %v3692 = vpack.c.b16 %v3644, %v3640
        %v3693 = vpack.c.b16 %v3645, %v3641
        %v3694 = vpack.c.b16 %v3646, %v3642
        %v3695 = vpack.c.b16 %v3651, %v3647
        %v3696 = vpack.c.b16 %v3652, %v3648
        %v3697 = vpack.c.b16 %v3653, %v3649
        %v3698 = vpack.c.b16 %v3654, %v3650
        %v3699 = vpack.c.b16 %v3659, %v3655
        %v3700 = vpack.c.b16 %v3660, %v3656
        %v3701 = vpack.c.b16 %v3661, %v3657
        %v3702 = vpack.c.b16 %v3662, %v3658
        %v3703 = vpack.c.b16 %v3667, %v3663
        %v3704 = vpack.c.b16 %v3668, %v3664
        %v3705 = vpack.c.b16 %v3669, %v3665
        %v3706 = vpack.c.b16 %v3670, %v3666
        %v3707 = vpack.c.b16 %v3675, %v3671
        %v3708 = vpack.c.b16 %v3676, %v3672
        %v3709 = vpack.c.b16 %v3677, %v3673
        %v3710 = vpack.c.b16 %v3678, %v3674
        %3743 = vmatprep.subr.bf16.mxu0 %v3680
        %3744 = vmatpush1.bf16.msra.mxu0 %v3679
        %3745 = vmatprep.subr.bf16.mxu0 %v3684
        %3746 = vmatpush1.bf16.msra.mxu0 %v3683
        %3747 = vmatprep.subr.bf16.mxu0 %v3688
        %3748 = vmatpush1.bf16.msra.mxu0 %v3687
        %3749 = vmatprep.subr.bf16.mxu0 %v3692
        %3750 = vmatpush1.bf16.msra.mxu0 %v3691
        %3751 = vmatprep.subr.bf16.mxu0 %v3696
        %3752 = vmatpush1.bf16.msra.mxu0 %v3695
        %3753 = vmatprep.subr.bf16.mxu0 %v3700
        %3754 = vmatpush1.bf16.msra.mxu0 %v3699
        %3755 = vmatprep.subr.bf16.mxu0 %v3704
        %3756 = vmatpush1.bf16.msra.mxu0 %v3703
        %3757 = vmatprep.subr.bf16.mxu0 %v3708
        %3758 = vmatpush1.bf16.msra.mxu0 %v3707
        %3759 = vmatprep.subr.bf16.mxu0 0
        %3760 = vmatpush1.bf16.msra.mxu0 0
        %3761 = vmatprep.subr.bf16.mxu0 0
        %3762 = vmatpush1.bf16.msra.mxu0 0
        %3763 = vmatprep.subr.bf16.mxu0 0
        %3764 = vmatpush1.bf16.msra.mxu0 0
        %3765 = vmatprep.subr.bf16.mxu0 0
        %3766 = vmatpush1.bf16.msra.mxu0 0
        %3767 = vmatprep.subr.bf16.mxu0 0
        %3768 = vmatpush1.bf16.msra.mxu0 0
        %3769 = vmatprep.subr.bf16.mxu0 0
        %3770 = vmatpush1.bf16.msra.mxu0 0
        %3771 = vmatprep.subr.bf16.mxu0 0
        %3772 = vmatpush1.bf16.msra.mxu0 0
        %3773 = vmatprep.subr.bf16.mxu0 0
        %3774 = vmatpush1.bf16.msra.mxu0 0
        %3775 = vmatprep.mubr.bf16.mxu0 0
        %3776 = vmatmul.mubr.bf16.gmra.mrb[0].mxu0 %v3546
        %v3777 = vpop.f32.mrb[0].mxu0
        %v3778 = vadd.f32 0.0, %v3777
        %v3779 = vpop.f32.mrb[0].mxu0
        %v3780 = vadd.f32 0.0, %v3779
        %v3781 = vpop.f32.mrb[0].mxu0
        %v3782 = vpop.f32.mrb[0].mxu0
        %3783 = vdwg.mxu0
        %3784 = vmatprep.subr.bf16.mxu0 %v3682
        %3785 = vmatpush1.bf16.msra.mxu0 %v3681
        %3786 = vmatprep.subr.bf16.mxu0 %v3686
        %3787 = vmatpush1.bf16.msra.mxu0 %v3685
        %3788 = vmatprep.subr.bf16.mxu0 %v3690
        %3789 = vmatpush1.bf16.msra.mxu0 %v3689
        %3790 = vmatprep.subr.bf16.mxu0 %v3694
        %3791 = vmatpush1.bf16.msra.mxu0 %v3693
        %3792 = vmatprep.subr.bf16.mxu0 %v3698
        %3793 = vmatpush1.bf16.msra.mxu0 %v3697
        %3794 = vmatprep.subr.bf16.mxu0 %v3702
        %3795 = vmatpush1.bf16.msra.mxu0 %v3701
        %3796 = vmatprep.subr.bf16.mxu0 %v3706
        %3797 = vmatpush1.bf16.msra.mxu0 %v3705
        %3798 = vmatprep.subr.bf16.mxu0 %v3710
        %3799 = vmatpush1.bf16.msra.mxu0 %v3709
        %3800 = vmatprep.subr.bf16.mxu0 0
        %3801 = vmatpush1.bf16.msra.mxu0 0
        %3802 = vmatprep.subr.bf16.mxu0 0
        %3803 = vmatpush1.bf16.msra.mxu0 0
        %3804 = vmatprep.subr.bf16.mxu0 0
        %3805 = vmatpush1.bf16.msra.mxu0 0
        %3806 = vmatprep.subr.bf16.mxu0 0
        %3807 = vmatpush1.bf16.msra.mxu0 0
        %3808 = vmatprep.subr.bf16.mxu0 0
        %3809 = vmatpush1.bf16.msra.mxu0 0
        %3810 = vmatprep.subr.bf16.mxu0 0
        %3811 = vmatpush1.bf16.msra.mxu0 0
        %3812 = vmatprep.subr.bf16.mxu0 0
        %3813 = vmatpush1.bf16.msra.mxu0 0
        %3814 = vmatprep.subr.bf16.mxu0 0
        %3815 = vmatpush1.bf16.msra.mxu0 0
        %3816 = vmatprep.mubr.bf16.mxu0 0
        %3817 = vmatmul.mubr.bf16.gmra.mrb[0].mxu0 %v3546
        %v3818 = vpop.f32.mrb[0].mxu0
        %v3819 = vadd.f32 0.0, %v3818
        %v3820 = vpop.f32.mrb[0].mxu0
        %v3821 = vadd.f32 0.0, %v3820
        %v3822 = vpop.f32.mrb[0].mxu0
        %v3823 = vpop.f32.mrb[0].mxu0
        %3824 = vdwg.mxu0
        %v3825 = vadd.f32 %v3547, %v3778
        %v3826 = vadd.f32 %v3548, %v3780
        %v3827 = vadd.f32 %v3549, %v3819
        %v3828 = vadd.f32 %v3550, %v3821
        %v3829 = vmul.f32 %v3825, 0.5
        %v3830 = vtanh.pop %v3829
        %v3831 = vmul.f32 %v3830, 0.5
        %v3832 = vadd.f32 %v3831, 0.5
        %v3833 = vmul.f32 %v3826, 0.5
        %v3834 = vtanh.pop %v3833
        %v3835 = vmul.f32 %v3834, 0.5
        %v3836 = vadd.f32 %v3835, 0.5
        %v3837 = vtanh.pop %v3827
        %v3838 = vmul.f32 %v3828, 0.5
        %v3839 = vtanh.pop %v3838
        %v3840 = vmul.f32 %v3839, 0.5
        %v3841 = vadd.f32 %v3840, 0.5
        %v3842 = vld [vmem:[#allocation3] sm:$0xff]
        %v3843 = vmul.f32 %v3836, %v3842
        %v3844 = vmul.f32 %v3832, %v3837
        %v3845 = vadd.f32 %v3843, %v3844
        %v3846 = vtanh.pop %v3845
        %v3847 = vmul.f32 %v3841, %v3846
        %3848 = vst [vmem:[#allocation2] sm:$0xff] %v3847
        %3849 = vst [vmem:[#allocation3] sm:$0xff] %v3845
        %v3850 = vpack.c.bf16 %v3847, %v3847
        %s3851 = scalar_lea.vmem %s403, 20
        %3852 = vst [vmem:[%s3851] sm:$0xf] %v3850
        %s3853 = scalar_lea.vmem %s372, 64
        %v3854 = vld [vmem:[%s3853] sm:$0xff]
        %v3855 = vld [vmem:[%s3853 + $0x8] sm:$0xff]
        %v3856 = vld [vmem:[#allocation2] sm:$0xff]
        %v3857 = vpack.c.bf16 %v3856, %v3856
        %v3858 = vunpack.c.l.bf16 %v3854
        %v3859 = vunpack.c.h.bf16 %v3854
        %v3860 = vunpack.c.l.bf16 %v3855
        %v3861 = vunpack.c.h.bf16 %v3855
        %v3862 = vld [vmem:[%s390] sm:$0xff]
        %v3863 = vld [vmem:[%s390 + $0x8] sm:$0xff]
        %v3864 = vld [vmem:[%s390 + $0x10] sm:$0xff]
        %v3865 = vld [vmem:[%s390 + $0x18] sm:$0xff]
        %v3866 = vld [vmem:[%s390 + $0x20] sm:$0xff]
        %v3867 = vld [vmem:[%s390 + $0x28] sm:$0xff]
        %v3868 = vld [vmem:[%s390 + $0x30] sm:$0xff]
        %v3869 = vld [vmem:[%s390 + $0x38] sm:$0xff]
        %v3870 = vld [vmem:[%s390 + $0x40] sm:$0xff]
        %v3871 = vld [vmem:[%s390 + $0x48] sm:$0xff]
        %v3872 = vld [vmem:[%s390 + $0x50] sm:$0xff]
        %v3873 = vld [vmem:[%s390 + $0x58] sm:$0xff]
        %v3874 = vld [vmem:[%s390 + $0x60] sm:$0xff]
        %v3875 = vld [vmem:[%s390 + $0x68] sm:$0xff]
        %v3876 = vld [vmem:[%s390 + $0x70] sm:$0xff]
        %v3877 = vld [vmem:[%s390 + $0x78] sm:$0xff]
        %v3878 = vld [vmem:[%s390 + $0x80] sm:$0xff]
        %v3879 = vld [vmem:[%s390 + $0x88] sm:$0xff]
        %v3880 = vld [vmem:[%s390 + $0x90] sm:$0xff]
        %v3881 = vld [vmem:[%s390 + $0x98] sm:$0xff]
        %v3882 = vld [vmem:[%s390 + $0xa0] sm:$0xff]
        %v3883 = vld [vmem:[%s390 + $0xa8] sm:$0xff]
        %v3884 = vld [vmem:[%s390 + $0xb0] sm:$0xff]
        %v3885 = vld [vmem:[%s390 + $0xb8] sm:$0xff]
        %v3886 = vld [vmem:[%s390 + $0xc0] sm:$0xff]
        %v3887 = vld [vmem:[%s390 + $0xc8] sm:$0xff]
        %v3888 = vld [vmem:[%s390 + $0xd0] sm:$0xff]
        %v3889 = vld [vmem:[%s390 + $0xd8] sm:$0xff]
        %v3890 = vld [vmem:[%s390 + $0xe0] sm:$0xff]
        %v3891 = vld [vmem:[%s390 + $0xe8] sm:$0xff]
        %v3892 = vld [vmem:[%s390 + $0xf0] sm:$0xff]
        %v3893 = vld [vmem:[%s390 + $0xf8] sm:$0xff]
        %v3926 = vunpack.c.l.b16 %v3862
        %v3927 = vunpack.c.h.b16 %v3862
        %v3928 = vunpack.c.l.b16 %v3863
        %v3929 = vunpack.c.h.b16 %v3863
        %v3930 = vunpack.c.l.b16 %v3864
        %v3931 = vunpack.c.h.b16 %v3864
        %v3932 = vunpack.c.l.b16 %v3865
        %v3933 = vunpack.c.h.b16 %v3865
        %v3934 = vunpack.c.l.b16 %v3866
        %v3935 = vunpack.c.h.b16 %v3866
        %v3936 = vunpack.c.l.b16 %v3867
        %v3937 = vunpack.c.h.b16 %v3867
        %v3938 = vunpack.c.l.b16 %v3868
        %v3939 = vunpack.c.h.b16 %v3868
        %v3940 = vunpack.c.l.b16 %v3869
        %v3941 = vunpack.c.h.b16 %v3869
        %v3942 = vunpack.c.l.b16 %v3870
        %v3943 = vunpack.c.h.b16 %v3870
        %v3944 = vunpack.c.l.b16 %v3871
        %v3945 = vunpack.c.h.b16 %v3871
        %v3946 = vunpack.c.l.b16 %v3872
        %v3947 = vunpack.c.h.b16 %v3872
        %v3948 = vunpack.c.l.b16 %v3873
        %v3949 = vunpack.c.h.b16 %v3873
        %v3950 = vunpack.c.l.b16 %v3874
        %v3951 = vunpack.c.h.b16 %v3874
        %v3952 = vunpack.c.l.b16 %v3875
        %v3953 = vunpack.c.h.b16 %v3875
        %v3954 = vunpack.c.l.b16 %v3876
        %v3955 = vunpack.c.h.b16 %v3876
        %v3956 = vunpack.c.l.b16 %v3877
        %v3957 = vunpack.c.h.b16 %v3877
        %v3958 = vunpack.c.l.b16 %v3878
        %v3959 = vunpack.c.h.b16 %v3878
        %v3960 = vunpack.c.l.b16 %v3879
        %v3961 = vunpack.c.h.b16 %v3879
        %v3962 = vunpack.c.l.b16 %v3880
        %v3963 = vunpack.c.h.b16 %v3880
        %v3964 = vunpack.c.l.b16 %v3881
        %v3965 = vunpack.c.h.b16 %v3881
        %v3966 = vunpack.c.l.b16 %v3882
        %v3967 = vunpack.c.h.b16 %v3882
        %v3968 = vunpack.c.l.b16 %v3883
        %v3969 = vunpack.c.h.b16 %v3883
        %v3970 = vunpack.c.l.b16 %v3884
        %v3971 = vunpack.c.h.b16 %v3884
        %v3972 = vunpack.c.l.b16 %v3885
        %v3973 = vunpack.c.h.b16 %v3885
        %v3974 = vunpack.c.l.b16 %v3886
        %v3975 = vunpack.c.h.b16 %v3886
        %v3976 = vunpack.c.l.b16 %v3887
        %v3977 = vunpack.c.h.b16 %v3887
        %v3978 = vunpack.c.l.b16 %v3888
        %v3979 = vunpack.c.h.b16 %v3888
        %v3980 = vunpack.c.l.b16 %v3889
        %v3981 = vunpack.c.h.b16 %v3889
        %v3982 = vunpack.c.l.b16 %v3890
        %v3983 = vunpack.c.h.b16 %v3890
        %v3984 = vunpack.c.l.b16 %v3891
        %v3985 = vunpack.c.h.b16 %v3891
        %v3986 = vunpack.c.l.b16 %v3892
        %v3987 = vunpack.c.h.b16 %v3892
        %v3988 = vunpack.c.l.b16 %v3893
        %v3989 = vunpack.c.h.b16 %v3893
        %v3990 = vpack.c.b16 %v3930, %v3926
        %v3991 = vpack.c.b16 %v3931, %v3927
        %v3992 = vpack.c.b16 %v3932, %v3928
        %v3993 = vpack.c.b16 %v3933, %v3929
        %v3994 = vpack.c.b16 %v3938, %v3934
        %v3995 = vpack.c.b16 %v3939, %v3935
        %v3996 = vpack.c.b16 %v3940, %v3936
        %v3997 = vpack.c.b16 %v3941, %v3937
        %v3998 = vpack.c.b16 %v3946, %v3942
        %v3999 = vpack.c.b16 %v3947, %v3943
        %v4000 = vpack.c.b16 %v3948, %v3944
        %v4001 = vpack.c.b16 %v3949, %v3945
        %v4002 = vpack.c.b16 %v3954, %v3950
        %v4003 = vpack.c.b16 %v3955, %v3951
        %v4004 = vpack.c.b16 %v3956, %v3952
        %v4005 = vpack.c.b16 %v3957, %v3953
        %v4006 = vpack.c.b16 %v3962, %v3958
        %v4007 = vpack.c.b16 %v3963, %v3959
        %v4008 = vpack.c.b16 %v3964, %v3960
        %v4009 = vpack.c.b16 %v3965, %v3961
        %v4010 = vpack.c.b16 %v3970, %v3966
        %v4011 = vpack.c.b16 %v3971, %v3967
        %v4012 = vpack.c.b16 %v3972, %v3968
        %v4013 = vpack.c.b16 %v3973, %v3969
        %v4014 = vpack.c.b16 %v3978, %v3974
        %v4015 = vpack.c.b16 %v3979, %v3975
        %v4016 = vpack.c.b16 %v3980, %v3976
        %v4017 = vpack.c.b16 %v3981, %v3977
        %v4018 = vpack.c.b16 %v3986, %v3982
        %v4019 = vpack.c.b16 %v3987, %v3983
        %v4020 = vpack.c.b16 %v3988, %v3984
        %v4021 = vpack.c.b16 %v3989, %v3985
        %4054 = vmatprep.subr.bf16.mxu0 %v3991
        %4055 = vmatpush1.bf16.msra.mxu0 %v3990
        %4056 = vmatprep.subr.bf16.mxu0 %v3995
        %4057 = vmatpush1.bf16.msra.mxu0 %v3994
        %4058 = vmatprep.subr.bf16.mxu0 %v3999
        %4059 = vmatpush1.bf16.msra.mxu0 %v3998
        %4060 = vmatprep.subr.bf16.mxu0 %v4003
        %4061 = vmatpush1.bf16.msra.mxu0 %v4002
        %4062 = vmatprep.subr.bf16.mxu0 %v4007
        %4063 = vmatpush1.bf16.msra.mxu0 %v4006
        %4064 = vmatprep.subr.bf16.mxu0 %v4011
        %4065 = vmatpush1.bf16.msra.mxu0 %v4010
        %4066 = vmatprep.subr.bf16.mxu0 %v4015
        %4067 = vmatpush1.bf16.msra.mxu0 %v4014
        %4068 = vmatprep.subr.bf16.mxu0 %v4019
        %4069 = vmatpush1.bf16.msra.mxu0 %v4018
        %4070 = vmatprep.subr.bf16.mxu0 0
        %4071 = vmatpush1.bf16.msra.mxu0 0
        %4072 = vmatprep.subr.bf16.mxu0 0
        %4073 = vmatpush1.bf16.msra.mxu0 0
        %4074 = vmatprep.subr.bf16.mxu0 0
        %4075 = vmatpush1.bf16.msra.mxu0 0
        %4076 = vmatprep.subr.bf16.mxu0 0
        %4077 = vmatpush1.bf16.msra.mxu0 0
        %4078 = vmatprep.subr.bf16.mxu0 0
        %4079 = vmatpush1.bf16.msra.mxu0 0
        %4080 = vmatprep.subr.bf16.mxu0 0
        %4081 = vmatpush1.bf16.msra.mxu0 0
        %4082 = vmatprep.subr.bf16.mxu0 0
        %4083 = vmatpush1.bf16.msra.mxu0 0
        %4084 = vmatprep.subr.bf16.mxu0 0
        %4085 = vmatpush1.bf16.msra.mxu0 0
        %4086 = vmatprep.mubr.bf16.mxu0 0
        %4087 = vmatmul.mubr.bf16.gmra.mrb[0].mxu0 %v3857
        %v4088 = vpop.f32.mrb[0].mxu0
        %v4089 = vadd.f32 0.0, %v4088
        %v4090 = vpop.f32.mrb[0].mxu0
        %v4091 = vadd.f32 0.0, %v4090
        %v4092 = vpop.f32.mrb[0].mxu0
        %v4093 = vpop.f32.mrb[0].mxu0
        %4094 = vdwg.mxu0
        %4095 = vmatprep.subr.bf16.mxu0 %v3993
        %4096 = vmatpush1.bf16.msra.mxu0 %v3992
        %4097 = vmatprep.subr.bf16.mxu0 %v3997
        %4098 = vmatpush1.bf16.msra.mxu0 %v3996
        %4099 = vmatprep.subr.bf16.mxu0 %v4001
        %4100 = vmatpush1.bf16.msra.mxu0 %v4000
        %4101 = vmatprep.subr.bf16.mxu0 %v4005
        %4102 = vmatpush1.bf16.msra.mxu0 %v4004
        %4103 = vmatprep.subr.bf16.mxu0 %v4009
        %4104 = vmatpush1.bf16.msra.mxu0 %v4008
        %4105 = vmatprep.subr.bf16.mxu0 %v4013
        %4106 = vmatpush1.bf16.msra.mxu0 %v4012
        %4107 = vmatprep.subr.bf16.mxu0 %v4017
        %4108 = vmatpush1.bf16.msra.mxu0 %v4016
        %4109 = vmatprep.subr.bf16.mxu0 %v4021
        %4110 = vmatpush1.bf16.msra.mxu0 %v4020
        %4111 = vmatprep.subr.bf16.mxu0 0
        %4112 = vmatpush1.bf16.msra.mxu0 0
        %4113 = vmatprep.subr.bf16.mxu0 0
        %4114 = vmatpush1.bf16.msra.mxu0 0
        %4115 = vmatprep.subr.bf16.mxu0 0
        %4116 = vmatpush1.bf16.msra.mxu0 0
        %4117 = vmatprep.subr.bf16.mxu0 0
        %4118 = vmatpush1.bf16.msra.mxu0 0
        %4119 = vmatprep.subr.bf16.mxu0 0
        %4120 = vmatpush1.bf16.msra.mxu0 0
        %4121 = vmatprep.subr.bf16.mxu0 0
        %4122 = vmatpush1.bf16.msra.mxu0 0
        %4123 = vmatprep.subr.bf16.mxu0 0
        %4124 = vmatpush1.bf16.msra.mxu0 0
        %4125 = vmatprep.subr.bf16.mxu0 0
        %4126 = vmatpush1.bf16.msra.mxu0 0
        %4127 = vmatprep.mubr.bf16.mxu0 0
        %4128 = vmatmul.mubr.bf16.gmra.mrb[0].mxu0 %v3857
        %v4129 = vpop.f32.mrb[0].mxu0
        %v4130 = vadd.f32 0.0, %v4129
        %v4131 = vpop.f32.mrb[0].mxu0
        %v4132 = vadd.f32 0.0, %v4131
        %v4133 = vpop.f32.mrb[0].mxu0
        %v4134 = vpop.f32.mrb[0].mxu0
        %4135 = vdwg.mxu0
        %v4136 = vadd.f32 %v3858, %v4089
        %v4137 = vadd.f32 %v3859, %v4091
        %v4138 = vadd.f32 %v3860, %v4130
        %v4139 = vadd.f32 %v3861, %v4132
        %v4140 = vmul.f32 %v4136, 0.5
        %v4141 = vtanh.pop %v4140
        %v4142 = vmul.f32 %v4141, 0.5
        %v4143 = vadd.f32 %v4142, 0.5
        %v4144 = vmul.f32 %v4137, 0.5
        %v4145 = vtanh.pop %v4144
        %v4146 = vmul.f32 %v4145, 0.5
        %v4147 = vadd.f32 %v4146, 0.5
        %v4148 = vtanh.pop %v4138
        %v4149 = vmul.f32 %v4139, 0.5
        %v4150 = vtanh.pop %v4149
        %v4151 = vmul.f32 %v4150, 0.5
        %v4152 = vadd.f32 %v4151, 0.5
        %v4153 = vld [vmem:[#allocation3] sm:$0xff]
        %v4154 = vmul.f32 %v4147, %v4153
        %v4155 = vmul.f32 %v4143, %v4148
        %v4156 = vadd.f32 %v4154, %v4155
        %v4157 = vtanh.pop %v4156
        %v4158 = vmul.f32 %v4152, %v4157
        %4159 = vst [vmem:[#allocation2] sm:$0xff] %v4158
        %4160 = vst [vmem:[#allocation3] sm:$0xff] %v4156
        %v4161 = vpack.c.bf16 %v4158, %v4158
        %s4162 = scalar_lea.vmem %s403, 16
        %4163 = vst [vmem:[%s4162] sm:$0xf] %v4161
        %s4164 = scalar_lea.vmem %s372, 48
        %v4165 = vld [vmem:[%s4164] sm:$0xff]
        %v4166 = vld [vmem:[%s4164 + $0x8] sm:$0xff]
        %v4167 = vld [vmem:[#allocation2] sm:$0xff]
        %v4168 = vpack.c.bf16 %v4167, %v4167
        %v4169 = vunpack.c.l.bf16 %v4165
        %v4170 = vunpack.c.h.bf16 %v4165
        %v4171 = vunpack.c.l.bf16 %v4166
        %v4172 = vunpack.c.h.bf16 %v4166
        %v4173 = vld [vmem:[%s390] sm:$0xff]
        %v4174 = vld [vmem:[%s390 + $0x8] sm:$0xff]
        %v4175 = vld [vmem:[%s390 + $0x10] sm:$0xff]
        %v4176 = vld [vmem:[%s390 + $0x18] sm:$0xff]
        %v4177 = vld [vmem:[%s390 + $0x20] sm:$0xff]
        %v4178 = vld [vmem:[%s390 + $0x28] sm:$0xff]
        %v4179 = vld [vmem:[%s390 + $0x30] sm:$0xff]
        %v4180 = vld [vmem:[%s390 + $0x38] sm:$0xff]
        %v4181 = vld [vmem:[%s390 + $0x40] sm:$0xff]
        %v4182 = vld [vmem:[%s390 + $0x48] sm:$0xff]
        %v4183 = vld [vmem:[%s390 + $0x50] sm:$0xff]
        %v4184 = vld [vmem:[%s390 + $0x58] sm:$0xff]
        %v4185 = vld [vmem:[%s390 + $0x60] sm:$0xff]
        %v4186 = vld [vmem:[%s390 + $0x68] sm:$0xff]
        %v4187 = vld [vmem:[%s390 + $0x70] sm:$0xff]
        %v4188 = vld [vmem:[%s390 + $0x78] sm:$0xff]
        %v4189 = vld [vmem:[%s390 + $0x80] sm:$0xff]
        %v4190 = vld [vmem:[%s390 + $0x88] sm:$0xff]
        %v4191 = vld [vmem:[%s390 + $0x90] sm:$0xff]
        %v4192 = vld [vmem:[%s390 + $0x98] sm:$0xff]
        %v4193 = vld [vmem:[%s390 + $0xa0] sm:$0xff]
        %v4194 = vld [vmem:[%s390 + $0xa8] sm:$0xff]
        %v4195 = vld [vmem:[%s390 + $0xb0] sm:$0xff]
        %v4196 = vld [vmem:[%s390 + $0xb8] sm:$0xff]
        %v4197 = vld [vmem:[%s390 + $0xc0] sm:$0xff]
        %v4198 = vld [vmem:[%s390 + $0xc8] sm:$0xff]
        %v4199 = vld [vmem:[%s390 + $0xd0] sm:$0xff]
        %v4200 = vld [vmem:[%s390 + $0xd8] sm:$0xff]
        %v4201 = vld [vmem:[%s390 + $0xe0] sm:$0xff]
        %v4202 = vld [vmem:[%s390 + $0xe8] sm:$0xff]
        %v4203 = vld [vmem:[%s390 + $0xf0] sm:$0xff]
        %v4204 = vld [vmem:[%s390 + $0xf8] sm:$0xff]
        %v4237 = vunpack.c.l.b16 %v4173
        %v4238 = vunpack.c.h.b16 %v4173
        %v4239 = vunpack.c.l.b16 %v4174
        %v4240 = vunpack.c.h.b16 %v4174
        %v4241 = vunpack.c.l.b16 %v4175
        %v4242 = vunpack.c.h.b16 %v4175
        %v4243 = vunpack.c.l.b16 %v4176
        %v4244 = vunpack.c.h.b16 %v4176
        %v4245 = vunpack.c.l.b16 %v4177
        %v4246 = vunpack.c.h.b16 %v4177
        %v4247 = vunpack.c.l.b16 %v4178
        %v4248 = vunpack.c.h.b16 %v4178
        %v4249 = vunpack.c.l.b16 %v4179
        %v4250 = vunpack.c.h.b16 %v4179
        %v4251 = vunpack.c.l.b16 %v4180
        %v4252 = vunpack.c.h.b16 %v4180
        %v4253 = vunpack.c.l.b16 %v4181
        %v4254 = vunpack.c.h.b16 %v4181
        %v4255 = vunpack.c.l.b16 %v4182
        %v4256 = vunpack.c.h.b16 %v4182
        %v4257 = vunpack.c.l.b16 %v4183
        %v4258 = vunpack.c.h.b16 %v4183
        %v4259 = vunpack.c.l.b16 %v4184
        %v4260 = vunpack.c.h.b16 %v4184
        %v4261 = vunpack.c.l.b16 %v4185
        %v4262 = vunpack.c.h.b16 %v4185
        %v4263 = vunpack.c.l.b16 %v4186
        %v4264 = vunpack.c.h.b16 %v4186
        %v4265 = vunpack.c.l.b16 %v4187
        %v4266 = vunpack.c.h.b16 %v4187
        %v4267 = vunpack.c.l.b16 %v4188
        %v4268 = vunpack.c.h.b16 %v4188
        %v4269 = vunpack.c.l.b16 %v4189
        %v4270 = vunpack.c.h.b16 %v4189
        %v4271 = vunpack.c.l.b16 %v4190
        %v4272 = vunpack.c.h.b16 %v4190
        %v4273 = vunpack.c.l.b16 %v4191
        %v4274 = vunpack.c.h.b16 %v4191
        %v4275 = vunpack.c.l.b16 %v4192
        %v4276 = vunpack.c.h.b16 %v4192
        %v4277 = vunpack.c.l.b16 %v4193
        %v4278 = vunpack.c.h.b16 %v4193
        %v4279 = vunpack.c.l.b16 %v4194
        %v4280 = vunpack.c.h.b16 %v4194
        %v4281 = vunpack.c.l.b16 %v4195
        %v4282 = vunpack.c.h.b16 %v4195
        %v4283 = vunpack.c.l.b16 %v4196
        %v4284 = vunpack.c.h.b16 %v4196
        %v4285 = vunpack.c.l.b16 %v4197
        %v4286 = vunpack.c.h.b16 %v4197
        %v4287 = vunpack.c.l.b16 %v4198
        %v4288 = vunpack.c.h.b16 %v4198
        %v4289 = vunpack.c.l.b16 %v4199
        %v4290 = vunpack.c.h.b16 %v4199
        %v4291 = vunpack.c.l.b16 %v4200
        %v4292 = vunpack.c.h.b16 %v4200
        %v4293 = vunpack.c.l.b16 %v4201
        %v4294 = vunpack.c.h.b16 %v4201
        %v4295 = vunpack.c.l.b16 %v4202
        %v4296 = vunpack.c.h.b16 %v4202
        %v4297 = vunpack.c.l.b16 %v4203
        %v4298 = vunpack.c.h.b16 %v4203
        %v4299 = vunpack.c.l.b16 %v4204
        %v4300 = vunpack.c.h.b16 %v4204
        %v4301 = vpack.c.b16 %v4241, %v4237
        %v4302 = vpack.c.b16 %v4242, %v4238
        %v4303 = vpack.c.b16 %v4243, %v4239
        %v4304 = vpack.c.b16 %v4244, %v4240
        %v4305 = vpack.c.b16 %v4249, %v4245
        %v4306 = vpack.c.b16 %v4250, %v4246
        %v4307 = vpack.c.b16 %v4251, %v4247
        %v4308 = vpack.c.b16 %v4252, %v4248
        %v4309 = vpack.c.b16 %v4257, %v4253
        %v4310 = vpack.c.b16 %v4258, %v4254
        %v4311 = vpack.c.b16 %v4259, %v4255
        %v4312 = vpack.c.b16 %v4260, %v4256
        %v4313 = vpack.c.b16 %v4265, %v4261
        %v4314 = vpack.c.b16 %v4266, %v4262
        %v4315 = vpack.c.b16 %v4267, %v4263
        %v4316 = vpack.c.b16 %v4268, %v4264
        %v4317 = vpack.c.b16 %v4273, %v4269
        %v4318 = vpack.c.b16 %v4274, %v4270
        %v4319 = vpack.c.b16 %v4275, %v4271
        %v4320 = vpack.c.b16 %v4276, %v4272
        %v4321 = vpack.c.b16 %v4281, %v4277
        %v4322 = vpack.c.b16 %v4282, %v4278
        %v4323 = vpack.c.b16 %v4283, %v4279
        %v4324 = vpack.c.b16 %v4284, %v4280
        %v4325 = vpack.c.b16 %v4289, %v4285
        %v4326 = vpack.c.b16 %v4290, %v4286
        %v4327 = vpack.c.b16 %v4291, %v4287
        %v4328 = vpack.c.b16 %v4292, %v4288
        %v4329 = vpack.c.b16 %v4297, %v4293
        %v4330 = vpack.c.b16 %v4298, %v4294
        %v4331 = vpack.c.b16 %v4299, %v4295
        %v4332 = vpack.c.b16 %v4300, %v4296
        %4365 = vmatprep.subr.bf16.mxu0 %v4302
        %4366 = vmatpush1.bf16.msra.mxu0 %v4301
        %4367 = vmatprep.subr.bf16.mxu0 %v4306
        %4368 = vmatpush1.bf16.msra.mxu0 %v4305
        %4369 = vmatprep.subr.bf16.mxu0 %v4310
        %4370 = vmatpush1.bf16.msra.mxu0 %v4309
        %4371 = vmatprep.subr.bf16.mxu0 %v4314
        %4372 = vmatpush1.bf16.msra.mxu0 %v4313
        %4373 = vmatprep.subr.bf16.mxu0 %v4318
        %4374 = vmatpush1.bf16.msra.mxu0 %v4317
        %4375 = vmatprep.subr.bf16.mxu0 %v4322
        %4376 = vmatpush1.bf16.msra.mxu0 %v4321
        %4377 = vmatprep.subr.bf16.mxu0 %v4326
        %4378 = vmatpush1.bf16.msra.mxu0 %v4325
        %4379 = vmatprep.subr.bf16.mxu0 %v4330
        %4380 = vmatpush1.bf16.msra.mxu0 %v4329
        %4381 = vmatprep.subr.bf16.mxu0 0
        %4382 = vmatpush1.bf16.msra.mxu0 0
        %4383 = vmatprep.subr.bf16.mxu0 0
        %4384 = vmatpush1.bf16.msra.mxu0 0
        %4385 = vmatprep.subr.bf16.mxu0 0
        %4386 = vmatpush1.bf16.msra.mxu0 0
        %4387 = vmatprep.subr.bf16.mxu0 0
        %4388 = vmatpush1.bf16.msra.mxu0 0
        %4389 = vmatprep.subr.bf16.mxu0 0
        %4390 = vmatpush1.bf16.msra.mxu0 0
        %4391 = vmatprep.subr.bf16.mxu0 0
        %4392 = vmatpush1.bf16.msra.mxu0 0
        %4393 = vmatprep.subr.bf16.mxu0 0
        %4394 = vmatpush1.bf16.msra.mxu0 0
        %4395 = vmatprep.subr.bf16.mxu0 0
        %4396 = vmatpush1.bf16.msra.mxu0 0
        %4397 = vmatprep.mubr.bf16.mxu0 0
        %4398 = vmatmul.mubr.bf16.gmra.mrb[0].mxu0 %v4168
        %v4399 = vpop.f32.mrb[0].mxu0
        %v4400 = vadd.f32 0.0, %v4399
        %v4401 = vpop.f32.mrb[0].mxu0
        %v4402 = vadd.f32 0.0, %v4401
        %v4403 = vpop.f32.mrb[0].mxu0
        %v4404 = vpop.f32.mrb[0].mxu0
        %4405 = vdwg.mxu0
        %4406 = vmatprep.subr.bf16.mxu0 %v4304
        %4407 = vmatpush1.bf16.msra.mxu0 %v4303
        %4408 = vmatprep.subr.bf16.mxu0 %v4308
        %4409 = vmatpush1.bf16.msra.mxu0 %v4307
        %4410 = vmatprep.subr.bf16.mxu0 %v4312
        %4411 = vmatpush1.bf16.msra.mxu0 %v4311
        %4412 = vmatprep.subr.bf16.mxu0 %v4316
        %4413 = vmatpush1.bf16.msra.mxu0 %v4315
        %4414 = vmatprep.subr.bf16.mxu0 %v4320
        %4415 = vmatpush1.bf16.msra.mxu0 %v4319
        %4416 = vmatprep.subr.bf16.mxu0 %v4324
        %4417 = vmatpush1.bf16.msra.mxu0 %v4323
        %4418 = vmatprep.subr.bf16.mxu0 %v4328
        %4419 = vmatpush1.bf16.msra.mxu0 %v4327
        %4420 = vmatprep.subr.bf16.mxu0 %v4332
        %4421 = vmatpush1.bf16.msra.mxu0 %v4331
        %4422 = vmatprep.subr.bf16.mxu0 0
        %4423 = vmatpush1.bf16.msra.mxu0 0
        %4424 = vmatprep.subr.bf16.mxu0 0
        %4425 = vmatpush1.bf16.msra.mxu0 0
        %4426 = vmatprep.subr.bf16.mxu0 0
        %4427 = vmatpush1.bf16.msra.mxu0 0
        %4428 = vmatprep.subr.bf16.mxu0 0
        %4429 = vmatpush1.bf16.msra.mxu0 0
        %4430 = vmatprep.subr.bf16.mxu0 0
        %4431 = vmatpush1.bf16.msra.mxu0 0
        %4432 = vmatprep.subr.bf16.mxu0 0
        %4433 = vmatpush1.bf16.msra.mxu0 0
        %4434 = vmatprep.subr.bf16.mxu0 0
        %4435 = vmatpush1.bf16.msra.mxu0 0
        %4436 = vmatprep.subr.bf16.mxu0 0
        %4437 = vmatpush1.bf16.msra.mxu0 0
        %4438 = vmatprep.mubr.bf16.mxu0 0
        %4439 = vmatmul.mubr.bf16.gmra.mrb[0].mxu0 %v4168
        %v4440 = vpop.f32.mrb[0].mxu0
        %v4441 = vadd.f32 0.0, %v4440
        %v4442 = vpop.f32.mrb[0].mxu0
        %v4443 = vadd.f32 0.0, %v4442
        %v4444 = vpop.f32.mrb[0].mxu0
        %v4445 = vpop.f32.mrb[0].mxu0
        %4446 = vdwg.mxu0
        %v4447 = vadd.f32 %v4169, %v4400
        %v4448 = vadd.f32 %v4170, %v4402
        %v4449 = vadd.f32 %v4171, %v4441
        %v4450 = vadd.f32 %v4172, %v4443
        %v4451 = vmul.f32 %v4447, 0.5
        %v4452 = vtanh.pop %v4451
        %v4453 = vmul.f32 %v4452, 0.5
        %v4454 = vadd.f32 %v4453, 0.5
        %v4455 = vmul.f32 %v4448, 0.5
        %v4456 = vtanh.pop %v4455
        %v4457 = vmul.f32 %v4456, 0.5
        %v4458 = vadd.f32 %v4457, 0.5
        %v4459 = vtanh.pop %v4449
        %v4460 = vmul.f32 %v4450, 0.5
        %v4461 = vtanh.pop %v4460
        %v4462 = vmul.f32 %v4461, 0.5
        %v4463 = vadd.f32 %v4462, 0.5
        %v4464 = vld [vmem:[#allocation3] sm:$0xff]
        %v4465 = vmul.f32 %v4458, %v4464
        %v4466 = vmul.f32 %v4454, %v4459
        %v4467 = vadd.f32 %v4465, %v4466
        %v4468 = vtanh.pop %v4467
        %v4469 = vmul.f32 %v4463, %v4468
        %4470 = vst [vmem:[#allocation2] sm:$0xff] %v4469
        %4471 = vst [vmem:[#allocation3] sm:$0xff] %v4467
        %v4472 = vpack.c.bf16 %v4469, %v4469
        %s4473 = scalar_lea.vmem %s403, 12
        %4474 = vst [vmem:[%s4473] sm:$0xf] %v4472
        %s4475 = scalar_lea.vmem %s372, 32
        %v4476 = vld [vmem:[%s4475] sm:$0xff]
        %v4477 = vld [vmem:[%s4475 + $0x8] sm:$0xff]
        %v4478 = vld [vmem:[#allocation2] sm:$0xff]
        %v4479 = vpack.c.bf16 %v4478, %v4478
        %v4480 = vunpack.c.l.bf16 %v4476
        %v4481 = vunpack.c.h.bf16 %v4476
        %v4482 = vunpack.c.l.bf16 %v4477
        %v4483 = vunpack.c.h.bf16 %v4477
        %v4484 = vld [vmem:[%s390] sm:$0xff]
        %v4485 = vld [vmem:[%s390 + $0x8] sm:$0xff]
        %v4486 = vld [vmem:[%s390 + $0x10] sm:$0xff]
        %v4487 = vld [vmem:[%s390 + $0x18] sm:$0xff]
        %v4488 = vld [vmem:[%s390 + $0x20] sm:$0xff]
        %v4489 = vld [vmem:[%s390 + $0x28] sm:$0xff]
        %v4490 = vld [vmem:[%s390 + $0x30] sm:$0xff]
        %v4491 = vld [vmem:[%s390 + $0x38] sm:$0xff]
        %v4492 = vld [vmem:[%s390 + $0x40] sm:$0xff]
        %v4493 = vld [vmem:[%s390 + $0x48] sm:$0xff]
        %v4494 = vld [vmem:[%s390 + $0x50] sm:$0xff]
        %v4495 = vld [vmem:[%s390 + $0x58] sm:$0xff]
        %v4496 = vld [vmem:[%s390 + $0x60] sm:$0xff]
        %v4497 = vld [vmem:[%s390 + $0x68] sm:$0xff]
        %v4498 = vld [vmem:[%s390 + $0x70] sm:$0xff]
        %v4499 = vld [vmem:[%s390 + $0x78] sm:$0xff]
        %v4500 = vld [vmem:[%s390 + $0x80] sm:$0xff]
        %v4501 = vld [vmem:[%s390 + $0x88] sm:$0xff]
        %v4502 = vld [vmem:[%s390 + $0x90] sm:$0xff]
        %v4503 = vld [vmem:[%s390 + $0x98] sm:$0xff]
        %v4504 = vld [vmem:[%s390 + $0xa0] sm:$0xff]
        %v4505 = vld [vmem:[%s390 + $0xa8] sm:$0xff]
        %v4506 = vld [vmem:[%s390 + $0xb0] sm:$0xff]
        %v4507 = vld [vmem:[%s390 + $0xb8] sm:$0xff]
        %v4508 = vld [vmem:[%s390 + $0xc0] sm:$0xff]
        %v4509 = vld [vmem:[%s390 + $0xc8] sm:$0xff]
        %v4510 = vld [vmem:[%s390 + $0xd0] sm:$0xff]
        %v4511 = vld [vmem:[%s390 + $0xd8] sm:$0xff]
        %v4512 = vld [vmem:[%s390 + $0xe0] sm:$0xff]
        %v4513 = vld [vmem:[%s390 + $0xe8] sm:$0xff]
        %v4514 = vld [vmem:[%s390 + $0xf0] sm:$0xff]
        %v4515 = vld [vmem:[%s390 + $0xf8] sm:$0xff]
        %v4548 = vunpack.c.l.b16 %v4484
        %v4549 = vunpack.c.h.b16 %v4484
        %v4550 = vunpack.c.l.b16 %v4485
        %v4551 = vunpack.c.h.b16 %v4485
        %v4552 = vunpack.c.l.b16 %v4486
        %v4553 = vunpack.c.h.b16 %v4486
        %v4554 = vunpack.c.l.b16 %v4487
        %v4555 = vunpack.c.h.b16 %v4487
        %v4556 = vunpack.c.l.b16 %v4488
        %v4557 = vunpack.c.h.b16 %v4488
        %v4558 = vunpack.c.l.b16 %v4489
        %v4559 = vunpack.c.h.b16 %v4489
        %v4560 = vunpack.c.l.b16 %v4490
        %v4561 = vunpack.c.h.b16 %v4490
        %v4562 = vunpack.c.l.b16 %v4491
        %v4563 = vunpack.c.h.b16 %v4491
        %v4564 = vunpack.c.l.b16 %v4492
        %v4565 = vunpack.c.h.b16 %v4492
        %v4566 = vunpack.c.l.b16 %v4493
        %v4567 = vunpack.c.h.b16 %v4493
        %v4568 = vunpack.c.l.b16 %v4494
        %v4569 = vunpack.c.h.b16 %v4494
        %v4570 = vunpack.c.l.b16 %v4495
        %v4571 = vunpack.c.h.b16 %v4495
        %v4572 = vunpack.c.l.b16 %v4496
        %v4573 = vunpack.c.h.b16 %v4496
        %v4574 = vunpack.c.l.b16 %v4497
        %v4575 = vunpack.c.h.b16 %v4497
        %v4576 = vunpack.c.l.b16 %v4498
        %v4577 = vunpack.c.h.b16 %v4498
        %v4578 = vunpack.c.l.b16 %v4499
        %v4579 = vunpack.c.h.b16 %v4499
        %v4580 = vunpack.c.l.b16 %v4500
        %v4581 = vunpack.c.h.b16 %v4500
        %v4582 = vunpack.c.l.b16 %v4501
        %v4583 = vunpack.c.h.b16 %v4501
        %v4584 = vunpack.c.l.b16 %v4502
        %v4585 = vunpack.c.h.b16 %v4502
        %v4586 = vunpack.c.l.b16 %v4503
        %v4587 = vunpack.c.h.b16 %v4503
        %v4588 = vunpack.c.l.b16 %v4504
        %v4589 = vunpack.c.h.b16 %v4504
        %v4590 = vunpack.c.l.b16 %v4505
        %v4591 = vunpack.c.h.b16 %v4505
        %v4592 = vunpack.c.l.b16 %v4506
        %v4593 = vunpack.c.h.b16 %v4506
        %v4594 = vunpack.c.l.b16 %v4507
        %v4595 = vunpack.c.h.b16 %v4507
        %v4596 = vunpack.c.l.b16 %v4508
        %v4597 = vunpack.c.h.b16 %v4508
        %v4598 = vunpack.c.l.b16 %v4509
        %v4599 = vunpack.c.h.b16 %v4509
        %v4600 = vunpack.c.l.b16 %v4510
        %v4601 = vunpack.c.h.b16 %v4510
        %v4602 = vunpack.c.l.b16 %v4511
        %v4603 = vunpack.c.h.b16 %v4511
        %v4604 = vunpack.c.l.b16 %v4512
        %v4605 = vunpack.c.h.b16 %v4512
        %v4606 = vunpack.c.l.b16 %v4513
        %v4607 = vunpack.c.h.b16 %v4513
        %v4608 = vunpack.c.l.b16 %v4514
        %v4609 = vunpack.c.h.b16 %v4514
        %v4610 = vunpack.c.l.b16 %v4515
        %v4611 = vunpack.c.h.b16 %v4515
        %v4612 = vpack.c.b16 %v4552, %v4548
        %v4613 = vpack.c.b16 %v4553, %v4549
        %v4614 = vpack.c.b16 %v4554, %v4550
        %v4615 = vpack.c.b16 %v4555, %v4551
        %v4616 = vpack.c.b16 %v4560, %v4556
        %v4617 = vpack.c.b16 %v4561, %v4557
        %v4618 = vpack.c.b16 %v4562, %v4558
        %v4619 = vpack.c.b16 %v4563, %v4559
        %v4620 = vpack.c.b16 %v4568, %v4564
        %v4621 = vpack.c.b16 %v4569, %v4565
        %v4622 = vpack.c.b16 %v4570, %v4566
        %v4623 = vpack.c.b16 %v4571, %v4567
        %v4624 = vpack.c.b16 %v4576, %v4572
        %v4625 = vpack.c.b16 %v4577, %v4573
        %v4626 = vpack.c.b16 %v4578, %v4574
        %v4627 = vpack.c.b16 %v4579, %v4575
        %v4628 = vpack.c.b16 %v4584, %v4580
        %v4629 = vpack.c.b16 %v4585, %v4581
        %v4630 = vpack.c.b16 %v4586, %v4582
        %v4631 = vpack.c.b16 %v4587, %v4583
        %v4632 = vpack.c.b16 %v4592, %v4588
        %v4633 = vpack.c.b16 %v4593, %v4589
        %v4634 = vpack.c.b16 %v4594, %v4590
        %v4635 = vpack.c.b16 %v4595, %v4591
        %v4636 = vpack.c.b16 %v4600, %v4596
        %v4637 = vpack.c.b16 %v4601, %v4597
        %v4638 = vpack.c.b16 %v4602, %v4598
        %v4639 = vpack.c.b16 %v4603, %v4599
        %v4640 = vpack.c.b16 %v4608, %v4604
        %v4641 = vpack.c.b16 %v4609, %v4605
        %v4642 = vpack.c.b16 %v4610, %v4606
        %v4643 = vpack.c.b16 %v4611, %v4607
        %4676 = vmatprep.subr.bf16.mxu0 %v4613
        %4677 = vmatpush1.bf16.msra.mxu0 %v4612
        %4678 = vmatprep.subr.bf16.mxu0 %v4617
        %4679 = vmatpush1.bf16.msra.mxu0 %v4616
        %4680 = vmatprep.subr.bf16.mxu0 %v4621
        %4681 = vmatpush1.bf16.msra.mxu0 %v4620
        %4682 = vmatprep.subr.bf16.mxu0 %v4625
        %4683 = vmatpush1.bf16.msra.mxu0 %v4624
        %4684 = vmatprep.subr.bf16.mxu0 %v4629
        %4685 = vmatpush1.bf16.msra.mxu0 %v4628
        %4686 = vmatprep.subr.bf16.mxu0 %v4633
        %4687 = vmatpush1.bf16.msra.mxu0 %v4632
        %4688 = vmatprep.subr.bf16.mxu0 %v4637
        %4689 = vmatpush1.bf16.msra.mxu0 %v4636
        %4690 = vmatprep.subr.bf16.mxu0 %v4641
        %4691 = vmatpush1.bf16.msra.mxu0 %v4640
        %4692 = vmatprep.subr.bf16.mxu0 0
        %4693 = vmatpush1.bf16.msra.mxu0 0
        %4694 = vmatprep.subr.bf16.mxu0 0
        %4695 = vmatpush1.bf16.msra.mxu0 0
        %4696 = vmatprep.subr.bf16.mxu0 0
        %4697 = vmatpush1.bf16.msra.mxu0 0
        %4698 = vmatprep.subr.bf16.mxu0 0
        %4699 = vmatpush1.bf16.msra.mxu0 0
        %4700 = vmatprep.subr.bf16.mxu0 0
        %4701 = vmatpush1.bf16.msra.mxu0 0
        %4702 = vmatprep.subr.bf16.mxu0 0
        %4703 = vmatpush1.bf16.msra.mxu0 0
        %4704 = vmatprep.subr.bf16.mxu0 0
        %4705 = vmatpush1.bf16.msra.mxu0 0
        %4706 = vmatprep.subr.bf16.mxu0 0
        %4707 = vmatpush1.bf16.msra.mxu0 0
        %4708 = vmatprep.mubr.bf16.mxu0 0
        %4709 = vmatmul.mubr.bf16.gmra.mrb[0].mxu0 %v4479
        %v4710 = vpop.f32.mrb[0].mxu0
        %v4711 = vadd.f32 0.0, %v4710
        %v4712 = vpop.f32.mrb[0].mxu0
        %v4713 = vadd.f32 0.0, %v4712
        %v4714 = vpop.f32.mrb[0].mxu0
        %v4715 = vpop.f32.mrb[0].mxu0
        %4716 = vdwg.mxu0
        %4717 = vmatprep.subr.bf16.mxu0 %v4615
        %4718 = vmatpush1.bf16.msra.mxu0 %v4614
        %4719 = vmatprep.subr.bf16.mxu0 %v4619
        %4720 = vmatpush1.bf16.msra.mxu0 %v4618
        %4721 = vmatprep.subr.bf16.mxu0 %v4623
        %4722 = vmatpush1.bf16.msra.mxu0 %v4622
        %4723 = vmatprep.subr.bf16.mxu0 %v4627
        %4724 = vmatpush1.bf16.msra.mxu0 %v4626
        %4725 = vmatprep.subr.bf16.mxu0 %v4631
        %4726 = vmatpush1.bf16.msra.mxu0 %v4630
        %4727 = vmatprep.subr.bf16.mxu0 %v4635
        %4728 = vmatpush1.bf16.msra.mxu0 %v4634
        %4729 = vmatprep.subr.bf16.mxu0 %v4639
        %4730 = vmatpush1.bf16.msra.mxu0 %v4638
        %4731 = vmatprep.subr.bf16.mxu0 %v4643
        %4732 = vmatpush1.bf16.msra.mxu0 %v4642
        %4733 = vmatprep.subr.bf16.mxu0 0
        %4734 = vmatpush1.bf16.msra.mxu0 0
        %4735 = vmatprep.subr.bf16.mxu0 0
        %4736 = vmatpush1.bf16.msra.mxu0 0
        %4737 = vmatprep.subr.bf16.mxu0 0
        %4738 = vmatpush1.bf16.msra.mxu0 0
        %4739 = vmatprep.subr.bf16.mxu0 0
        %4740 = vmatpush1.bf16.msra.mxu0 0
        %4741 = vmatprep.subr.bf16.mxu0 0
        %4742 = vmatpush1.bf16.msra.mxu0 0
        %4743 = vmatprep.subr.bf16.mxu0 0
        %4744 = vmatpush1.bf16.msra.mxu0 0
        %4745 = vmatprep.subr.bf16.mxu0 0
        %4746 = vmatpush1.bf16.msra.mxu0 0
        %4747 = vmatprep.subr.bf16.mxu0 0
        %4748 = vmatpush1.bf16.msra.mxu0 0
        %4749 = vmatprep.mubr.bf16.mxu0 0
        %4750 = vmatmul.mubr.bf16.gmra.mrb[0].mxu0 %v4479
        %v4751 = vpop.f32.mrb[0].mxu0
        %v4752 = vadd.f32 0.0, %v4751
        %v4753 = vpop.f32.mrb[0].mxu0
        %v4754 = vadd.f32 0.0, %v4753
        %v4755 = vpop.f32.mrb[0].mxu0
        %v4756 = vpop.f32.mrb[0].mxu0
        %4757 = vdwg.mxu0
        %v4758 = vadd.f32 %v4480, %v4711
        %v4759 = vadd.f32 %v4481, %v4713
        %v4760 = vadd.f32 %v4482, %v4752
        %v4761 = vadd.f32 %v4483, %v4754
        %v4762 = vmul.f32 %v4758, 0.5
        %v4763 = vtanh.pop %v4762
        %v4764 = vmul.f32 %v4763, 0.5
        %v4765 = vadd.f32 %v4764, 0.5
        %v4766 = vmul.f32 %v4759, 0.5
        %v4767 = vtanh.pop %v4766
        %v4768 = vmul.f32 %v4767, 0.5
        %v4769 = vadd.f32 %v4768, 0.5
        %v4770 = vtanh.pop %v4760
        %v4771 = vmul.f32 %v4761, 0.5
        %v4772 = vtanh.pop %v4771
        %v4773 = vmul.f32 %v4772, 0.5
        %v4774 = vadd.f32 %v4773, 0.5
        %v4775 = vld [vmem:[#allocation3] sm:$0xff]
        %v4776 = vmul.f32 %v4769, %v4775
        %v4777 = vmul.f32 %v4765, %v4770
        %v4778 = vadd.f32 %v4776, %v4777
        %v4779 = vtanh.pop %v4778
        %v4780 = vmul.f32 %v4774, %v4779
        %4781 = vst [vmem:[#allocation2] sm:$0xff] %v4780
        %4782 = vst [vmem:[#allocation3] sm:$0xff] %v4778
        %v4783 = vpack.c.bf16 %v4780, %v4780
        %s4784 = scalar_lea.vmem %s403, 8
        %4785 = vst [vmem:[%s4784] sm:$0xf] %v4783
        %s4786 = scalar_lea.vmem %s372, 16
        %v4787 = vld [vmem:[%s4786] sm:$0xff]
        %v4788 = vld [vmem:[%s4786 + $0x8] sm:$0xff]
        %v4789 = vld [vmem:[#allocation2] sm:$0xff]
        %v4790 = vpack.c.bf16 %v4789, %v4789
        %v4791 = vunpack.c.l.bf16 %v4787
        %v4792 = vunpack.c.h.bf16 %v4787
        %v4793 = vunpack.c.l.bf16 %v4788
        %v4794 = vunpack.c.h.bf16 %v4788
        %v4795 = vld [vmem:[%s390] sm:$0xff]
        %v4796 = vld [vmem:[%s390 + $0x8] sm:$0xff]
        %v4797 = vld [vmem:[%s390 + $0x10] sm:$0xff]
        %v4798 = vld [vmem:[%s390 + $0x18] sm:$0xff]
        %v4799 = vld [vmem:[%s390 + $0x20] sm:$0xff]
        %v4800 = vld [vmem:[%s390 + $0x28] sm:$0xff]
        %v4801 = vld [vmem:[%s390 + $0x30] sm:$0xff]
        %v4802 = vld [vmem:[%s390 + $0x38] sm:$0xff]
        %v4803 = vld [vmem:[%s390 + $0x40] sm:$0xff]
        %v4804 = vld [vmem:[%s390 + $0x48] sm:$0xff]
        %v4805 = vld [vmem:[%s390 + $0x50] sm:$0xff]
        %v4806 = vld [vmem:[%s390 + $0x58] sm:$0xff]
        %v4807 = vld [vmem:[%s390 + $0x60] sm:$0xff]
        %v4808 = vld [vmem:[%s390 + $0x68] sm:$0xff]
        %v4809 = vld [vmem:[%s390 + $0x70] sm:$0xff]
        %v4810 = vld [vmem:[%s390 + $0x78] sm:$0xff]
        %v4811 = vld [vmem:[%s390 + $0x80] sm:$0xff]
        %v4812 = vld [vmem:[%s390 + $0x88] sm:$0xff]
        %v4813 = vld [vmem:[%s390 + $0x90] sm:$0xff]
        %v4814 = vld [vmem:[%s390 + $0x98] sm:$0xff]
        %v4815 = vld [vmem:[%s390 + $0xa0] sm:$0xff]
        %v4816 = vld [vmem:[%s390 + $0xa8] sm:$0xff]
        %v4817 = vld [vmem:[%s390 + $0xb0] sm:$0xff]
        %v4818 = vld [vmem:[%s390 + $0xb8] sm:$0xff]
        %v4819 = vld [vmem:[%s390 + $0xc0] sm:$0xff]
        %v4820 = vld [vmem:[%s390 + $0xc8] sm:$0xff]
        %v4821 = vld [vmem:[%s390 + $0xd0] sm:$0xff]
        %v4822 = vld [vmem:[%s390 + $0xd8] sm:$0xff]
        %v4823 = vld [vmem:[%s390 + $0xe0] sm:$0xff]
        %v4824 = vld [vmem:[%s390 + $0xe8] sm:$0xff]
        %v4825 = vld [vmem:[%s390 + $0xf0] sm:$0xff]
        %v4826 = vld [vmem:[%s390 + $0xf8] sm:$0xff]
        %v4859 = vunpack.c.l.b16 %v4795
        %v4860 = vunpack.c.h.b16 %v4795
        %v4861 = vunpack.c.l.b16 %v4796
        %v4862 = vunpack.c.h.b16 %v4796
        %v4863 = vunpack.c.l.b16 %v4797
        %v4864 = vunpack.c.h.b16 %v4797
        %v4865 = vunpack.c.l.b16 %v4798
        %v4866 = vunpack.c.h.b16 %v4798
        %v4867 = vunpack.c.l.b16 %v4799
        %v4868 = vunpack.c.h.b16 %v4799
        %v4869 = vunpack.c.l.b16 %v4800
        %v4870 = vunpack.c.h.b16 %v4800
        %v4871 = vunpack.c.l.b16 %v4801
        %v4872 = vunpack.c.h.b16 %v4801
        %v4873 = vunpack.c.l.b16 %v4802
        %v4874 = vunpack.c.h.b16 %v4802
        %v4875 = vunpack.c.l.b16 %v4803
        %v4876 = vunpack.c.h.b16 %v4803
        %v4877 = vunpack.c.l.b16 %v4804
        %v4878 = vunpack.c.h.b16 %v4804
        %v4879 = vunpack.c.l.b16 %v4805
        %v4880 = vunpack.c.h.b16 %v4805
        %v4881 = vunpack.c.l.b16 %v4806
        %v4882 = vunpack.c.h.b16 %v4806
        %v4883 = vunpack.c.l.b16 %v4807
        %v4884 = vunpack.c.h.b16 %v4807
        %v4885 = vunpack.c.l.b16 %v4808
        %v4886 = vunpack.c.h.b16 %v4808
        %v4887 = vunpack.c.l.b16 %v4809
        %v4888 = vunpack.c.h.b16 %v4809
        %v4889 = vunpack.c.l.b16 %v4810
        %v4890 = vunpack.c.h.b16 %v4810
        %v4891 = vunpack.c.l.b16 %v4811
        %v4892 = vunpack.c.h.b16 %v4811
        %v4893 = vunpack.c.l.b16 %v4812
        %v4894 = vunpack.c.h.b16 %v4812
        %v4895 = vunpack.c.l.b16 %v4813
        %v4896 = vunpack.c.h.b16 %v4813
        %v4897 = vunpack.c.l.b16 %v4814
        %v4898 = vunpack.c.h.b16 %v4814
        %v4899 = vunpack.c.l.b16 %v4815
        %v4900 = vunpack.c.h.b16 %v4815
        %v4901 = vunpack.c.l.b16 %v4816
        %v4902 = vunpack.c.h.b16 %v4816
        %v4903 = vunpack.c.l.b16 %v4817
        %v4904 = vunpack.c.h.b16 %v4817
        %v4905 = vunpack.c.l.b16 %v4818
        %v4906 = vunpack.c.h.b16 %v4818
        %v4907 = vunpack.c.l.b16 %v4819
        %v4908 = vunpack.c.h.b16 %v4819
        %v4909 = vunpack.c.l.b16 %v4820
        %v4910 = vunpack.c.h.b16 %v4820
        %v4911 = vunpack.c.l.b16 %v4821
        %v4912 = vunpack.c.h.b16 %v4821
        %v4913 = vunpack.c.l.b16 %v4822
        %v4914 = vunpack.c.h.b16 %v4822
        %v4915 = vunpack.c.l.b16 %v4823
        %v4916 = vunpack.c.h.b16 %v4823
        %v4917 = vunpack.c.l.b16 %v4824
        %v4918 = vunpack.c.h.b16 %v4824
        %v4919 = vunpack.c.l.b16 %v4825
        %v4920 = vunpack.c.h.b16 %v4825
        %v4921 = vunpack.c.l.b16 %v4826
        %v4922 = vunpack.c.h.b16 %v4826
        %v4923 = vpack.c.b16 %v4863, %v4859
        %v4924 = vpack.c.b16 %v4864, %v4860
        %v4925 = vpack.c.b16 %v4865, %v4861
        %v4926 = vpack.c.b16 %v4866, %v4862
        %v4927 = vpack.c.b16 %v4871, %v4867
        %v4928 = vpack.c.b16 %v4872, %v4868
        %v4929 = vpack.c.b16 %v4873, %v4869
        %v4930 = vpack.c.b16 %v4874, %v4870
        %v4931 = vpack.c.b16 %v4879, %v4875
        %v4932 = vpack.c.b16 %v4880, %v4876
        %v4933 = vpack.c.b16 %v4881, %v4877
        %v4934 = vpack.c.b16 %v4882, %v4878
        %v4935 = vpack.c.b16 %v4887, %v4883
        %v4936 = vpack.c.b16 %v4888, %v4884
        %v4937 = vpack.c.b16 %v4889, %v4885
        %v4938 = vpack.c.b16 %v4890, %v4886
        %v4939 = vpack.c.b16 %v4895, %v4891
        %v4940 = vpack.c.b16 %v4896, %v4892
        %v4941 = vpack.c.b16 %v4897, %v4893
        %v4942 = vpack.c.b16 %v4898, %v4894
        %v4943 = vpack.c.b16 %v4903, %v4899
        %v4944 = vpack.c.b16 %v4904, %v4900
        %v4945 = vpack.c.b16 %v4905, %v4901
        %v4946 = vpack.c.b16 %v4906, %v4902
        %v4947 = vpack.c.b16 %v4911, %v4907
        %v4948 = vpack.c.b16 %v4912, %v4908
        %v4949 = vpack.c.b16 %v4913, %v4909
        %v4950 = vpack.c.b16 %v4914, %v4910
        %v4951 = vpack.c.b16 %v4919, %v4915
        %v4952 = vpack.c.b16 %v4920, %v4916
        %v4953 = vpack.c.b16 %v4921, %v4917
        %v4954 = vpack.c.b16 %v4922, %v4918
        %4987 = vmatprep.subr.bf16.mxu0 %v4924
        %4988 = vmatpush1.bf16.msra.mxu0 %v4923
        %4989 = vmatprep.subr.bf16.mxu0 %v4928
        %4990 = vmatpush1.bf16.msra.mxu0 %v4927
        %4991 = vmatprep.subr.bf16.mxu0 %v4932
        %4992 = vmatpush1.bf16.msra.mxu0 %v4931
        %4993 = vmatprep.subr.bf16.mxu0 %v4936
        %4994 = vmatpush1.bf16.msra.mxu0 %v4935
        %4995 = vmatprep.subr.bf16.mxu0 %v4940
        %4996 = vmatpush1.bf16.msra.mxu0 %v4939
        %4997 = vmatprep.subr.bf16.mxu0 %v4944
        %4998 = vmatpush1.bf16.msra.mxu0 %v4943
        %4999 = vmatprep.subr.bf16.mxu0 %v4948
        %5000 = vmatpush1.bf16.msra.mxu0 %v4947
        %5001 = vmatprep.subr.bf16.mxu0 %v4952
        %5002 = vmatpush1.bf16.msra.mxu0 %v4951
        %5003 = vmatprep.subr.bf16.mxu0 0
        %5004 = vmatpush1.bf16.msra.mxu0 0
        %5005 = vmatprep.subr.bf16.mxu0 0
        %5006 = vmatpush1.bf16.msra.mxu0 0
        %5007 = vmatprep.subr.bf16.mxu0 0
        %5008 = vmatpush1.bf16.msra.mxu0 0
        %5009 = vmatprep.subr.bf16.mxu0 0
        %5010 = vmatpush1.bf16.msra.mxu0 0
        %5011 = vmatprep.subr.bf16.mxu0 0
        %5012 = vmatpush1.bf16.msra.mxu0 0
        %5013 = vmatprep.subr.bf16.mxu0 0
        %5014 = vmatpush1.bf16.msra.mxu0 0
        %5015 = vmatprep.subr.bf16.mxu0 0
        %5016 = vmatpush1.bf16.msra.mxu0 0
        %5017 = vmatprep.subr.bf16.mxu0 0
        %5018 = vmatpush1.bf16.msra.mxu0 0
        %5019 = vmatprep.mubr.bf16.mxu0 0
        %5020 = vmatmul.mubr.bf16.gmra.mrb[0].mxu0 %v4790
        %v5021 = vpop.f32.mrb[0].mxu0
        %v5022 = vadd.f32 0.0, %v5021
        %v5023 = vpop.f32.mrb[0].mxu0
        %v5024 = vadd.f32 0.0, %v5023
        %v5025 = vpop.f32.mrb[0].mxu0
        %v5026 = vpop.f32.mrb[0].mxu0
        %5027 = vdwg.mxu0
        %5028 = vmatprep.subr.bf16.mxu0 %v4926
        %5029 = vmatpush1.bf16.msra.mxu0 %v4925
        %5030 = vmatprep.subr.bf16.mxu0 %v4930
        %5031 = vmatpush1.bf16.msra.mxu0 %v4929
        %5032 = vmatprep.subr.bf16.mxu0 %v4934
        %5033 = vmatpush1.bf16.msra.mxu0 %v4933
        %5034 = vmatprep.subr.bf16.mxu0 %v4938
        %5035 = vmatpush1.bf16.msra.mxu0 %v4937
        %5036 = vmatprep.subr.bf16.mxu0 %v4942
        %5037 = vmatpush1.bf16.msra.mxu0 %v4941
        %5038 = vmatprep.subr.bf16.mxu0 %v4946
        %5039 = vmatpush1.bf16.msra.mxu0 %v4945
        %5040 = vmatprep.subr.bf16.mxu0 %v4950
        %5041 = vmatpush1.bf16.msra.mxu0 %v4949
        %5042 = vmatprep.subr.bf16.mxu0 %v4954
        %5043 = vmatpush1.bf16.msra.mxu0 %v4953
        %5044 = vmatprep.subr.bf16.mxu0 0
        %5045 = vmatpush1.bf16.msra.mxu0 0
        %5046 = vmatprep.subr.bf16.mxu0 0
        %5047 = vmatpush1.bf16.msra.mxu0 0
        %5048 = vmatprep.subr.bf16.mxu0 0
        %5049 = vmatpush1.bf16.msra.mxu0 0
        %5050 = vmatprep.subr.bf16.mxu0 0
        %5051 = vmatpush1.bf16.msra.mxu0 0
        %5052 = vmatprep.subr.bf16.mxu0 0
        %5053 = vmatpush1.bf16.msra.mxu0 0
        %5054 = vmatprep.subr.bf16.mxu0 0
        %5055 = vmatpush1.bf16.msra.mxu0 0
        %5056 = vmatprep.subr.bf16.mxu0 0
        %5057 = vmatpush1.bf16.msra.mxu0 0
        %5058 = vmatprep.subr.bf16.mxu0 0
        %5059 = vmatpush1.bf16.msra.mxu0 0
        %5060 = vmatprep.mubr.bf16.mxu0 0
        %5061 = vmatmul.mubr.bf16.gmra.mrb[0].mxu0 %v4790
        %v5062 = vpop.f32.mrb[0].mxu0
        %v5063 = vadd.f32 0.0, %v5062
        %v5064 = vpop.f32.mrb[0].mxu0
        %v5065 = vadd.f32 0.0, %v5064
        %v5066 = vpop.f32.mrb[0].mxu0
        %v5067 = vpop.f32.mrb[0].mxu0
        %5068 = vdwg.mxu0
        %v5069 = vadd.f32 %v4791, %v5022
        %v5070 = vadd.f32 %v4792, %v5024
        %v5071 = vadd.f32 %v4793, %v5063
        %v5072 = vadd.f32 %v4794, %v5065
        %v5073 = vmul.f32 %v5069, 0.5
        %v5074 = vtanh.pop %v5073
        %v5075 = vmul.f32 %v5074, 0.5
        %v5076 = vadd.f32 %v5075, 0.5
        %v5077 = vmul.f32 %v5070, 0.5
        %v5078 = vtanh.pop %v5077
        %v5079 = vmul.f32 %v5078, 0.5
        %v5080 = vadd.f32 %v5079, 0.5
        %v5081 = vtanh.pop %v5071
        %v5082 = vmul.f32 %v5072, 0.5
        %v5083 = vtanh.pop %v5082
        %v5084 = vmul.f32 %v5083, 0.5
        %v5085 = vadd.f32 %v5084, 0.5
        %v5086 = vld [vmem:[#allocation3] sm:$0xff]
        %v5087 = vmul.f32 %v5080, %v5086
        %v5088 = vmul.f32 %v5076, %v5081
        %v5089 = vadd.f32 %v5087, %v5088
        %v5090 = vtanh.pop %v5089
        %v5091 = vmul.f32 %v5085, %v5090
        %5092 = vst [vmem:[#allocation2] sm:$0xff] %v5091
        %5093 = vst [vmem:[#allocation3] sm:$0xff] %v5089
        %v5094 = vpack.c.bf16 %v5091, %v5091
        %s5095 = scalar_lea.vmem %s403, 4
        %5096 = vst [vmem:[%s5095] sm:$0xf] %v5094
        %v5097 = vld [vmem:[%s372] sm:$0xff]
        %v5098 = vld [vmem:[%s372 + $0x8] sm:$0xff]
        %v5099 = vld [vmem:[#allocation2] sm:$0xff]
        %v5100 = vpack.c.bf16 %v5099, %v5099
        %v5101 = vunpack.c.l.bf16 %v5097
        %v5102 = vunpack.c.h.bf16 %v5097
        %v5103 = vunpack.c.l.bf16 %v5098
        %v5104 = vunpack.c.h.bf16 %v5098
        %v5105 = vld [vmem:[%s390] sm:$0xff]
        %v5106 = vld [vmem:[%s390 + $0x8] sm:$0xff]
        %v5107 = vld [vmem:[%s390 + $0x10] sm:$0xff]
        %v5108 = vld [vmem:[%s390 + $0x18] sm:$0xff]
        %v5109 = vld [vmem:[%s390 + $0x20] sm:$0xff]
        %v5110 = vld [vmem:[%s390 + $0x28] sm:$0xff]
        %v5111 = vld [vmem:[%s390 + $0x30] sm:$0xff]
        %v5112 = vld [vmem:[%s390 + $0x38] sm:$0xff]
        %v5113 = vld [vmem:[%s390 + $0x40] sm:$0xff]
        %v5114 = vld [vmem:[%s390 + $0x48] sm:$0xff]
        %v5115 = vld [vmem:[%s390 + $0x50] sm:$0xff]
        %v5116 = vld [vmem:[%s390 + $0x58] sm:$0xff]
        %v5117 = vld [vmem:[%s390 + $0x60] sm:$0xff]
        %v5118 = vld [vmem:[%s390 + $0x68] sm:$0xff]
        %v5119 = vld [vmem:[%s390 + $0x70] sm:$0xff]
        %v5120 = vld [vmem:[%s390 + $0x78] sm:$0xff]
        %v5121 = vld [vmem:[%s390 + $0x80] sm:$0xff]
        %v5122 = vld [vmem:[%s390 + $0x88] sm:$0xff]
        %v5123 = vld [vmem:[%s390 + $0x90] sm:$0xff]
        %v5124 = vld [vmem:[%s390 + $0x98] sm:$0xff]
        %v5125 = vld [vmem:[%s390 + $0xa0] sm:$0xff]
        %v5126 = vld [vmem:[%s390 + $0xa8] sm:$0xff]
        %v5127 = vld [vmem:[%s390 + $0xb0] sm:$0xff]
        %v5128 = vld [vmem:[%s390 + $0xb8] sm:$0xff]
        %v5129 = vld [vmem:[%s390 + $0xc0] sm:$0xff]
        %v5130 = vld [vmem:[%s390 + $0xc8] sm:$0xff]
        %v5131 = vld [vmem:[%s390 + $0xd0] sm:$0xff]
        %v5132 = vld [vmem:[%s390 + $0xd8] sm:$0xff]
        %v5133 = vld [vmem:[%s390 + $0xe0] sm:$0xff]
        %v5134 = vld [vmem:[%s390 + $0xe8] sm:$0xff]
        %v5135 = vld [vmem:[%s390 + $0xf0] sm:$0xff]
        %v5136 = vld [vmem:[%s390 + $0xf8] sm:$0xff]
        %v5169 = vunpack.c.l.b16 %v5105
        %v5170 = vunpack.c.h.b16 %v5105
        %v5171 = vunpack.c.l.b16 %v5106
        %v5172 = vunpack.c.h.b16 %v5106
        %v5173 = vunpack.c.l.b16 %v5107
        %v5174 = vunpack.c.h.b16 %v5107
        %v5175 = vunpack.c.l.b16 %v5108
        %v5176 = vunpack.c.h.b16 %v5108
        %v5177 = vunpack.c.l.b16 %v5109
        %v5178 = vunpack.c.h.b16 %v5109
        %v5179 = vunpack.c.l.b16 %v5110
        %v5180 = vunpack.c.h.b16 %v5110
        %v5181 = vunpack.c.l.b16 %v5111
        %v5182 = vunpack.c.h.b16 %v5111
        %v5183 = vunpack.c.l.b16 %v5112
        %v5184 = vunpack.c.h.b16 %v5112
        %v5185 = vunpack.c.l.b16 %v5113
        %v5186 = vunpack.c.h.b16 %v5113
        %v5187 = vunpack.c.l.b16 %v5114
        %v5188 = vunpack.c.h.b16 %v5114
        %v5189 = vunpack.c.l.b16 %v5115
        %v5190 = vunpack.c.h.b16 %v5115
        %v5191 = vunpack.c.l.b16 %v5116
        %v5192 = vunpack.c.h.b16 %v5116
        %v5193 = vunpack.c.l.b16 %v5117
        %v5194 = vunpack.c.h.b16 %v5117
        %v5195 = vunpack.c.l.b16 %v5118
        %v5196 = vunpack.c.h.b16 %v5118
        %v5197 = vunpack.c.l.b16 %v5119
        %v5198 = vunpack.c.h.b16 %v5119
        %v5199 = vunpack.c.l.b16 %v5120
        %v5200 = vunpack.c.h.b16 %v5120
        %v5201 = vunpack.c.l.b16 %v5121
        %v5202 = vunpack.c.h.b16 %v5121
        %v5203 = vunpack.c.l.b16 %v5122
        %v5204 = vunpack.c.h.b16 %v5122
        %v5205 = vunpack.c.l.b16 %v5123
        %v5206 = vunpack.c.h.b16 %v5123
        %v5207 = vunpack.c.l.b16 %v5124
        %v5208 = vunpack.c.h.b16 %v5124
        %v5209 = vunpack.c.l.b16 %v5125
        %v5210 = vunpack.c.h.b16 %v5125
        %v5211 = vunpack.c.l.b16 %v5126
        %v5212 = vunpack.c.h.b16 %v5126
        %v5213 = vunpack.c.l.b16 %v5127
        %v5214 = vunpack.c.h.b16 %v5127
        %v5215 = vunpack.c.l.b16 %v5128
        %v5216 = vunpack.c.h.b16 %v5128
        %v5217 = vunpack.c.l.b16 %v5129
        %v5218 = vunpack.c.h.b16 %v5129
        %v5219 = vunpack.c.l.b16 %v5130
        %v5220 = vunpack.c.h.b16 %v5130
        %v5221 = vunpack.c.l.b16 %v5131
        %v5222 = vunpack.c.h.b16 %v5131
        %v5223 = vunpack.c.l.b16 %v5132
        %v5224 = vunpack.c.h.b16 %v5132
        %v5225 = vunpack.c.l.b16 %v5133
        %v5226 = vunpack.c.h.b16 %v5133
        %v5227 = vunpack.c.l.b16 %v5134
        %v5228 = vunpack.c.h.b16 %v5134
        %v5229 = vunpack.c.l.b16 %v5135
        %v5230 = vunpack.c.h.b16 %v5135
        %v5231 = vunpack.c.l.b16 %v5136
        %v5232 = vunpack.c.h.b16 %v5136
        %v5233 = vpack.c.b16 %v5173, %v5169
        %v5234 = vpack.c.b16 %v5174, %v5170
        %v5235 = vpack.c.b16 %v5175, %v5171
        %v5236 = vpack.c.b16 %v5176, %v5172
        %v5237 = vpack.c.b16 %v5181, %v5177
        %v5238 = vpack.c.b16 %v5182, %v5178
        %v5239 = vpack.c.b16 %v5183, %v5179
        %v5240 = vpack.c.b16 %v5184, %v5180
        %v5241 = vpack.c.b16 %v5189, %v5185
        %v5242 = vpack.c.b16 %v5190, %v5186
        %v5243 = vpack.c.b16 %v5191, %v5187
        %v5244 = vpack.c.b16 %v5192, %v5188
        %v5245 = vpack.c.b16 %v5197, %v5193
        %v5246 = vpack.c.b16 %v5198, %v5194
        %v5247 = vpack.c.b16 %v5199, %v5195
        %v5248 = vpack.c.b16 %v5200, %v5196
        %v5249 = vpack.c.b16 %v5205, %v5201
        %v5250 = vpack.c.b16 %v5206, %v5202
        %v5251 = vpack.c.b16 %v5207, %v5203
        %v5252 = vpack.c.b16 %v5208, %v5204
        %v5253 = vpack.c.b16 %v5213, %v5209
        %v5254 = vpack.c.b16 %v5214, %v5210
        %v5255 = vpack.c.b16 %v5215, %v5211
        %v5256 = vpack.c.b16 %v5216, %v5212
        %v5257 = vpack.c.b16 %v5221, %v5217
        %v5258 = vpack.c.b16 %v5222, %v5218
        %v5259 = vpack.c.b16 %v5223, %v5219
        %v5260 = vpack.c.b16 %v5224, %v5220
        %v5261 = vpack.c.b16 %v5229, %v5225
        %v5262 = vpack.c.b16 %v5230, %v5226
        %v5263 = vpack.c.b16 %v5231, %v5227
        %v5264 = vpack.c.b16 %v5232, %v5228
        %5297 = vmatprep.subr.bf16.mxu0 %v5234
        %5298 = vmatpush1.bf16.msra.mxu0 %v5233
        %5299 = vmatprep.subr.bf16.mxu0 %v5238
        %5300 = vmatpush1.bf16.msra.mxu0 %v5237
        %5301 = vmatprep.subr.bf16.mxu0 %v5242
        %5302 = vmatpush1.bf16.msra.mxu0 %v5241
        %5303 = vmatprep.subr.bf16.mxu0 %v5246
        %5304 = vmatpush1.bf16.msra.mxu0 %v5245
        %5305 = vmatprep.subr.bf16.mxu0 %v5250
        %5306 = vmatpush1.bf16.msra.mxu0 %v5249
        %5307 = vmatprep.subr.bf16.mxu0 %v5254
        %5308 = vmatpush1.bf16.msra.mxu0 %v5253
        %5309 = vmatprep.subr.bf16.mxu0 %v5258
        %5310 = vmatpush1.bf16.msra.mxu0 %v5257
        %5311 = vmatprep.subr.bf16.mxu0 %v5262
        %5312 = vmatpush1.bf16.msra.mxu0 %v5261
        %5313 = vmatprep.subr.bf16.mxu0 0
        %5314 = vmatpush1.bf16.msra.mxu0 0
        %5315 = vmatprep.subr.bf16.mxu0 0
        %5316 = vmatpush1.bf16.msra.mxu0 0
        %5317 = vmatprep.subr.bf16.mxu0 0
        %5318 = vmatpush1.bf16.msra.mxu0 0
        %5319 = vmatprep.subr.bf16.mxu0 0
        %5320 = vmatpush1.bf16.msra.mxu0 0
        %5321 = vmatprep.subr.bf16.mxu0 0
        %5322 = vmatpush1.bf16.msra.mxu0 0
        %5323 = vmatprep.subr.bf16.mxu0 0
        %5324 = vmatpush1.bf16.msra.mxu0 0
        %5325 = vmatprep.subr.bf16.mxu0 0
        %5326 = vmatpush1.bf16.msra.mxu0 0
        %5327 = vmatprep.subr.bf16.mxu0 0
        %5328 = vmatpush1.bf16.msra.mxu0 0
        %5329 = vmatprep.mubr.bf16.mxu0 0
        %5330 = vmatmul.mubr.bf16.gmra.mrb[0].mxu0 %v5100
        %v5331 = vpop.f32.mrb[0].mxu0
        %v5332 = vadd.f32 0.0, %v5331
        %v5333 = vpop.f32.mrb[0].mxu0
        %v5334 = vadd.f32 0.0, %v5333
        %v5335 = vpop.f32.mrb[0].mxu0
        %v5336 = vpop.f32.mrb[0].mxu0
        %5337 = vdwg.mxu0
        %5338 = vmatprep.subr.bf16.mxu0 %v5236
        %5339 = vmatpush1.bf16.msra.mxu0 %v5235
        %5340 = vmatprep.subr.bf16.mxu0 %v5240
        %5341 = vmatpush1.bf16.msra.mxu0 %v5239
        %5342 = vmatprep.subr.bf16.mxu0 %v5244
        %5343 = vmatpush1.bf16.msra.mxu0 %v5243
        %5344 = vmatprep.subr.bf16.mxu0 %v5248
        %5345 = vmatpush1.bf16.msra.mxu0 %v5247
        %5346 = vmatprep.subr.bf16.mxu0 %v5252
        %5347 = vmatpush1.bf16.msra.mxu0 %v5251
        %5348 = vmatprep.subr.bf16.mxu0 %v5256
        %5349 = vmatpush1.bf16.msra.mxu0 %v5255
        %5350 = vmatprep.subr.bf16.mxu0 %v5260
        %5351 = vmatpush1.bf16.msra.mxu0 %v5259
        %5352 = vmatprep.subr.bf16.mxu0 %v5264
        %5353 = vmatpush1.bf16.msra.mxu0 %v5263
        %5354 = vmatprep.subr.bf16.mxu0 0
        %5355 = vmatpush1.bf16.msra.mxu0 0
        %5356 = vmatprep.subr.bf16.mxu0 0
        %5357 = vmatpush1.bf16.msra.mxu0 0
        %5358 = vmatprep.subr.bf16.mxu0 0
        %5359 = vmatpush1.bf16.msra.mxu0 0
        %5360 = vmatprep.subr.bf16.mxu0 0
        %5361 = vmatpush1.bf16.msra.mxu0 0
        %5362 = vmatprep.subr.bf16.mxu0 0
        %5363 = vmatpush1.bf16.msra.mxu0 0
        %5364 = vmatprep.subr.bf16.mxu0 0
        %5365 = vmatpush1.bf16.msra.mxu0 0
        %5366 = vmatprep.subr.bf16.mxu0 0
        %5367 = vmatpush1.bf16.msra.mxu0 0
        %5368 = vmatprep.subr.bf16.mxu0 0
        %5369 = vmatpush1.bf16.msra.mxu0 0
        %5370 = vmatprep.mubr.bf16.mxu0 0
        %5371 = vmatmul.mubr.bf16.gmra.mrb[0].mxu0 %v5100
        %v5372 = vpop.f32.mrb[0].mxu0
        %v5373 = vadd.f32 0.0, %v5372
        %v5374 = vpop.f32.mrb[0].mxu0
        %v5375 = vadd.f32 0.0, %v5374
        %v5376 = vpop.f32.mrb[0].mxu0
        %v5377 = vpop.f32.mrb[0].mxu0
        %5378 = vdwg.mxu0
        %v5379 = vadd.f32 %v5101, %v5332
        %v5380 = vadd.f32 %v5102, %v5334
        %v5381 = vadd.f32 %v5103, %v5373
        %v5382 = vadd.f32 %v5104, %v5375
        %v5383 = vmul.f32 %v5379, 0.5
        %v5384 = vtanh.pop %v5383
        %v5385 = vmul.f32 %v5384, 0.5
        %v5386 = vadd.f32 %v5385, 0.5
        %v5387 = vmul.f32 %v5380, 0.5
        %v5388 = vtanh.pop %v5387
        %v5389 = vmul.f32 %v5388, 0.5
        %v5390 = vadd.f32 %v5389, 0.5
        %v5391 = vtanh.pop %v5381
        %v5392 = vmul.f32 %v5382, 0.5
        %v5393 = vtanh.pop %v5392
        %v5394 = vmul.f32 %v5393, 0.5
        %v5395 = vadd.f32 %v5394, 0.5
        %v5396 = vld [vmem:[#allocation3] sm:$0xff]
        %v5397 = vmul.f32 %v5390, %v5396
        %v5398 = vmul.f32 %v5386, %v5391
        %v5399 = vadd.f32 %v5397, %v5398
        %v5400 = vtanh.pop %v5399
        %v5401 = vmul.f32 %v5395, %v5400
        %5402 = vst [vmem:[#allocation2] sm:$0xff] %v5401
        %5403 = vst [vmem:[#allocation3] sm:$0xff] %v5399
        %v5404 = vpack.c.bf16 %v5401, %v5401
        %5405 = vst [vmem:[%s403] sm:$0xf] %v5404
      $region48: #{bilstm_forward.1} parent=35 // pred_fallthru
        _
      // Predicated region
      $region49: #{bilstm_forward.1} parent=35 // pred_check
        %p5406 = pneg %p418
      $region50: #{bilstm_forward.1} parent=35 // pred_check_branch
        %5408 = sbr.rel (%p5406) target = $region52
      $region51: #{bilstm_forward.1} parent=35 // pred_region
        %v5409 = vld [vmem:[#allocation2] sm:$0xff]
        %5410 = vst [vmem:[%s412] sm:$0xff] %v5409
        %v5411 = vld [vmem:[#allocation3] sm:$0xff]
        %5412 = vst [vmem:[%s416] sm:$0xff] %v5411
      $region52: #{bilstm_forward.1} parent=35 // pred_fallthru
        _
      %s5413 = smul.u32 %s23, 2
      %s5414 = ssub.s32 0, %s5413
      %s5415 = smul.u32 %s22, %s5414
      %s5416 = sadd.s32 %s23, %s5415
      %s5417 = smul.u32 8, %s5416
      %p5418 = scmp.lt.s32.totalorder %s22, 1
      %s5419 = scalar_select %p5418, %s22, 1
      %p5420 = scmp.lt.s32.totalorder %s5417, 7
      %s5421 = scalar_select %p5420, %s5417, 7
      %s5422 = smul.addr %s5419, 8
      %s5423 = sadd.s32 %s5421, %s5422
      %s5424 = smul.addr %s5423, 4
      %s5425 = scalar_lea.vmem %s4, %s5424
      %p5426 = scmp.lt.s32.totalorder %s22, 1
      %s5427 = scalar_select %p5426, %s22, 1
      %s5428 = smul.addr %s5427, 8
      %s5429 = scalar_lea.vmem %s5, %s5428
      %p5430 = scmp.lt.s32.totalorder %s22, 1
      %s5431 = scalar_select %p5430, %s22, 1
      %s5432 = smul.addr %s5431, 8
      %s5433 = scalar_lea.vmem %s6, %s5432
      // Predicated region
      $region53: #{bilstm_forward.1} parent=35 // pred_check
        %p5434 = pneg %p172
      $region54: #{bilstm_forward.1} parent=35 // pred_check_branch
        %5436 = sbr.rel (%p5434) target = $region56
      $region55: #{bilstm_forward.1} parent=35 // pred_region
        %s5437 = smul.u32 %s23, 2
        %s5438 = ssub.s32 0, %s5437
        %s5439 = smul.u32 %s22, %s5438
        %s5440 = sadd.s32 %s23, %s5439
        %s5441 = smul.u32 8, %s5440
      $region56: #{bilstm_forward.1} parent=35 // pred_fallthru
        _
      // Predicated region
      $region57: #{bilstm_forward.1} parent=35 // pred_check
        %p5442 = pneg %p198
      $region58: #{bilstm_forward.1} parent=35 // pred_check_branch
        %5444 = sbr.rel (%p5442) target = $region60
      $region59: #{bilstm_forward.1} parent=35 // pred_region
        _
      $region60: #{bilstm_forward.1} parent=35 // pred_fallthru
        _
      // Predicated region
      $region61: #{bilstm_forward.1} parent=35 // pred_check
        %p5445 = pneg %p224
      $region62: #{bilstm_forward.1} parent=35 // pred_check_branch
        %5447 = sbr.rel (%p5445) target = $region64
      $region63: #{bilstm_forward.1} parent=35 // pred_region
        _
      $region64: #{bilstm_forward.1} parent=35 // pred_fallthru
        _
    $region36: #{bilstm_forward.1} parent=5 // pred_fallthru
      _
    %p5448 = scmp.le.s32.totalorder 2, %s13
    // Predicated region
    $region65: #{bilstm_forward.1} parent=5 // pred_check
      %p5449 = pneg %p5448
    $region66: #{bilstm_forward.1} parent=5 // pred_check_branch
      %5451 = sbr.rel (%p5449) target = $region68
    $region67: #{bilstm_forward.1} parent=5 // pred_region
      %s5452 = ssub.s32 %s13, 2
      // Predicated region
      $region69: #{bilstm_forward.1} parent=67 // pred_check
        %p5453 = pneg %p178
      $region70: #{bilstm_forward.1} parent=67 // pred_check_branch
        %5455 = sbr.rel (%p5453) target = $region72
      $region71: #{bilstm_forward.1} parent=67 // pred_region
        %s5456 = smul.u32 %s25, 2
        %s5457 = ssub.s32 0, %s5456
        %s5458 = smul.u32 %s24, %s5457
        %s5459 = sadd.s32 %s25, %s5458
        %s5460 = smul.u32 8, %s5459
        %p5461 = scmp.lt.s32.totalorder %s24, 1
        %s5462 = scalar_select %p5461, %s24, 1
        %p5463 = scmp.lt.s32.totalorder %s5460, 7
        %s5464 = scalar_select %p5463, %s5460, 7
        %s5465 = smul.addr %s5462, 8
        %s5466 = sadd.s32 %s5464, %s5465
        %s5467 = smul.addr %s5466, 4
        %s5468 = scalar_lea.vmem %s4, %s5467
      $region72: #{bilstm_forward.1} parent=67 // pred_fallthru
        _
      // Predicated region
      $region73: #{bilstm_forward.1} parent=67 // pred_check
        %p5469 = pneg %p204
      $region74: #{bilstm_forward.1} parent=67 // pred_check_branch
        %5471 = sbr.rel (%p5469) target = $region76
      $region75: #{bilstm_forward.1} parent=67 // pred_region
        %p5472 = scmp.lt.s32.totalorder %s24, 1
        %s5473 = scalar_select %p5472, %s24, 1
        %s5474 = smul.addr %s5473, 8
        %s5475 = scalar_lea.vmem %s5, %s5474
      $region76: #{bilstm_forward.1} parent=67 // pred_fallthru
        _
      // Predicated region
      $region77: #{bilstm_forward.1} parent=67 // pred_check
        %p5476 = pneg %p230
      $region78: #{bilstm_forward.1} parent=67 // pred_check_branch
        %5478 = sbr.rel (%p5476) target = $region80
      $region79: #{bilstm_forward.1} parent=67 // pred_region
        %p5479 = scmp.lt.s32.totalorder %s24, 1
        %s5480 = scalar_select %p5479, %s24, 1
        %s5481 = smul.addr %s5480, 8
        %s5482 = scalar_lea.vmem %s6, %s5481
      $region80: #{bilstm_forward.1} parent=67 // pred_fallthru
        _
    $region68: #{bilstm_forward.1} parent=5 // pred_fallthru
      _
  $region6: #{bilstm_forward.1} parent=0 // loop_footer
    %s17 = sadd.s32 1, %s13
  $region7: #{bilstm_forward.1} parent=0 // loop_footer_branch
    %12 = sbr.rel target = $region3
  $region8: #{bilstm_forward.1} parent=0 // loop_exit
    _

</llo_original>
